<compile_context>
chip_gen: v7x
topology: tpu7x:2x2x1
jax: 0.10.0
libtpu: 0.0.40
codegen_flags: <defaults>
</compile_context>

<pallas_src>
import functools

import jax
import jax.numpy as jnp
from jax.experimental import pallas as pl
from jax.experimental.pallas import tpu as pltpu


# ----------------------------------------------------------------------------
# Fused conv: per-tap MXU matmul accumulation + bias (+ skip) + ReLU epilogue
# ----------------------------------------------------------------------------
def _conv_kernel(x_ref, w_ref, b_ref, *rest, kh, kw, H, W, relu, has_skip):
    if has_skip:
        skip_ref, o_ref = rest
    else:
        (o_ref,) = rest
    cin = x_ref.shape[-1]

    # One DMA'd padded block per batch element; widen once so the per-tap
    # slice + spatial flatten is layout-trivial (f32 sublane tile of 8 divides
    # both H and W used here).
    xf = x_ref[0].astype(jnp.float32)                       # (Hp, Wp, Cin)

    acc = None
    for t in range(kh * kw):
        dy, dx = divmod(t, kw)
        patch = xf[dy:dy + H, dx:dx + W, :].reshape(H * W, cin)
        d = jnp.dot(patch.astype(jnp.bfloat16), w_ref[t],
                    preferred_element_type=jnp.float32)     # (H*W, Cout) f32
        acc = d if acc is None else acc + d

    acc = acc + b_ref[...]                                   # (1, Cout) bcast
    if has_skip:
        acc = acc + skip_ref[0].astype(jnp.float32)          # residual add
    if relu:
        acc = jnp.maximum(acc, 0.0)
    o_ref[0] = acc.astype(o_ref.dtype)


def conv2d_same(x, w, b, *, relu, skip=None):
    """SAME-padded stride-1 conv with fused bias (+ optional skip) + ReLU.

    x: (B, H, W, Cin) bf16 NHWC.  w: (kh, kw, Cin, Cout) f32.  b: (Cout,) f32.
    skip: optional (B, H*W, Cout) bf16 added before the ReLU.
    Returns (B, H*W, Cout) bf16.
    """
    B, H, W, Cin = x.shape
    kh, kw, _, Cout = w.shape
    ph, pw = kh // 2, kw // 2
    xp = x if (ph == 0 and pw == 0) else jnp.pad(
        x, ((0, 0), (ph, ph), (pw, pw), (0, 0)))
    Hp, Wp = H + 2 * ph, W + 2 * pw

    wt = w.reshape(kh * kw, Cin, Cout).astype(jnp.bfloat16)  # MXU operands bf16
    bias = b.reshape(1, Cout).astype(jnp.float32)

    in_specs = [
        pl.BlockSpec((1, Hp, Wp, Cin), lambda n: (n, 0, 0, 0)),
        pl.BlockSpec((kh * kw, Cin, Cout), lambda n: (0, 0, 0)),
        pl.BlockSpec((1, Cout), lambda n: (0, 0)),
    ]
    args = [xp, wt, bias]
    if skip is not None:
        in_specs.append(pl.BlockSpec((1, H * W, Cout), lambda n: (n, 0, 0)))
        args.append(skip)

    return pl.pallas_call(
        functools.partial(_conv_kernel, kh=kh, kw=kw, H=H, W=W,
                          relu=relu, has_skip=skip is not None),
        out_shape=jax.ShapeDtypeStruct((B, H * W, Cout), jnp.bfloat16),
        grid_spec=pltpu.PrefetchScalarGridSpec(
            num_scalar_prefetch=0,
            grid=(B,),
            in_specs=in_specs,
            out_specs=pl.BlockSpec((1, H * W, Cout), lambda n: (n, 0, 0)),
        ),
        compiler_params=pltpu.CompilerParams(
            dimension_semantics=("parallel",)),
    )(*args)


# ----------------------------------------------------------------------------
# 2x2 stride-2 max pool: single read of the feature map, no window stacking
# ----------------------------------------------------------------------------
def _maxpool_kernel(x_ref, o_ref, *, Ho, C):
    for r in range(Ho):
        top = x_ref[0, 2 * r].astype(jnp.float32)        # (Wo, 2C)
        bot = x_ref[0, 2 * r + 1].astype(jnp.float32)    # (Wo, 2C)
        m = jnp.maximum(top, bot)                        # H-direction max
        o_ref[0, r] = jnp.maximum(m[:, :C], m[:, C:]).astype(o_ref.dtype)


def maxpool2x2(x):
    """x: (B, H, W, C) bf16 -> (B, H//2, W//2, C) bf16."""
    B, H, W, C = x.shape
    Ho, Wo = H // 2, W // 2
    # Pure row-major reshape: pairs the two W-columns of each window on lanes.
    xr = x.reshape(B, H, Wo, 2 * C)
    return pl.pallas_call(
        functools.partial(_maxpool_kernel, Ho=Ho, C=C),
        out_shape=jax.ShapeDtypeStruct((B, Ho, Wo, C), x.dtype),
        grid_spec=pltpu.PrefetchScalarGridSpec(
            num_scalar_prefetch=0,
            grid=(B,),
            in_specs=[pl.BlockSpec((1, H, Wo, 2 * C), lambda n: (n, 0, 0, 0))],
            out_specs=pl.BlockSpec((1, Ho, Wo, C), lambda n: (n, 0, 0, 0)),
        ),
        compiler_params=pltpu.CompilerParams(
            dimension_semantics=("parallel",)),
    )(xr)


# ----------------------------------------------------------------------------
# Fused global average pool + embedding Linear
# ----------------------------------------------------------------------------
def _gap_embed_kernel(x_ref, w_ref, b_ref, o_ref):
    feats = jnp.mean(x_ref[0].astype(jnp.float32), axis=0, keepdims=True)
    y = jnp.dot(feats.astype(jnp.bfloat16), w_ref[...],
                preferred_element_type=jnp.float32)
    o_ref[0] = (y + b_ref[...]).astype(o_ref.dtype)


def gap_embed(x, w, b):
    """x: (B, S, C) bf16;  w: (C, E) f32;  b: (E,) f32  ->  (B, E) f32."""
    B, S, C = x.shape
    E = w.shape[1]
    out = pl.pallas_call(
        _gap_embed_kernel,
        out_shape=jax.ShapeDtypeStruct((B, 1, E), jnp.float32),
        grid_spec=pltpu.PrefetchScalarGridSpec(
            num_scalar_prefetch=0,
            grid=(B,),
            in_specs=[
                pl.BlockSpec((1, S, C), lambda n: (n, 0, 0)),
                pl.BlockSpec((C, E), lambda n: (0, 0)),
                pl.BlockSpec((1, E), lambda n: (0, 0)),
            ],
            out_specs=pl.BlockSpec((1, 1, E), lambda n: (n, 0, 0)),
        ),
        compiler_params=pltpu.CompilerParams(
            dimension_semantics=("parallel",)),
    )(x, w.astype(jnp.bfloat16), b.reshape(1, E).astype(jnp.float32))
    return out.reshape(B, E)


# ----------------------------------------------------------------------------
# EncoderCNN forward
# ----------------------------------------------------------------------------
def encoder_cnn_forward(images_nchw, params):
    # NCHW (PyTorch) -> NHWC; activations bf16 at the kernel boundary.
    x = jnp.transpose(images_nchw, (0, 2, 3, 1)).astype(jnp.bfloat16)
    B, H, W, _ = x.shape

    # ---- backbone (self.resnet): stem conv + relu + 2x2 maxpool ----
    c_stem = params["stem_b"].shape[0]
    y = conv2d_same(x, params["stem_w"], params["stem_b"], relu=True)
    y = maxpool2x2(y.reshape(B, H, W, c_stem))          # (B, H/2, W/2, c_stem)
    B, Ho, Wo, _ = y.shape

    # ---- one bottleneck residual block: 1x1 -> 3x3 -> 1x1, +skip, relu ----
    skip = y.reshape(B, Ho * Wo, c_stem)
    c_mid = params["b1_b"].shape[0]
    z = conv2d_same(y, params["b1_w"], params["b1_b"], relu=True)
    z = conv2d_same(z.reshape(B, Ho, Wo, c_mid), params["b2_w"],
                    params["b2_b"], relu=True)
    z = conv2d_same(z.reshape(B, Ho, Wo, c_mid), params["b3_w"],
                    params["b3_b"], relu=True, skip=skip)   # (B, Ho*Wo, c_stem)

    # ---- resnet avgpool + features.view(B, -1) + self.embed (fused) ----
    return gap_embed(z, params["embed_w"], params["embed_b"])


def init_params(key, c_in, c_stem, c_mid, embed_size):
    ks = jax.random.split(key, 10)

    def w(k, shape, fan_in):
        return jax.random.normal(k, shape, jnp.float32) / jnp.sqrt(float(fan_in))

    return {
        "stem_w": w(ks[0], (3, 3, c_in, c_stem), 3 * 3 * c_in),
        "stem_b": 0.01 * jax.random.normal(ks[1], (c_stem,), jnp.float32),
        "b1_w": w(ks[2], (1, 1, c_stem, c_mid), c_stem),
        "b1_b": 0.01 * jax.random.normal(ks[3], (c_mid,), jnp.float32),
        "b2_w": w(ks[4], (3, 3, c_mid, c_mid), 3 * 3 * c_mid),
        "b2_b": 0.01 * jax.random.normal(ks[5], (c_mid,), jnp.float32),
        "b3_w": w(ks[6], (1, 1, c_mid, c_stem), c_mid),
        "b3_b": 0.01 * jax.random.normal(ks[7], (c_stem,), jnp.float32),
        "embed_w": w(ks[8], (c_stem, embed_size), c_stem),
        "embed_b": 0.01 * jax.random.normal(ks[9], (embed_size,), jnp.float32),
    }


if __name__ == "__main__":
    key = jax.random.PRNGKey(0)
    k_img, k_par = jax.random.split(key)

    B, C_in, H, W = 2, 4, 16, 16                 # small NCHW input
    c_stem, c_mid, embed_size = 128, 128, 256    # lane-dense channel widths

    images = jax.random.normal(k_img, (B, C_in, H, W), jnp.float32)
    params = init_params(k_par, C_in, c_stem, c_mid, embed_size)

    features = jax.jit(encoder_cnn_forward)(images, params)
    features = jax.block_until_ready(features)
    assert features.shape == (B, embed_size)
    assert features.dtype == jnp.float32
    print("KERNEL_OK")
</pallas_src>

<mosaic_0001>
module attributes {stable_mosaic.version = 11 : i64} {
  func.func @_conv_kernel(%arg0: i32, %arg1: memref<1x18x18x4xbf16, #tpu.memory_space<vmem>>, %arg2: memref<9x4x128xbf16, #tpu.memory_space<vmem>>, %arg3: memref<1x128xf32, #tpu.memory_space<vmem>>, %arg4: memref<1x256x128xbf16, #tpu.memory_space<vmem>>) attributes {dimension_semantics = [#tpu.dimension_semantics<parallel>], iteration_bounds = array<i64: 2>, scalar_prefetch = 0 : i64, scratch_operands = 0 : i64, tpu.core_type = #tpu.core_type<tc>, window_params = [{transform_indices = @transform_0, window_bounds = array<i64: 1, 18, 18, 4>}, {pipeline_mode = #tpu.pipeline_mode<synchronous>, transform_indices = @transform_1, window_bounds = array<i64: 9, 4, 128>}, {pipeline_mode = #tpu.pipeline_mode<synchronous>, transform_indices = @transform_2, window_bounds = array<i64: 1, 128>}, {transform_indices = @transform_3, window_bounds = array<i64: 1, 256, 128>}]} {
    %c0 = arith.constant 0 : index
    %c0_0 = arith.constant 0 : index
    %c0_1 = arith.constant 0 : index
    %c0_2 = arith.constant 0 : index
    %0 = vector.load %arg1[%c0, %c0_0, %c0_1, %c0_2] : memref<1x18x18x4xbf16, #tpu.memory_space<vmem>>, vector<1x18x18x4xbf16>
    %1 = vector.shape_cast %0 : vector<1x18x18x4xbf16> to vector<18x18x4xbf16>
    %2 = arith.extf %1 : vector<18x18x4xbf16> to vector<18x18x4xf32>
    %3 = vector.extract_strided_slice %2 {offsets = [0, 0, 0], sizes = [16, 16, 4], strides = [1, 1, 1]} : vector<18x18x4xf32> to vector<16x16x4xf32>
    %4 = vector.shape_cast %3 : vector<16x16x4xf32> to vector<256x4xf32>
    %5 = arith.truncf %4 : vector<256x4xf32> to vector<256x4xbf16>
    %c0_3 = arith.constant 0 : index
    %c0_4 = arith.constant 0 : index
    %c0_5 = arith.constant 0 : index
    %6 = vector.load %arg2[%c0_3, %c0_4, %c0_5] : memref<9x4x128xbf16, #tpu.memory_space<vmem>>, vector<1x4x128xbf16>
    %7 = vector.shape_cast %6 : vector<1x4x128xbf16> to vector<4x128xbf16>
    %cst = arith.constant dense<0.000000e+00> : vector<256x128xf32>
    %8 = tpu.matmul %5, %7, %cst {dimension_numbers = #tpu.dot_dimension_numbers<[1], [0], [0], [1], [0, 0, 1, 1], [], []>} : vector<256x4xbf16>, vector<4x128xbf16>, vector<256x128xf32> -> vector<256x128xf32>
    %9 = vector.extract_strided_slice %2 {offsets = [0, 1, 0], sizes = [16, 16, 4], strides = [1, 1, 1]} : vector<18x18x4xf32> to vector<16x16x4xf32>
    %10 = vector.shape_cast %9 : vector<16x16x4xf32> to vector<256x4xf32>
    %11 = arith.truncf %10 : vector<256x4xf32> to vector<256x4xbf16>
    %c1 = arith.constant 1 : index
    %c0_6 = arith.constant 0 : index
    %c0_7 = arith.constant 0 : index
    %12 = vector.load %arg2[%c1, %c0_6, %c0_7] : memref<9x4x128xbf16, #tpu.memory_space<vmem>>, vector<1x4x128xbf16>
    %13 = vector.shape_cast %12 : vector<1x4x128xbf16> to vector<4x128xbf16>
    %cst_8 = arith.constant dense<0.000000e+00> : vector<256x128xf32>
    %14 = tpu.matmul %11, %13, %cst_8 {dimension_numbers = #tpu.dot_dimension_numbers<[1], [0], [0], [1], [0, 0, 1, 1], [], []>} : vector<256x4xbf16>, vector<4x128xbf16>, vector<256x128xf32> -> vector<256x128xf32>
    %15 = arith.addf %8, %14 : vector<256x128xf32>
    %16 = vector.extract_strided_slice %2 {offsets = [0, 2, 0], sizes = [16, 16, 4], strides = [1, 1, 1]} : vector<18x18x4xf32> to vector<16x16x4xf32>
    %17 = vector.shape_cast %16 : vector<16x16x4xf32> to vector<256x4xf32>
    %18 = arith.truncf %17 : vector<256x4xf32> to vector<256x4xbf16>
    %c2 = arith.constant 2 : index
    %c0_9 = arith.constant 0 : index
    %c0_10 = arith.constant 0 : index
    %19 = vector.load %arg2[%c2, %c0_9, %c0_10] : memref<9x4x128xbf16, #tpu.memory_space<vmem>>, vector<1x4x128xbf16>
    %20 = vector.shape_cast %19 : vector<1x4x128xbf16> to vector<4x128xbf16>
    %cst_11 = arith.constant dense<0.000000e+00> : vector<256x128xf32>
    %21 = tpu.matmul %18, %20, %cst_11 {dimension_numbers = #tpu.dot_dimension_numbers<[1], [0], [0], [1], [0, 0, 1, 1], [], []>} : vector<256x4xbf16>, vector<4x128xbf16>, vector<256x128xf32> -> vector<256x128xf32>
    %22 = arith.addf %15, %21 : vector<256x128xf32>
    %23 = vector.extract_strided_slice %2 {offsets = [1, 0, 0], sizes = [16, 16, 4], strides = [1, 1, 1]} : vector<18x18x4xf32> to vector<16x16x4xf32>
    %24 = vector.shape_cast %23 : vector<16x16x4xf32> to vector<256x4xf32>
    %25 = arith.truncf %24 : vector<256x4xf32> to vector<256x4xbf16>
    %c3 = arith.constant 3 : index
    %c0_12 = arith.constant 0 : index
    %c0_13 = arith.constant 0 : index
    %26 = vector.load %arg2[%c3, %c0_12, %c0_13] : memref<9x4x128xbf16, #tpu.memory_space<vmem>>, vector<1x4x128xbf16>
    %27 = vector.shape_cast %26 : vector<1x4x128xbf16> to vector<4x128xbf16>
    %cst_14 = arith.constant dense<0.000000e+00> : vector<256x128xf32>
    %28 = tpu.matmul %25, %27, %cst_14 {dimension_numbers = #tpu.dot_dimension_numbers<[1], [0], [0], [1], [0, 0, 1, 1], [], []>} : vector<256x4xbf16>, vector<4x128xbf16>, vector<256x128xf32> -> vector<256x128xf32>
    %29 = arith.addf %22, %28 : vector<256x128xf32>
    %30 = vector.extract_strided_slice %2 {offsets = [1, 1, 0], sizes = [16, 16, 4], strides = [1, 1, 1]} : vector<18x18x4xf32> to vector<16x16x4xf32>
    %31 = vector.shape_cast %30 : vector<16x16x4xf32> to vector<256x4xf32>
    %32 = arith.truncf %31 : vector<256x4xf32> to vector<256x4xbf16>
    %c4 = arith.constant 4 : index
    %c0_15 = arith.constant 0 : index
    %c0_16 = arith.constant 0 : index
    %33 = vector.load %arg2[%c4, %c0_15, %c0_16] : memref<9x4x128xbf16, #tpu.memory_space<vmem>>, vector<1x4x128xbf16>
    %34 = vector.shape_cast %33 : vector<1x4x128xbf16> to vector<4x128xbf16>
    %cst_17 = arith.constant dense<0.000000e+00> : vector<256x128xf32>
    %35 = tpu.matmul %32, %34, %cst_17 {dimension_numbers = #tpu.dot_dimension_numbers<[1], [0], [0], [1], [0, 0, 1, 1], [], []>} : vector<256x4xbf16>, vector<4x128xbf16>, vector<256x128xf32> -> vector<256x128xf32>
    %36 = arith.addf %29, %35 : vector<256x128xf32>
    %37 = vector.extract_strided_slice %2 {offsets = [1, 2, 0], sizes = [16, 16, 4], strides = [1, 1, 1]} : vector<18x18x4xf32> to vector<16x16x4xf32>
    %38 = vector.shape_cast %37 : vector<16x16x4xf32> to vector<256x4xf32>
    %39 = arith.truncf %38 : vector<256x4xf32> to vector<256x4xbf16>
    %c5 = arith.constant 5 : index
    %c0_18 = arith.constant 0 : index
    %c0_19 = arith.constant 0 : index
    %40 = vector.load %arg2[%c5, %c0_18, %c0_19] : memref<9x4x128xbf16, #tpu.memory_space<vmem>>, vector<1x4x128xbf16>
    %41 = vector.shape_cast %40 : vector<1x4x128xbf16> to vector<4x128xbf16>
    %cst_20 = arith.constant dense<0.000000e+00> : vector<256x128xf32>
    %42 = tpu.matmul %39, %41, %cst_20 {dimension_numbers = #tpu.dot_dimension_numbers<[1], [0], [0], [1], [0, 0, 1, 1], [], []>} : vector<256x4xbf16>, vector<4x128xbf16>, vector<256x128xf32> -> vector<256x128xf32>
    %43 = arith.addf %36, %42 : vector<256x128xf32>
    %44 = vector.extract_strided_slice %2 {offsets = [2, 0, 0], sizes = [16, 16, 4], strides = [1, 1, 1]} : vector<18x18x4xf32> to vector<16x16x4xf32>
    %45 = vector.shape_cast %44 : vector<16x16x4xf32> to vector<256x4xf32>
    %46 = arith.truncf %45 : vector<256x4xf32> to vector<256x4xbf16>
    %c6 = arith.constant 6 : index
    %c0_21 = arith.constant 0 : index
    %c0_22 = arith.constant 0 : index
    %47 = vector.load %arg2[%c6, %c0_21, %c0_22] : memref<9x4x128xbf16, #tpu.memory_space<vmem>>, vector<1x4x128xbf16>
    %48 = vector.shape_cast %47 : vector<1x4x128xbf16> to vector<4x128xbf16>
    %cst_23 = arith.constant dense<0.000000e+00> : vector<256x128xf32>
    %49 = tpu.matmul %46, %48, %cst_23 {dimension_numbers = #tpu.dot_dimension_numbers<[1], [0], [0], [1], [0, 0, 1, 1], [], []>} : vector<256x4xbf16>, vector<4x128xbf16>, vector<256x128xf32> -> vector<256x128xf32>
    %50 = arith.addf %43, %49 : vector<256x128xf32>
    %51 = vector.extract_strided_slice %2 {offsets = [2, 1, 0], sizes = [16, 16, 4], strides = [1, 1, 1]} : vector<18x18x4xf32> to vector<16x16x4xf32>
    %52 = vector.shape_cast %51 : vector<16x16x4xf32> to vector<256x4xf32>
    %53 = arith.truncf %52 : vector<256x4xf32> to vector<256x4xbf16>
    %c7 = arith.constant 7 : index
    %c0_24 = arith.constant 0 : index
    %c0_25 = arith.constant 0 : index
    %54 = vector.load %arg2[%c7, %c0_24, %c0_25] : memref<9x4x128xbf16, #tpu.memory_space<vmem>>, vector<1x4x128xbf16>
    %55 = vector.shape_cast %54 : vector<1x4x128xbf16> to vector<4x128xbf16>
    %cst_26 = arith.constant dense<0.000000e+00> : vector<256x128xf32>
    %56 = tpu.matmul %53, %55, %cst_26 {dimension_numbers = #tpu.dot_dimension_numbers<[1], [0], [0], [1], [0, 0, 1, 1], [], []>} : vector<256x4xbf16>, vector<4x128xbf16>, vector<256x128xf32> -> vector<256x128xf32>
    %57 = arith.addf %50, %56 : vector<256x128xf32>
    %58 = vector.extract_strided_slice %2 {offsets = [2, 2, 0], sizes = [16, 16, 4], strides = [1, 1, 1]} : vector<18x18x4xf32> to vector<16x16x4xf32>
    %59 = vector.shape_cast %58 : vector<16x16x4xf32> to vector<256x4xf32>
    %60 = arith.truncf %59 : vector<256x4xf32> to vector<256x4xbf16>
    %c8 = arith.constant 8 : index
    %c0_27 = arith.constant 0 : index
    %c0_28 = arith.constant 0 : index
    %61 = vector.load %arg2[%c8, %c0_27, %c0_28] : memref<9x4x128xbf16, #tpu.memory_space<vmem>>, vector<1x4x128xbf16>
    %62 = vector.shape_cast %61 : vector<1x4x128xbf16> to vector<4x128xbf16>
    %cst_29 = arith.constant dense<0.000000e+00> : vector<256x128xf32>
    %63 = tpu.matmul %60, %62, %cst_29 {dimension_numbers = #tpu.dot_dimension_numbers<[1], [0], [0], [1], [0, 0, 1, 1], [], []>} : vector<256x4xbf16>, vector<4x128xbf16>, vector<256x128xf32> -> vector<256x128xf32>
    %64 = arith.addf %57, %63 : vector<256x128xf32>
    %c0_30 = arith.constant 0 : index
    %c0_31 = arith.constant 0 : index
    %65 = vector.load %arg3[%c0_30, %c0_31] : memref<1x128xf32, #tpu.memory_space<vmem>>, vector<1x128xf32>
    %66 = vector.broadcast %65 : vector<1x128xf32> to vector<256x128xf32>
    %67 = arith.addf %64, %66 : vector<256x128xf32>
    %cst_32 = arith.constant 0.000000e+00 : f32
    %68 = vector.broadcast %cst_32 : f32 to vector<256x128xf32>
    %69 = arith.maximumf %67, %68 : vector<256x128xf32>
    %70 = arith.truncf %69 : vector<256x128xf32> to vector<256x128xbf16>
    %c0_33 = arith.constant 0 : index
    %c0_34 = arith.constant 0 : index
    %c0_35 = arith.constant 0 : index
    %71 = vector.load %arg4[%c0_33, %c0_34, %c0_35] : memref<1x256x128xbf16, #tpu.memory_space<vmem>>, vector<1x256x128xbf16>
    %72 = vector.shape_cast %71 : vector<1x256x128xbf16> to vector<256x128xbf16>
    %73 = vector.shape_cast %70 : vector<256x128xbf16> to vector<1x256x128xbf16>
    tpu.vector_store %arg4[%c0_33, %c0_34, %c0_35], %73 {strides = array<i32>} : memref<1x256x128xbf16, #tpu.memory_space<vmem>>, vector<1x256x128xbf16>,
    return
  }
  func.func @transform_0(%arg0: i32) -> (i32, i32, i32, i32) {
    %c0_i32 = arith.constant 0 : i32
    %c0_i32_0 = arith.constant 0 : i32
    %c0_i32_1 = arith.constant 0 : i32
    %c0_i32_2 = arith.constant 0 : i32
    return %arg0, %c0_i32, %c0_i32_0, %c0_i32_1 : i32, i32, i32, i32
  }
  func.func @transform_1(%arg0: i32) -> (i32, i32, i32) {
    %c0_i32 = arith.constant 0 : i32
    %c0_i32_0 = arith.constant 0 : i32
    %c0_i32_1 = arith.constant 0 : i32
    %c0_i32_2 = arith.constant 0 : i32
    return %c0_i32, %c0_i32_0, %c0_i32_1 : i32, i32, i32
  }
  func.func @transform_2(%arg0: i32) -> (i32, i32) {
    %c0_i32 = arith.constant 0 : i32
    %c0_i32_0 = arith.constant 0 : i32
    %c0_i32_1 = arith.constant 0 : i32
    return %c0_i32, %c0_i32_0 : i32, i32
  }
  func.func @transform_3(%arg0: i32) -> (i32, i32, i32) {
    %c0_i32 = arith.constant 0 : i32
    %c0_i32_0 = arith.constant 0 : i32
    %c0_i32_1 = arith.constant 0 : i32
    return %arg0, %c0_i32, %c0_i32_0 : i32, i32, i32
  }
}

module attributes {stable_mosaic.version = 11 : i64} {
  func.func @_maxpool_kernel(%arg0: i32, %arg1: memref<1x16x8x256xbf16, #tpu.memory_space<vmem>>, %arg2: memref<1x8x8x128xbf16, #tpu.memory_space<vmem>>) attributes {dimension_semantics = [#tpu.dimension_semantics<parallel>], iteration_bounds = array<i64: 2>, scalar_prefetch = 0 : i64, scratch_operands = 0 : i64, tpu.core_type = #tpu.core_type<tc>, window_params = [{transform_indices = @transform_0, window_bounds = array<i64: 1, 16, 8, 256>}, {transform_indices = @transform_1, window_bounds = array<i64: 1, 8, 8, 128>}]} {
    %c0 = arith.constant 0 : index
    %c0_0 = arith.constant 0 : index
    %c0_1 = arith.constant 0 : index
    %c0_2 = arith.constant 0 : index
    %0 = vector.load %arg1[%c0, %c0_0, %c0_1, %c0_2] : memref<1x16x8x256xbf16, #tpu.memory_space<vmem>>, vector<1x1x8x256xbf16>
    %1 = vector.shape_cast %0 : vector<1x1x8x256xbf16> to vector<8x256xbf16>
    %2 = arith.extf %1 : vector<8x256xbf16> to vector<8x256xf32>
    %c0_3 = arith.constant 0 : index
    %c1 = arith.constant 1 : index
    %c0_4 = arith.constant 0 : index
    %c0_5 = arith.constant 0 : index
    %3 = vector.load %arg1[%c0_3, %c1, %c0_4, %c0_5] : memref<1x16x8x256xbf16, #tpu.memory_space<vmem>>, vector<1x1x8x256xbf16>
    %4 = vector.shape_cast %3 : vector<1x1x8x256xbf16> to vector<8x256xbf16>
    %5 = arith.extf %4 : vector<8x256xbf16> to vector<8x256xf32>
    %6 = arith.maximumf %2, %5 : vector<8x256xf32>
    %7 = vector.extract_strided_slice %6 {offsets = [0, 0], sizes = [8, 128], strides = [1, 1]} : vector<8x256xf32> to vector<8x128xf32>
    %8 = vector.extract_strided_slice %6 {offsets = [0, 128], sizes = [8, 128], strides = [1, 1]} : vector<8x256xf32> to vector<8x128xf32>
    %9 = arith.maximumf %7, %8 : vector<8x128xf32>
    %10 = arith.truncf %9 : vector<8x128xf32> to vector<8x128xbf16>
    %c0_6 = arith.constant 0 : index
    %c0_7 = arith.constant 0 : index
    %c0_8 = arith.constant 0 : index
    %c0_9 = arith.constant 0 : index
    %11 = vector.load %arg2[%c0_6, %c0_7, %c0_8, %c0_9] : memref<1x8x8x128xbf16, #tpu.memory_space<vmem>>, vector<1x1x8x128xbf16>
    %12 = vector.shape_cast %11 : vector<1x1x8x128xbf16> to vector<8x128xbf16>
    %13 = vector.shape_cast %10 : vector<8x128xbf16> to vector<1x1x8x128xbf16>
    tpu.vector_store %arg2[%c0_6, %c0_7, %c0_8, %c0_9], %13 {strides = array<i32>} : memref<1x8x8x128xbf16, #tpu.memory_space<vmem>>, vector<1x1x8x128xbf16>,
    %c0_10 = arith.constant 0 : index
    %c2 = arith.constant 2 : index
    %c0_11 = arith.constant 0 : index
    %c0_12 = arith.constant 0 : index
    %14 = vector.load %arg1[%c0_10, %c2, %c0_11, %c0_12] : memref<1x16x8x256xbf16, #tpu.memory_space<vmem>>, vector<1x1x8x256xbf16>
    %15 = vector.shape_cast %14 : vector<1x1x8x256xbf16> to vector<8x256xbf16>
    %16 = arith.extf %15 : vector<8x256xbf16> to vector<8x256xf32>
    %c0_13 = arith.constant 0 : index
    %c3 = arith.constant 3 : index
    %c0_14 = arith.constant 0 : index
    %c0_15 = arith.constant 0 : index
    %17 = vector.load %arg1[%c0_13, %c3, %c0_14, %c0_15] : memref<1x16x8x256xbf16, #tpu.memory_space<vmem>>, vector<1x1x8x256xbf16>
    %18 = vector.shape_cast %17 : vector<1x1x8x256xbf16> to vector<8x256xbf16>
    %19 = arith.extf %18 : vector<8x256xbf16> to vector<8x256xf32>
    %20 = arith.maximumf %16, %19 : vector<8x256xf32>
    %21 = vector.extract_strided_slice %20 {offsets = [0, 0], sizes = [8, 128], strides = [1, 1]} : vector<8x256xf32> to vector<8x128xf32>
    %22 = vector.extract_strided_slice %20 {offsets = [0, 128], sizes = [8, 128], strides = [1, 1]} : vector<8x256xf32> to vector<8x128xf32>
    %23 = arith.maximumf %21, %22 : vector<8x128xf32>
    %24 = arith.truncf %23 : vector<8x128xf32> to vector<8x128xbf16>
    %c0_16 = arith.constant 0 : index
    %c1_17 = arith.constant 1 : index
    %c0_18 = arith.constant 0 : index
    %c0_19 = arith.constant 0 : index
    %25 = vector.load %arg2[%c0_16, %c1_17, %c0_18, %c0_19] : memref<1x8x8x128xbf16, #tpu.memory_space<vmem>>, vector<1x1x8x128xbf16>
    %26 = vector.shape_cast %25 : vector<1x1x8x128xbf16> to vector<8x128xbf16>
    %27 = vector.shape_cast %24 : vector<8x128xbf16> to vector<1x1x8x128xbf16>
    tpu.vector_store %arg2[%c0_16, %c1_17, %c0_18, %c0_19], %27 {strides = array<i32>} : memref<1x8x8x128xbf16, #tpu.memory_space<vmem>>, vector<1x1x8x128xbf16>,
    %c0_20 = arith.constant 0 : index
    %c4 = arith.constant 4 : index
    %c0_21 = arith.constant 0 : index
    %c0_22 = arith.constant 0 : index
    %28 = vector.load %arg1[%c0_20, %c4, %c0_21, %c0_22] : memref<1x16x8x256xbf16, #tpu.memory_space<vmem>>, vector<1x1x8x256xbf16>
    %29 = vector.shape_cast %28 : vector<1x1x8x256xbf16> to vector<8x256xbf16>
    %30 = arith.extf %29 : vector<8x256xbf16> to vector<8x256xf32>
    %c0_23 = arith.constant 0 : index
    %c5 = arith.constant 5 : index
    %c0_24 = arith.constant 0 : index
    %c0_25 = arith.constant 0 : index
    %31 = vector.load %arg1[%c0_23, %c5, %c0_24, %c0_25] : memref<1x16x8x256xbf16, #tpu.memory_space<vmem>>, vector<1x1x8x256xbf16>
    %32 = vector.shape_cast %31 : vector<1x1x8x256xbf16> to vector<8x256xbf16>
    %33 = arith.extf %32 : vector<8x256xbf16> to vector<8x256xf32>
    %34 = arith.maximumf %30, %33 : vector<8x256xf32>
    %35 = vector.extract_strided_slice %34 {offsets = [0, 0], sizes = [8, 128], strides = [1, 1]} : vector<8x256xf32> to vector<8x128xf32>
    %36 = vector.extract_strided_slice %34 {offsets = [0, 128], sizes = [8, 128], strides = [1, 1]} : vector<8x256xf32> to vector<8x128xf32>
    %37 = arith.maximumf %35, %36 : vector<8x128xf32>
    %38 = arith.truncf %37 : vector<8x128xf32> to vector<8x128xbf16>
    %c0_26 = arith.constant 0 : index
    %c2_27 = arith.constant 2 : index
    %c0_28 = arith.constant 0 : index
    %c0_29 = arith.constant 0 : index
    %39 = vector.load %arg2[%c0_26, %c2_27, %c0_28, %c0_29] : memref<1x8x8x128xbf16, #tpu.memory_space<vmem>>, vector<1x1x8x128xbf16>
    %40 = vector.shape_cast %39 : vector<1x1x8x128xbf16> to vector<8x128xbf16>
    %41 = vector.shape_cast %38 : vector<8x128xbf16> to vector<1x1x8x128xbf16>
    tpu.vector_store %arg2[%c0_26, %c2_27, %c0_28, %c0_29], %41 {strides = array<i32>} : memref<1x8x8x128xbf16, #tpu.memory_space<vmem>>, vector<1x1x8x128xbf16>,
    %c0_30 = arith.constant 0 : index
    %c6 = arith.constant 6 : index
    %c0_31 = arith.constant 0 : index
    %c0_32 = arith.constant 0 : index
    %42 = vector.load %arg1[%c0_30, %c6, %c0_31, %c0_32] : memref<1x16x8x256xbf16, #tpu.memory_space<vmem>>, vector<1x1x8x256xbf16>
    %43 = vector.shape_cast %42 : vector<1x1x8x256xbf16> to vector<8x256xbf16>
    %44 = arith.extf %43 : vector<8x256xbf16> to vector<8x256xf32>
    %c0_33 = arith.constant 0 : index
    %c7 = arith.constant 7 : index
    %c0_34 = arith.constant 0 : index
    %c0_35 = arith.constant 0 : index
    %45 = vector.load %arg1[%c0_33, %c7, %c0_34, %c0_35] : memref<1x16x8x256xbf16, #tpu.memory_space<vmem>>, vector<1x1x8x256xbf16>
    %46 = vector.shape_cast %45 : vector<1x1x8x256xbf16> to vector<8x256xbf16>
    %47 = arith.extf %46 : vector<8x256xbf16> to vector<8x256xf32>
    %48 = arith.maximumf %44, %47 : vector<8x256xf32>
    %49 = vector.extract_strided_slice %48 {offsets = [0, 0], sizes = [8, 128], strides = [1, 1]} : vector<8x256xf32> to vector<8x128xf32>
    %50 = vector.extract_strided_slice %48 {offsets = [0, 128], sizes = [8, 128], strides = [1, 1]} : vector<8x256xf32> to vector<8x128xf32>
    %51 = arith.maximumf %49, %50 : vector<8x128xf32>
    %52 = arith.truncf %51 : vector<8x128xf32> to vector<8x128xbf16>
    %c0_36 = arith.constant 0 : index
    %c3_37 = arith.constant 3 : index
    %c0_38 = arith.constant 0 : index
    %c0_39 = arith.constant 0 : index
    %53 = vector.load %arg2[%c0_36, %c3_37, %c0_38, %c0_39] : memref<1x8x8x128xbf16, #tpu.memory_space<vmem>>, vector<1x1x8x128xbf16>
    %54 = vector.shape_cast %53 : vector<1x1x8x128xbf16> to vector<8x128xbf16>
    %55 = vector.shape_cast %52 : vector<8x128xbf16> to vector<1x1x8x128xbf16>
    tpu.vector_store %arg2[%c0_36, %c3_37, %c0_38, %c0_39], %55 {strides = array<i32>} : memref<1x8x8x128xbf16, #tpu.memory_space<vmem>>, vector<1x1x8x128xbf16>,
    %c0_40 = arith.constant 0 : index
    %c8 = arith.constant 8 : index
    %c0_41 = arith.constant 0 : index
    %c0_42 = arith.constant 0 : index
    %56 = vector.load %arg1[%c0_40, %c8, %c0_41, %c0_42] : memref<1x16x8x256xbf16, #tpu.memory_space<vmem>>, vector<1x1x8x256xbf16>
    %57 = vector.shape_cast %56 : vector<1x1x8x256xbf16> to vector<8x256xbf16>
    %58 = arith.extf %57 : vector<8x256xbf16> to vector<8x256xf32>
    %c0_43 = arith.constant 0 : index
    %c9 = arith.constant 9 : index
    %c0_44 = arith.constant 0 : index
    %c0_45 = arith.constant 0 : index
    %59 = vector.load %arg1[%c0_43, %c9, %c0_44, %c0_45] : memref<1x16x8x256xbf16, #tpu.memory_space<vmem>>, vector<1x1x8x256xbf16>
    %60 = vector.shape_cast %59 : vector<1x1x8x256xbf16> to vector<8x256xbf16>
    %61 = arith.extf %60 : vector<8x256xbf16> to vector<8x256xf32>
    %62 = arith.maximumf %58, %61 : vector<8x256xf32>
    %63 = vector.extract_strided_slice %62 {offsets = [0, 0], sizes = [8, 128], strides = [1, 1]} : vector<8x256xf32> to vector<8x128xf32>
    %64 = vector.extract_strided_slice %62 {offsets = [0, 128], sizes = [8, 128], strides = [1, 1]} : vector<8x256xf32> to vector<8x128xf32>
    %65 = arith.maximumf %63, %64 : vector<8x128xf32>
    %66 = arith.truncf %65 : vector<8x128xf32> to vector<8x128xbf16>
    %c0_46 = arith.constant 0 : index
    %c4_47 = arith.constant 4 : index
    %c0_48 = arith.constant 0 : index
    %c0_49 = arith.constant 0 : index
    %67 = vector.load %arg2[%c0_46, %c4_47, %c0_48, %c0_49] : memref<1x8x8x128xbf16, #tpu.memory_space<vmem>>, vector<1x1x8x128xbf16>
    %68 = vector.shape_cast %67 : vector<1x1x8x128xbf16> to vector<8x128xbf16>
    %69 = vector.shape_cast %66 : vector<8x128xbf16> to vector<1x1x8x128xbf16>
    tpu.vector_store %arg2[%c0_46, %c4_47, %c0_48, %c0_49], %69 {strides = array<i32>} : memref<1x8x8x128xbf16, #tpu.memory_space<vmem>>, vector<1x1x8x128xbf16>,
    %c0_50 = arith.constant 0 : index
    %c10 = arith.constant 10 : index
    %c0_51 = arith.constant 0 : index
    %c0_52 = arith.constant 0 : index
    %70 = vector.load %arg1[%c0_50, %c10, %c0_51, %c0_52] : memref<1x16x8x256xbf16, #tpu.memory_space<vmem>>, vector<1x1x8x256xbf16>
    %71 = vector.shape_cast %70 : vector<1x1x8x256xbf16> to vector<8x256xbf16>
    %72 = arith.extf %71 : vector<8x256xbf16> to vector<8x256xf32>
    %c0_53 = arith.constant 0 : index
    %c11 = arith.constant 11 : index
    %c0_54 = arith.constant 0 : index
    %c0_55 = arith.constant 0 : index
    %73 = vector.load %arg1[%c0_53, %c11, %c0_54, %c0_55] : memref<1x16x8x256xbf16, #tpu.memory_space<vmem>>, vector<1x1x8x256xbf16>
    %74 = vector.shape_cast %73 : vector<1x1x8x256xbf16> to vector<8x256xbf16>
    %75 = arith.extf %74 : vector<8x256xbf16> to vector<8x256xf32>
    %76 = arith.maximumf %72, %75 : vector<8x256xf32>
    %77 = vector.extract_strided_slice %76 {offsets = [0, 0], sizes = [8, 128], strides = [1, 1]} : vector<8x256xf32> to vector<8x128xf32>
    %78 = vector.extract_strided_slice %76 {offsets = [0, 128], sizes = [8, 128], strides = [1, 1]} : vector<8x256xf32> to vector<8x128xf32>
    %79 = arith.maximumf %77, %78 : vector<8x128xf32>
    %80 = arith.truncf %79 : vector<8x128xf32> to vector<8x128xbf16>
    %c0_56 = arith.constant 0 : index
    %c5_57 = arith.constant 5 : index
    %c0_58 = arith.constant 0 : index
    %c0_59 = arith.constant 0 : index
    %81 = vector.load %arg2[%c0_56, %c5_57, %c0_58, %c0_59] : memref<1x8x8x128xbf16, #tpu.memory_space<vmem>>, vector<1x1x8x128xbf16>
    %82 = vector.shape_cast %81 : vector<1x1x8x128xbf16> to vector<8x128xbf16>
    %83 = vector.shape_cast %80 : vector<8x128xbf16> to vector<1x1x8x128xbf16>
    tpu.vector_store %arg2[%c0_56, %c5_57, %c0_58, %c0_59], %83 {strides = array<i32>} : memref<1x8x8x128xbf16, #tpu.memory_space<vmem>>, vector<1x1x8x128xbf16>,
    %c0_60 = arith.constant 0 : index
    %c12 = arith.constant 12 : index
    %c0_61 = arith.constant 0 : index
    %c0_62 = arith.constant 0 : index
    %84 = vector.load %arg1[%c0_60, %c12, %c0_61, %c0_62] : memref<1x16x8x256xbf16, #tpu.memory_space<vmem>>, vector<1x1x8x256xbf16>
    %85 = vector.shape_cast %84 : vector<1x1x8x256xbf16> to vector<8x256xbf16>
    %86 = arith.extf %85 : vector<8x256xbf16> to vector<8x256xf32>
    %c0_63 = arith.constant 0 : index
    %c13 = arith.constant 13 : index
    %c0_64 = arith.constant 0 : index
    %c0_65 = arith.constant 0 : index
    %87 = vector.load %arg1[%c0_63, %c13, %c0_64, %c0_65] : memref<1x16x8x256xbf16, #tpu.memory_space<vmem>>, vector<1x1x8x256xbf16>
    %88 = vector.shape_cast %87 : vector<1x1x8x256xbf16> to vector<8x256xbf16>
    %89 = arith.extf %88 : vector<8x256xbf16> to vector<8x256xf32>
    %90 = arith.maximumf %86, %89 : vector<8x256xf32>
    %91 = vector.extract_strided_slice %90 {offsets = [0, 0], sizes = [8, 128], strides = [1, 1]} : vector<8x256xf32> to vector<8x128xf32>
    %92 = vector.extract_strided_slice %90 {offsets = [0, 128], sizes = [8, 128], strides = [1, 1]} : vector<8x256xf32> to vector<8x128xf32>
    %93 = arith.maximumf %91, %92 : vector<8x128xf32>
    %94 = arith.truncf %93 : vector<8x128xf32> to vector<8x128xbf16>
    %c0_66 = arith.constant 0 : index
    %c6_67 = arith.constant 6 : index
    %c0_68 = arith.constant 0 : index
    %c0_69 = arith.constant 0 : index
    %95 = vector.load %arg2[%c0_66, %c6_67, %c0_68, %c0_69] : memref<1x8x8x128xbf16, #tpu.memory_space<vmem>>, vector<1x1x8x128xbf16>
    %96 = vector.shape_cast %95 : vector<1x1x8x128xbf16> to vector<8x128xbf16>
    %97 = vector.shape_cast %94 : vector<8x128xbf16> to vector<1x1x8x128xbf16>
    tpu.vector_store %arg2[%c0_66, %c6_67, %c0_68, %c0_69], %97 {strides = array<i32>} : memref<1x8x8x128xbf16, #tpu.memory_space<vmem>>, vector<1x1x8x128xbf16>,
    %c0_70 = arith.constant 0 : index
    %c14 = arith.constant 14 : index
    %c0_71 = arith.constant 0 : index
    %c0_72 = arith.constant 0 : index
    %98 = vector.load %arg1[%c0_70, %c14, %c0_71, %c0_72] : memref<1x16x8x256xbf16, #tpu.memory_space<vmem>>, vector<1x1x8x256xbf16>
    %99 = vector.shape_cast %98 : vector<1x1x8x256xbf16> to vector<8x256xbf16>
    %100 = arith.extf %99 : vector<8x256xbf16> to vector<8x256xf32>
    %c0_73 = arith.constant 0 : index
    %c15 = arith.constant 15 : index
    %c0_74 = arith.constant 0 : index
    %c0_75 = arith.constant 0 : index
    %101 = vector.load %arg1[%c0_73, %c15, %c0_74, %c0_75] : memref<1x16x8x256xbf16, #tpu.memory_space<vmem>>, vector<1x1x8x256xbf16>
    %102 = vector.shape_cast %101 : vector<1x1x8x256xbf16> to vector<8x256xbf16>
    %103 = arith.extf %102 : vector<8x256xbf16> to vector<8x256xf32>
    %104 = arith.maximumf %100, %103 : vector<8x256xf32>
    %105 = vector.extract_strided_slice %104 {offsets = [0, 0], sizes = [8, 128], strides = [1, 1]} : vector<8x256xf32> to vector<8x128xf32>
    %106 = vector.extract_strided_slice %104 {offsets = [0, 128], sizes = [8, 128], strides = [1, 1]} : vector<8x256xf32> to vector<8x128xf32>
    %107 = arith.maximumf %105, %106 : vector<8x128xf32>
    %108 = arith.truncf %107 : vector<8x128xf32> to vector<8x128xbf16>
    %c0_76 = arith.constant 0 : index
    %c7_77 = arith.constant 7 : index
    %c0_78 = arith.constant 0 : index
    %c0_79 = arith.constant 0 : index
    %109 = vector.load %arg2[%c0_76, %c7_77, %c0_78, %c0_79] : memref<1x8x8x128xbf16, #tpu.memory_space<vmem>>, vector<1x1x8x128xbf16>
    %110 = vector.shape_cast %109 : vector<1x1x8x128xbf16> to vector<8x128xbf16>
    %111 = vector.shape_cast %108 : vector<8x128xbf16> to vector<1x1x8x128xbf16>
    tpu.vector_store %arg2[%c0_76, %c7_77, %c0_78, %c0_79], %111 {strides = array<i32>} : memref<1x8x8x128xbf16, #tpu.memory_space<vmem>>, vector<1x1x8x128xbf16>,
    return
  }
  func.func @transform_0(%arg0: i32) -> (i32, i32, i32, i32) {
    %c0_i32 = arith.constant 0 : i32
    %c0_i32_0 = arith.constant 0 : i32
    %c0_i32_1 = arith.constant 0 : i32
    %c0_i32_2 = arith.constant 0 : i32
    return %arg0, %c0_i32, %c0_i32_0, %c0_i32_1 : i32, i32, i32, i32
  }
  func.func @transform_1(%arg0: i32) -> (i32, i32, i32, i32) {
    %c0_i32 = arith.constant 0 : i32
    %c0_i32_0 = arith.constant 0 : i32
    %c0_i32_1 = arith.constant 0 : i32
    %c0_i32_2 = arith.constant 0 : i32
    return %arg0, %c0_i32, %c0_i32_0, %c0_i32_1 : i32, i32, i32, i32
  }
}

module attributes {stable_mosaic.version = 11 : i64} {
  func.func @_conv_kernel(%arg0: i32, %arg1: memref<1x8x8x128xbf16, #tpu.memory_space<vmem>>, %arg2: memref<1x128x128xbf16, #tpu.memory_space<vmem>>, %arg3: memref<1x128xf32, #tpu.memory_space<vmem>>, %arg4: memref<1x64x128xbf16, #tpu.memory_space<vmem>>) attributes {dimension_semantics = [#tpu.dimension_semantics<parallel>], iteration_bounds = array<i64: 2>, scalar_prefetch = 0 : i64, scratch_operands = 0 : i64, tpu.core_type = #tpu.core_type<tc>, window_params = [{transform_indices = @transform_0, window_bounds = array<i64: 1, 8, 8, 128>}, {pipeline_mode = #tpu.pipeline_mode<synchronous>, transform_indices = @transform_1, window_bounds = array<i64: 1, 128, 128>}, {pipeline_mode = #tpu.pipeline_mode<synchronous>, transform_indices = @transform_2, window_bounds = array<i64: 1, 128>}, {transform_indices = @transform_3, window_bounds = array<i64: 1, 64, 128>}]} {
    %c0 = arith.constant 0 : index
    %c0_0 = arith.constant 0 : index
    %c0_1 = arith.constant 0 : index
    %c0_2 = arith.constant 0 : index
    %0 = vector.load %arg1[%c0, %c0_0, %c0_1, %c0_2] : memref<1x8x8x128xbf16, #tpu.memory_space<vmem>>, vector<1x8x8x128xbf16>
    %1 = vector.shape_cast %0 : vector<1x8x8x128xbf16> to vector<8x8x128xbf16>
    %2 = arith.extf %1 : vector<8x8x128xbf16> to vector<8x8x128xf32>
    %3 = vector.shape_cast %2 : vector<8x8x128xf32> to vector<64x128xf32>
    %4 = arith.truncf %3 : vector<64x128xf32> to vector<64x128xbf16>
    %c0_3 = arith.constant 0 : index
    %c0_4 = arith.constant 0 : index
    %c0_5 = arith.constant 0 : index
    %5 = vector.load %arg2[%c0_3, %c0_4, %c0_5] : memref<1x128x128xbf16, #tpu.memory_space<vmem>>, vector<1x128x128xbf16>
    %6 = vector.shape_cast %5 : vector<1x128x128xbf16> to vector<128x128xbf16>
    %cst = arith.constant dense<0.000000e+00> : vector<64x128xf32>
    %7 = tpu.matmul %4, %6, %cst {dimension_numbers = #tpu.dot_dimension_numbers<[1], [0], [0], [1], [0, 0, 1, 1], [], []>} : vector<64x128xbf16>, vector<128x128xbf16>, vector<64x128xf32> -> vector<64x128xf32>
    %c0_6 = arith.constant 0 : index
    %c0_7 = arith.constant 0 : index
    %8 = vector.load %arg3[%c0_6, %c0_7] : memref<1x128xf32, #tpu.memory_space<vmem>>, vector<1x128xf32>
    %9 = vector.broadcast %8 : vector<1x128xf32> to vector<64x128xf32>
    %10 = arith.addf %7, %9 : vector<64x128xf32>
    %cst_8 = arith.constant 0.000000e+00 : f32
    %11 = vector.broadcast %cst_8 : f32 to vector<64x128xf32>
    %12 = arith.maximumf %10, %11 : vector<64x128xf32>
    %13 = arith.truncf %12 : vector<64x128xf32> to vector<64x128xbf16>
    %c0_9 = arith.constant 0 : index
    %c0_10 = arith.constant 0 : index
    %c0_11 = arith.constant 0 : index
    %14 = vector.load %arg4[%c0_9, %c0_10, %c0_11] : memref<1x64x128xbf16, #tpu.memory_space<vmem>>, vector<1x64x128xbf16>
    %15 = vector.shape_cast %14 : vector<1x64x128xbf16> to vector<64x128xbf16>
    %16 = vector.shape_cast %13 : vector<64x128xbf16> to vector<1x64x128xbf16>
    tpu.vector_store %arg4[%c0_9, %c0_10, %c0_11], %16 {strides = array<i32>} : memref<1x64x128xbf16, #tpu.memory_space<vmem>>, vector<1x64x128xbf16>,
    return
  }
  func.func @transform_0(%arg0: i32) -> (i32, i32, i32, i32) {
    %c0_i32 = arith.constant 0 : i32
    %c0_i32_0 = arith.constant 0 : i32
    %c0_i32_1 = arith.constant 0 : i32
    %c0_i32_2 = arith.constant 0 : i32
    return %arg0, %c0_i32, %c0_i32_0, %c0_i32_1 : i32, i32, i32, i32
  }
  func.func @transform_1(%arg0: i32) -> (i32, i32, i32) {
    %c0_i32 = arith.constant 0 : i32
    %c0_i32_0 = arith.constant 0 : i32
    %c0_i32_1 = arith.constant 0 : i32
    %c0_i32_2 = arith.constant 0 : i32
    return %c0_i32, %c0_i32_0, %c0_i32_1 : i32, i32, i32
  }
  func.func @transform_2(%arg0: i32) -> (i32, i32) {
    %c0_i32 = arith.constant 0 : i32
    %c0_i32_0 = arith.constant 0 : i32
    %c0_i32_1 = arith.constant 0 : i32
    return %c0_i32, %c0_i32_0 : i32, i32
  }
  func.func @transform_3(%arg0: i32) -> (i32, i32, i32) {
    %c0_i32 = arith.constant 0 : i32
    %c0_i32_0 = arith.constant 0 : i32
    %c0_i32_1 = arith.constant 0 : i32
    return %arg0, %c0_i32, %c0_i32_0 : i32, i32, i32
  }
}

module attributes {stable_mosaic.version = 11 : i64} {
  func.func @_conv_kernel(%arg0: i32, %arg1: memref<1x8x8x128xbf16, #tpu.memory_space<vmem>>, %arg2: memref<1x128x128xbf16, #tpu.memory_space<vmem>>, %arg3: memref<1x128xf32, #tpu.memory_space<vmem>>, %arg4: memref<1x64x128xbf16, #tpu.memory_space<vmem>>, %arg5: memref<1x64x128xbf16, #tpu.memory_space<vmem>>) attributes {dimension_semantics = [#tpu.dimension_semantics<parallel>], iteration_bounds = array<i64: 2>, scalar_prefetch = 0 : i64, scratch_operands = 0 : i64, tpu.core_type = #tpu.core_type<tc>, window_params = [{transform_indices = @transform_0, window_bounds = array<i64: 1, 8, 8, 128>}, {pipeline_mode = #tpu.pipeline_mode<synchronous>, transform_indices = @transform_1, window_bounds = array<i64: 1, 128, 128>}, {pipeline_mode = #tpu.pipeline_mode<synchronous>, transform_indices = @transform_2, window_bounds = array<i64: 1, 128>}, {transform_indices = @transform_3, window_bounds = array<i64: 1, 64, 128>}, {transform_indices = @transform_4, window_bounds = array<i64: 1, 64, 128>}]} {
    %c0 = arith.constant 0 : index
    %c0_0 = arith.constant 0 : index
    %c0_1 = arith.constant 0 : index
    %c0_2 = arith.constant 0 : index
    %0 = vector.load %arg1[%c0, %c0_0, %c0_1, %c0_2] : memref<1x8x8x128xbf16, #tpu.memory_space<vmem>>, vector<1x8x8x128xbf16>
    %1 = vector.shape_cast %0 : vector<1x8x8x128xbf16> to vector<8x8x128xbf16>
    %2 = arith.extf %1 : vector<8x8x128xbf16> to vector<8x8x128xf32>
    %3 = vector.shape_cast %2 : vector<8x8x128xf32> to vector<64x128xf32>
    %4 = arith.truncf %3 : vector<64x128xf32> to vector<64x128xbf16>
    %c0_3 = arith.constant 0 : index
    %c0_4 = arith.constant 0 : index
    %c0_5 = arith.constant 0 : index
    %5 = vector.load %arg2[%c0_3, %c0_4, %c0_5] : memref<1x128x128xbf16, #tpu.memory_space<vmem>>, vector<1x128x128xbf16>
    %6 = vector.shape_cast %5 : vector<1x128x128xbf16> to vector<128x128xbf16>
    %cst = arith.constant dense<0.000000e+00> : vector<64x128xf32>
    %7 = tpu.matmul %4, %6, %cst {dimension_numbers = #tpu.dot_dimension_numbers<[1], [0], [0], [1], [0, 0, 1, 1], [], []>} : vector<64x128xbf16>, vector<128x128xbf16>, vector<64x128xf32> -> vector<64x128xf32>
    %c0_6 = arith.constant 0 : index
    %c0_7 = arith.constant 0 : index
    %8 = vector.load %arg3[%c0_6, %c0_7] : memref<1x128xf32, #tpu.memory_space<vmem>>, vector<1x128xf32>
    %9 = vector.broadcast %8 : vector<1x128xf32> to vector<64x128xf32>
    %10 = arith.addf %7, %9 : vector<64x128xf32>
    %c0_8 = arith.constant 0 : index
    %c0_9 = arith.constant 0 : index
    %c0_10 = arith.constant 0 : index
    %11 = vector.load %arg4[%c0_8, %c0_9, %c0_10] : memref<1x64x128xbf16, #tpu.memory_space<vmem>>, vector<1x64x128xbf16>
    %12 = vector.shape_cast %11 : vector<1x64x128xbf16> to vector<64x128xbf16>
    %13 = arith.extf %12 : vector<64x128xbf16> to vector<64x128xf32>
    %14 = arith.addf %10, %13 : vector<64x128xf32>
    %cst_11 = arith.constant 0.000000e+00 : f32
    %15 = vector.broadcast %cst_11 : f32 to vector<64x128xf32>
    %16 = arith.maximumf %14, %15 : vector<64x128xf32>
    %17 = arith.truncf %16 : vector<64x128xf32> to vector<64x128xbf16>
    %c0_12 = arith.constant 0 : index
    %c0_13 = arith.constant 0 : index
    %c0_14 = arith.constant 0 : index
    %18 = vector.load %arg5[%c0_12, %c0_13, %c0_14] : memref<1x64x128xbf16, #tpu.memory_space<vmem>>, vector<1x64x128xbf16>
    %19 = vector.shape_cast %18 : vector<1x64x128xbf16> to vector<64x128xbf16>
    %20 = vector.shape_cast %17 : vector<64x128xbf16> to vector<1x64x128xbf16>
    tpu.vector_store %arg5[%c0_12, %c0_13, %c0_14], %20 {strides = array<i32>} : memref<1x64x128xbf16, #tpu.memory_space<vmem>>, vector<1x64x128xbf16>,
    return
  }
  func.func @transform_0(%arg0: i32) -> (i32, i32, i32, i32) {
    %c0_i32 = arith.constant 0 : i32
    %c0_i32_0 = arith.constant 0 : i32
    %c0_i32_1 = arith.constant 0 : i32
    %c0_i32_2 = arith.constant 0 : i32
    return %arg0, %c0_i32, %c0_i32_0, %c0_i32_1 : i32, i32, i32, i32
  }
  func.func @transform_1(%arg0: i32) -> (i32, i32, i32) {
    %c0_i32 = arith.constant 0 : i32
    %c0_i32_0 = arith.constant 0 : i32
    %c0_i32_1 = arith.constant 0 : i32
    %c0_i32_2 = arith.constant 0 : i32
    return %c0_i32, %c0_i32_0, %c0_i32_1 : i32, i32, i32
  }
  func.func @transform_2(%arg0: i32) -> (i32, i32) {
    %c0_i32 = arith.constant 0 : i32
    %c0_i32_0 = arith.constant 0 : i32
    %c0_i32_1 = arith.constant 0 : i32
    return %c0_i32, %c0_i32_0 : i32, i32
  }
  func.func @transform_3(%arg0: i32) -> (i32, i32, i32) {
    %c0_i32 = arith.constant 0 : i32
    %c0_i32_0 = arith.constant 0 : i32
    %c0_i32_1 = arith.constant 0 : i32
    return %arg0, %c0_i32, %c0_i32_0 : i32, i32, i32
  }
  func.func @transform_4(%arg0: i32) -> (i32, i32, i32) {
    %c0_i32 = arith.constant 0 : i32
    %c0_i32_0 = arith.constant 0 : i32
    %c0_i32_1 = arith.constant 0 : i32
    return %arg0, %c0_i32, %c0_i32_0 : i32, i32, i32
  }
}

module attributes {stable_mosaic.version = 11 : i64} {
  func.func @_conv_kernel(%arg0: i32, %arg1: memref<1x10x10x128xbf16, #tpu.memory_space<vmem>>, %arg2: memref<9x128x128xbf16, #tpu.memory_space<vmem>>, %arg3: memref<1x128xf32, #tpu.memory_space<vmem>>, %arg4: memref<1x64x128xbf16, #tpu.memory_space<vmem>>) attributes {dimension_semantics = [#tpu.dimension_semantics<parallel>], iteration_bounds = array<i64: 2>, scalar_prefetch = 0 : i64, scratch_operands = 0 : i64, tpu.core_type = #tpu.core_type<tc>, window_params = [{transform_indices = @transform_0, window_bounds = array<i64: 1, 10, 10, 128>}, {pipeline_mode = #tpu.pipeline_mode<synchronous>, transform_indices = @transform_1, window_bounds = array<i64: 9, 128, 128>}, {pipeline_mode = #tpu.pipeline_mode<synchronous>, transform_indices = @transform_2, window_bounds = array<i64: 1, 128>}, {transform_indices = @transform_3, window_bounds = array<i64: 1, 64, 128>}]} {
    %c0 = arith.constant 0 : index
    %c0_0 = arith.constant 0 : index
    %c0_1 = arith.constant 0 : index
    %c0_2 = arith.constant 0 : index
    %0 = vector.load %arg1[%c0, %c0_0, %c0_1, %c0_2] : memref<1x10x10x128xbf16, #tpu.memory_space<vmem>>, vector<1x10x10x128xbf16>
    %1 = vector.shape_cast %0 : vector<1x10x10x128xbf16> to vector<10x10x128xbf16>
    %2 = arith.extf %1 : vector<10x10x128xbf16> to vector<10x10x128xf32>
    %3 = vector.extract_strided_slice %2 {offsets = [0, 0, 0], sizes = [8, 8, 128], strides = [1, 1, 1]} : vector<10x10x128xf32> to vector<8x8x128xf32>
    %4 = vector.shape_cast %3 : vector<8x8x128xf32> to vector<64x128xf32>
    %5 = arith.truncf %4 : vector<64x128xf32> to vector<64x128xbf16>
    %c0_3 = arith.constant 0 : index
    %c0_4 = arith.constant 0 : index
    %c0_5 = arith.constant 0 : index
    %6 = vector.load %arg2[%c0_3, %c0_4, %c0_5] : memref<9x128x128xbf16, #tpu.memory_space<vmem>>, vector<1x128x128xbf16>
    %7 = vector.shape_cast %6 : vector<1x128x128xbf16> to vector<128x128xbf16>
    %cst = arith.constant dense<0.000000e+00> : vector<64x128xf32>
    %8 = tpu.matmul %5, %7, %cst {dimension_numbers = #tpu.dot_dimension_numbers<[1], [0], [0], [1], [0, 0, 1, 1], [], []>} : vector<64x128xbf16>, vector<128x128xbf16>, vector<64x128xf32> -> vector<64x128xf32>
    %9 = vector.extract_strided_slice %2 {offsets = [0, 1, 0], sizes = [8, 8, 128], strides = [1, 1, 1]} : vector<10x10x128xf32> to vector<8x8x128xf32>
    %10 = vector.shape_cast %9 : vector<8x8x128xf32> to vector<64x128xf32>
    %11 = arith.truncf %10 : vector<64x128xf32> to vector<64x128xbf16>
    %c1 = arith.constant 1 : index
    %c0_6 = arith.constant 0 : index
    %c0_7 = arith.constant 0 : index
    %12 = vector.load %arg2[%c1, %c0_6, %c0_7] : memref<9x128x128xbf16, #tpu.memory_space<vmem>>, vector<1x128x128xbf16>
    %13 = vector.shape_cast %12 : vector<1x128x128xbf16> to vector<128x128xbf16>
    %cst_8 = arith.constant dense<0.000000e+00> : vector<64x128xf32>
    %14 = tpu.matmul %11, %13, %cst_8 {dimension_numbers = #tpu.dot_dimension_numbers<[1], [0], [0], [1], [0, 0, 1, 1], [], []>} : vector<64x128xbf16>, vector<128x128xbf16>, vector<64x128xf32> -> vector<64x128xf32>
    %15 = arith.addf %8, %14 : vector<64x128xf32>
    %16 = vector.extract_strided_slice %2 {offsets = [0, 2, 0], sizes = [8, 8, 128], strides = [1, 1, 1]} : vector<10x10x128xf32> to vector<8x8x128xf32>
    %17 = vector.shape_cast %16 : vector<8x8x128xf32> to vector<64x128xf32>
    %18 = arith.truncf %17 : vector<64x128xf32> to vector<64x128xbf16>
    %c2 = arith.constant 2 : index
    %c0_9 = arith.constant 0 : index
    %c0_10 = arith.constant 0 : index
    %19 = vector.load %arg2[%c2, %c0_9, %c0_10] : memref<9x128x128xbf16, #tpu.memory_space<vmem>>, vector<1x128x128xbf16>
    %20 = vector.shape_cast %19 : vector<1x128x128xbf16> to vector<128x128xbf16>
    %cst_11 = arith.constant dense<0.000000e+00> : vector<64x128xf32>
    %21 = tpu.matmul %18, %20, %cst_11 {dimension_numbers = #tpu.dot_dimension_numbers<[1], [0], [0], [1], [0, 0, 1, 1], [], []>} : vector<64x128xbf16>, vector<128x128xbf16>, vector<64x128xf32> -> vector<64x128xf32>
    %22 = arith.addf %15, %21 : vector<64x128xf32>
    %23 = vector.extract_strided_slice %2 {offsets = [1, 0, 0], sizes = [8, 8, 128], strides = [1, 1, 1]} : vector<10x10x128xf32> to vector<8x8x128xf32>
    %24 = vector.shape_cast %23 : vector<8x8x128xf32> to vector<64x128xf32>
    %25 = arith.truncf %24 : vector<64x128xf32> to vector<64x128xbf16>
    %c3 = arith.constant 3 : index
    %c0_12 = arith.constant 0 : index
    %c0_13 = arith.constant 0 : index
    %26 = vector.load %arg2[%c3, %c0_12, %c0_13] : memref<9x128x128xbf16, #tpu.memory_space<vmem>>, vector<1x128x128xbf16>
    %27 = vector.shape_cast %26 : vector<1x128x128xbf16> to vector<128x128xbf16>
    %cst_14 = arith.constant dense<0.000000e+00> : vector<64x128xf32>
    %28 = tpu.matmul %25, %27, %cst_14 {dimension_numbers = #tpu.dot_dimension_numbers<[1], [0], [0], [1], [0, 0, 1, 1], [], []>} : vector<64x128xbf16>, vector<128x128xbf16>, vector<64x128xf32> -> vector<64x128xf32>
    %29 = arith.addf %22, %28 : vector<64x128xf32>
    %30 = vector.extract_strided_slice %2 {offsets = [1, 1, 0], sizes = [8, 8, 128], strides = [1, 1, 1]} : vector<10x10x128xf32> to vector<8x8x128xf32>
    %31 = vector.shape_cast %30 : vector<8x8x128xf32> to vector<64x128xf32>
    %32 = arith.truncf %31 : vector<64x128xf32> to vector<64x128xbf16>
    %c4 = arith.constant 4 : index
    %c0_15 = arith.constant 0 : index
    %c0_16 = arith.constant 0 : index
    %33 = vector.load %arg2[%c4, %c0_15, %c0_16] : memref<9x128x128xbf16, #tpu.memory_space<vmem>>, vector<1x128x128xbf16>
    %34 = vector.shape_cast %33 : vector<1x128x128xbf16> to vector<128x128xbf16>
    %cst_17 = arith.constant dense<0.000000e+00> : vector<64x128xf32>
    %35 = tpu.matmul %32, %34, %cst_17 {dimension_numbers = #tpu.dot_dimension_numbers<[1], [0], [0], [1], [0, 0, 1, 1], [], []>} : vector<64x128xbf16>, vector<128x128xbf16>, vector<64x128xf32> -> vector<64x128xf32>
    %36 = arith.addf %29, %35 : vector<64x128xf32>
    %37 = vector.extract_strided_slice %2 {offsets = [1, 2, 0], sizes = [8, 8, 128], strides = [1, 1, 1]} : vector<10x10x128xf32> to vector<8x8x128xf32>
    %38 = vector.shape_cast %37 : vector<8x8x128xf32> to vector<64x128xf32>
    %39 = arith.truncf %38 : vector<64x128xf32> to vector<64x128xbf16>
    %c5 = arith.constant 5 : index
    %c0_18 = arith.constant 0 : index
    %c0_19 = arith.constant 0 : index
    %40 = vector.load %arg2[%c5, %c0_18, %c0_19] : memref<9x128x128xbf16, #tpu.memory_space<vmem>>, vector<1x128x128xbf16>
    %41 = vector.shape_cast %40 : vector<1x128x128xbf16> to vector<128x128xbf16>
    %cst_20 = arith.constant dense<0.000000e+00> : vector<64x128xf32>
    %42 = tpu.matmul %39, %41, %cst_20 {dimension_numbers = #tpu.dot_dimension_numbers<[1], [0], [0], [1], [0, 0, 1, 1], [], []>} : vector<64x128xbf16>, vector<128x128xbf16>, vector<64x128xf32> -> vector<64x128xf32>
    %43 = arith.addf %36, %42 : vector<64x128xf32>
    %44 = vector.extract_strided_slice %2 {offsets = [2, 0, 0], sizes = [8, 8, 128], strides = [1, 1, 1]} : vector<10x10x128xf32> to vector<8x8x128xf32>
    %45 = vector.shape_cast %44 : vector<8x8x128xf32> to vector<64x128xf32>
    %46 = arith.truncf %45 : vector<64x128xf32> to vector<64x128xbf16>
    %c6 = arith.constant 6 : index
    %c0_21 = arith.constant 0 : index
    %c0_22 = arith.constant 0 : index
    %47 = vector.load %arg2[%c6, %c0_21, %c0_22] : memref<9x128x128xbf16, #tpu.memory_space<vmem>>, vector<1x128x128xbf16>
    %48 = vector.shape_cast %47 : vector<1x128x128xbf16> to vector<128x128xbf16>
    %cst_23 = arith.constant dense<0.000000e+00> : vector<64x128xf32>
    %49 = tpu.matmul %46, %48, %cst_23 {dimension_numbers = #tpu.dot_dimension_numbers<[1], [0], [0], [1], [0, 0, 1, 1], [], []>} : vector<64x128xbf16>, vector<128x128xbf16>, vector<64x128xf32> -> vector<64x128xf32>
    %50 = arith.addf %43, %49 : vector<64x128xf32>
    %51 = vector.extract_strided_slice %2 {offsets = [2, 1, 0], sizes = [8, 8, 128], strides = [1, 1, 1]} : vector<10x10x128xf32> to vector<8x8x128xf32>
    %52 = vector.shape_cast %51 : vector<8x8x128xf32> to vector<64x128xf32>
    %53 = arith.truncf %52 : vector<64x128xf32> to vector<64x128xbf16>
    %c7 = arith.constant 7 : index
    %c0_24 = arith.constant 0 : index
    %c0_25 = arith.constant 0 : index
    %54 = vector.load %arg2[%c7, %c0_24, %c0_25] : memref<9x128x128xbf16, #tpu.memory_space<vmem>>, vector<1x128x128xbf16>
    %55 = vector.shape_cast %54 : vector<1x128x128xbf16> to vector<128x128xbf16>
    %cst_26 = arith.constant dense<0.000000e+00> : vector<64x128xf32>
    %56 = tpu.matmul %53, %55, %cst_26 {dimension_numbers = #tpu.dot_dimension_numbers<[1], [0], [0], [1], [0, 0, 1, 1], [], []>} : vector<64x128xbf16>, vector<128x128xbf16>, vector<64x128xf32> -> vector<64x128xf32>
    %57 = arith.addf %50, %56 : vector<64x128xf32>
    %58 = vector.extract_strided_slice %2 {offsets = [2, 2, 0], sizes = [8, 8, 128], strides = [1, 1, 1]} : vector<10x10x128xf32> to vector<8x8x128xf32>
    %59 = vector.shape_cast %58 : vector<8x8x128xf32> to vector<64x128xf32>
    %60 = arith.truncf %59 : vector<64x128xf32> to vector<64x128xbf16>
    %c8 = arith.constant 8 : index
    %c0_27 = arith.constant 0 : index
    %c0_28 = arith.constant 0 : index
    %61 = vector.load %arg2[%c8, %c0_27, %c0_28] : memref<9x128x128xbf16, #tpu.memory_space<vmem>>, vector<1x128x128xbf16>
    %62 = vector.shape_cast %61 : vector<1x128x128xbf16> to vector<128x128xbf16>
    %cst_29 = arith.constant dense<0.000000e+00> : vector<64x128xf32>
    %63 = tpu.matmul %60, %62, %cst_29 {dimension_numbers = #tpu.dot_dimension_numbers<[1], [0], [0], [1], [0, 0, 1, 1], [], []>} : vector<64x128xbf16>, vector<128x128xbf16>, vector<64x128xf32> -> vector<64x128xf32>
    %64 = arith.addf %57, %63 : vector<64x128xf32>
    %c0_30 = arith.constant 0 : index
    %c0_31 = arith.constant 0 : index
    %65 = vector.load %arg3[%c0_30, %c0_31] : memref<1x128xf32, #tpu.memory_space<vmem>>, vector<1x128xf32>
    %66 = vector.broadcast %65 : vector<1x128xf32> to vector<64x128xf32>
    %67 = arith.addf %64, %66 : vector<64x128xf32>
    %cst_32 = arith.constant 0.000000e+00 : f32
    %68 = vector.broadcast %cst_32 : f32 to vector<64x128xf32>
    %69 = arith.maximumf %67, %68 : vector<64x128xf32>
    %70 = arith.truncf %69 : vector<64x128xf32> to vector<64x128xbf16>
    %c0_33 = arith.constant 0 : index
    %c0_34 = arith.constant 0 : index
    %c0_35 = arith.constant 0 : index
    %71 = vector.load %arg4[%c0_33, %c0_34, %c0_35] : memref<1x64x128xbf16, #tpu.memory_space<vmem>>, vector<1x64x128xbf16>
    %72 = vector.shape_cast %71 : vector<1x64x128xbf16> to vector<64x128xbf16>
    %73 = vector.shape_cast %70 : vector<64x128xbf16> to vector<1x64x128xbf16>
    tpu.vector_store %arg4[%c0_33, %c0_34, %c0_35], %73 {strides = array<i32>} : memref<1x64x128xbf16, #tpu.memory_space<vmem>>, vector<1x64x128xbf16>,
    return
  }
  func.func @transform_0(%arg0: i32) -> (i32, i32, i32, i32) {
    %c0_i32 = arith.constant 0 : i32
    %c0_i32_0 = arith.constant 0 : i32
    %c0_i32_1 = arith.constant 0 : i32
    %c0_i32_2 = arith.constant 0 : i32
    return %arg0, %c0_i32, %c0_i32_0, %c0_i32_1 : i32, i32, i32, i32
  }
  func.func @transform_1(%arg0: i32) -> (i32, i32, i32) {
    %c0_i32 = arith.constant 0 : i32
    %c0_i32_0 = arith.constant 0 : i32
    %c0_i32_1 = arith.constant 0 : i32
    %c0_i32_2 = arith.constant 0 : i32
    return %c0_i32, %c0_i32_0, %c0_i32_1 : i32, i32, i32
  }
  func.func @transform_2(%arg0: i32) -> (i32, i32) {
    %c0_i32 = arith.constant 0 : i32
    %c0_i32_0 = arith.constant 0 : i32
    %c0_i32_1 = arith.constant 0 : i32
    return %c0_i32, %c0_i32_0 : i32, i32
  }
  func.func @transform_3(%arg0: i32) -> (i32, i32, i32) {
    %c0_i32 = arith.constant 0 : i32
    %c0_i32_0 = arith.constant 0 : i32
    %c0_i32_1 = arith.constant 0 : i32
    return %arg0, %c0_i32, %c0_i32_0 : i32, i32, i32
  }
}

module attributes {stable_mosaic.version = 11 : i64} {
  func.func @_gap_embed_kernel(%arg0: i32, %arg1: memref<1x64x128xbf16, #tpu.memory_space<vmem>>, %arg2: memref<128x256xbf16, #tpu.memory_space<vmem>>, %arg3: memref<1x256xf32, #tpu.memory_space<vmem>>, %arg4: memref<1x1x256xf32, #tpu.memory_space<vmem>>) attributes {dimension_semantics = [#tpu.dimension_semantics<parallel>], iteration_bounds = array<i64: 2>, scalar_prefetch = 0 : i64, scratch_operands = 0 : i64, tpu.core_type = #tpu.core_type<tc>, window_params = [{transform_indices = @transform_0, window_bounds = array<i64: 1, 64, 128>}, {pipeline_mode = #tpu.pipeline_mode<synchronous>, transform_indices = @transform_1, window_bounds = array<i64: 128, 256>}, {pipeline_mode = #tpu.pipeline_mode<synchronous>, transform_indices = @transform_2, window_bounds = array<i64: 1, 256>}, {transform_indices = @transform_3, window_bounds = array<i64: 1, 1, 256>}]} {
    %c0 = arith.constant 0 : index
    %c0_0 = arith.constant 0 : index
    %c0_1 = arith.constant 0 : index
    %0 = vector.load %arg1[%c0, %c0_0, %c0_1] : memref<1x64x128xbf16, #tpu.memory_space<vmem>>, vector<1x64x128xbf16>
    %1 = vector.shape_cast %0 : vector<1x64x128xbf16> to vector<64x128xbf16>
    %2 = arith.extf %1 : vector<64x128xbf16> to vector<64x128xf32>
    %cst = arith.constant dense<0.000000e+00> : vector<128xf32>
    %3 = vector.multi_reduction <add>, %2, %cst [0] : vector<64x128xf32> to vector<128xf32>
    %4 = vector.shape_cast %3 : vector<128xf32> to vector<1x128xf32>
    %cst_2 = arith.constant 6.400000e+01 : f32
    %5 = vector.broadcast %cst_2 : f32 to vector<1x128xf32>
    %6 = arith.divf %4, %5 : vector<1x128xf32>
    %7 = arith.truncf %6 : vector<1x128xf32> to vector<1x128xbf16>
    %c0_3 = arith.constant 0 : index
    %c0_4 = arith.constant 0 : index
    %8 = vector.load %arg2[%c0_3, %c0_4] : memref<128x256xbf16, #tpu.memory_space<vmem>>, vector<128x256xbf16>
    %cst_5 = arith.constant dense<0.000000e+00> : vector<1x256xf32>
    %9 = tpu.matmul %7, %8, %cst_5 {dimension_numbers = #tpu.dot_dimension_numbers<[1], [0], [0], [1], [0, 0, 1, 1], [], []>} : vector<1x128xbf16>, vector<128x256xbf16>, vector<1x256xf32> -> vector<1x256xf32>
    %c0_6 = arith.constant 0 : index
    %c0_7 = arith.constant 0 : index
    %10 = vector.load %arg3[%c0_6, %c0_7] : memref<1x256xf32, #tpu.memory_space<vmem>>, vector<1x256xf32>
    %11 = arith.addf %9, %10 : vector<1x256xf32>
    %c0_8 = arith.constant 0 : index
    %c0_9 = arith.constant 0 : index
    %c0_10 = arith.constant 0 : index
    %12 = vector.load %arg4[%c0_8, %c0_9, %c0_10] : memref<1x1x256xf32, #tpu.memory_space<vmem>>, vector<1x1x256xf32>
    %13 = vector.shape_cast %12 : vector<1x1x256xf32> to vector<1x256xf32>
    %14 = vector.shape_cast %11 : vector<1x256xf32> to vector<1x1x256xf32>
    tpu.vector_store %arg4[%c0_8, %c0_9, %c0_10], %14 {strides = array<i32>} : memref<1x1x256xf32, #tpu.memory_space<vmem>>, vector<1x1x256xf32>,
    return
  }
  func.func @transform_0(%arg0: i32) -> (i32, i32, i32) {
    %c0_i32 = arith.constant 0 : i32
    %c0_i32_0 = arith.constant 0 : i32
    %c0_i32_1 = arith.constant 0 : i32
    return %arg0, %c0_i32, %c0_i32_0 : i32, i32, i32
  }
  func.func @transform_1(%arg0: i32) -> (i32, i32) {
    %c0_i32 = arith.constant 0 : i32
    %c0_i32_0 = arith.constant 0 : i32
    %c0_i32_1 = arith.constant 0 : i32
    return %c0_i32, %c0_i32_0 : i32, i32
  }
  func.func @transform_2(%arg0: i32) -> (i32, i32) {
    %c0_i32 = arith.constant 0 : i32
    %c0_i32_0 = arith.constant 0 : i32
    %c0_i32_1 = arith.constant 0 : i32
    return %c0_i32, %c0_i32_0 : i32, i32
  }
  func.func @transform_3(%arg0: i32) -> (i32, i32, i32) {
    %c0_i32 = arith.constant 0 : i32
    %c0_i32_0 = arith.constant 0 : i32
    %c0_i32_1 = arith.constant 0 : i32
    return %arg0, %c0_i32, %c0_i32_0 : i32, i32, i32
  }
}

</mosaic_0001>

<llo_original>
// kernel: encoder_cnn_forward.7
$region0: #{encoder_cnn_forward.7}
  #allocation0 [shape = 'u32[]', space=smem, size = 0x4, offset = 0x4, fixed_abs, tag = 'smem constant byte address 0x4 - core index']
  #allocation1 [shape = 'u32[144,128]{1,0:T(1,128)}', space=vmem, size = 0x12000, scoped, tag = 'internal scratch']
  %s0 = inlined_call_operand.vmem [shape: bf16[2,16,8,256], index: 0, kind: input, shape index: {}]
  %s1 = inlined_call_operand.vmem [shape: bf16[2,8,8,128], index: 1, kind: output, shape index: {}]
  %s2 = sld [smem:[#allocation0]]
  $region37: #{encoder_cnn_forward.7} parent=0
    _
  %s4 = ssub.s32 1, %s2
  %s5 = scalar_select 0, %s4, %s2
  loop: start=0, step=1, limit=4
  $region2: #{encoder_cnn_forward.7} parent=0 // loop_pre_header
    _
  $region3: #{encoder_cnn_forward.7} parent=0 // loop_header
    %s7 = sphi 0, %s11
    %p8 = scmp.ge.s32.totalorder %s7, 4
    %s17 = sphi 0, %s19
    %s20 = sphi 0, %s17
    %s21 = sphi 0, %s20
    %s37 = sphi 0, %s21
    %s43 = sphi 0, %s45
    %s46 = sphi 0, %s43
    %s47 = sphi 0, %s46
    %s63 = sphi 0, %s47
  $region4: #{encoder_cnn_forward.7} parent=0 // loop_header_branch
    %10 = sbr.rel (%p8) target = $region8
  $region5: #{encoder_cnn_forward.7} parent=0 // loop_body
    %s12 = ssub.s32 %s7, 1
    %s13 = ssub.s32 %s7, 2
    %s14 = sadd.s32 %s7, 1
    %s15 = ssub.s32 %s7, %s14
    %p16 = scmp.eq.s32.totalorder %s15, 0
    %s18 = sadd.s32 %s17, 1
    %s19 = scalar_select %p16, %s17, %s18
    %p22 = pneg %p16
    %p23 = scmp.eq.s32.totalorder %s7, 1
    %p24 = por %p22, %p23
    %p25 = scmp.ne.s32.totalorder %s17, %s20
    %p26 = scmp.eq.s32.totalorder %s7, 0
    %p27 = por %p25, %p26
    %p28 = scmp.ne.s32.totalorder %s17, %s20
    %p29 = scmp.eq.s32.totalorder %s12, 1
    %p30 = por %p28, %p29
    %p31 = scmp.ne.s32.totalorder %s20, %s21
    %p32 = scmp.eq.s32.totalorder %s12, 0
    %p33 = por %p31, %p32
    %p34 = scmp.ne.s32.totalorder %s20, %s21
    %p35 = scmp.eq.s32.totalorder %s13, 1
    %p36 = por %p34, %p35
    %p38 = scmp.ne.s32.totalorder %s21, %s37
    %p39 = scmp.eq.s32.totalorder %s13, 0
    %p40 = por %p38, %p39
    %s41 = ssub.s32 %s7, %s14
    %p42 = scmp.eq.s32.totalorder %s41, 0
    %s44 = sadd.s32 %s43, 1
    %s45 = scalar_select %p42, %s43, %s44
    %p48 = pneg %p42
    %p49 = scmp.eq.s32.totalorder %s7, 1
    %p50 = por %p48, %p49
    %p51 = scmp.ne.s32.totalorder %s43, %s46
    %p52 = scmp.eq.s32.totalorder %s7, 0
    %p53 = por %p51, %p52
    %p54 = scmp.ne.s32.totalorder %s43, %s46
    %p55 = scmp.eq.s32.totalorder %s12, 1
    %p56 = por %p54, %p55
    %p57 = scmp.ne.s32.totalorder %s46, %s47
    %p58 = scmp.eq.s32.totalorder %s12, 0
    %p59 = por %p57, %p58
    %p60 = scmp.ne.s32.totalorder %s46, %s47
    %p61 = scmp.eq.s32.totalorder %s13, 1
    %p62 = por %p60, %p61
    %p64 = scmp.ne.s32.totalorder %s47, %s63
    %p65 = scmp.eq.s32.totalorder %s13, 0
    %p66 = por %p64, %p65
    %p67 = scmp.le.s32.totalorder 1, %s7
    %p68 = scmp.lt.s32.totalorder %s7, 3
    %p69 = pnand %p67, %p68
    %p70 = pneg %p69
    // Predicated region
    $region9: #{encoder_cnn_forward.7} parent=5 // pred_check
      _
    $region10: #{encoder_cnn_forward.7} parent=5 // pred_check_branch
      %72 = sbr.rel (%p69) target = $region12
    $region11: #{encoder_cnn_forward.7} parent=5 // pred_region
      %s73 = ssub.s32 %s7, 1
    $region12: #{encoder_cnn_forward.7} parent=5 // pred_fallthru
      _
    %p74 = scmp.lt.s32.totalorder %s7, 2
    // Predicated region
    $region13: #{encoder_cnn_forward.7} parent=5 // pred_check
      %p75 = pneg %p74
    $region14: #{encoder_cnn_forward.7} parent=5 // pred_check_branch
      %77 = sbr.rel (%p75) target = $region16
    $region15: #{encoder_cnn_forward.7} parent=5 // pred_region
      // Predicated region
      $region17: #{encoder_cnn_forward.7} parent=15 // pred_check
        %p78 = pneg %p27
      $region18: #{encoder_cnn_forward.7} parent=15 // pred_check_branch
        %80 = sbr.rel (%p78) target = $region20
      $region19: #{encoder_cnn_forward.7} parent=15 // pred_region
        %p81 = scmp.lt.s32.totalorder %s7, 1
        %s82 = scalar_select %p81, %s7, 1
        %s83 = smul.addr %s82, 32
        %s84 = smul.addr %s83, 4
        %s85 = scalar_lea.vmem %s0, %s84
      $region20: #{encoder_cnn_forward.7} parent=15 // pred_fallthru
        _
    $region16: #{encoder_cnn_forward.7} parent=5 // pred_fallthru
      _
    %p86 = scmp.le.s32.totalorder 1, %s7
    %p87 = scmp.lt.s32.totalorder %s7, 3
    %p88 = pnand %p86, %p87
    %p89 = pneg %p88
    // Predicated region
    $region21: #{encoder_cnn_forward.7} parent=5 // pred_check
      _
    $region22: #{encoder_cnn_forward.7} parent=5 // pred_check_branch
      %91 = sbr.rel (%p88) target = $region24
    $region23: #{encoder_cnn_forward.7} parent=5 // pred_region
      %s92 = ssub.s32 %s7, 1
      %p93 = scmp.lt.s32.totalorder %s12, 1
      %s94 = scalar_select %p93, %s12, 1
      %s95 = smul.addr %s94, 32
      %s96 = smul.addr %s95, 4
      %s97 = scalar_lea.vmem %s0, %s96
      %p98 = pneg %p33
      %p99 = pneg %p30
      %p100 = pneg %p59
      %p101 = pneg %p56
      %p102 = scmp.lt.s32.totalorder %s12, 1
      %s103 = scalar_select %p102, %s12, 1
      %s104 = smul.addr %s103, 8
      %s105 = smul.addr %s104, 4
      %s106 = scalar_lea.vmem %s1, %s105
      %p107 = scmp.lt.s32.totalorder %s12, 1
      %s108 = scalar_select %p107, %s12, 1
      %s109 = smul.addr %s108, 32
      %s110 = smul.addr %s109, 4
      %s111 = scalar_lea.vmem %s0, %s110
      %p112 = scmp.lt.s32.totalorder %s12, 1
      %s113 = scalar_select %p112, %s12, 1
      %s114 = smul.addr %s113, 8
      %s115 = smul.addr %s114, 4
      %s116 = scalar_lea.vmem %s1, %s115
      %v117 = vld [vmem:[%s111] sm:$0xff]
      %v118 = vunpack.c.l.bf16 %v117
      %v119 = vunpack.c.h.bf16 %v117
      %s120 = scalar_lea.vmem %s111, 8
      %v121 = vld [vmem:[%s120] sm:$0xff]
      %v122 = vunpack.c.l.bf16 %v121
      %v123 = vunpack.c.h.bf16 %v121
      %v124 = vmax.f32 %v118, %v122
      %v125 = vmax.f32 %v119, %v123
      %v126 = vmax.f32 %v124, %v125
      %v127 = vpack.c.bf16 %v126, %v126
      %128 = vst [vmem:[%s116] sm:$0xf] %v127
      %s129 = scalar_lea.vmem %s111, 16
      %v130 = vld [vmem:[%s129] sm:$0xff]
      %v131 = vunpack.c.l.bf16 %v130
      %v132 = vunpack.c.h.bf16 %v130
      %s133 = scalar_lea.vmem %s111, 24
      %v134 = vld [vmem:[%s133] sm:$0xff]
      %v135 = vunpack.c.l.bf16 %v134
      %v136 = vunpack.c.h.bf16 %v134
      %v137 = vmax.f32 %v131, %v135
      %v138 = vmax.f32 %v132, %v136
      %v139 = vmax.f32 %v137, %v138
      %v140 = vpack.c.bf16 %v139, %v139
      %s141 = scalar_lea.vmem %s116, 4
      %142 = vst [vmem:[%s141] sm:$0xf] %v140
      %s143 = scalar_lea.vmem %s111, 32
      %v144 = vld [vmem:[%s143] sm:$0xff]
      %v145 = vunpack.c.l.bf16 %v144
      %v146 = vunpack.c.h.bf16 %v144
      %s147 = scalar_lea.vmem %s111, 40
      %v148 = vld [vmem:[%s147] sm:$0xff]
      %v149 = vunpack.c.l.bf16 %v148
      %v150 = vunpack.c.h.bf16 %v148
      %v151 = vmax.f32 %v145, %v149
      %v152 = vmax.f32 %v146, %v150
      %v153 = vmax.f32 %v151, %v152
      %v154 = vpack.c.bf16 %v153, %v153
      %s155 = scalar_lea.vmem %s116, 8
      %156 = vst [vmem:[%s155] sm:$0xf] %v154
      %s157 = scalar_lea.vmem %s111, 48
      %v158 = vld [vmem:[%s157] sm:$0xff]
      %v159 = vunpack.c.l.bf16 %v158
      %v160 = vunpack.c.h.bf16 %v158
      %s161 = scalar_lea.vmem %s111, 56
      %v162 = vld [vmem:[%s161] sm:$0xff]
      %v163 = vunpack.c.l.bf16 %v162
      %v164 = vunpack.c.h.bf16 %v162
      %v165 = vmax.f32 %v159, %v163
      %v166 = vmax.f32 %v160, %v164
      %v167 = vmax.f32 %v165, %v166
      %v168 = vpack.c.bf16 %v167, %v167
      %s169 = scalar_lea.vmem %s116, 12
      %170 = vst [vmem:[%s169] sm:$0xf] %v168
      %s171 = scalar_lea.vmem %s111, 64
      %v172 = vld [vmem:[%s171] sm:$0xff]
      %v173 = vunpack.c.l.bf16 %v172
      %v174 = vunpack.c.h.bf16 %v172
      %s175 = scalar_lea.vmem %s111, 72
      %v176 = vld [vmem:[%s175] sm:$0xff]
      %v177 = vunpack.c.l.bf16 %v176
      %v178 = vunpack.c.h.bf16 %v176
      %v179 = vmax.f32 %v173, %v177
      %v180 = vmax.f32 %v174, %v178
      %v181 = vmax.f32 %v179, %v180
      %v182 = vpack.c.bf16 %v181, %v181
      %s183 = scalar_lea.vmem %s116, 16
      %184 = vst [vmem:[%s183] sm:$0xf] %v182
      %s185 = scalar_lea.vmem %s111, 80
      %v186 = vld [vmem:[%s185] sm:$0xff]
      %v187 = vunpack.c.l.bf16 %v186
      %v188 = vunpack.c.h.bf16 %v186
      %s189 = scalar_lea.vmem %s111, 88
      %v190 = vld [vmem:[%s189] sm:$0xff]
      %v191 = vunpack.c.l.bf16 %v190
      %v192 = vunpack.c.h.bf16 %v190
      %v193 = vmax.f32 %v187, %v191
      %v194 = vmax.f32 %v188, %v192
      %v195 = vmax.f32 %v193, %v194
      %v196 = vpack.c.bf16 %v195, %v195
      %s197 = scalar_lea.vmem %s116, 20
      %198 = vst [vmem:[%s197] sm:$0xf] %v196
      %s199 = scalar_lea.vmem %s111, 96
      %v200 = vld [vmem:[%s199] sm:$0xff]
      %v201 = vunpack.c.l.bf16 %v200
      %v202 = vunpack.c.h.bf16 %v200
      %s203 = scalar_lea.vmem %s111, 104
      %v204 = vld [vmem:[%s203] sm:$0xff]
      %v205 = vunpack.c.l.bf16 %v204
      %v206 = vunpack.c.h.bf16 %v204
      %v207 = vmax.f32 %v201, %v205
      %v208 = vmax.f32 %v202, %v206
      %v209 = vmax.f32 %v207, %v208
      %v210 = vpack.c.bf16 %v209, %v209
      %s211 = scalar_lea.vmem %s116, 24
      %212 = vst [vmem:[%s211] sm:$0xf] %v210
      %s213 = scalar_lea.vmem %s111, 112
      %v214 = vld [vmem:[%s213] sm:$0xff]
      %v215 = vunpack.c.l.bf16 %v214
      %v216 = vunpack.c.h.bf16 %v214
      %s217 = scalar_lea.vmem %s111, 120
      %v218 = vld [vmem:[%s217] sm:$0xff]
      %v219 = vunpack.c.l.bf16 %v218
      %v220 = vunpack.c.h.bf16 %v218
      %v221 = vmax.f32 %v215, %v219
      %v222 = vmax.f32 %v216, %v220
      %v223 = vmax.f32 %v221, %v222
      %v224 = vpack.c.bf16 %v223, %v223
      %s225 = scalar_lea.vmem %s116, 28
      %226 = vst [vmem:[%s225] sm:$0xf] %v224
      %p227 = scmp.lt.s32.totalorder %s12, 1
      %s228 = scalar_select %p227, %s12, 1
      %s229 = smul.addr %s228, 8
      %s230 = smul.addr %s229, 4
      %s231 = scalar_lea.vmem %s1, %s230
      // Predicated region
      $region25: #{encoder_cnn_forward.7} parent=23 // pred_check
        %p232 = pneg %p56
      $region26: #{encoder_cnn_forward.7} parent=23 // pred_check_branch
        %234 = sbr.rel (%p232) target = $region28
      $region27: #{encoder_cnn_forward.7} parent=23 // pred_region
        _
      $region28: #{encoder_cnn_forward.7} parent=23 // pred_fallthru
        _
    $region24: #{encoder_cnn_forward.7} parent=5 // pred_fallthru
      _
    %p235 = scmp.le.s32.totalorder 2, %s7
    // Predicated region
    $region29: #{encoder_cnn_forward.7} parent=5 // pred_check
      %p236 = pneg %p235
    $region30: #{encoder_cnn_forward.7} parent=5 // pred_check_branch
      %238 = sbr.rel (%p236) target = $region32
    $region31: #{encoder_cnn_forward.7} parent=5 // pred_region
      %s239 = ssub.s32 %s7, 2
      // Predicated region
      $region33: #{encoder_cnn_forward.7} parent=31 // pred_check
        %p240 = pneg %p62
      $region34: #{encoder_cnn_forward.7} parent=31 // pred_check_branch
        %242 = sbr.rel (%p240) target = $region36
      $region35: #{encoder_cnn_forward.7} parent=31 // pred_region
        %p243 = scmp.lt.s32.totalorder %s13, 1
        %s244 = scalar_select %p243, %s13, 1
        %s245 = smul.addr %s244, 8
        %s246 = smul.addr %s245, 4
        %s247 = scalar_lea.vmem %s1, %s246
      $region36: #{encoder_cnn_forward.7} parent=31 // pred_fallthru
        _
    $region32: #{encoder_cnn_forward.7} parent=5 // pred_fallthru
      _
  $region6: #{encoder_cnn_forward.7} parent=0 // loop_footer
    %s11 = sadd.s32 1, %s7
  $region7: #{encoder_cnn_forward.7} parent=0 // loop_footer_branch
    %6 = sbr.rel target = $region3
  $region8: #{encoder_cnn_forward.7} parent=0 // loop_exit
    _

// kernel: encoder_cnn_forward.8
$region0: #{encoder_cnn_forward.8}
  #allocation0 [shape = 'u32[]', space=smem, size = 0x4, offset = 0x4, fixed_abs, tag = 'smem constant byte address 0x4 - core index']
  #allocation1 [shape = 'u32[144,128]{1,0:T(1,128)}', space=vmem, size = 0x12000, scoped, tag = 'internal scratch']
  %s0 = inlined_call_operand.vmem [shape: bf16[2,8,8,128], index: 0, kind: input, shape index: {}]
  %s1 = inlined_call_operand.vmem [shape: bf16[1,128,128], index: 1, kind: input, shape index: {}]
  %s2 = inlined_call_operand.vmem [shape: f32[1,128], index: 2, kind: input, shape index: {}]
  %s3 = inlined_call_operand.vmem [shape: bf16[2,64,128], index: 3, kind: output, shape index: {}]
  %s4 = sld [smem:[#allocation0]]
  $region45: #{encoder_cnn_forward.8} parent=0
    _
  %s6 = ssub.s32 1, %s4
  %s7 = scalar_select 0, %s6, %s4
  loop: start=0, step=1, limit=4
  $region2: #{encoder_cnn_forward.8} parent=0 // loop_pre_header
    _
  $region3: #{encoder_cnn_forward.8} parent=0 // loop_header
    %s9 = sphi 0, %s13
    %p10 = scmp.ge.s32.totalorder %s9, 4
    %s19 = sphi 0, %s21
    %s22 = sphi 0, %s19
    %s23 = sphi 0, %s22
    %s39 = sphi 0, %s23
    %s43 = sphi 0, %s43
    %s45 = sphi 0, %s43
    %s46 = sphi 0, %s45
    %s60 = sphi 0, %s46
    %s64 = sphi 0, %s64
    %s66 = sphi 0, %s64
    %s67 = sphi 0, %s66
    %s81 = sphi 0, %s67
    %s87 = sphi 0, %s89
    %s90 = sphi 0, %s87
    %s91 = sphi 0, %s90
    %s107 = sphi 0, %s91
  $region4: #{encoder_cnn_forward.8} parent=0 // loop_header_branch
    %12 = sbr.rel (%p10) target = $region8
  $region5: #{encoder_cnn_forward.8} parent=0 // loop_body
    %s14 = ssub.s32 %s9, 1
    %s15 = ssub.s32 %s9, 2
    %s16 = sadd.s32 %s9, 1
    %s17 = ssub.s32 %s9, %s16
    %p18 = scmp.eq.s32.totalorder %s17, 0
    %s20 = sadd.s32 %s19, 1
    %s21 = scalar_select %p18, %s19, %s20
    %p24 = pneg %p18
    %p25 = scmp.eq.s32.totalorder %s9, 1
    %p26 = por %p24, %p25
    %p27 = scmp.ne.s32.totalorder %s19, %s22
    %p28 = scmp.eq.s32.totalorder %s9, 0
    %p29 = por %p27, %p28
    %p30 = scmp.ne.s32.totalorder %s19, %s22
    %p31 = scmp.eq.s32.totalorder %s14, 1
    %p32 = por %p30, %p31
    %p33 = scmp.ne.s32.totalorder %s22, %s23
    %p34 = scmp.eq.s32.totalorder %s14, 0
    %p35 = por %p33, %p34
    %p36 = scmp.ne.s32.totalorder %s22, %s23
    %p37 = scmp.eq.s32.totalorder %s15, 1
    %p38 = por %p36, %p37
    %p40 = scmp.ne.s32.totalorder %s23, %s39
    %p41 = scmp.eq.s32.totalorder %s15, 0
    %p42 = por %p40, %p41
    %s44 = sadd.s32 %s43, 1
    %p47 = scmp.eq.s32.totalorder %s9, 1
    %p48 = scmp.ne.s32.totalorder %s43, %s45
    %p49 = scmp.eq.s32.totalorder %s9, 0
    %p50 = por %p48, %p49
    %p51 = scmp.ne.s32.totalorder %s43, %s45
    %p52 = scmp.eq.s32.totalorder %s14, 1
    %p53 = por %p51, %p52
    %p54 = scmp.ne.s32.totalorder %s45, %s46
    %p55 = scmp.eq.s32.totalorder %s14, 0
    %p56 = por %p54, %p55
    %p57 = scmp.ne.s32.totalorder %s45, %s46
    %p58 = scmp.eq.s32.totalorder %s15, 1
    %p59 = por %p57, %p58
    %p61 = scmp.ne.s32.totalorder %s46, %s60
    %p62 = scmp.eq.s32.totalorder %s15, 0
    %p63 = por %p61, %p62
    %s65 = sadd.s32 %s64, 1
    %p68 = scmp.eq.s32.totalorder %s9, 1
    %p69 = scmp.ne.s32.totalorder %s64, %s66
    %p70 = scmp.eq.s32.totalorder %s9, 0
    %p71 = por %p69, %p70
    %p72 = scmp.ne.s32.totalorder %s64, %s66
    %p73 = scmp.eq.s32.totalorder %s14, 1
    %p74 = por %p72, %p73
    %p75 = scmp.ne.s32.totalorder %s66, %s67
    %p76 = scmp.eq.s32.totalorder %s14, 0
    %p77 = por %p75, %p76
    %p78 = scmp.ne.s32.totalorder %s66, %s67
    %p79 = scmp.eq.s32.totalorder %s15, 1
    %p80 = por %p78, %p79
    %p82 = scmp.ne.s32.totalorder %s67, %s81
    %p83 = scmp.eq.s32.totalorder %s15, 0
    %p84 = por %p82, %p83
    %s85 = ssub.s32 %s9, %s16
    %p86 = scmp.eq.s32.totalorder %s85, 0
    %s88 = sadd.s32 %s87, 1
    %s89 = scalar_select %p86, %s87, %s88
    %p92 = pneg %p86
    %p93 = scmp.eq.s32.totalorder %s9, 1
    %p94 = por %p92, %p93
    %p95 = scmp.ne.s32.totalorder %s87, %s90
    %p96 = scmp.eq.s32.totalorder %s9, 0
    %p97 = por %p95, %p96
    %p98 = scmp.ne.s32.totalorder %s87, %s90
    %p99 = scmp.eq.s32.totalorder %s14, 1
    %p100 = por %p98, %p99
    %p101 = scmp.ne.s32.totalorder %s90, %s91
    %p102 = scmp.eq.s32.totalorder %s14, 0
    %p103 = por %p101, %p102
    %p104 = scmp.ne.s32.totalorder %s90, %s91
    %p105 = scmp.eq.s32.totalorder %s15, 1
    %p106 = por %p104, %p105
    %p108 = scmp.ne.s32.totalorder %s91, %s107
    %p109 = scmp.eq.s32.totalorder %s15, 0
    %p110 = por %p108, %p109
    %p111 = scmp.le.s32.totalorder 1, %s9
    %p112 = scmp.lt.s32.totalorder %s9, 3
    %p113 = pnand %p111, %p112
    %p114 = pneg %p113
    // Predicated region
    $region9: #{encoder_cnn_forward.8} parent=5 // pred_check
      _
    $region10: #{encoder_cnn_forward.8} parent=5 // pred_check_branch
      %116 = sbr.rel (%p113) target = $region12
    $region11: #{encoder_cnn_forward.8} parent=5 // pred_region
      %s117 = ssub.s32 %s9, 1
      // Predicated region
      $region13: #{encoder_cnn_forward.8} parent=11 // pred_check
        %p118 = pneg %p56
      $region14: #{encoder_cnn_forward.8} parent=11 // pred_check_branch
        %120 = sbr.rel (%p118) target = $region16
      $region15: #{encoder_cnn_forward.8} parent=11 // pred_region
        _
      $region16: #{encoder_cnn_forward.8} parent=11 // pred_fallthru
        _
      // Predicated region
      $region17: #{encoder_cnn_forward.8} parent=11 // pred_check
        %p121 = pneg %p77
      $region18: #{encoder_cnn_forward.8} parent=11 // pred_check_branch
        %123 = sbr.rel (%p121) target = $region20
      $region19: #{encoder_cnn_forward.8} parent=11 // pred_region
        _
      $region20: #{encoder_cnn_forward.8} parent=11 // pred_fallthru
        _
    $region12: #{encoder_cnn_forward.8} parent=5 // pred_fallthru
      _
    %p124 = scmp.lt.s32.totalorder %s9, 2
    // Predicated region
    $region21: #{encoder_cnn_forward.8} parent=5 // pred_check
      %p125 = pneg %p124
    $region22: #{encoder_cnn_forward.8} parent=5 // pred_check_branch
      %127 = sbr.rel (%p125) target = $region24
    $region23: #{encoder_cnn_forward.8} parent=5 // pred_region
      // Predicated region
      $region25: #{encoder_cnn_forward.8} parent=23 // pred_check
        %p128 = pneg %p29
      $region26: #{encoder_cnn_forward.8} parent=23 // pred_check_branch
        %130 = sbr.rel (%p128) target = $region28
      $region27: #{encoder_cnn_forward.8} parent=23 // pred_region
        %p131 = scmp.lt.s32.totalorder %s9, 1
        %s132 = scalar_select %p131, %s9, 1
        %s133 = smul.addr %s132, 8
        %s134 = smul.addr %s133, 4
        %s135 = scalar_lea.vmem %s0, %s134
      $region28: #{encoder_cnn_forward.8} parent=23 // pred_fallthru
        _
    $region24: #{encoder_cnn_forward.8} parent=5 // pred_fallthru
      _
    %p136 = scmp.le.s32.totalorder 1, %s9
    %p137 = scmp.lt.s32.totalorder %s9, 3
    %p138 = pnand %p136, %p137
    %p139 = pneg %p138
    // Predicated region
    $region29: #{encoder_cnn_forward.8} parent=5 // pred_check
      _
    $region30: #{encoder_cnn_forward.8} parent=5 // pred_check_branch
      %141 = sbr.rel (%p138) target = $region32
    $region31: #{encoder_cnn_forward.8} parent=5 // pred_region
      %s142 = ssub.s32 %s9, 1
      %p143 = scmp.lt.s32.totalorder %s14, 1
      %s144 = scalar_select %p143, %s14, 1
      %s145 = smul.addr %s144, 8
      %s146 = smul.addr %s145, 4
      %s147 = scalar_lea.vmem %s0, %s146
      %p148 = pneg %p35
      %p149 = pneg %p32
      %p150 = pneg %p56
      %p151 = pneg %p53
      %p152 = pneg %p77
      %p153 = pneg %p74
      %p154 = pneg %p103
      %p155 = pneg %p100
      %p156 = scmp.lt.s32.totalorder %s14, 1
      %s157 = scalar_select %p156, %s14, 1
      %s158 = smul.addr %s157, 8
      %s159 = smul.addr %s158, 4
      %s160 = scalar_lea.vmem %s3, %s159
      %p161 = scmp.lt.s32.totalorder %s14, 1
      %s162 = scalar_select %p161, %s14, 1
      %s163 = smul.addr %s162, 8
      %s164 = smul.addr %s163, 4
      %s165 = scalar_lea.vmem %s0, %s164
      %p166 = scmp.lt.s32.totalorder %s14, 1
      %s167 = scalar_select %p166, %s14, 1
      %s168 = smul.addr %s167, 8
      %s169 = smul.addr %s168, 4
      %s170 = scalar_lea.vmem %s3, %s169
      %v172 = vld [vmem:[%s165] sm:$0xf]
      %v173 = vld [vmem:[%s165 + $0x4] sm:$0xf]
      %v174 = vld [vmem:[%s165 + $0x8] sm:$0xf]
      %v175 = vld [vmem:[%s165 + $0xc] sm:$0xf]
      %v176 = vld [vmem:[%s165 + $0x10] sm:$0xf]
      %v177 = vld [vmem:[%s165 + $0x14] sm:$0xf]
      %v178 = vld [vmem:[%s165 + $0x18] sm:$0xf]
      %v179 = vld [vmem:[%s165 + $0x1c] sm:$0xf]
      %v180 = vunpack.c.l.bf16 %v172
      %v181 = vunpack.c.l.bf16 %v173
      %v182 = vunpack.c.l.bf16 %v174
      %v183 = vunpack.c.l.bf16 %v175
      %v184 = vunpack.c.l.bf16 %v176
      %v185 = vunpack.c.l.bf16 %v177
      %v186 = vunpack.c.l.bf16 %v178
      %v187 = vunpack.c.l.bf16 %v179
      %v188 = vpack.c.bf16 %v181, %v180
      %v189 = vpack.c.bf16 %v183, %v182
      %v190 = vpack.c.bf16 %v185, %v184
      %v191 = vpack.c.bf16 %v187, %v186
      %v192 = vld [vmem:[%s1] sm:$0xf]
      %v193 = vld [vmem:[%s1 + $0x4] sm:$0xf]
      %v194 = vld [vmem:[%s1 + $0x8] sm:$0xf]
      %v195 = vld [vmem:[%s1 + $0xc] sm:$0xf]
      %v196 = vld [vmem:[%s1 + $0x10] sm:$0xf]
      %v197 = vld [vmem:[%s1 + $0x14] sm:$0xf]
      %v198 = vld [vmem:[%s1 + $0x18] sm:$0xf]
      %v199 = vld [vmem:[%s1 + $0x1c] sm:$0xf]
      %v200 = vld [vmem:[%s1 + $0x20] sm:$0xf]
      %v201 = vld [vmem:[%s1 + $0x24] sm:$0xf]
      %v202 = vld [vmem:[%s1 + $0x28] sm:$0xf]
      %v203 = vld [vmem:[%s1 + $0x2c] sm:$0xf]
      %v204 = vld [vmem:[%s1 + $0x30] sm:$0xf]
      %v205 = vld [vmem:[%s1 + $0x34] sm:$0xf]
      %v206 = vld [vmem:[%s1 + $0x38] sm:$0xf]
      %v207 = vld [vmem:[%s1 + $0x3c] sm:$0xf]
      %v208 = vld [vmem:[%s2] sm:$0x1]
      %v210 = vlaneseq
      %v211 = vshrl.u32 %v210, 7
      %v212 = vsub.s32 0, %v211
      %v213 = vrot.slane %v208, %v212
      %v231 = vunpack.c.l.b16 %v192
      %v232 = vunpack.c.l.b16 %v193
      %v233 = vunpack.c.l.b16 %v194
      %v234 = vunpack.c.l.b16 %v195
      %v235 = vunpack.c.l.b16 %v196
      %v236 = vunpack.c.l.b16 %v197
      %v237 = vunpack.c.l.b16 %v198
      %v238 = vunpack.c.l.b16 %v199
      %v239 = vunpack.c.l.b16 %v200
      %v240 = vunpack.c.l.b16 %v201
      %v241 = vunpack.c.l.b16 %v202
      %v242 = vunpack.c.l.b16 %v203
      %v243 = vunpack.c.l.b16 %v204
      %v244 = vunpack.c.l.b16 %v205
      %v245 = vunpack.c.l.b16 %v206
      %v246 = vunpack.c.l.b16 %v207
      %v247 = vpack.c.b16 %v232, %v231
      %v248 = vpack.c.b16 %v234, %v233
      %v249 = vpack.c.b16 %v236, %v235
      %v250 = vpack.c.b16 %v238, %v237
      %v251 = vpack.c.b16 %v240, %v239
      %v252 = vpack.c.b16 %v242, %v241
      %v253 = vpack.c.b16 %v244, %v243
      %v254 = vpack.c.b16 %v246, %v245
      %263 = vmatprep.subr.bf16.mxu0 0
      %264 = vmatpush1.bf16.msra.mxu0 %v247
      %265 = vmatprep.subr.bf16.mxu0 0
      %266 = vmatpush1.bf16.msra.mxu0 %v248
      %267 = vmatprep.subr.bf16.mxu0 0
      %268 = vmatpush1.bf16.msra.mxu0 %v249
      %269 = vmatprep.subr.bf16.mxu0 0
      %270 = vmatpush1.bf16.msra.mxu0 %v250
      %271 = vmatprep.subr.bf16.mxu0 0
      %272 = vmatpush1.bf16.msra.mxu0 %v251
      %273 = vmatprep.subr.bf16.mxu0 0
      %274 = vmatpush1.bf16.msra.mxu0 %v252
      %275 = vmatprep.subr.bf16.mxu0 0
      %276 = vmatpush1.bf16.msra.mxu0 %v253
      %277 = vmatprep.subr.bf16.mxu0 0
      %278 = vmatpush1.bf16.msra.mxu0 %v254
      %279 = vmatprep.subr.bf16.mxu0 0
      %280 = vmatpush1.bf16.msra.mxu0 0
      %281 = vmatprep.subr.bf16.mxu0 0
      %282 = vmatpush1.bf16.msra.mxu0 0
      %283 = vmatprep.subr.bf16.mxu0 0
      %284 = vmatpush1.bf16.msra.mxu0 0
      %285 = vmatprep.subr.bf16.mxu0 0
      %286 = vmatpush1.bf16.msra.mxu0 0
      %287 = vmatprep.subr.bf16.mxu0 0
      %288 = vmatpush1.bf16.msra.mxu0 0
      %289 = vmatprep.subr.bf16.mxu0 0
      %290 = vmatpush1.bf16.msra.mxu0 0
      %291 = vmatprep.subr.bf16.mxu0 0
      %292 = vmatpush1.bf16.msra.mxu0 0
      %293 = vmatprep.subr.bf16.mxu0 0
      %294 = vmatpush1.bf16.msra.mxu0 0
      %295 = vmatprep.mubr.bf16.mxu0 0
      %296 = vmatmul.mubr.bf16.gmra.mrb[0].mxu0 %v188
      %v297 = vpop.f32.mrb[0].mxu0
      %v298 = vadd.f32 %v213, %v297
      %v299 = vpop.f32.mrb[0].mxu0
      %v300 = vpop.f32.mrb[0].mxu0
      %v301 = vadd.f32 %v213, %v300
      %v302 = vpop.f32.mrb[0].mxu0
      %303 = vmatprep.mubr.bf16.mxu0 0
      %304 = vmatmul.mubr.bf16.gmra.mrb[0].mxu0 %v189
      %v305 = vpop.f32.mrb[0].mxu0
      %v306 = vadd.f32 %v213, %v305
      %v307 = vpop.f32.mrb[0].mxu0
      %v308 = vpop.f32.mrb[0].mxu0
      %v309 = vadd.f32 %v213, %v308
      %v310 = vpop.f32.mrb[0].mxu0
      %311 = vmatprep.mubr.bf16.mxu0 0
      %312 = vmatmul.mubr.bf16.gmra.mrb[0].mxu0 %v190
      %v313 = vpop.f32.mrb[0].mxu0
      %v314 = vadd.f32 %v213, %v313
      %v315 = vpop.f32.mrb[0].mxu0
      %v316 = vpop.f32.mrb[0].mxu0
      %v317 = vadd.f32 %v213, %v316
      %v318 = vpop.f32.mrb[0].mxu0
      %319 = vmatprep.mubr.bf16.mxu0 0
      %320 = vmatmul.mubr.bf16.gmra.mrb[0].mxu0 %v191
      %v321 = vpop.f32.mrb[0].mxu0
      %v322 = vadd.f32 %v213, %v321
      %v323 = vpop.f32.mrb[0].mxu0
      %v324 = vpop.f32.mrb[0].mxu0
      %v325 = vadd.f32 %v213, %v324
      %v326 = vpop.f32.mrb[0].mxu0
      %327 = vdwg.mxu0
      %v328 = vmax.f32 %v298, 0.0
      %v329 = vmax.f32 %v301, 0.0
      %v330 = vmax.f32 %v306, 0.0
      %v331 = vmax.f32 %v309, 0.0
      %v332 = vmax.f32 %v314, 0.0
      %v333 = vmax.f32 %v317, 0.0
      %v334 = vmax.f32 %v322, 0.0
      %v335 = vmax.f32 %v325, 0.0
      %v336 = vpack.c.bf16 %v329, %v328
      %v337 = vpack.c.bf16 %v331, %v330
      %v338 = vpack.c.bf16 %v333, %v332
      %v339 = vpack.c.bf16 %v335, %v334
      %v344 = vunpack.c.l.b16 %v336
      %v345 = vunpack.c.h.b16 %v336
      %v346 = vunpack.c.l.b16 %v337
      %v347 = vunpack.c.h.b16 %v337
      %v348 = vunpack.c.l.b16 %v338
      %v349 = vunpack.c.h.b16 %v338
      %v350 = vunpack.c.l.b16 %v339
      %v351 = vunpack.c.h.b16 %v339
      %v352 = vpack.c.b16 %v344, %v344
      %v353 = vpack.c.b16 %v345, %v345
      %v354 = vpack.c.b16 %v346, %v346
      %v355 = vpack.c.b16 %v347, %v347
      %v356 = vpack.c.b16 %v348, %v348
      %v357 = vpack.c.b16 %v349, %v349
      %v358 = vpack.c.b16 %v350, %v350
      %v359 = vpack.c.b16 %v351, %v351
      %368 = vst [vmem:[%s170] sm:$0xf] %v352
      %369 = vst [vmem:[%s170 + $0x4] sm:$0xf] %v353
      %370 = vst [vmem:[%s170 + $0x8] sm:$0xf] %v354
      %371 = vst [vmem:[%s170 + $0xc] sm:$0xf] %v355
      %372 = vst [vmem:[%s170 + $0x10] sm:$0xf] %v356
      %373 = vst [vmem:[%s170 + $0x14] sm:$0xf] %v357
      %374 = vst [vmem:[%s170 + $0x18] sm:$0xf] %v358
      %375 = vst [vmem:[%s170 + $0x1c] sm:$0xf] %v359
      %p376 = scmp.lt.s32.totalorder %s14, 1
      %s377 = scalar_select %p376, %s14, 1
      %s378 = smul.addr %s377, 8
      %s379 = smul.addr %s378, 4
      %s380 = scalar_lea.vmem %s3, %s379
      // Predicated region
      $region33: #{encoder_cnn_forward.8} parent=31 // pred_check
        %p381 = pneg %p100
      $region34: #{encoder_cnn_forward.8} parent=31 // pred_check_branch
        %383 = sbr.rel (%p381) target = $region36
      $region35: #{encoder_cnn_forward.8} parent=31 // pred_region
        _
      $region36: #{encoder_cnn_forward.8} parent=31 // pred_fallthru
        _
    $region32: #{encoder_cnn_forward.8} parent=5 // pred_fallthru
      _
    %p384 = scmp.le.s32.totalorder 2, %s9
    // Predicated region
    $region37: #{encoder_cnn_forward.8} parent=5 // pred_check
      %p385 = pneg %p384
    $region38: #{encoder_cnn_forward.8} parent=5 // pred_check_branch
      %387 = sbr.rel (%p385) target = $region40
    $region39: #{encoder_cnn_forward.8} parent=5 // pred_region
      %s388 = ssub.s32 %s9, 2
      // Predicated region
      $region41: #{encoder_cnn_forward.8} parent=39 // pred_check
        %p389 = pneg %p106
      $region42: #{encoder_cnn_forward.8} parent=39 // pred_check_branch
        %391 = sbr.rel (%p389) target = $region44
      $region43: #{encoder_cnn_forward.8} parent=39 // pred_region
        %p392 = scmp.lt.s32.totalorder %s15, 1
        %s393 = scalar_select %p392, %s15, 1
        %s394 = smul.addr %s393, 8
        %s395 = smul.addr %s394, 4
        %s396 = scalar_lea.vmem %s3, %s395
      $region44: #{encoder_cnn_forward.8} parent=39 // pred_fallthru
        _
    $region40: #{encoder_cnn_forward.8} parent=5 // pred_fallthru
      _
  $region6: #{encoder_cnn_forward.8} parent=0 // loop_footer
    %s13 = sadd.s32 1, %s9
  $region7: #{encoder_cnn_forward.8} parent=0 // loop_footer_branch
    %8 = sbr.rel target = $region3
  $region8: #{encoder_cnn_forward.8} parent=0 // loop_exit
    _

// kernel: encoder_cnn_forward.10
$region0: #{encoder_cnn_forward.10}
  #allocation0 [shape = 'u32[]', space=smem, size = 0x4, offset = 0x4, fixed_abs, tag = 'smem constant byte address 0x4 - core index']
  #allocation1 [shape = 'u32[144,128]{1,0:T(1,128)}', space=vmem, size = 0x12000, scoped, tag = 'internal scratch']
  %s0 = inlined_call_operand.vmem [shape: bf16[2,8,8,128], index: 0, kind: input, shape index: {}]
  %s1 = inlined_call_operand.vmem [shape: bf16[1,128,128], index: 1, kind: input, shape index: {}]
  %s2 = inlined_call_operand.vmem [shape: f32[1,128], index: 2, kind: input, shape index: {}]
  %s3 = inlined_call_operand.vmem [shape: bf16[2,64,128], index: 3, kind: input, shape index: {}]
  %s4 = inlined_call_operand.vmem [shape: bf16[2,64,128], index: 4, kind: output, shape index: {}]
  %s5 = sld [smem:[#allocation0]]
  $region49: #{encoder_cnn_forward.10} parent=0
    _
  %s7 = ssub.s32 1, %s5
  %s8 = scalar_select 0, %s7, %s5
  loop: start=0, step=1, limit=4
  $region2: #{encoder_cnn_forward.10} parent=0 // loop_pre_header
    _
  $region3: #{encoder_cnn_forward.10} parent=0 // loop_header
    %s10 = sphi 0, %s14
    %p11 = scmp.ge.s32.totalorder %s10, 4
    %s20 = sphi 0, %s22
    %s23 = sphi 0, %s20
    %s24 = sphi 0, %s23
    %s40 = sphi 0, %s24
    %s44 = sphi 0, %s44
    %s46 = sphi 0, %s44
    %s47 = sphi 0, %s46
    %s61 = sphi 0, %s47
    %s65 = sphi 0, %s65
    %s67 = sphi 0, %s65
    %s68 = sphi 0, %s67
    %s82 = sphi 0, %s68
    %s88 = sphi 0, %s90
    %s91 = sphi 0, %s88
    %s92 = sphi 0, %s91
    %s108 = sphi 0, %s92
    %s114 = sphi 0, %s116
    %s117 = sphi 0, %s114
    %s118 = sphi 0, %s117
    %s134 = sphi 0, %s118
  $region4: #{encoder_cnn_forward.10} parent=0 // loop_header_branch
    %13 = sbr.rel (%p11) target = $region8
  $region5: #{encoder_cnn_forward.10} parent=0 // loop_body
    %s15 = ssub.s32 %s10, 1
    %s16 = ssub.s32 %s10, 2
    %s17 = sadd.s32 %s10, 1
    %s18 = ssub.s32 %s10, %s17
    %p19 = scmp.eq.s32.totalorder %s18, 0
    %s21 = sadd.s32 %s20, 1
    %s22 = scalar_select %p19, %s20, %s21
    %p25 = pneg %p19
    %p26 = scmp.eq.s32.totalorder %s10, 1
    %p27 = por %p25, %p26
    %p28 = scmp.ne.s32.totalorder %s20, %s23
    %p29 = scmp.eq.s32.totalorder %s10, 0
    %p30 = por %p28, %p29
    %p31 = scmp.ne.s32.totalorder %s20, %s23
    %p32 = scmp.eq.s32.totalorder %s15, 1
    %p33 = por %p31, %p32
    %p34 = scmp.ne.s32.totalorder %s23, %s24
    %p35 = scmp.eq.s32.totalorder %s15, 0
    %p36 = por %p34, %p35
    %p37 = scmp.ne.s32.totalorder %s23, %s24
    %p38 = scmp.eq.s32.totalorder %s16, 1
    %p39 = por %p37, %p38
    %p41 = scmp.ne.s32.totalorder %s24, %s40
    %p42 = scmp.eq.s32.totalorder %s16, 0
    %p43 = por %p41, %p42
    %s45 = sadd.s32 %s44, 1
    %p48 = scmp.eq.s32.totalorder %s10, 1
    %p49 = scmp.ne.s32.totalorder %s44, %s46
    %p50 = scmp.eq.s32.totalorder %s10, 0
    %p51 = por %p49, %p50
    %p52 = scmp.ne.s32.totalorder %s44, %s46
    %p53 = scmp.eq.s32.totalorder %s15, 1
    %p54 = por %p52, %p53
    %p55 = scmp.ne.s32.totalorder %s46, %s47
    %p56 = scmp.eq.s32.totalorder %s15, 0
    %p57 = por %p55, %p56
    %p58 = scmp.ne.s32.totalorder %s46, %s47
    %p59 = scmp.eq.s32.totalorder %s16, 1
    %p60 = por %p58, %p59
    %p62 = scmp.ne.s32.totalorder %s47, %s61
    %p63 = scmp.eq.s32.totalorder %s16, 0
    %p64 = por %p62, %p63
    %s66 = sadd.s32 %s65, 1
    %p69 = scmp.eq.s32.totalorder %s10, 1
    %p70 = scmp.ne.s32.totalorder %s65, %s67
    %p71 = scmp.eq.s32.totalorder %s10, 0
    %p72 = por %p70, %p71
    %p73 = scmp.ne.s32.totalorder %s65, %s67
    %p74 = scmp.eq.s32.totalorder %s15, 1
    %p75 = por %p73, %p74
    %p76 = scmp.ne.s32.totalorder %s67, %s68
    %p77 = scmp.eq.s32.totalorder %s15, 0
    %p78 = por %p76, %p77
    %p79 = scmp.ne.s32.totalorder %s67, %s68
    %p80 = scmp.eq.s32.totalorder %s16, 1
    %p81 = por %p79, %p80
    %p83 = scmp.ne.s32.totalorder %s68, %s82
    %p84 = scmp.eq.s32.totalorder %s16, 0
    %p85 = por %p83, %p84
    %s86 = ssub.s32 %s10, %s17
    %p87 = scmp.eq.s32.totalorder %s86, 0
    %s89 = sadd.s32 %s88, 1
    %s90 = scalar_select %p87, %s88, %s89
    %p93 = pneg %p87
    %p94 = scmp.eq.s32.totalorder %s10, 1
    %p95 = por %p93, %p94
    %p96 = scmp.ne.s32.totalorder %s88, %s91
    %p97 = scmp.eq.s32.totalorder %s10, 0
    %p98 = por %p96, %p97
    %p99 = scmp.ne.s32.totalorder %s88, %s91
    %p100 = scmp.eq.s32.totalorder %s15, 1
    %p101 = por %p99, %p100
    %p102 = scmp.ne.s32.totalorder %s91, %s92
    %p103 = scmp.eq.s32.totalorder %s15, 0
    %p104 = por %p102, %p103
    %p105 = scmp.ne.s32.totalorder %s91, %s92
    %p106 = scmp.eq.s32.totalorder %s16, 1
    %p107 = por %p105, %p106
    %p109 = scmp.ne.s32.totalorder %s92, %s108
    %p110 = scmp.eq.s32.totalorder %s16, 0
    %p111 = por %p109, %p110
    %s112 = ssub.s32 %s10, %s17
    %p113 = scmp.eq.s32.totalorder %s112, 0
    %s115 = sadd.s32 %s114, 1
    %s116 = scalar_select %p113, %s114, %s115
    %p119 = pneg %p113
    %p120 = scmp.eq.s32.totalorder %s10, 1
    %p121 = por %p119, %p120
    %p122 = scmp.ne.s32.totalorder %s114, %s117
    %p123 = scmp.eq.s32.totalorder %s10, 0
    %p124 = por %p122, %p123
    %p125 = scmp.ne.s32.totalorder %s114, %s117
    %p126 = scmp.eq.s32.totalorder %s15, 1
    %p127 = por %p125, %p126
    %p128 = scmp.ne.s32.totalorder %s117, %s118
    %p129 = scmp.eq.s32.totalorder %s15, 0
    %p130 = por %p128, %p129
    %p131 = scmp.ne.s32.totalorder %s117, %s118
    %p132 = scmp.eq.s32.totalorder %s16, 1
    %p133 = por %p131, %p132
    %p135 = scmp.ne.s32.totalorder %s118, %s134
    %p136 = scmp.eq.s32.totalorder %s16, 0
    %p137 = por %p135, %p136
    %p138 = scmp.le.s32.totalorder 1, %s10
    %p139 = scmp.lt.s32.totalorder %s10, 3
    %p140 = pnand %p138, %p139
    %p141 = pneg %p140
    // Predicated region
    $region9: #{encoder_cnn_forward.10} parent=5 // pred_check
      _
    $region10: #{encoder_cnn_forward.10} parent=5 // pred_check_branch
      %143 = sbr.rel (%p140) target = $region12
    $region11: #{encoder_cnn_forward.10} parent=5 // pred_region
      %s144 = ssub.s32 %s10, 1
      // Predicated region
      $region13: #{encoder_cnn_forward.10} parent=11 // pred_check
        %p145 = pneg %p57
      $region14: #{encoder_cnn_forward.10} parent=11 // pred_check_branch
        %147 = sbr.rel (%p145) target = $region16
      $region15: #{encoder_cnn_forward.10} parent=11 // pred_region
        _
      $region16: #{encoder_cnn_forward.10} parent=11 // pred_fallthru
        _
      // Predicated region
      $region17: #{encoder_cnn_forward.10} parent=11 // pred_check
        %p148 = pneg %p78
      $region18: #{encoder_cnn_forward.10} parent=11 // pred_check_branch
        %150 = sbr.rel (%p148) target = $region20
      $region19: #{encoder_cnn_forward.10} parent=11 // pred_region
        _
      $region20: #{encoder_cnn_forward.10} parent=11 // pred_fallthru
        _
    $region12: #{encoder_cnn_forward.10} parent=5 // pred_fallthru
      _
    %p151 = scmp.lt.s32.totalorder %s10, 2
    // Predicated region
    $region21: #{encoder_cnn_forward.10} parent=5 // pred_check
      %p152 = pneg %p151
    $region22: #{encoder_cnn_forward.10} parent=5 // pred_check_branch
      %154 = sbr.rel (%p152) target = $region24
    $region23: #{encoder_cnn_forward.10} parent=5 // pred_region
      // Predicated region
      $region25: #{encoder_cnn_forward.10} parent=23 // pred_check
        %p155 = pneg %p30
      $region26: #{encoder_cnn_forward.10} parent=23 // pred_check_branch
        %157 = sbr.rel (%p155) target = $region28
      $region27: #{encoder_cnn_forward.10} parent=23 // pred_region
        %p158 = scmp.lt.s32.totalorder %s10, 1
        %s159 = scalar_select %p158, %s10, 1
        %s160 = smul.addr %s159, 8
        %s161 = smul.addr %s160, 4
        %s162 = scalar_lea.vmem %s0, %s161
      $region28: #{encoder_cnn_forward.10} parent=23 // pred_fallthru
        _
      // Predicated region
      $region29: #{encoder_cnn_forward.10} parent=23 // pred_check
        %p163 = pneg %p98
      $region30: #{encoder_cnn_forward.10} parent=23 // pred_check_branch
        %165 = sbr.rel (%p163) target = $region32
      $region31: #{encoder_cnn_forward.10} parent=23 // pred_region
        %p166 = scmp.lt.s32.totalorder %s10, 1
        %s167 = scalar_select %p166, %s10, 1
        %s168 = smul.addr %s167, 8
        %s169 = smul.addr %s168, 4
        %s170 = scalar_lea.vmem %s3, %s169
      $region32: #{encoder_cnn_forward.10} parent=23 // pred_fallthru
        _
    $region24: #{encoder_cnn_forward.10} parent=5 // pred_fallthru
      _
    %p171 = scmp.le.s32.totalorder 1, %s10
    %p172 = scmp.lt.s32.totalorder %s10, 3
    %p173 = pnand %p171, %p172
    %p174 = pneg %p173
    // Predicated region
    $region33: #{encoder_cnn_forward.10} parent=5 // pred_check
      _
    $region34: #{encoder_cnn_forward.10} parent=5 // pred_check_branch
      %176 = sbr.rel (%p173) target = $region36
    $region35: #{encoder_cnn_forward.10} parent=5 // pred_region
      %s177 = ssub.s32 %s10, 1
      %p178 = scmp.lt.s32.totalorder %s15, 1
      %s179 = scalar_select %p178, %s15, 1
      %s180 = smul.addr %s179, 8
      %s181 = smul.addr %s180, 4
      %s182 = scalar_lea.vmem %s0, %s181
      %p183 = pneg %p36
      %p184 = pneg %p33
      %p185 = pneg %p57
      %p186 = pneg %p54
      %p187 = pneg %p78
      %p188 = pneg %p75
      %p189 = scmp.lt.s32.totalorder %s15, 1
      %s190 = scalar_select %p189, %s15, 1
      %s191 = smul.addr %s190, 8
      %s192 = smul.addr %s191, 4
      %s193 = scalar_lea.vmem %s3, %s192
      %p194 = pneg %p104
      %p195 = pneg %p101
      %p196 = pneg %p130
      %p197 = pneg %p127
      %p198 = scmp.lt.s32.totalorder %s15, 1
      %s199 = scalar_select %p198, %s15, 1
      %s200 = smul.addr %s199, 8
      %s201 = smul.addr %s200, 4
      %s202 = scalar_lea.vmem %s4, %s201
      %p203 = scmp.lt.s32.totalorder %s15, 1
      %s204 = scalar_select %p203, %s15, 1
      %s205 = smul.addr %s204, 8
      %s206 = smul.addr %s205, 4
      %s207 = scalar_lea.vmem %s0, %s206
      %p208 = scmp.lt.s32.totalorder %s15, 1
      %s209 = scalar_select %p208, %s15, 1
      %s210 = smul.addr %s209, 8
      %s211 = smul.addr %s210, 4
      %s212 = scalar_lea.vmem %s3, %s211
      %p213 = scmp.lt.s32.totalorder %s15, 1
      %s214 = scalar_select %p213, %s15, 1
      %s215 = smul.addr %s214, 8
      %s216 = smul.addr %s215, 4
      %s217 = scalar_lea.vmem %s4, %s216
      %v219 = vld [vmem:[%s207] sm:$0xf]
      %v220 = vld [vmem:[%s207 + $0x4] sm:$0xf]
      %v221 = vld [vmem:[%s207 + $0x8] sm:$0xf]
      %v222 = vld [vmem:[%s207 + $0xc] sm:$0xf]
      %v223 = vld [vmem:[%s207 + $0x10] sm:$0xf]
      %v224 = vld [vmem:[%s207 + $0x14] sm:$0xf]
      %v225 = vld [vmem:[%s207 + $0x18] sm:$0xf]
      %v226 = vld [vmem:[%s207 + $0x1c] sm:$0xf]
      %v227 = vunpack.c.l.bf16 %v219
      %v228 = vunpack.c.l.bf16 %v220
      %v229 = vunpack.c.l.bf16 %v221
      %v230 = vunpack.c.l.bf16 %v222
      %v231 = vunpack.c.l.bf16 %v223
      %v232 = vunpack.c.l.bf16 %v224
      %v233 = vunpack.c.l.bf16 %v225
      %v234 = vunpack.c.l.bf16 %v226
      %v235 = vpack.c.bf16 %v228, %v227
      %v236 = vpack.c.bf16 %v230, %v229
      %v237 = vpack.c.bf16 %v232, %v231
      %v238 = vpack.c.bf16 %v234, %v233
      %v239 = vld [vmem:[%s1] sm:$0xf]
      %v240 = vld [vmem:[%s1 + $0x4] sm:$0xf]
      %v241 = vld [vmem:[%s1 + $0x8] sm:$0xf]
      %v242 = vld [vmem:[%s1 + $0xc] sm:$0xf]
      %v243 = vld [vmem:[%s1 + $0x10] sm:$0xf]
      %v244 = vld [vmem:[%s1 + $0x14] sm:$0xf]
      %v245 = vld [vmem:[%s1 + $0x18] sm:$0xf]
      %v246 = vld [vmem:[%s1 + $0x1c] sm:$0xf]
      %v247 = vld [vmem:[%s1 + $0x20] sm:$0xf]
      %v248 = vld [vmem:[%s1 + $0x24] sm:$0xf]
      %v249 = vld [vmem:[%s1 + $0x28] sm:$0xf]
      %v250 = vld [vmem:[%s1 + $0x2c] sm:$0xf]
      %v251 = vld [vmem:[%s1 + $0x30] sm:$0xf]
      %v252 = vld [vmem:[%s1 + $0x34] sm:$0xf]
      %v253 = vld [vmem:[%s1 + $0x38] sm:$0xf]
      %v254 = vld [vmem:[%s1 + $0x3c] sm:$0xf]
      %v255 = vld [vmem:[%s2] sm:$0x1]
      %v257 = vlaneseq
      %v258 = vshrl.u32 %v257, 7
      %v259 = vsub.s32 0, %v258
      %v260 = vrot.slane %v255, %v259
      %v278 = vunpack.c.l.b16 %v239
      %v279 = vunpack.c.l.b16 %v240
      %v280 = vunpack.c.l.b16 %v241
      %v281 = vunpack.c.l.b16 %v242
      %v282 = vunpack.c.l.b16 %v243
      %v283 = vunpack.c.l.b16 %v244
      %v284 = vunpack.c.l.b16 %v245
      %v285 = vunpack.c.l.b16 %v246
      %v286 = vunpack.c.l.b16 %v247
      %v287 = vunpack.c.l.b16 %v248
      %v288 = vunpack.c.l.b16 %v249
      %v289 = vunpack.c.l.b16 %v250
      %v290 = vunpack.c.l.b16 %v251
      %v291 = vunpack.c.l.b16 %v252
      %v292 = vunpack.c.l.b16 %v253
      %v293 = vunpack.c.l.b16 %v254
      %v294 = vpack.c.b16 %v279, %v278
      %v295 = vpack.c.b16 %v281, %v280
      %v296 = vpack.c.b16 %v283, %v282
      %v297 = vpack.c.b16 %v285, %v284
      %v298 = vpack.c.b16 %v287, %v286
      %v299 = vpack.c.b16 %v289, %v288
      %v300 = vpack.c.b16 %v291, %v290
      %v301 = vpack.c.b16 %v293, %v292
      %310 = vmatprep.subr.bf16.mxu0 0
      %311 = vmatpush1.bf16.msra.mxu0 %v294
      %312 = vmatprep.subr.bf16.mxu0 0
      %313 = vmatpush1.bf16.msra.mxu0 %v295
      %314 = vmatprep.subr.bf16.mxu0 0
      %315 = vmatpush1.bf16.msra.mxu0 %v296
      %316 = vmatprep.subr.bf16.mxu0 0
      %317 = vmatpush1.bf16.msra.mxu0 %v297
      %318 = vmatprep.subr.bf16.mxu0 0
      %319 = vmatpush1.bf16.msra.mxu0 %v298
      %320 = vmatprep.subr.bf16.mxu0 0
      %321 = vmatpush1.bf16.msra.mxu0 %v299
      %322 = vmatprep.subr.bf16.mxu0 0
      %323 = vmatpush1.bf16.msra.mxu0 %v300
      %324 = vmatprep.subr.bf16.mxu0 0
      %325 = vmatpush1.bf16.msra.mxu0 %v301
      %326 = vmatprep.subr.bf16.mxu0 0
      %327 = vmatpush1.bf16.msra.mxu0 0
      %328 = vmatprep.subr.bf16.mxu0 0
      %329 = vmatpush1.bf16.msra.mxu0 0
      %330 = vmatprep.subr.bf16.mxu0 0
      %331 = vmatpush1.bf16.msra.mxu0 0
      %332 = vmatprep.subr.bf16.mxu0 0
      %333 = vmatpush1.bf16.msra.mxu0 0
      %334 = vmatprep.subr.bf16.mxu0 0
      %335 = vmatpush1.bf16.msra.mxu0 0
      %336 = vmatprep.subr.bf16.mxu0 0
      %337 = vmatpush1.bf16.msra.mxu0 0
      %338 = vmatprep.subr.bf16.mxu0 0
      %339 = vmatpush1.bf16.msra.mxu0 0
      %340 = vmatprep.subr.bf16.mxu0 0
      %341 = vmatpush1.bf16.msra.mxu0 0
      %342 = vmatprep.mubr.bf16.mxu0 0
      %343 = vmatmul.mubr.bf16.gmra.mrb[0].mxu0 %v235
      %v344 = vpop.f32.mrb[0].mxu0
      %v345 = vadd.f32 %v260, %v344
      %v346 = vpop.f32.mrb[0].mxu0
      %v347 = vpop.f32.mrb[0].mxu0
      %v348 = vadd.f32 %v260, %v347
      %v349 = vpop.f32.mrb[0].mxu0
      %350 = vmatprep.mubr.bf16.mxu0 0
      %351 = vmatmul.mubr.bf16.gmra.mrb[0].mxu0 %v236
      %v352 = vpop.f32.mrb[0].mxu0
      %v353 = vadd.f32 %v260, %v352
      %v354 = vpop.f32.mrb[0].mxu0
      %v355 = vpop.f32.mrb[0].mxu0
      %v356 = vadd.f32 %v260, %v355
      %v357 = vpop.f32.mrb[0].mxu0
      %358 = vmatprep.mubr.bf16.mxu0 0
      %359 = vmatmul.mubr.bf16.gmra.mrb[0].mxu0 %v237
      %v360 = vpop.f32.mrb[0].mxu0
      %v361 = vadd.f32 %v260, %v360
      %v362 = vpop.f32.mrb[0].mxu0
      %v363 = vpop.f32.mrb[0].mxu0
      %v364 = vadd.f32 %v260, %v363
      %v365 = vpop.f32.mrb[0].mxu0
      %366 = vmatprep.mubr.bf16.mxu0 0
      %367 = vmatmul.mubr.bf16.gmra.mrb[0].mxu0 %v238
      %v368 = vpop.f32.mrb[0].mxu0
      %v369 = vadd.f32 %v260, %v368
      %v370 = vpop.f32.mrb[0].mxu0
      %v371 = vpop.f32.mrb[0].mxu0
      %v372 = vadd.f32 %v260, %v371
      %v373 = vpop.f32.mrb[0].mxu0
      %374 = vdwg.mxu0
      %v375 = vld [vmem:[%s212] sm:$0xf]
      %v376 = vld [vmem:[%s212 + $0x4] sm:$0xf]
      %v377 = vld [vmem:[%s212 + $0x8] sm:$0xf]
      %v378 = vld [vmem:[%s212 + $0xc] sm:$0xf]
      %v379 = vld [vmem:[%s212 + $0x10] sm:$0xf]
      %v380 = vld [vmem:[%s212 + $0x14] sm:$0xf]
      %v381 = vld [vmem:[%s212 + $0x18] sm:$0xf]
      %v382 = vld [vmem:[%s212 + $0x1c] sm:$0xf]
      %v383 = vunpack.c.l.bf16 %v375
      %v384 = vunpack.c.l.bf16 %v376
      %v385 = vunpack.c.l.bf16 %v377
      %v386 = vunpack.c.l.bf16 %v378
      %v387 = vunpack.c.l.bf16 %v379
      %v388 = vunpack.c.l.bf16 %v380
      %v389 = vunpack.c.l.bf16 %v381
      %v390 = vunpack.c.l.bf16 %v382
      %v391 = vadd.f32 %v345, %v383
      %v392 = vadd.f32 %v348, %v384
      %v393 = vadd.f32 %v353, %v385
      %v394 = vadd.f32 %v356, %v386
      %v395 = vadd.f32 %v361, %v387
      %v396 = vadd.f32 %v364, %v388
      %v397 = vadd.f32 %v369, %v389
      %v398 = vadd.f32 %v372, %v390
      %v399 = vmax.f32 %v391, 0.0
      %v400 = vmax.f32 %v392, 0.0
      %v401 = vmax.f32 %v393, 0.0
      %v402 = vmax.f32 %v394, 0.0
      %v403 = vmax.f32 %v395, 0.0
      %v404 = vmax.f32 %v396, 0.0
      %v405 = vmax.f32 %v397, 0.0
      %v406 = vmax.f32 %v398, 0.0
      %v407 = vpack.c.bf16 %v400, %v399
      %v408 = vpack.c.bf16 %v402, %v401
      %v409 = vpack.c.bf16 %v404, %v403
      %v410 = vpack.c.bf16 %v406, %v405
      %v415 = vunpack.c.l.b16 %v407
      %v416 = vunpack.c.h.b16 %v407
      %v417 = vunpack.c.l.b16 %v408
      %v418 = vunpack.c.h.b16 %v408
      %v419 = vunpack.c.l.b16 %v409
      %v420 = vunpack.c.h.b16 %v409
      %v421 = vunpack.c.l.b16 %v410
      %v422 = vunpack.c.h.b16 %v410
      %v423 = vpack.c.b16 %v415, %v415
      %v424 = vpack.c.b16 %v416, %v416
      %v425 = vpack.c.b16 %v417, %v417
      %v426 = vpack.c.b16 %v418, %v418
      %v427 = vpack.c.b16 %v419, %v419
      %v428 = vpack.c.b16 %v420, %v420
      %v429 = vpack.c.b16 %v421, %v421
      %v430 = vpack.c.b16 %v422, %v422
      %439 = vst [vmem:[%s217] sm:$0xf] %v423
      %440 = vst [vmem:[%s217 + $0x4] sm:$0xf] %v424
      %441 = vst [vmem:[%s217 + $0x8] sm:$0xf] %v425
      %442 = vst [vmem:[%s217 + $0xc] sm:$0xf] %v426
      %443 = vst [vmem:[%s217 + $0x10] sm:$0xf] %v427
      %444 = vst [vmem:[%s217 + $0x14] sm:$0xf] %v428
      %445 = vst [vmem:[%s217 + $0x18] sm:$0xf] %v429
      %446 = vst [vmem:[%s217 + $0x1c] sm:$0xf] %v430
      %p447 = scmp.lt.s32.totalorder %s15, 1
      %s448 = scalar_select %p447, %s15, 1
      %s449 = smul.addr %s448, 8
      %s450 = smul.addr %s449, 4
      %s451 = scalar_lea.vmem %s4, %s450
      // Predicated region
      $region37: #{encoder_cnn_forward.10} parent=35 // pred_check
        %p452 = pneg %p127
      $region38: #{encoder_cnn_forward.10} parent=35 // pred_check_branch
        %454 = sbr.rel (%p452) target = $region40
      $region39: #{encoder_cnn_forward.10} parent=35 // pred_region
        _
      $region40: #{encoder_cnn_forward.10} parent=35 // pred_fallthru
        _
    $region36: #{encoder_cnn_forward.10} parent=5 // pred_fallthru
      _
    %p455 = scmp.le.s32.totalorder 2, %s10
    // Predicated region
    $region41: #{encoder_cnn_forward.10} parent=5 // pred_check
      %p456 = pneg %p455
    $region42: #{encoder_cnn_forward.10} parent=5 // pred_check_branch
      %458 = sbr.rel (%p456) target = $region44
    $region43: #{encoder_cnn_forward.10} parent=5 // pred_region
      %s459 = ssub.s32 %s10, 2
      // Predicated region
      $region45: #{encoder_cnn_forward.10} parent=43 // pred_check
        %p460 = pneg %p133
      $region46: #{encoder_cnn_forward.10} parent=43 // pred_check_branch
        %462 = sbr.rel (%p460) target = $region48
      $region47: #{encoder_cnn_forward.10} parent=43 // pred_region
        %p463 = scmp.lt.s32.totalorder %s16, 1
        %s464 = scalar_select %p463, %s16, 1
        %s465 = smul.addr %s464, 8
        %s466 = smul.addr %s465, 4
        %s467 = scalar_lea.vmem %s4, %s466
      $region48: #{encoder_cnn_forward.10} parent=43 // pred_fallthru
        _
    $region44: #{encoder_cnn_forward.10} parent=5 // pred_fallthru
      _
  $region6: #{encoder_cnn_forward.10} parent=0 // loop_footer
    %s14 = sadd.s32 1, %s10
  $region7: #{encoder_cnn_forward.10} parent=0 // loop_footer_branch
    %9 = sbr.rel target = $region3
  $region8: #{encoder_cnn_forward.10} parent=0 // loop_exit
    _

// kernel: encoder_cnn_forward.11
$region0: #{encoder_cnn_forward.11}
  #allocation0 [shape = 'u32[]', space=smem, size = 0x4, offset = 0x4, fixed_abs, tag = 'smem constant byte address 0x4 - core index']
  #allocation1 [shape = 'u32[144,128]{1,0:T(1,128)}', space=vmem, size = 0x12000, scoped, tag = 'internal scratch']
  %s0 = inlined_call_operand.vmem [shape: bf16[2,64,128], index: 0, kind: input, shape index: {}]
  %s1 = inlined_call_operand.vmem [shape: bf16[128,256], index: 1, kind: input, shape index: {}]
  %s2 = inlined_call_operand.vmem [shape: f32[1,256], index: 2, kind: input, shape index: {}]
  %s3 = inlined_call_operand.vmem [shape: f32[2,1,256], index: 3, kind: output, shape index: {}]
  %s4 = sld [smem:[#allocation0]]
  $region45: #{encoder_cnn_forward.11} parent=0
    _
  %s6 = ssub.s32 1, %s4
  %s7 = scalar_select 0, %s6, %s4
  loop: start=0, step=1, limit=4
  $region2: #{encoder_cnn_forward.11} parent=0 // loop_pre_header
    _
  $region3: #{encoder_cnn_forward.11} parent=0 // loop_header
    %s9 = sphi 0, %s13
    %p10 = scmp.ge.s32.totalorder %s9, 4
    %s19 = sphi 0, %s21
    %s22 = sphi 0, %s19
    %s23 = sphi 0, %s22
    %s39 = sphi 0, %s23
    %s43 = sphi 0, %s43
    %s45 = sphi 0, %s43
    %s46 = sphi 0, %s45
    %s60 = sphi 0, %s46
    %s64 = sphi 0, %s64
    %s66 = sphi 0, %s64
    %s67 = sphi 0, %s66
    %s81 = sphi 0, %s67
    %s87 = sphi 0, %s89
    %s90 = sphi 0, %s87
    %s91 = sphi 0, %s90
    %s107 = sphi 0, %s91
  $region4: #{encoder_cnn_forward.11} parent=0 // loop_header_branch
    %12 = sbr.rel (%p10) target = $region8
  $region5: #{encoder_cnn_forward.11} parent=0 // loop_body
    %s14 = ssub.s32 %s9, 1
    %s15 = ssub.s32 %s9, 2
    %s16 = sadd.s32 %s9, 1
    %s17 = ssub.s32 %s9, %s16
    %p18 = scmp.eq.s32.totalorder %s17, 0
    %s20 = sadd.s32 %s19, 1
    %s21 = scalar_select %p18, %s19, %s20
    %p24 = pneg %p18
    %p25 = scmp.eq.s32.totalorder %s9, 1
    %p26 = por %p24, %p25
    %p27 = scmp.ne.s32.totalorder %s19, %s22
    %p28 = scmp.eq.s32.totalorder %s9, 0
    %p29 = por %p27, %p28
    %p30 = scmp.ne.s32.totalorder %s19, %s22
    %p31 = scmp.eq.s32.totalorder %s14, 1
    %p32 = por %p30, %p31
    %p33 = scmp.ne.s32.totalorder %s22, %s23
    %p34 = scmp.eq.s32.totalorder %s14, 0
    %p35 = por %p33, %p34
    %p36 = scmp.ne.s32.totalorder %s22, %s23
    %p37 = scmp.eq.s32.totalorder %s15, 1
    %p38 = por %p36, %p37
    %p40 = scmp.ne.s32.totalorder %s23, %s39
    %p41 = scmp.eq.s32.totalorder %s15, 0
    %p42 = por %p40, %p41
    %s44 = sadd.s32 %s43, 1
    %p47 = scmp.eq.s32.totalorder %s9, 1
    %p48 = scmp.ne.s32.totalorder %s43, %s45
    %p49 = scmp.eq.s32.totalorder %s9, 0
    %p50 = por %p48, %p49
    %p51 = scmp.ne.s32.totalorder %s43, %s45
    %p52 = scmp.eq.s32.totalorder %s14, 1
    %p53 = por %p51, %p52
    %p54 = scmp.ne.s32.totalorder %s45, %s46
    %p55 = scmp.eq.s32.totalorder %s14, 0
    %p56 = por %p54, %p55
    %p57 = scmp.ne.s32.totalorder %s45, %s46
    %p58 = scmp.eq.s32.totalorder %s15, 1
    %p59 = por %p57, %p58
    %p61 = scmp.ne.s32.totalorder %s46, %s60
    %p62 = scmp.eq.s32.totalorder %s15, 0
    %p63 = por %p61, %p62
    %s65 = sadd.s32 %s64, 1
    %p68 = scmp.eq.s32.totalorder %s9, 1
    %p69 = scmp.ne.s32.totalorder %s64, %s66
    %p70 = scmp.eq.s32.totalorder %s9, 0
    %p71 = por %p69, %p70
    %p72 = scmp.ne.s32.totalorder %s64, %s66
    %p73 = scmp.eq.s32.totalorder %s14, 1
    %p74 = por %p72, %p73
    %p75 = scmp.ne.s32.totalorder %s66, %s67
    %p76 = scmp.eq.s32.totalorder %s14, 0
    %p77 = por %p75, %p76
    %p78 = scmp.ne.s32.totalorder %s66, %s67
    %p79 = scmp.eq.s32.totalorder %s15, 1
    %p80 = por %p78, %p79
    %p82 = scmp.ne.s32.totalorder %s67, %s81
    %p83 = scmp.eq.s32.totalorder %s15, 0
    %p84 = por %p82, %p83
    %s85 = ssub.s32 %s9, %s16
    %p86 = scmp.eq.s32.totalorder %s85, 0
    %s88 = sadd.s32 %s87, 1
    %s89 = scalar_select %p86, %s87, %s88
    %p92 = pneg %p86
    %p93 = scmp.eq.s32.totalorder %s9, 1
    %p94 = por %p92, %p93
    %p95 = scmp.ne.s32.totalorder %s87, %s90
    %p96 = scmp.eq.s32.totalorder %s9, 0
    %p97 = por %p95, %p96
    %p98 = scmp.ne.s32.totalorder %s87, %s90
    %p99 = scmp.eq.s32.totalorder %s14, 1
    %p100 = por %p98, %p99
    %p101 = scmp.ne.s32.totalorder %s90, %s91
    %p102 = scmp.eq.s32.totalorder %s14, 0
    %p103 = por %p101, %p102
    %p104 = scmp.ne.s32.totalorder %s90, %s91
    %p105 = scmp.eq.s32.totalorder %s15, 1
    %p106 = por %p104, %p105
    %p108 = scmp.ne.s32.totalorder %s91, %s107
    %p109 = scmp.eq.s32.totalorder %s15, 0
    %p110 = por %p108, %p109
    %p111 = scmp.le.s32.totalorder 1, %s9
    %p112 = scmp.lt.s32.totalorder %s9, 3
    %p113 = pnand %p111, %p112
    %p114 = pneg %p113
    // Predicated region
    $region9: #{encoder_cnn_forward.11} parent=5 // pred_check
      _
    $region10: #{encoder_cnn_forward.11} parent=5 // pred_check_branch
      %116 = sbr.rel (%p113) target = $region12
    $region11: #{encoder_cnn_forward.11} parent=5 // pred_region
      %s117 = ssub.s32 %s9, 1
      // Predicated region
      $region13: #{encoder_cnn_forward.11} parent=11 // pred_check
        %p118 = pneg %p56
      $region14: #{encoder_cnn_forward.11} parent=11 // pred_check_branch
        %120 = sbr.rel (%p118) target = $region16
      $region15: #{encoder_cnn_forward.11} parent=11 // pred_region
        _
      $region16: #{encoder_cnn_forward.11} parent=11 // pred_fallthru
        _
      // Predicated region
      $region17: #{encoder_cnn_forward.11} parent=11 // pred_check
        %p121 = pneg %p77
      $region18: #{encoder_cnn_forward.11} parent=11 // pred_check_branch
        %123 = sbr.rel (%p121) target = $region20
      $region19: #{encoder_cnn_forward.11} parent=11 // pred_region
        _
      $region20: #{encoder_cnn_forward.11} parent=11 // pred_fallthru
        _
    $region12: #{encoder_cnn_forward.11} parent=5 // pred_fallthru
      _
    %p124 = scmp.lt.s32.totalorder %s9, 2
    // Predicated region
    $region21: #{encoder_cnn_forward.11} parent=5 // pred_check
      %p125 = pneg %p124
    $region22: #{encoder_cnn_forward.11} parent=5 // pred_check_branch
      %127 = sbr.rel (%p125) target = $region24
    $region23: #{encoder_cnn_forward.11} parent=5 // pred_region
      // Predicated region
      $region25: #{encoder_cnn_forward.11} parent=23 // pred_check
        %p128 = pneg %p29
      $region26: #{encoder_cnn_forward.11} parent=23 // pred_check_branch
        %130 = sbr.rel (%p128) target = $region28
      $region27: #{encoder_cnn_forward.11} parent=23 // pred_region
        %p131 = scmp.lt.s32.totalorder %s9, 1
        %s132 = scalar_select %p131, %s9, 1
        %s133 = smul.addr %s132, 8
        %s134 = smul.addr %s133, 4
        %s135 = scalar_lea.vmem %s0, %s134
      $region28: #{encoder_cnn_forward.11} parent=23 // pred_fallthru
        _
    $region24: #{encoder_cnn_forward.11} parent=5 // pred_fallthru
      _
    %p136 = scmp.le.s32.totalorder 1, %s9
    %p137 = scmp.lt.s32.totalorder %s9, 3
    %p138 = pnand %p136, %p137
    %p139 = pneg %p138
    // Predicated region
    $region29: #{encoder_cnn_forward.11} parent=5 // pred_check
      _
    $region30: #{encoder_cnn_forward.11} parent=5 // pred_check_branch
      %141 = sbr.rel (%p138) target = $region32
    $region31: #{encoder_cnn_forward.11} parent=5 // pred_region
      %s142 = ssub.s32 %s9, 1
      %p143 = scmp.lt.s32.totalorder %s14, 1
      %s144 = scalar_select %p143, %s14, 1
      %s145 = smul.addr %s144, 8
      %s146 = smul.addr %s145, 4
      %s147 = scalar_lea.vmem %s0, %s146
      %p148 = pneg %p35
      %p149 = pneg %p32
      %p150 = pneg %p56
      %p151 = pneg %p53
      %p152 = pneg %p77
      %p153 = pneg %p74
      %p154 = pneg %p103
      %p155 = pneg %p100
      %p156 = scmp.lt.s32.totalorder %s14, 1
      %s157 = scalar_select %p156, %s14, 1
      %s158 = smul.addr %s157, 2
      %s159 = scalar_lea.vmem %s3, %s158
      %p160 = scmp.lt.s32.totalorder %s14, 1
      %s161 = scalar_select %p160, %s14, 1
      %s162 = smul.addr %s161, 8
      %s163 = smul.addr %s162, 4
      %s164 = scalar_lea.vmem %s0, %s163
      %p165 = scmp.lt.s32.totalorder %s14, 1
      %s166 = scalar_select %p165, %s14, 1
      %s167 = smul.addr %s166, 2
      %s168 = scalar_lea.vmem %s3, %s167
      %v170 = vld [vmem:[%s164] sm:$0xf]
      %v171 = vld [vmem:[%s164 + $0x4] sm:$0xf]
      %v172 = vld [vmem:[%s164 + $0x8] sm:$0xf]
      %v173 = vld [vmem:[%s164 + $0xc] sm:$0xf]
      %v174 = vld [vmem:[%s164 + $0x10] sm:$0xf]
      %v175 = vld [vmem:[%s164 + $0x14] sm:$0xf]
      %v176 = vld [vmem:[%s164 + $0x18] sm:$0xf]
      %v177 = vld [vmem:[%s164 + $0x1c] sm:$0xf]
      %v178 = vunpack.c.l.bf16 %v170
      %v179 = vunpack.c.l.bf16 %v171
      %v180 = vunpack.c.l.bf16 %v172
      %v181 = vunpack.c.l.bf16 %v173
      %v182 = vunpack.c.l.bf16 %v174
      %v183 = vunpack.c.l.bf16 %v175
      %v184 = vunpack.c.l.bf16 %v176
      %v185 = vunpack.c.l.bf16 %v177
      %v186 = vadd.f32 %v178, %v179
      %v187 = vadd.f32 %v186, %v180
      %v188 = vadd.f32 %v187, %v181
      %v189 = vadd.f32 %v188, %v182
      %v190 = vadd.f32 %v189, %v183
      %v191 = vadd.f32 %v190, %v184
      %v192 = vadd.f32 %v191, %v185
      %v193 = vrot.slane %v192, 4
      %v194 = vadd.f32 %v192, %v193
      %v195 = vrot.slane %v194, 2
      %v196 = vadd.f32 %v194, %v195
      %v197 = vrot.slane %v196, 1
      %v198 = vadd.f32 %v196, %v197
      %v199 = vrcp.pop 64.0
      %v200 = vmul.f32 %v198, %v199
      %v201 = vpack.c.bf16 %v200, %v200
      %v202 = vld [vmem:[%s1] sm:$0xff]
      %v203 = vld [vmem:[%s1 + $0x8] sm:$0xff]
      %v204 = vld [vmem:[%s1 + $0x10] sm:$0xff]
      %v205 = vld [vmem:[%s1 + $0x18] sm:$0xff]
      %v206 = vld [vmem:[%s1 + $0x20] sm:$0xff]
      %v207 = vld [vmem:[%s1 + $0x28] sm:$0xff]
      %v208 = vld [vmem:[%s1 + $0x30] sm:$0xff]
      %v209 = vld [vmem:[%s1 + $0x38] sm:$0xff]
      %v210 = vld [vmem:[%s1 + $0x40] sm:$0xff]
      %v211 = vld [vmem:[%s1 + $0x48] sm:$0xff]
      %v212 = vld [vmem:[%s1 + $0x50] sm:$0xff]
      %v213 = vld [vmem:[%s1 + $0x58] sm:$0xff]
      %v214 = vld [vmem:[%s1 + $0x60] sm:$0xff]
      %v215 = vld [vmem:[%s1 + $0x68] sm:$0xff]
      %v216 = vld [vmem:[%s1 + $0x70] sm:$0xff]
      %v217 = vld [vmem:[%s1 + $0x78] sm:$0xff]
      %v218 = vld [vmem:[%s2] sm:$0x3]
      %v235 = vunpack.c.l.b16 %v202
      %v236 = vunpack.c.h.b16 %v202
      %v237 = vunpack.c.l.b16 %v203
      %v238 = vunpack.c.h.b16 %v203
      %v239 = vunpack.c.l.b16 %v204
      %v240 = vunpack.c.h.b16 %v204
      %v241 = vunpack.c.l.b16 %v205
      %v242 = vunpack.c.h.b16 %v205
      %v243 = vunpack.c.l.b16 %v206
      %v244 = vunpack.c.h.b16 %v206
      %v245 = vunpack.c.l.b16 %v207
      %v246 = vunpack.c.h.b16 %v207
      %v247 = vunpack.c.l.b16 %v208
      %v248 = vunpack.c.h.b16 %v208
      %v249 = vunpack.c.l.b16 %v209
      %v250 = vunpack.c.h.b16 %v209
      %v251 = vunpack.c.l.b16 %v210
      %v252 = vunpack.c.h.b16 %v210
      %v253 = vunpack.c.l.b16 %v211
      %v254 = vunpack.c.h.b16 %v211
      %v255 = vunpack.c.l.b16 %v212
      %v256 = vunpack.c.h.b16 %v212
      %v257 = vunpack.c.l.b16 %v213
      %v258 = vunpack.c.h.b16 %v213
      %v259 = vunpack.c.l.b16 %v214
      %v260 = vunpack.c.h.b16 %v214
      %v261 = vunpack.c.l.b16 %v215
      %v262 = vunpack.c.h.b16 %v215
      %v263 = vunpack.c.l.b16 %v216
      %v264 = vunpack.c.h.b16 %v216
      %v265 = vunpack.c.l.b16 %v217
      %v266 = vunpack.c.h.b16 %v217
      %v267 = vpack.c.b16 %v237, %v235
      %v268 = vpack.c.b16 %v238, %v236
      %v269 = vpack.c.b16 %v241, %v239
      %v270 = vpack.c.b16 %v242, %v240
      %v271 = vpack.c.b16 %v245, %v243
      %v272 = vpack.c.b16 %v246, %v244
      %v273 = vpack.c.b16 %v249, %v247
      %v274 = vpack.c.b16 %v250, %v248
      %v275 = vpack.c.b16 %v253, %v251
      %v276 = vpack.c.b16 %v254, %v252
      %v277 = vpack.c.b16 %v257, %v255
      %v278 = vpack.c.b16 %v258, %v256
      %v279 = vpack.c.b16 %v261, %v259
      %v280 = vpack.c.b16 %v262, %v260
      %v281 = vpack.c.b16 %v265, %v263
      %v282 = vpack.c.b16 %v266, %v264
      %v300 = vlaneseq
      %v301 = vshrl.u32 %v300, 7
      %v302 = vsub.s32 0, %v301
      %v303 = vrot.slane %v218, %v302
      %v304 = vlaneseq
      %v305 = vshrl.u32 %v304, 7
      %v306 = vsub.s32 1, %v305
      %v307 = vrot.slane %v218, %v306
      %310 = vmatprep.subr.bf16.mxu0 %v268
      %311 = vmatpush1.bf16.msra.mxu0 %v267
      %312 = vmatprep.subr.bf16.mxu0 %v270
      %313 = vmatpush1.bf16.msra.mxu0 %v269
      %314 = vmatprep.subr.bf16.mxu0 %v272
      %315 = vmatpush1.bf16.msra.mxu0 %v271
      %316 = vmatprep.subr.bf16.mxu0 %v274
      %317 = vmatpush1.bf16.msra.mxu0 %v273
      %318 = vmatprep.subr.bf16.mxu0 %v276
      %319 = vmatpush1.bf16.msra.mxu0 %v275
      %320 = vmatprep.subr.bf16.mxu0 %v278
      %321 = vmatpush1.bf16.msra.mxu0 %v277
      %322 = vmatprep.subr.bf16.mxu0 %v280
      %323 = vmatpush1.bf16.msra.mxu0 %v279
      %324 = vmatprep.subr.bf16.mxu0 %v282
      %325 = vmatpush1.bf16.msra.mxu0 %v281
      %326 = vmatprep.subr.bf16.mxu0 0
      %327 = vmatpush1.bf16.msra.mxu0 0
      %328 = vmatprep.subr.bf16.mxu0 0
      %329 = vmatpush1.bf16.msra.mxu0 0
      %330 = vmatprep.subr.bf16.mxu0 0
      %331 = vmatpush1.bf16.msra.mxu0 0
      %332 = vmatprep.subr.bf16.mxu0 0
      %333 = vmatpush1.bf16.msra.mxu0 0
      %334 = vmatprep.subr.bf16.mxu0 0
      %335 = vmatpush1.bf16.msra.mxu0 0
      %336 = vmatprep.subr.bf16.mxu0 0
      %337 = vmatpush1.bf16.msra.mxu0 0
      %338 = vmatprep.subr.bf16.mxu0 0
      %339 = vmatpush1.bf16.msra.mxu0 0
      %340 = vmatprep.subr.bf16.mxu0 0
      %341 = vmatpush1.bf16.msra.mxu0 0
      %342 = vmatprep.mubr.bf16.mxu0 0
      %343 = vmatmul.mubr.bf16.gmra.mrb[0].mxu0 %v201
      %v344 = vpop.f32.mrb[0].mxu0
      %v345 = vadd.f32 %v303, %v344
      %v346 = vpop.f32.mrb[0].mxu0
      %v347 = vadd.f32 %v307, %v346
      %v348 = vpop.f32.mrb[0].mxu0
      %v349 = vpop.f32.mrb[0].mxu0
      %350 = vdwg.mxu0
      %v353 = vcombine.low %v345, %v347
      %v355 = vunpack.c.l.s4 1966171168
      %v356 = vunpack.c.0.s8 %v355
      %v357 = vlaneseq
      %v358 = vshrl.u32 %v357, 7
      %v359 = vsub.s32 %v356, %v358
      %v360 = vrot.slane %v353, %v359
      %v362 = vunpack.c.l.s4 1966171168
      %v363 = vunpack.c.0.s8 %v362
      %v364 = vlaneseq
      %v365 = vshrl.u32 %v364, 7
      %v366 = vsub.s32 %v363, %v365
      %v367 = vrot.slane %v360, %v366
      %v369 = vlaneseq
      %vm370 = vcmp.ge.s32.totalorder %v369, 0
      %vm371 = vcmp.lt.s32.totalorder %v369, 256
      %vm372 = vmand %vm370, %vm371
      %373 = vst.msk [vmem:[%s168] sm:$0x3] %vm372, %v367
      %p374 = scmp.lt.s32.totalorder %s14, 1
      %s375 = scalar_select %p374, %s14, 1
      %s376 = smul.addr %s375, 2
      %s377 = scalar_lea.vmem %s3, %s376
      // Predicated region
      $region33: #{encoder_cnn_forward.11} parent=31 // pred_check
        %p378 = pneg %p100
      $region34: #{encoder_cnn_forward.11} parent=31 // pred_check_branch
        %380 = sbr.rel (%p378) target = $region36
      $region35: #{encoder_cnn_forward.11} parent=31 // pred_region
        _
      $region36: #{encoder_cnn_forward.11} parent=31 // pred_fallthru
        _
    $region32: #{encoder_cnn_forward.11} parent=5 // pred_fallthru
      _
    %p381 = scmp.le.s32.totalorder 2, %s9
    // Predicated region
    $region37: #{encoder_cnn_forward.11} parent=5 // pred_check
      %p382 = pneg %p381
    $region38: #{encoder_cnn_forward.11} parent=5 // pred_check_branch
      %384 = sbr.rel (%p382) target = $region40
    $region39: #{encoder_cnn_forward.11} parent=5 // pred_region
      %s385 = ssub.s32 %s9, 2
      // Predicated region
      $region41: #{encoder_cnn_forward.11} parent=39 // pred_check
        %p386 = pneg %p106
      $region42: #{encoder_cnn_forward.11} parent=39 // pred_check_branch
        %388 = sbr.rel (%p386) target = $region44
      $region43: #{encoder_cnn_forward.11} parent=39 // pred_region
        %p389 = scmp.lt.s32.totalorder %s15, 1
        %s390 = scalar_select %p389, %s15, 1
        %s391 = smul.addr %s390, 2
        %s392 = scalar_lea.vmem %s3, %s391
      $region44: #{encoder_cnn_forward.11} parent=39 // pred_fallthru
        _
    $region40: #{encoder_cnn_forward.11} parent=5 // pred_fallthru
      _
  $region6: #{encoder_cnn_forward.11} parent=0 // loop_footer
    %s13 = sadd.s32 1, %s9
  $region7: #{encoder_cnn_forward.11} parent=0 // loop_footer_branch
    %8 = sbr.rel target = $region3
  $region8: #{encoder_cnn_forward.11} parent=0 // loop_exit
    _

// kernel: encoder_cnn_forward.6
$region0: #{encoder_cnn_forward.6}
  #allocation0 [shape = 'u32[]', space=smem, size = 0x4, offset = 0x4, fixed_abs, tag = 'smem constant byte address 0x4 - core index']
  #allocation1 [shape = 'u32[144,128]{1,0:T(1,128)}', space=vmem, size = 0x12000, scoped, tag = 'internal scratch']
  %s0 = inlined_call_operand.vmem [shape: bf16[2,18,18,4], index: 0, kind: input, shape index: {}]
  %s1 = inlined_call_operand.vmem [shape: bf16[9,4,128], index: 1, kind: input, shape index: {}]
  %s2 = inlined_call_operand.vmem [shape: f32[1,128], index: 2, kind: input, shape index: {}]
  %s3 = inlined_call_operand.vmem [shape: bf16[2,256,128], index: 3, kind: output, shape index: {}]
  %s4 = sld [smem:[#allocation0]]
  $region45: #{encoder_cnn_forward.6} parent=0
    _
  %s6 = ssub.s32 1, %s4
  %s7 = scalar_select 0, %s6, %s4
  loop: start=0, step=1, limit=4
  $region2: #{encoder_cnn_forward.6} parent=0 // loop_pre_header
    _
  $region3: #{encoder_cnn_forward.6} parent=0 // loop_header
    %s9 = sphi 0, %s13
    %p10 = scmp.ge.s32.totalorder %s9, 4
    %s19 = sphi 0, %s21
    %s22 = sphi 0, %s19
    %s23 = sphi 0, %s22
    %s39 = sphi 0, %s23
    %s43 = sphi 0, %s43
    %s45 = sphi 0, %s43
    %s46 = sphi 0, %s45
    %s60 = sphi 0, %s46
    %s64 = sphi 0, %s64
    %s66 = sphi 0, %s64
    %s67 = sphi 0, %s66
    %s81 = sphi 0, %s67
    %s87 = sphi 0, %s89
    %s90 = sphi 0, %s87
    %s91 = sphi 0, %s90
    %s107 = sphi 0, %s91
  $region4: #{encoder_cnn_forward.6} parent=0 // loop_header_branch
    %12 = sbr.rel (%p10) target = $region8
  $region5: #{encoder_cnn_forward.6} parent=0 // loop_body
    %s14 = ssub.s32 %s9, 1
    %s15 = ssub.s32 %s9, 2
    %s16 = sadd.s32 %s9, 1
    %s17 = ssub.s32 %s9, %s16
    %p18 = scmp.eq.s32.totalorder %s17, 0
    %s20 = sadd.s32 %s19, 1
    %s21 = scalar_select %p18, %s19, %s20
    %p24 = pneg %p18
    %p25 = scmp.eq.s32.totalorder %s9, 1
    %p26 = por %p24, %p25
    %p27 = scmp.ne.s32.totalorder %s19, %s22
    %p28 = scmp.eq.s32.totalorder %s9, 0
    %p29 = por %p27, %p28
    %p30 = scmp.ne.s32.totalorder %s19, %s22
    %p31 = scmp.eq.s32.totalorder %s14, 1
    %p32 = por %p30, %p31
    %p33 = scmp.ne.s32.totalorder %s22, %s23
    %p34 = scmp.eq.s32.totalorder %s14, 0
    %p35 = por %p33, %p34
    %p36 = scmp.ne.s32.totalorder %s22, %s23
    %p37 = scmp.eq.s32.totalorder %s15, 1
    %p38 = por %p36, %p37
    %p40 = scmp.ne.s32.totalorder %s23, %s39
    %p41 = scmp.eq.s32.totalorder %s15, 0
    %p42 = por %p40, %p41
    %s44 = sadd.s32 %s43, 1
    %p47 = scmp.eq.s32.totalorder %s9, 1
    %p48 = scmp.ne.s32.totalorder %s43, %s45
    %p49 = scmp.eq.s32.totalorder %s9, 0
    %p50 = por %p48, %p49
    %p51 = scmp.ne.s32.totalorder %s43, %s45
    %p52 = scmp.eq.s32.totalorder %s14, 1
    %p53 = por %p51, %p52
    %p54 = scmp.ne.s32.totalorder %s45, %s46
    %p55 = scmp.eq.s32.totalorder %s14, 0
    %p56 = por %p54, %p55
    %p57 = scmp.ne.s32.totalorder %s45, %s46
    %p58 = scmp.eq.s32.totalorder %s15, 1
    %p59 = por %p57, %p58
    %p61 = scmp.ne.s32.totalorder %s46, %s60
    %p62 = scmp.eq.s32.totalorder %s15, 0
    %p63 = por %p61, %p62
    %s65 = sadd.s32 %s64, 1
    %p68 = scmp.eq.s32.totalorder %s9, 1
    %p69 = scmp.ne.s32.totalorder %s64, %s66
    %p70 = scmp.eq.s32.totalorder %s9, 0
    %p71 = por %p69, %p70
    %p72 = scmp.ne.s32.totalorder %s64, %s66
    %p73 = scmp.eq.s32.totalorder %s14, 1
    %p74 = por %p72, %p73
    %p75 = scmp.ne.s32.totalorder %s66, %s67
    %p76 = scmp.eq.s32.totalorder %s14, 0
    %p77 = por %p75, %p76
    %p78 = scmp.ne.s32.totalorder %s66, %s67
    %p79 = scmp.eq.s32.totalorder %s15, 1
    %p80 = por %p78, %p79
    %p82 = scmp.ne.s32.totalorder %s67, %s81
    %p83 = scmp.eq.s32.totalorder %s15, 0
    %p84 = por %p82, %p83
    %s85 = ssub.s32 %s9, %s16
    %p86 = scmp.eq.s32.totalorder %s85, 0
    %s88 = sadd.s32 %s87, 1
    %s89 = scalar_select %p86, %s87, %s88
    %p92 = pneg %p86
    %p93 = scmp.eq.s32.totalorder %s9, 1
    %p94 = por %p92, %p93
    %p95 = scmp.ne.s32.totalorder %s87, %s90
    %p96 = scmp.eq.s32.totalorder %s9, 0
    %p97 = por %p95, %p96
    %p98 = scmp.ne.s32.totalorder %s87, %s90
    %p99 = scmp.eq.s32.totalorder %s14, 1
    %p100 = por %p98, %p99
    %p101 = scmp.ne.s32.totalorder %s90, %s91
    %p102 = scmp.eq.s32.totalorder %s14, 0
    %p103 = por %p101, %p102
    %p104 = scmp.ne.s32.totalorder %s90, %s91
    %p105 = scmp.eq.s32.totalorder %s15, 1
    %p106 = por %p104, %p105
    %p108 = scmp.ne.s32.totalorder %s91, %s107
    %p109 = scmp.eq.s32.totalorder %s15, 0
    %p110 = por %p108, %p109
    %p111 = scmp.le.s32.totalorder 1, %s9
    %p112 = scmp.lt.s32.totalorder %s9, 3
    %p113 = pnand %p111, %p112
    %p114 = pneg %p113
    // Predicated region
    $region9: #{encoder_cnn_forward.6} parent=5 // pred_check
      _
    $region10: #{encoder_cnn_forward.6} parent=5 // pred_check_branch
      %116 = sbr.rel (%p113) target = $region12
    $region11: #{encoder_cnn_forward.6} parent=5 // pred_region
      %s117 = ssub.s32 %s9, 1
      // Predicated region
      $region13: #{encoder_cnn_forward.6} parent=11 // pred_check
        %p118 = pneg %p56
      $region14: #{encoder_cnn_forward.6} parent=11 // pred_check_branch
        %120 = sbr.rel (%p118) target = $region16
      $region15: #{encoder_cnn_forward.6} parent=11 // pred_region
        _
      $region16: #{encoder_cnn_forward.6} parent=11 // pred_fallthru
        _
      // Predicated region
      $region17: #{encoder_cnn_forward.6} parent=11 // pred_check
        %p121 = pneg %p77
      $region18: #{encoder_cnn_forward.6} parent=11 // pred_check_branch
        %123 = sbr.rel (%p121) target = $region20
      $region19: #{encoder_cnn_forward.6} parent=11 // pred_region
        _
      $region20: #{encoder_cnn_forward.6} parent=11 // pred_fallthru
        _
    $region12: #{encoder_cnn_forward.6} parent=5 // pred_fallthru
      _
    %p124 = scmp.lt.s32.totalorder %s9, 2
    // Predicated region
    $region21: #{encoder_cnn_forward.6} parent=5 // pred_check
      %p125 = pneg %p124
    $region22: #{encoder_cnn_forward.6} parent=5 // pred_check_branch
      %127 = sbr.rel (%p125) target = $region24
    $region23: #{encoder_cnn_forward.6} parent=5 // pred_region
      // Predicated region
      $region25: #{encoder_cnn_forward.6} parent=23 // pred_check
        %p128 = pneg %p29
      $region26: #{encoder_cnn_forward.6} parent=23 // pred_check_branch
        %130 = sbr.rel (%p128) target = $region28
      $region27: #{encoder_cnn_forward.6} parent=23 // pred_region
        %p131 = scmp.lt.s32.totalorder %s9, 1
        %s132 = scalar_select %p131, %s9, 1
        %s133 = smul.addr %s132, 54
        %s134 = smul.addr %s133, 4
        %s135 = scalar_lea.vmem %s0, %s134
      $region28: #{encoder_cnn_forward.6} parent=23 // pred_fallthru
        _
    $region24: #{encoder_cnn_forward.6} parent=5 // pred_fallthru
      _
    %p136 = scmp.le.s32.totalorder 1, %s9
    %p137 = scmp.lt.s32.totalorder %s9, 3
    %p138 = pnand %p136, %p137
    %p139 = pneg %p138
    // Predicated region
    $region29: #{encoder_cnn_forward.6} parent=5 // pred_check
      _
    $region30: #{encoder_cnn_forward.6} parent=5 // pred_check_branch
      %141 = sbr.rel (%p138) target = $region32
    $region31: #{encoder_cnn_forward.6} parent=5 // pred_region
      %s142 = ssub.s32 %s9, 1
      %p143 = scmp.lt.s32.totalorder %s14, 1
      %s144 = scalar_select %p143, %s14, 1
      %s145 = smul.addr %s144, 54
      %s146 = smul.addr %s145, 4
      %s147 = scalar_lea.vmem %s0, %s146
      %p148 = pneg %p35
      %p149 = pneg %p32
      %p150 = pneg %p56
      %p151 = pneg %p53
      %p152 = pneg %p77
      %p153 = pneg %p74
      %p154 = pneg %p103
      %p155 = pneg %p100
      %p156 = scmp.lt.s32.totalorder %s14, 1
      %s157 = scalar_select %p156, %s14, 1
      %s158 = smul.addr %s157, 32
      %s159 = smul.addr %s158, 4
      %s160 = scalar_lea.vmem %s3, %s159
      %p161 = scmp.lt.s32.totalorder %s14, 1
      %s162 = scalar_select %p161, %s14, 1
      %s163 = smul.addr %s162, 54
      %s164 = smul.addr %s163, 4
      %s165 = scalar_lea.vmem %s0, %s164
      %p166 = scmp.lt.s32.totalorder %s14, 1
      %s167 = scalar_select %p166, %s14, 1
      %s168 = smul.addr %s167, 32
      %s169 = smul.addr %s168, 4
      %s170 = scalar_lea.vmem %s3, %s169
      %v172 = vld [vmem:[%s165] sm:$0xf]
      %v173 = vld [vmem:[%s165 + $0x4] sm:$0xf]
      %v174 = vld [vmem:[%s165 + $0x8] sm:$0x1]
      %v175 = vld [vmem:[%s165 + $0xc] sm:$0xf]
      %v176 = vld [vmem:[%s165 + $0x10] sm:$0xf]
      %v177 = vld [vmem:[%s165 + $0x14] sm:$0x1]
      %v178 = vld [vmem:[%s165 + $0x18] sm:$0xf]
      %v179 = vld [vmem:[%s165 + $0x1c] sm:$0xf]
      %v180 = vld [vmem:[%s165 + $0x20] sm:$0x1]
      %v181 = vld [vmem:[%s165 + $0x24] sm:$0xf]
      %v182 = vld [vmem:[%s165 + $0x28] sm:$0xf]
      %v183 = vld [vmem:[%s165 + $0x2c] sm:$0x1]
      %v184 = vld [vmem:[%s165 + $0x30] sm:$0xf]
      %v185 = vld [vmem:[%s165 + $0x34] sm:$0xf]
      %v186 = vld [vmem:[%s165 + $0x38] sm:$0x1]
      %v187 = vld [vmem:[%s165 + $0x3c] sm:$0xf]
      %v188 = vld [vmem:[%s165 + $0x40] sm:$0xf]
      %v189 = vld [vmem:[%s165 + $0x44] sm:$0x1]
      %v190 = vld [vmem:[%s165 + $0x48] sm:$0xf]
      %v191 = vld [vmem:[%s165 + $0x4c] sm:$0xf]
      %v192 = vld [vmem:[%s165 + $0x50] sm:$0x1]
      %v193 = vld [vmem:[%s165 + $0x54] sm:$0xf]
      %v194 = vld [vmem:[%s165 + $0x58] sm:$0xf]
      %v195 = vld [vmem:[%s165 + $0x5c] sm:$0x1]
      %v196 = vld [vmem:[%s165 + $0x60] sm:$0xf]
      %v197 = vld [vmem:[%s165 + $0x64] sm:$0xf]
      %v198 = vld [vmem:[%s165 + $0x68] sm:$0x1]
      %v199 = vld [vmem:[%s165 + $0x6c] sm:$0xf]
      %v200 = vld [vmem:[%s165 + $0x70] sm:$0xf]
      %v201 = vld [vmem:[%s165 + $0x74] sm:$0x1]
      %v202 = vld [vmem:[%s165 + $0x78] sm:$0xf]
      %v203 = vld [vmem:[%s165 + $0x7c] sm:$0xf]
      %v204 = vld [vmem:[%s165 + $0x80] sm:$0x1]
      %v205 = vld [vmem:[%s165 + $0x84] sm:$0xf]
      %v206 = vld [vmem:[%s165 + $0x88] sm:$0xf]
      %v207 = vld [vmem:[%s165 + $0x8c] sm:$0x1]
      %v208 = vld [vmem:[%s165 + $0x90] sm:$0xf]
      %v209 = vld [vmem:[%s165 + $0x94] sm:$0xf]
      %v210 = vld [vmem:[%s165 + $0x98] sm:$0x1]
      %v211 = vld [vmem:[%s165 + $0x9c] sm:$0xf]
      %v212 = vld [vmem:[%s165 + $0xa0] sm:$0xf]
      %v213 = vld [vmem:[%s165 + $0xa4] sm:$0x1]
      %v214 = vld [vmem:[%s165 + $0xa8] sm:$0xf]
      %v215 = vld [vmem:[%s165 + $0xac] sm:$0xf]
      %v216 = vld [vmem:[%s165 + $0xb0] sm:$0x1]
      %v217 = vld [vmem:[%s165 + $0xb4] sm:$0xf]
      %v218 = vld [vmem:[%s165 + $0xb8] sm:$0xf]
      %v219 = vld [vmem:[%s165 + $0xbc] sm:$0x1]
      %v220 = vld [vmem:[%s165 + $0xc0] sm:$0xf]
      %v221 = vld [vmem:[%s165 + $0xc4] sm:$0xf]
      %v222 = vld [vmem:[%s165 + $0xc8] sm:$0x1]
      %v223 = vld [vmem:[%s165 + $0xcc] sm:$0xf]
      %v224 = vld [vmem:[%s165 + $0xd0] sm:$0xf]
      %v225 = vld [vmem:[%s165 + $0xd4] sm:$0x1]
      %v226 = vunpack.c.l.bf16 %v172
      %v227 = vunpack.c.l.bf16 %v173
      %v228 = vunpack.c.l.bf16 %v174
      %v229 = vunpack.c.l.bf16 %v175
      %v230 = vunpack.c.l.bf16 %v176
      %v231 = vunpack.c.l.bf16 %v177
      %v232 = vunpack.c.l.bf16 %v178
      %v233 = vunpack.c.l.bf16 %v179
      %v234 = vunpack.c.l.bf16 %v180
      %v235 = vunpack.c.l.bf16 %v181
      %v236 = vunpack.c.l.bf16 %v182
      %v237 = vunpack.c.l.bf16 %v183
      %v238 = vunpack.c.l.bf16 %v184
      %v239 = vunpack.c.l.bf16 %v185
      %v240 = vunpack.c.l.bf16 %v186
      %v241 = vunpack.c.l.bf16 %v187
      %v242 = vunpack.c.l.bf16 %v188
      %v243 = vunpack.c.l.bf16 %v189
      %v244 = vunpack.c.l.bf16 %v190
      %v245 = vunpack.c.l.bf16 %v191
      %v246 = vunpack.c.l.bf16 %v192
      %v247 = vunpack.c.l.bf16 %v193
      %v248 = vunpack.c.l.bf16 %v194
      %v249 = vunpack.c.l.bf16 %v195
      %v250 = vunpack.c.l.bf16 %v196
      %v251 = vunpack.c.l.bf16 %v197
      %v252 = vunpack.c.l.bf16 %v198
      %v253 = vunpack.c.l.bf16 %v199
      %v254 = vunpack.c.l.bf16 %v200
      %v255 = vunpack.c.l.bf16 %v201
      %v256 = vunpack.c.l.bf16 %v202
      %v257 = vunpack.c.l.bf16 %v203
      %v258 = vunpack.c.l.bf16 %v204
      %v259 = vunpack.c.l.bf16 %v205
      %v260 = vunpack.c.l.bf16 %v206
      %v261 = vunpack.c.l.bf16 %v207
      %v262 = vunpack.c.l.bf16 %v208
      %v263 = vunpack.c.l.bf16 %v209
      %v264 = vunpack.c.l.bf16 %v210
      %v265 = vunpack.c.l.bf16 %v211
      %v266 = vunpack.c.l.bf16 %v212
      %v267 = vunpack.c.l.bf16 %v213
      %v268 = vunpack.c.l.bf16 %v214
      %v269 = vunpack.c.l.bf16 %v215
      %v270 = vunpack.c.l.bf16 %v216
      %v271 = vunpack.c.l.bf16 %v217
      %v272 = vunpack.c.l.bf16 %v218
      %v273 = vunpack.c.l.bf16 %v219
      %v274 = vunpack.c.l.bf16 %v220
      %v275 = vunpack.c.l.bf16 %v221
      %v276 = vunpack.c.l.bf16 %v222
      %v277 = vunpack.c.l.bf16 %v223
      %v278 = vunpack.c.l.bf16 %v224
      %v279 = vunpack.c.l.bf16 %v225
      %v280 = vpack.c.bf16 %v227, %v226
      %v281 = vpack.c.bf16 %v230, %v229
      %v282 = vpack.c.bf16 %v233, %v232
      %v283 = vpack.c.bf16 %v236, %v235
      %v284 = vpack.c.bf16 %v239, %v238
      %v285 = vpack.c.bf16 %v242, %v241
      %v286 = vpack.c.bf16 %v245, %v244
      %v287 = vpack.c.bf16 %v248, %v247
      %v288 = vpack.c.bf16 %v251, %v250
      %v289 = vpack.c.bf16 %v254, %v253
      %v290 = vpack.c.bf16 %v257, %v256
      %v291 = vpack.c.bf16 %v260, %v259
      %v292 = vpack.c.bf16 %v263, %v262
      %v293 = vpack.c.bf16 %v266, %v265
      %v294 = vpack.c.bf16 %v269, %v268
      %v295 = vpack.c.bf16 %v272, %v271
      %v296 = vld [vmem:[%s1] sm:$0x3]
      %vm345 = vcmask 1046528
      %v346 = vrot.slane %v226, 1
      %v347 = vrot.slane %v227, 1
      %v348 = vsel %vm345, %v346, %v347
      %v349 = vrot.slane %v228, 1
      %v350 = vsel %vm345, %v347, %v349
      %v351 = vrot.slane %v229, 1
      %v352 = vrot.slane %v230, 1
      %v353 = vsel %vm345, %v351, %v352
      %v354 = vrot.slane %v231, 1
      %v355 = vsel %vm345, %v352, %v354
      %v356 = vrot.slane %v232, 1
      %v357 = vrot.slane %v233, 1
      %v358 = vsel %vm345, %v356, %v357
      %v359 = vrot.slane %v234, 1
      %v360 = vsel %vm345, %v357, %v359
      %v361 = vrot.slane %v235, 1
      %v362 = vrot.slane %v236, 1
      %v363 = vsel %vm345, %v361, %v362
      %v364 = vrot.slane %v237, 1
      %v365 = vsel %vm345, %v362, %v364
      %v366 = vrot.slane %v238, 1
      %v367 = vrot.slane %v239, 1
      %v368 = vsel %vm345, %v366, %v367
      %v369 = vrot.slane %v240, 1
      %v370 = vsel %vm345, %v367, %v369
      %v371 = vrot.slane %v241, 1
      %v372 = vrot.slane %v242, 1
      %v373 = vsel %vm345, %v371, %v372
      %v374 = vrot.slane %v243, 1
      %v375 = vsel %vm345, %v372, %v374
      %v376 = vrot.slane %v244, 1
      %v377 = vrot.slane %v245, 1
      %v378 = vsel %vm345, %v376, %v377
      %v379 = vrot.slane %v246, 1
      %v380 = vsel %vm345, %v377, %v379
      %v381 = vrot.slane %v247, 1
      %v382 = vrot.slane %v248, 1
      %v383 = vsel %vm345, %v381, %v382
      %v384 = vrot.slane %v249, 1
      %v385 = vsel %vm345, %v382, %v384
      %v386 = vrot.slane %v250, 1
      %v387 = vrot.slane %v251, 1
      %v388 = vsel %vm345, %v386, %v387
      %v389 = vrot.slane %v252, 1
      %v390 = vsel %vm345, %v387, %v389
      %v391 = vrot.slane %v253, 1
      %v392 = vrot.slane %v254, 1
      %v393 = vsel %vm345, %v391, %v392
      %v394 = vrot.slane %v255, 1
      %v395 = vsel %vm345, %v392, %v394
      %v396 = vrot.slane %v256, 1
      %v397 = vrot.slane %v257, 1
      %v398 = vsel %vm345, %v396, %v397
      %v399 = vrot.slane %v258, 1
      %v400 = vsel %vm345, %v397, %v399
      %v401 = vrot.slane %v259, 1
      %v402 = vrot.slane %v260, 1
      %v403 = vsel %vm345, %v401, %v402
      %v404 = vrot.slane %v261, 1
      %v405 = vsel %vm345, %v402, %v404
      %v406 = vrot.slane %v262, 1
      %v407 = vrot.slane %v263, 1
      %v408 = vsel %vm345, %v406, %v407
      %v409 = vrot.slane %v264, 1
      %v410 = vsel %vm345, %v407, %v409
      %v411 = vrot.slane %v265, 1
      %v412 = vrot.slane %v266, 1
      %v413 = vsel %vm345, %v411, %v412
      %v414 = vrot.slane %v267, 1
      %v415 = vsel %vm345, %v412, %v414
      %v416 = vrot.slane %v268, 1
      %v417 = vrot.slane %v269, 1
      %v418 = vsel %vm345, %v416, %v417
      %v419 = vrot.slane %v270, 1
      %v420 = vsel %vm345, %v417, %v419
      %v421 = vrot.slane %v271, 1
      %v422 = vrot.slane %v272, 1
      %v423 = vsel %vm345, %v421, %v422
      %v424 = vrot.slane %v273, 1
      %v425 = vsel %vm345, %v422, %v424
      %v458 = vpack.c.bf16 %v350, %v348
      %v459 = vpack.c.bf16 %v355, %v353
      %v460 = vpack.c.bf16 %v360, %v358
      %v461 = vpack.c.bf16 %v365, %v363
      %v462 = vpack.c.bf16 %v370, %v368
      %v463 = vpack.c.bf16 %v375, %v373
      %v464 = vpack.c.bf16 %v380, %v378
      %v465 = vpack.c.bf16 %v385, %v383
      %v466 = vpack.c.bf16 %v390, %v388
      %v467 = vpack.c.bf16 %v395, %v393
      %v468 = vpack.c.bf16 %v400, %v398
      %v469 = vpack.c.bf16 %v405, %v403
      %v470 = vpack.c.bf16 %v410, %v408
      %v471 = vpack.c.bf16 %v415, %v413
      %v472 = vpack.c.bf16 %v420, %v418
      %v473 = vpack.c.bf16 %v425, %v423
      %s474 = scalar_lea.vmem %s1, 2
      %v475 = vld [vmem:[%s474] sm:$0x3]
      %vm476 = vcmask 31744
      %v478 = vsel %vm476, %v458, 0
      %v481 = vsel %vm476, %v459, 0
      %v484 = vsel %vm476, %v460, 0
      %v487 = vsel %vm476, %v461, 0
      %v490 = vsel %vm476, %v462, 0
      %v493 = vsel %vm476, %v463, 0
      %v496 = vsel %vm476, %v464, 0
      %v499 = vsel %vm476, %v465, 0
      %v502 = vsel %vm476, %v466, 0
      %v505 = vsel %vm476, %v467, 0
      %v508 = vsel %vm476, %v468, 0
      %v511 = vsel %vm476, %v469, 0
      %v514 = vsel %vm476, %v470, 0
      %v517 = vsel %vm476, %v471, 0
      %v520 = vsel %vm476, %v472, 0
      %v523 = vsel %vm476, %v473, 0
      %vm525 = vcmask 1041408
      %v527 = vsel %vm525, %v475, 0
      %529 = vmatprep.subr.bf16.mxu0 0
      %530 = vmatpush1.bf16.msra.mxu0 %v527
      %531 = vmatprep.subr.bf16.mxu0 0
      %532 = vmatpush1.bf16.msra.mxu0 0
      %533 = vmatprep.subr.bf16.mxu0 0
      %534 = vmatpush1.bf16.msra.mxu0 0
      %535 = vmatprep.subr.bf16.mxu0 0
      %536 = vmatpush1.bf16.msra.mxu0 0
      %537 = vmatprep.subr.bf16.mxu0 0
      %538 = vmatpush1.bf16.msra.mxu0 0
      %539 = vmatprep.subr.bf16.mxu0 0
      %540 = vmatpush1.bf16.msra.mxu0 0
      %541 = vmatprep.subr.bf16.mxu0 0
      %542 = vmatpush1.bf16.msra.mxu0 0
      %543 = vmatprep.subr.bf16.mxu0 0
      %544 = vmatpush1.bf16.msra.mxu0 0
      %545 = vmatprep.subr.bf16.mxu0 0
      %546 = vmatpush1.bf16.msra.mxu0 0
      %547 = vmatprep.subr.bf16.mxu0 0
      %548 = vmatpush1.bf16.msra.mxu0 0
      %549 = vmatprep.subr.bf16.mxu0 0
      %550 = vmatpush1.bf16.msra.mxu0 0
      %551 = vmatprep.subr.bf16.mxu0 0
      %552 = vmatpush1.bf16.msra.mxu0 0
      %553 = vmatprep.subr.bf16.mxu0 0
      %554 = vmatpush1.bf16.msra.mxu0 0
      %555 = vmatprep.subr.bf16.mxu0 0
      %556 = vmatpush1.bf16.msra.mxu0 0
      %557 = vmatprep.subr.bf16.mxu0 0
      %558 = vmatpush1.bf16.msra.mxu0 0
      %559 = vmatprep.subr.bf16.mxu0 0
      %560 = vmatpush1.bf16.msra.mxu0 0
      %561 = vmatprep.mubr.bf16.mxu0 0
      %562 = vmatmul.mubr.bf16.gmra.mrb[0].mxu0 %v478
      %v563 = vpop.f32.mrb[0].mxu0
      %v564 = vadd.f32 0.0, %v563
      %v565 = vpop.f32.mrb[0].mxu0
      %v566 = vpop.f32.mrb[0].mxu0
      %v567 = vadd.f32 0.0, %v566
      %v568 = vpop.f32.mrb[0].mxu0
      %569 = vmatprep.mubr.bf16.mxu0 0
      %570 = vmatmul.mubr.bf16.gmra.mrb[0].mxu0 %v481
      %v571 = vpop.f32.mrb[0].mxu0
      %v572 = vadd.f32 0.0, %v571
      %v573 = vpop.f32.mrb[0].mxu0
      %v574 = vpop.f32.mrb[0].mxu0
      %v575 = vadd.f32 0.0, %v574
      %v576 = vpop.f32.mrb[0].mxu0
      %577 = vmatprep.mubr.bf16.mxu0 0
      %578 = vmatmul.mubr.bf16.gmra.mrb[0].mxu0 %v484
      %v579 = vpop.f32.mrb[0].mxu0
      %v580 = vadd.f32 0.0, %v579
      %v581 = vpop.f32.mrb[0].mxu0
      %v582 = vpop.f32.mrb[0].mxu0
      %v583 = vadd.f32 0.0, %v582
      %v584 = vpop.f32.mrb[0].mxu0
      %585 = vmatprep.mubr.bf16.mxu0 0
      %586 = vmatmul.mubr.bf16.gmra.mrb[0].mxu0 %v487
      %v587 = vpop.f32.mrb[0].mxu0
      %v588 = vadd.f32 0.0, %v587
      %v589 = vpop.f32.mrb[0].mxu0
      %v590 = vpop.f32.mrb[0].mxu0
      %v591 = vadd.f32 0.0, %v590
      %v592 = vpop.f32.mrb[0].mxu0
      %593 = vmatprep.mubr.bf16.mxu0 0
      %594 = vmatmul.mubr.bf16.gmra.mrb[0].mxu0 %v490
      %v595 = vpop.f32.mrb[0].mxu0
      %v596 = vadd.f32 0.0, %v595
      %v597 = vpop.f32.mrb[0].mxu0
      %v598 = vpop.f32.mrb[0].mxu0
      %v599 = vadd.f32 0.0, %v598
      %v600 = vpop.f32.mrb[0].mxu0
      %601 = vmatprep.mubr.bf16.mxu0 0
      %602 = vmatmul.mubr.bf16.gmra.mrb[0].mxu0 %v493
      %v603 = vpop.f32.mrb[0].mxu0
      %v604 = vadd.f32 0.0, %v603
      %v605 = vpop.f32.mrb[0].mxu0
      %v606 = vpop.f32.mrb[0].mxu0
      %v607 = vadd.f32 0.0, %v606
      %v608 = vpop.f32.mrb[0].mxu0
      %609 = vmatprep.mubr.bf16.mxu0 0
      %610 = vmatmul.mubr.bf16.gmra.mrb[0].mxu0 %v496
      %v611 = vpop.f32.mrb[0].mxu0
      %v612 = vadd.f32 0.0, %v611
      %v613 = vpop.f32.mrb[0].mxu0
      %v614 = vpop.f32.mrb[0].mxu0
      %v615 = vadd.f32 0.0, %v614
      %v616 = vpop.f32.mrb[0].mxu0
      %617 = vmatprep.mubr.bf16.mxu0 0
      %618 = vmatmul.mubr.bf16.gmra.mrb[0].mxu0 %v499
      %v619 = vpop.f32.mrb[0].mxu0
      %v620 = vadd.f32 0.0, %v619
      %v621 = vpop.f32.mrb[0].mxu0
      %v622 = vpop.f32.mrb[0].mxu0
      %v623 = vadd.f32 0.0, %v622
      %v624 = vpop.f32.mrb[0].mxu0
      %625 = vmatprep.mubr.bf16.mxu0 0
      %626 = vmatmul.mubr.bf16.gmra.mrb[0].mxu0 %v502
      %v627 = vpop.f32.mrb[0].mxu0
      %v628 = vadd.f32 0.0, %v627
      %v629 = vpop.f32.mrb[0].mxu0
      %v630 = vpop.f32.mrb[0].mxu0
      %v631 = vadd.f32 0.0, %v630
      %v632 = vpop.f32.mrb[0].mxu0
      %633 = vmatprep.mubr.bf16.mxu0 0
      %634 = vmatmul.mubr.bf16.gmra.mrb[0].mxu0 %v505
      %v635 = vpop.f32.mrb[0].mxu0
      %v636 = vadd.f32 0.0, %v635
      %v637 = vpop.f32.mrb[0].mxu0
      %v638 = vpop.f32.mrb[0].mxu0
      %v639 = vadd.f32 0.0, %v638
      %v640 = vpop.f32.mrb[0].mxu0
      %641 = vmatprep.mubr.bf16.mxu0 0
      %642 = vmatmul.mubr.bf16.gmra.mrb[0].mxu0 %v508
      %v643 = vpop.f32.mrb[0].mxu0
      %v644 = vadd.f32 0.0, %v643
      %v645 = vpop.f32.mrb[0].mxu0
      %v646 = vpop.f32.mrb[0].mxu0
      %v647 = vadd.f32 0.0, %v646
      %v648 = vpop.f32.mrb[0].mxu0
      %649 = vmatprep.mubr.bf16.mxu0 0
      %650 = vmatmul.mubr.bf16.gmra.mrb[0].mxu0 %v511
      %v651 = vpop.f32.mrb[0].mxu0
      %v652 = vadd.f32 0.0, %v651
      %v653 = vpop.f32.mrb[0].mxu0
      %v654 = vpop.f32.mrb[0].mxu0
      %v655 = vadd.f32 0.0, %v654
      %v656 = vpop.f32.mrb[0].mxu0
      %657 = vmatprep.mubr.bf16.mxu0 0
      %658 = vmatmul.mubr.bf16.gmra.mrb[0].mxu0 %v514
      %v659 = vpop.f32.mrb[0].mxu0
      %v660 = vadd.f32 0.0, %v659
      %v661 = vpop.f32.mrb[0].mxu0
      %v662 = vpop.f32.mrb[0].mxu0
      %v663 = vadd.f32 0.0, %v662
      %v664 = vpop.f32.mrb[0].mxu0
      %665 = vmatprep.mubr.bf16.mxu0 0
      %666 = vmatmul.mubr.bf16.gmra.mrb[0].mxu0 %v517
      %v667 = vpop.f32.mrb[0].mxu0
      %v668 = vadd.f32 0.0, %v667
      %v669 = vpop.f32.mrb[0].mxu0
      %v670 = vpop.f32.mrb[0].mxu0
      %v671 = vadd.f32 0.0, %v670
      %v672 = vpop.f32.mrb[0].mxu0
      %673 = vmatprep.mubr.bf16.mxu0 0
      %674 = vmatmul.mubr.bf16.gmra.mrb[0].mxu0 %v520
      %v675 = vpop.f32.mrb[0].mxu0
      %v676 = vadd.f32 0.0, %v675
      %v677 = vpop.f32.mrb[0].mxu0
      %v678 = vpop.f32.mrb[0].mxu0
      %v679 = vadd.f32 0.0, %v678
      %v680 = vpop.f32.mrb[0].mxu0
      %681 = vmatprep.mubr.bf16.mxu0 0
      %682 = vmatmul.mubr.bf16.gmra.mrb[0].mxu0 %v523
      %v683 = vpop.f32.mrb[0].mxu0
      %v684 = vadd.f32 0.0, %v683
      %v685 = vpop.f32.mrb[0].mxu0
      %v686 = vpop.f32.mrb[0].mxu0
      %v687 = vadd.f32 0.0, %v686
      %v688 = vpop.f32.mrb[0].mxu0
      %689 = vdwg.mxu0
      %v691 = vsel %vm476, %v280, 0
      %v694 = vsel %vm476, %v281, 0
      %v697 = vsel %vm476, %v282, 0
      %v700 = vsel %vm476, %v283, 0
      %v703 = vsel %vm476, %v284, 0
      %v706 = vsel %vm476, %v285, 0
      %v709 = vsel %vm476, %v286, 0
      %v712 = vsel %vm476, %v287, 0
      %v715 = vsel %vm476, %v288, 0
      %v718 = vsel %vm476, %v289, 0
      %v721 = vsel %vm476, %v290, 0
      %v724 = vsel %vm476, %v291, 0
      %v727 = vsel %vm476, %v292, 0
      %v730 = vsel %vm476, %v293, 0
      %v733 = vsel %vm476, %v294, 0
      %v736 = vsel %vm476, %v295, 0
      %v739 = vsel %vm525, %v296, 0
      %741 = vmatprep.subr.bf16.mxu0 0
      %742 = vmatpush1.bf16.msra.mxu0 %v739
      %743 = vmatprep.subr.bf16.mxu0 0
      %744 = vmatpush1.bf16.msra.mxu0 0
      %745 = vmatprep.subr.bf16.mxu0 0
      %746 = vmatpush1.bf16.msra.mxu0 0
      %747 = vmatprep.subr.bf16.mxu0 0
      %748 = vmatpush1.bf16.msra.mxu0 0
      %749 = vmatprep.subr.bf16.mxu0 0
      %750 = vmatpush1.bf16.msra.mxu0 0
      %751 = vmatprep.subr.bf16.mxu0 0
      %752 = vmatpush1.bf16.msra.mxu0 0
      %753 = vmatprep.subr.bf16.mxu0 0
      %754 = vmatpush1.bf16.msra.mxu0 0
      %755 = vmatprep.subr.bf16.mxu0 0
      %756 = vmatpush1.bf16.msra.mxu0 0
      %757 = vmatprep.subr.bf16.mxu0 0
      %758 = vmatpush1.bf16.msra.mxu0 0
      %759 = vmatprep.subr.bf16.mxu0 0
      %760 = vmatpush1.bf16.msra.mxu0 0
      %761 = vmatprep.subr.bf16.mxu0 0
      %762 = vmatpush1.bf16.msra.mxu0 0
      %763 = vmatprep.subr.bf16.mxu0 0
      %764 = vmatpush1.bf16.msra.mxu0 0
      %765 = vmatprep.subr.bf16.mxu0 0
      %766 = vmatpush1.bf16.msra.mxu0 0
      %767 = vmatprep.subr.bf16.mxu0 0
      %768 = vmatpush1.bf16.msra.mxu0 0
      %769 = vmatprep.subr.bf16.mxu0 0
      %770 = vmatpush1.bf16.msra.mxu0 0
      %771 = vmatprep.subr.bf16.mxu0 0
      %772 = vmatpush1.bf16.msra.mxu0 0
      %773 = vmatprep.mubr.bf16.mxu0 0
      %774 = vmatmul.mubr.bf16.gmra.mrb[0].mxu0 %v691
      %v775 = vpop.f32.mrb[0].mxu0
      %v776 = vadd.f32 %v564, %v775
      %v777 = vpop.f32.mrb[0].mxu0
      %v778 = vpop.f32.mrb[0].mxu0
      %v779 = vadd.f32 %v567, %v778
      %v780 = vpop.f32.mrb[0].mxu0
      %781 = vmatprep.mubr.bf16.mxu0 0
      %782 = vmatmul.mubr.bf16.gmra.mrb[0].mxu0 %v694
      %v783 = vpop.f32.mrb[0].mxu0
      %v784 = vadd.f32 %v572, %v783
      %v785 = vpop.f32.mrb[0].mxu0
      %v786 = vpop.f32.mrb[0].mxu0
      %v787 = vadd.f32 %v575, %v786
      %v788 = vpop.f32.mrb[0].mxu0
      %789 = vmatprep.mubr.bf16.mxu0 0
      %790 = vmatmul.mubr.bf16.gmra.mrb[0].mxu0 %v697
      %v791 = vpop.f32.mrb[0].mxu0
      %v792 = vadd.f32 %v580, %v791
      %v793 = vpop.f32.mrb[0].mxu0
      %v794 = vpop.f32.mrb[0].mxu0
      %v795 = vadd.f32 %v583, %v794
      %v796 = vpop.f32.mrb[0].mxu0
      %797 = vmatprep.mubr.bf16.mxu0 0
      %798 = vmatmul.mubr.bf16.gmra.mrb[0].mxu0 %v700
      %v799 = vpop.f32.mrb[0].mxu0
      %v800 = vadd.f32 %v588, %v799
      %v801 = vpop.f32.mrb[0].mxu0
      %v802 = vpop.f32.mrb[0].mxu0
      %v803 = vadd.f32 %v591, %v802
      %v804 = vpop.f32.mrb[0].mxu0
      %805 = vmatprep.mubr.bf16.mxu0 0
      %806 = vmatmul.mubr.bf16.gmra.mrb[0].mxu0 %v703
      %v807 = vpop.f32.mrb[0].mxu0
      %v808 = vadd.f32 %v596, %v807
      %v809 = vpop.f32.mrb[0].mxu0
      %v810 = vpop.f32.mrb[0].mxu0
      %v811 = vadd.f32 %v599, %v810
      %v812 = vpop.f32.mrb[0].mxu0
      %813 = vmatprep.mubr.bf16.mxu0 0
      %814 = vmatmul.mubr.bf16.gmra.mrb[0].mxu0 %v706
      %v815 = vpop.f32.mrb[0].mxu0
      %v816 = vadd.f32 %v604, %v815
      %v817 = vpop.f32.mrb[0].mxu0
      %v818 = vpop.f32.mrb[0].mxu0
      %v819 = vadd.f32 %v607, %v818
      %v820 = vpop.f32.mrb[0].mxu0
      %821 = vmatprep.mubr.bf16.mxu0 0
      %822 = vmatmul.mubr.bf16.gmra.mrb[0].mxu0 %v709
      %v823 = vpop.f32.mrb[0].mxu0
      %v824 = vadd.f32 %v612, %v823
      %v825 = vpop.f32.mrb[0].mxu0
      %v826 = vpop.f32.mrb[0].mxu0
      %v827 = vadd.f32 %v615, %v826
      %v828 = vpop.f32.mrb[0].mxu0
      %829 = vmatprep.mubr.bf16.mxu0 0
      %830 = vmatmul.mubr.bf16.gmra.mrb[0].mxu0 %v712
      %v831 = vpop.f32.mrb[0].mxu0
      %v832 = vadd.f32 %v620, %v831
      %v833 = vpop.f32.mrb[0].mxu0
      %v834 = vpop.f32.mrb[0].mxu0
      %v835 = vadd.f32 %v623, %v834
      %v836 = vpop.f32.mrb[0].mxu0
      %837 = vmatprep.mubr.bf16.mxu0 0
      %838 = vmatmul.mubr.bf16.gmra.mrb[0].mxu0 %v715
      %v839 = vpop.f32.mrb[0].mxu0
      %v840 = vadd.f32 %v628, %v839
      %v841 = vpop.f32.mrb[0].mxu0
      %v842 = vpop.f32.mrb[0].mxu0
      %v843 = vadd.f32 %v631, %v842
      %v844 = vpop.f32.mrb[0].mxu0
      %845 = vmatprep.mubr.bf16.mxu0 0
      %846 = vmatmul.mubr.bf16.gmra.mrb[0].mxu0 %v718
      %v847 = vpop.f32.mrb[0].mxu0
      %v848 = vadd.f32 %v636, %v847
      %v849 = vpop.f32.mrb[0].mxu0
      %v850 = vpop.f32.mrb[0].mxu0
      %v851 = vadd.f32 %v639, %v850
      %v852 = vpop.f32.mrb[0].mxu0
      %853 = vmatprep.mubr.bf16.mxu0 0
      %854 = vmatmul.mubr.bf16.gmra.mrb[0].mxu0 %v721
      %v855 = vpop.f32.mrb[0].mxu0
      %v856 = vadd.f32 %v644, %v855
      %v857 = vpop.f32.mrb[0].mxu0
      %v858 = vpop.f32.mrb[0].mxu0
      %v859 = vadd.f32 %v647, %v858
      %v860 = vpop.f32.mrb[0].mxu0
      %861 = vmatprep.mubr.bf16.mxu0 0
      %862 = vmatmul.mubr.bf16.gmra.mrb[0].mxu0 %v724
      %v863 = vpop.f32.mrb[0].mxu0
      %v864 = vadd.f32 %v652, %v863
      %v865 = vpop.f32.mrb[0].mxu0
      %v866 = vpop.f32.mrb[0].mxu0
      %v867 = vadd.f32 %v655, %v866
      %v868 = vpop.f32.mrb[0].mxu0
      %869 = vmatprep.mubr.bf16.mxu0 0
      %870 = vmatmul.mubr.bf16.gmra.mrb[0].mxu0 %v727
      %v871 = vpop.f32.mrb[0].mxu0
      %v872 = vadd.f32 %v660, %v871
      %v873 = vpop.f32.mrb[0].mxu0
      %v874 = vpop.f32.mrb[0].mxu0
      %v875 = vadd.f32 %v663, %v874
      %v876 = vpop.f32.mrb[0].mxu0
      %877 = vmatprep.mubr.bf16.mxu0 0
      %878 = vmatmul.mubr.bf16.gmra.mrb[0].mxu0 %v730
      %v879 = vpop.f32.mrb[0].mxu0
      %v880 = vadd.f32 %v668, %v879
      %v881 = vpop.f32.mrb[0].mxu0
      %v882 = vpop.f32.mrb[0].mxu0
      %v883 = vadd.f32 %v671, %v882
      %v884 = vpop.f32.mrb[0].mxu0
      %885 = vmatprep.mubr.bf16.mxu0 0
      %886 = vmatmul.mubr.bf16.gmra.mrb[0].mxu0 %v733
      %v887 = vpop.f32.mrb[0].mxu0
      %v888 = vadd.f32 %v676, %v887
      %v889 = vpop.f32.mrb[0].mxu0
      %v890 = vpop.f32.mrb[0].mxu0
      %v891 = vadd.f32 %v679, %v890
      %v892 = vpop.f32.mrb[0].mxu0
      %893 = vmatprep.mubr.bf16.mxu0 0
      %894 = vmatmul.mubr.bf16.gmra.mrb[0].mxu0 %v736
      %v895 = vpop.f32.mrb[0].mxu0
      %v896 = vadd.f32 %v684, %v895
      %v897 = vpop.f32.mrb[0].mxu0
      %v898 = vpop.f32.mrb[0].mxu0
      %v899 = vadd.f32 %v687, %v898
      %v900 = vpop.f32.mrb[0].mxu0
      %901 = vdwg.mxu0
      %vm902 = vcmask 1045504
      %v903 = vrot.slane %v226, 2
      %v904 = vrot.slane %v227, 2
      %v905 = vsel %vm902, %v903, %v904
      %v906 = vrot.slane %v228, 2
      %v907 = vsel %vm902, %v904, %v906
      %v908 = vrot.slane %v229, 2
      %v909 = vrot.slane %v230, 2
      %v910 = vsel %vm902, %v908, %v909
      %v911 = vrot.slane %v231, 2
      %v912 = vsel %vm902, %v909, %v911
      %v913 = vrot.slane %v232, 2
      %v914 = vrot.slane %v233, 2
      %v915 = vsel %vm902, %v913, %v914
      %v916 = vrot.slane %v234, 2
      %v917 = vsel %vm902, %v914, %v916
      %v918 = vrot.slane %v235, 2
      %v919 = vrot.slane %v236, 2
      %v920 = vsel %vm902, %v918, %v919
      %v921 = vrot.slane %v237, 2
      %v922 = vsel %vm902, %v919, %v921
      %v923 = vrot.slane %v238, 2
      %v924 = vrot.slane %v239, 2
      %v925 = vsel %vm902, %v923, %v924
      %v926 = vrot.slane %v240, 2
      %v927 = vsel %vm902, %v924, %v926
      %v928 = vrot.slane %v241, 2
      %v929 = vrot.slane %v242, 2
      %v930 = vsel %vm902, %v928, %v929
      %v931 = vrot.slane %v243, 2
      %v932 = vsel %vm902, %v929, %v931
      %v933 = vrot.slane %v244, 2
      %v934 = vrot.slane %v245, 2
      %v935 = vsel %vm902, %v933, %v934
      %v936 = vrot.slane %v246, 2
      %v937 = vsel %vm902, %v934, %v936
      %v938 = vrot.slane %v247, 2
      %v939 = vrot.slane %v248, 2
      %v940 = vsel %vm902, %v938, %v939
      %v941 = vrot.slane %v249, 2
      %v942 = vsel %vm902, %v939, %v941
      %v943 = vrot.slane %v250, 2
      %v944 = vrot.slane %v251, 2
      %v945 = vsel %vm902, %v943, %v944
      %v946 = vrot.slane %v252, 2
      %v947 = vsel %vm902, %v944, %v946
      %v948 = vrot.slane %v253, 2
      %v949 = vrot.slane %v254, 2
      %v950 = vsel %vm902, %v948, %v949
      %v951 = vrot.slane %v255, 2
      %v952 = vsel %vm902, %v949, %v951
      %v953 = vrot.slane %v256, 2
      %v954 = vrot.slane %v257, 2
      %v955 = vsel %vm902, %v953, %v954
      %v956 = vrot.slane %v258, 2
      %v957 = vsel %vm902, %v954, %v956
      %v958 = vrot.slane %v259, 2
      %v959 = vrot.slane %v260, 2
      %v960 = vsel %vm902, %v958, %v959
      %v961 = vrot.slane %v261, 2
      %v962 = vsel %vm902, %v959, %v961
      %v963 = vrot.slane %v262, 2
      %v964 = vrot.slane %v263, 2
      %v965 = vsel %vm902, %v963, %v964
      %v966 = vrot.slane %v264, 2
      %v967 = vsel %vm902, %v964, %v966
      %v968 = vrot.slane %v265, 2
      %v969 = vrot.slane %v266, 2
      %v970 = vsel %vm902, %v968, %v969
      %v971 = vrot.slane %v267, 2
      %v972 = vsel %vm902, %v969, %v971
      %v973 = vrot.slane %v268, 2
      %v974 = vrot.slane %v269, 2
      %v975 = vsel %vm902, %v973, %v974
      %v976 = vrot.slane %v270, 2
      %v977 = vsel %vm902, %v974, %v976
      %v978 = vrot.slane %v271, 2
      %v979 = vrot.slane %v272, 2
      %v980 = vsel %vm902, %v978, %v979
      %v981 = vrot.slane %v273, 2
      %v982 = vsel %vm902, %v979, %v981
      %v1015 = vpack.c.bf16 %v907, %v905
      %v1016 = vpack.c.bf16 %v912, %v910
      %v1017 = vpack.c.bf16 %v917, %v915
      %v1018 = vpack.c.bf16 %v922, %v920
      %v1019 = vpack.c.bf16 %v927, %v925
      %v1020 = vpack.c.bf16 %v932, %v930
      %v1021 = vpack.c.bf16 %v937, %v935
      %v1022 = vpack.c.bf16 %v942, %v940
      %v1023 = vpack.c.bf16 %v947, %v945
      %v1024 = vpack.c.bf16 %v952, %v950
      %v1025 = vpack.c.bf16 %v957, %v955
      %v1026 = vpack.c.bf16 %v962, %v960
      %v1027 = vpack.c.bf16 %v967, %v965
      %v1028 = vpack.c.bf16 %v972, %v970
      %v1029 = vpack.c.bf16 %v977, %v975
      %v1030 = vpack.c.bf16 %v982, %v980
      %s1031 = scalar_lea.vmem %s1, 4
      %v1032 = vld [vmem:[%s1031] sm:$0x3]
      %v1034 = vsel %vm476, %v1015, 0
      %v1037 = vsel %vm476, %v1016, 0
      %v1040 = vsel %vm476, %v1017, 0
      %v1043 = vsel %vm476, %v1018, 0
      %v1046 = vsel %vm476, %v1019, 0
      %v1049 = vsel %vm476, %v1020, 0
      %v1052 = vsel %vm476, %v1021, 0
      %v1055 = vsel %vm476, %v1022, 0
      %v1058 = vsel %vm476, %v1023, 0
      %v1061 = vsel %vm476, %v1024, 0
      %v1064 = vsel %vm476, %v1025, 0
      %v1067 = vsel %vm476, %v1026, 0
      %v1070 = vsel %vm476, %v1027, 0
      %v1073 = vsel %vm476, %v1028, 0
      %v1076 = vsel %vm476, %v1029, 0
      %v1079 = vsel %vm476, %v1030, 0
      %v1082 = vsel %vm525, %v1032, 0
      %1084 = vmatprep.subr.bf16.mxu0 0
      %1085 = vmatpush1.bf16.msra.mxu0 %v1082
      %1086 = vmatprep.subr.bf16.mxu0 0
      %1087 = vmatpush1.bf16.msra.mxu0 0
      %1088 = vmatprep.subr.bf16.mxu0 0
      %1089 = vmatpush1.bf16.msra.mxu0 0
      %1090 = vmatprep.subr.bf16.mxu0 0
      %1091 = vmatpush1.bf16.msra.mxu0 0
      %1092 = vmatprep.subr.bf16.mxu0 0
      %1093 = vmatpush1.bf16.msra.mxu0 0
      %1094 = vmatprep.subr.bf16.mxu0 0
      %1095 = vmatpush1.bf16.msra.mxu0 0
      %1096 = vmatprep.subr.bf16.mxu0 0
      %1097 = vmatpush1.bf16.msra.mxu0 0
      %1098 = vmatprep.subr.bf16.mxu0 0
      %1099 = vmatpush1.bf16.msra.mxu0 0
      %1100 = vmatprep.subr.bf16.mxu0 0
      %1101 = vmatpush1.bf16.msra.mxu0 0
      %1102 = vmatprep.subr.bf16.mxu0 0
      %1103 = vmatpush1.bf16.msra.mxu0 0
      %1104 = vmatprep.subr.bf16.mxu0 0
      %1105 = vmatpush1.bf16.msra.mxu0 0
      %1106 = vmatprep.subr.bf16.mxu0 0
      %1107 = vmatpush1.bf16.msra.mxu0 0
      %1108 = vmatprep.subr.bf16.mxu0 0
      %1109 = vmatpush1.bf16.msra.mxu0 0
      %1110 = vmatprep.subr.bf16.mxu0 0
      %1111 = vmatpush1.bf16.msra.mxu0 0
      %1112 = vmatprep.subr.bf16.mxu0 0
      %1113 = vmatpush1.bf16.msra.mxu0 0
      %1114 = vmatprep.subr.bf16.mxu0 0
      %1115 = vmatpush1.bf16.msra.mxu0 0
      %1116 = vmatprep.mubr.bf16.mxu0 0
      %1117 = vmatmul.mubr.bf16.gmra.mrb[0].mxu0 %v1034
      %v1118 = vpop.f32.mrb[0].mxu0
      %v1119 = vadd.f32 0.0, %v1118
      %v1120 = vpop.f32.mrb[0].mxu0
      %v1121 = vpop.f32.mrb[0].mxu0
      %v1122 = vadd.f32 0.0, %v1121
      %v1123 = vpop.f32.mrb[0].mxu0
      %1124 = vmatprep.mubr.bf16.mxu0 0
      %1125 = vmatmul.mubr.bf16.gmra.mrb[0].mxu0 %v1037
      %v1126 = vpop.f32.mrb[0].mxu0
      %v1127 = vadd.f32 0.0, %v1126
      %v1128 = vpop.f32.mrb[0].mxu0
      %v1129 = vpop.f32.mrb[0].mxu0
      %v1130 = vadd.f32 0.0, %v1129
      %v1131 = vpop.f32.mrb[0].mxu0
      %1132 = vmatprep.mubr.bf16.mxu0 0
      %1133 = vmatmul.mubr.bf16.gmra.mrb[0].mxu0 %v1040
      %v1134 = vpop.f32.mrb[0].mxu0
      %v1135 = vadd.f32 0.0, %v1134
      %v1136 = vpop.f32.mrb[0].mxu0
      %v1137 = vpop.f32.mrb[0].mxu0
      %v1138 = vadd.f32 0.0, %v1137
      %v1139 = vpop.f32.mrb[0].mxu0
      %1140 = vmatprep.mubr.bf16.mxu0 0
      %1141 = vmatmul.mubr.bf16.gmra.mrb[0].mxu0 %v1043
      %v1142 = vpop.f32.mrb[0].mxu0
      %v1143 = vadd.f32 0.0, %v1142
      %v1144 = vpop.f32.mrb[0].mxu0
      %v1145 = vpop.f32.mrb[0].mxu0
      %v1146 = vadd.f32 0.0, %v1145
      %v1147 = vpop.f32.mrb[0].mxu0
      %1148 = vmatprep.mubr.bf16.mxu0 0
      %1149 = vmatmul.mubr.bf16.gmra.mrb[0].mxu0 %v1046
      %v1150 = vpop.f32.mrb[0].mxu0
      %v1151 = vadd.f32 0.0, %v1150
      %v1152 = vpop.f32.mrb[0].mxu0
      %v1153 = vpop.f32.mrb[0].mxu0
      %v1154 = vadd.f32 0.0, %v1153
      %v1155 = vpop.f32.mrb[0].mxu0
      %1156 = vmatprep.mubr.bf16.mxu0 0
      %1157 = vmatmul.mubr.bf16.gmra.mrb[0].mxu0 %v1049
      %v1158 = vpop.f32.mrb[0].mxu0
      %v1159 = vadd.f32 0.0, %v1158
      %v1160 = vpop.f32.mrb[0].mxu0
      %v1161 = vpop.f32.mrb[0].mxu0
      %v1162 = vadd.f32 0.0, %v1161
      %v1163 = vpop.f32.mrb[0].mxu0
      %1164 = vmatprep.mubr.bf16.mxu0 0
      %1165 = vmatmul.mubr.bf16.gmra.mrb[0].mxu0 %v1052
      %v1166 = vpop.f32.mrb[0].mxu0
      %v1167 = vadd.f32 0.0, %v1166
      %v1168 = vpop.f32.mrb[0].mxu0
      %v1169 = vpop.f32.mrb[0].mxu0
      %v1170 = vadd.f32 0.0, %v1169
      %v1171 = vpop.f32.mrb[0].mxu0
      %1172 = vmatprep.mubr.bf16.mxu0 0
      %1173 = vmatmul.mubr.bf16.gmra.mrb[0].mxu0 %v1055
      %v1174 = vpop.f32.mrb[0].mxu0
      %v1175 = vadd.f32 0.0, %v1174
      %v1176 = vpop.f32.mrb[0].mxu0
      %v1177 = vpop.f32.mrb[0].mxu0
      %v1178 = vadd.f32 0.0, %v1177
      %v1179 = vpop.f32.mrb[0].mxu0
      %1180 = vmatprep.mubr.bf16.mxu0 0
      %1181 = vmatmul.mubr.bf16.gmra.mrb[0].mxu0 %v1058
      %v1182 = vpop.f32.mrb[0].mxu0
      %v1183 = vadd.f32 0.0, %v1182
      %v1184 = vpop.f32.mrb[0].mxu0
      %v1185 = vpop.f32.mrb[0].mxu0
      %v1186 = vadd.f32 0.0, %v1185
      %v1187 = vpop.f32.mrb[0].mxu0
      %1188 = vmatprep.mubr.bf16.mxu0 0
      %1189 = vmatmul.mubr.bf16.gmra.mrb[0].mxu0 %v1061
      %v1190 = vpop.f32.mrb[0].mxu0
      %v1191 = vadd.f32 0.0, %v1190
      %v1192 = vpop.f32.mrb[0].mxu0
      %v1193 = vpop.f32.mrb[0].mxu0
      %v1194 = vadd.f32 0.0, %v1193
      %v1195 = vpop.f32.mrb[0].mxu0
      %1196 = vmatprep.mubr.bf16.mxu0 0
      %1197 = vmatmul.mubr.bf16.gmra.mrb[0].mxu0 %v1064
      %v1198 = vpop.f32.mrb[0].mxu0
      %v1199 = vadd.f32 0.0, %v1198
      %v1200 = vpop.f32.mrb[0].mxu0
      %v1201 = vpop.f32.mrb[0].mxu0
      %v1202 = vadd.f32 0.0, %v1201
      %v1203 = vpop.f32.mrb[0].mxu0
      %1204 = vmatprep.mubr.bf16.mxu0 0
      %1205 = vmatmul.mubr.bf16.gmra.mrb[0].mxu0 %v1067
      %v1206 = vpop.f32.mrb[0].mxu0
      %v1207 = vadd.f32 0.0, %v1206
      %v1208 = vpop.f32.mrb[0].mxu0
      %v1209 = vpop.f32.mrb[0].mxu0
      %v1210 = vadd.f32 0.0, %v1209
      %v1211 = vpop.f32.mrb[0].mxu0
      %1212 = vmatprep.mubr.bf16.mxu0 0
      %1213 = vmatmul.mubr.bf16.gmra.mrb[0].mxu0 %v1070
      %v1214 = vpop.f32.mrb[0].mxu0
      %v1215 = vadd.f32 0.0, %v1214
      %v1216 = vpop.f32.mrb[0].mxu0
      %v1217 = vpop.f32.mrb[0].mxu0
      %v1218 = vadd.f32 0.0, %v1217
      %v1219 = vpop.f32.mrb[0].mxu0
      %1220 = vmatprep.mubr.bf16.mxu0 0
      %1221 = vmatmul.mubr.bf16.gmra.mrb[0].mxu0 %v1073
      %v1222 = vpop.f32.mrb[0].mxu0
      %v1223 = vadd.f32 0.0, %v1222
      %v1224 = vpop.f32.mrb[0].mxu0
      %v1225 = vpop.f32.mrb[0].mxu0
      %v1226 = vadd.f32 0.0, %v1225
      %v1227 = vpop.f32.mrb[0].mxu0
      %1228 = vmatprep.mubr.bf16.mxu0 0
      %1229 = vmatmul.mubr.bf16.gmra.mrb[0].mxu0 %v1076
      %v1230 = vpop.f32.mrb[0].mxu0
      %v1231 = vadd.f32 0.0, %v1230
      %v1232 = vpop.f32.mrb[0].mxu0
      %v1233 = vpop.f32.mrb[0].mxu0
      %v1234 = vadd.f32 0.0, %v1233
      %v1235 = vpop.f32.mrb[0].mxu0
      %1236 = vmatprep.mubr.bf16.mxu0 0
      %1237 = vmatmul.mubr.bf16.gmra.mrb[0].mxu0 %v1079
      %v1238 = vpop.f32.mrb[0].mxu0
      %v1239 = vadd.f32 0.0, %v1238
      %v1240 = vpop.f32.mrb[0].mxu0
      %v1241 = vpop.f32.mrb[0].mxu0
      %v1242 = vadd.f32 0.0, %v1241
      %v1243 = vpop.f32.mrb[0].mxu0
      %1244 = vdwg.mxu0
      %v1245 = vadd.f32 %v776, %v1119
      %v1246 = vadd.f32 %v779, %v1122
      %v1247 = vadd.f32 %v784, %v1127
      %v1248 = vadd.f32 %v787, %v1130
      %v1249 = vadd.f32 %v792, %v1135
      %v1250 = vadd.f32 %v795, %v1138
      %v1251 = vadd.f32 %v800, %v1143
      %v1252 = vadd.f32 %v803, %v1146
      %v1253 = vadd.f32 %v808, %v1151
      %v1254 = vadd.f32 %v811, %v1154
      %v1255 = vadd.f32 %v816, %v1159
      %v1256 = vadd.f32 %v819, %v1162
      %v1257 = vadd.f32 %v824, %v1167
      %v1258 = vadd.f32 %v827, %v1170
      %v1259 = vadd.f32 %v832, %v1175
      %v1260 = vadd.f32 %v835, %v1178
      %v1261 = vadd.f32 %v840, %v1183
      %v1262 = vadd.f32 %v843, %v1186
      %v1263 = vadd.f32 %v848, %v1191
      %v1264 = vadd.f32 %v851, %v1194
      %v1265 = vadd.f32 %v856, %v1199
      %v1266 = vadd.f32 %v859, %v1202
      %v1267 = vadd.f32 %v864, %v1207
      %v1268 = vadd.f32 %v867, %v1210
      %v1269 = vadd.f32 %v872, %v1215
      %v1270 = vadd.f32 %v875, %v1218
      %v1271 = vadd.f32 %v880, %v1223
      %v1272 = vadd.f32 %v883, %v1226
      %v1273 = vadd.f32 %v888, %v1231
      %v1274 = vadd.f32 %v891, %v1234
      %v1275 = vadd.f32 %v896, %v1239
      %v1276 = vadd.f32 %v899, %v1242
      %v1277 = vpack.c.bf16 %v275, %v274
      %s1278 = scalar_lea.vmem %s1, 6
      %v1279 = vld [vmem:[%s1278] sm:$0x3]
      %v1281 = vsel %vm476, %v1277, 0
      %v1284 = vsel %vm525, %v1279, 0
      %1286 = vmatprep.subr.bf16.mxu0 0
      %1287 = vmatpush1.bf16.msra.mxu0 %v1284
      %1288 = vmatprep.subr.bf16.mxu0 0
      %1289 = vmatpush1.bf16.msra.mxu0 0
      %1290 = vmatprep.subr.bf16.mxu0 0
      %1291 = vmatpush1.bf16.msra.mxu0 0
      %1292 = vmatprep.subr.bf16.mxu0 0
      %1293 = vmatpush1.bf16.msra.mxu0 0
      %1294 = vmatprep.subr.bf16.mxu0 0
      %1295 = vmatpush1.bf16.msra.mxu0 0
      %1296 = vmatprep.subr.bf16.mxu0 0
      %1297 = vmatpush1.bf16.msra.mxu0 0
      %1298 = vmatprep.subr.bf16.mxu0 0
      %1299 = vmatpush1.bf16.msra.mxu0 0
      %1300 = vmatprep.subr.bf16.mxu0 0
      %1301 = vmatpush1.bf16.msra.mxu0 0
      %1302 = vmatprep.subr.bf16.mxu0 0
      %1303 = vmatpush1.bf16.msra.mxu0 0
      %1304 = vmatprep.subr.bf16.mxu0 0
      %1305 = vmatpush1.bf16.msra.mxu0 0
      %1306 = vmatprep.subr.bf16.mxu0 0
      %1307 = vmatpush1.bf16.msra.mxu0 0
      %1308 = vmatprep.subr.bf16.mxu0 0
      %1309 = vmatpush1.bf16.msra.mxu0 0
      %1310 = vmatprep.subr.bf16.mxu0 0
      %1311 = vmatpush1.bf16.msra.mxu0 0
      %1312 = vmatprep.subr.bf16.mxu0 0
      %1313 = vmatpush1.bf16.msra.mxu0 0
      %1314 = vmatprep.subr.bf16.mxu0 0
      %1315 = vmatpush1.bf16.msra.mxu0 0
      %1316 = vmatprep.subr.bf16.mxu0 0
      %1317 = vmatpush1.bf16.msra.mxu0 0
      %1318 = vmatprep.mubr.bf16.mxu0 0
      %1319 = vmatmul.mubr.bf16.gmra.mrb[0].mxu0 %v694
      %v1320 = vpop.f32.mrb[0].mxu0
      %v1321 = vadd.f32 0.0, %v1320
      %v1322 = vpop.f32.mrb[0].mxu0
      %v1323 = vpop.f32.mrb[0].mxu0
      %v1324 = vadd.f32 0.0, %v1323
      %v1325 = vpop.f32.mrb[0].mxu0
      %1326 = vmatprep.mubr.bf16.mxu0 0
      %1327 = vmatmul.mubr.bf16.gmra.mrb[0].mxu0 %v697
      %v1328 = vpop.f32.mrb[0].mxu0
      %v1329 = vadd.f32 0.0, %v1328
      %v1330 = vpop.f32.mrb[0].mxu0
      %v1331 = vpop.f32.mrb[0].mxu0
      %v1332 = vadd.f32 0.0, %v1331
      %v1333 = vpop.f32.mrb[0].mxu0
      %1334 = vmatprep.mubr.bf16.mxu0 0
      %1335 = vmatmul.mubr.bf16.gmra.mrb[0].mxu0 %v700
      %v1336 = vpop.f32.mrb[0].mxu0
      %v1337 = vadd.f32 0.0, %v1336
      %v1338 = vpop.f32.mrb[0].mxu0
      %v1339 = vpop.f32.mrb[0].mxu0
      %v1340 = vadd.f32 0.0, %v1339
      %v1341 = vpop.f32.mrb[0].mxu0
      %1342 = vmatprep.mubr.bf16.mxu0 0
      %1343 = vmatmul.mubr.bf16.gmra.mrb[0].mxu0 %v703
      %v1344 = vpop.f32.mrb[0].mxu0
      %v1345 = vadd.f32 0.0, %v1344
      %v1346 = vpop.f32.mrb[0].mxu0
      %v1347 = vpop.f32.mrb[0].mxu0
      %v1348 = vadd.f32 0.0, %v1347
      %v1349 = vpop.f32.mrb[0].mxu0
      %1350 = vmatprep.mubr.bf16.mxu0 0
      %1351 = vmatmul.mubr.bf16.gmra.mrb[0].mxu0 %v706
      %v1352 = vpop.f32.mrb[0].mxu0
      %v1353 = vadd.f32 0.0, %v1352
      %v1354 = vpop.f32.mrb[0].mxu0
      %v1355 = vpop.f32.mrb[0].mxu0
      %v1356 = vadd.f32 0.0, %v1355
      %v1357 = vpop.f32.mrb[0].mxu0
      %1358 = vmatprep.mubr.bf16.mxu0 0
      %1359 = vmatmul.mubr.bf16.gmra.mrb[0].mxu0 %v709
      %v1360 = vpop.f32.mrb[0].mxu0
      %v1361 = vadd.f32 0.0, %v1360
      %v1362 = vpop.f32.mrb[0].mxu0
      %v1363 = vpop.f32.mrb[0].mxu0
      %v1364 = vadd.f32 0.0, %v1363
      %v1365 = vpop.f32.mrb[0].mxu0
      %1366 = vmatprep.mubr.bf16.mxu0 0
      %1367 = vmatmul.mubr.bf16.gmra.mrb[0].mxu0 %v712
      %v1368 = vpop.f32.mrb[0].mxu0
      %v1369 = vadd.f32 0.0, %v1368
      %v1370 = vpop.f32.mrb[0].mxu0
      %v1371 = vpop.f32.mrb[0].mxu0
      %v1372 = vadd.f32 0.0, %v1371
      %v1373 = vpop.f32.mrb[0].mxu0
      %1374 = vmatprep.mubr.bf16.mxu0 0
      %1375 = vmatmul.mubr.bf16.gmra.mrb[0].mxu0 %v715
      %v1376 = vpop.f32.mrb[0].mxu0
      %v1377 = vadd.f32 0.0, %v1376
      %v1378 = vpop.f32.mrb[0].mxu0
      %v1379 = vpop.f32.mrb[0].mxu0
      %v1380 = vadd.f32 0.0, %v1379
      %v1381 = vpop.f32.mrb[0].mxu0
      %1382 = vmatprep.mubr.bf16.mxu0 0
      %1383 = vmatmul.mubr.bf16.gmra.mrb[0].mxu0 %v718
      %v1384 = vpop.f32.mrb[0].mxu0
      %v1385 = vadd.f32 0.0, %v1384
      %v1386 = vpop.f32.mrb[0].mxu0
      %v1387 = vpop.f32.mrb[0].mxu0
      %v1388 = vadd.f32 0.0, %v1387
      %v1389 = vpop.f32.mrb[0].mxu0
      %1390 = vmatprep.mubr.bf16.mxu0 0
      %1391 = vmatmul.mubr.bf16.gmra.mrb[0].mxu0 %v721
      %v1392 = vpop.f32.mrb[0].mxu0
      %v1393 = vadd.f32 0.0, %v1392
      %v1394 = vpop.f32.mrb[0].mxu0
      %v1395 = vpop.f32.mrb[0].mxu0
      %v1396 = vadd.f32 0.0, %v1395
      %v1397 = vpop.f32.mrb[0].mxu0
      %1398 = vmatprep.mubr.bf16.mxu0 0
      %1399 = vmatmul.mubr.bf16.gmra.mrb[0].mxu0 %v724
      %v1400 = vpop.f32.mrb[0].mxu0
      %v1401 = vadd.f32 0.0, %v1400
      %v1402 = vpop.f32.mrb[0].mxu0
      %v1403 = vpop.f32.mrb[0].mxu0
      %v1404 = vadd.f32 0.0, %v1403
      %v1405 = vpop.f32.mrb[0].mxu0
      %1406 = vmatprep.mubr.bf16.mxu0 0
      %1407 = vmatmul.mubr.bf16.gmra.mrb[0].mxu0 %v727
      %v1408 = vpop.f32.mrb[0].mxu0
      %v1409 = vadd.f32 0.0, %v1408
      %v1410 = vpop.f32.mrb[0].mxu0
      %v1411 = vpop.f32.mrb[0].mxu0
      %v1412 = vadd.f32 0.0, %v1411
      %v1413 = vpop.f32.mrb[0].mxu0
      %1414 = vmatprep.mubr.bf16.mxu0 0
      %1415 = vmatmul.mubr.bf16.gmra.mrb[0].mxu0 %v730
      %v1416 = vpop.f32.mrb[0].mxu0
      %v1417 = vadd.f32 0.0, %v1416
      %v1418 = vpop.f32.mrb[0].mxu0
      %v1419 = vpop.f32.mrb[0].mxu0
      %v1420 = vadd.f32 0.0, %v1419
      %v1421 = vpop.f32.mrb[0].mxu0
      %1422 = vmatprep.mubr.bf16.mxu0 0
      %1423 = vmatmul.mubr.bf16.gmra.mrb[0].mxu0 %v733
      %v1424 = vpop.f32.mrb[0].mxu0
      %v1425 = vadd.f32 0.0, %v1424
      %v1426 = vpop.f32.mrb[0].mxu0
      %v1427 = vpop.f32.mrb[0].mxu0
      %v1428 = vadd.f32 0.0, %v1427
      %v1429 = vpop.f32.mrb[0].mxu0
      %1430 = vmatprep.mubr.bf16.mxu0 0
      %1431 = vmatmul.mubr.bf16.gmra.mrb[0].mxu0 %v736
      %v1432 = vpop.f32.mrb[0].mxu0
      %v1433 = vadd.f32 0.0, %v1432
      %v1434 = vpop.f32.mrb[0].mxu0
      %v1435 = vpop.f32.mrb[0].mxu0
      %v1436 = vadd.f32 0.0, %v1435
      %v1437 = vpop.f32.mrb[0].mxu0
      %1438 = vmatprep.mubr.bf16.mxu0 0
      %1439 = vmatmul.mubr.bf16.gmra.mrb[0].mxu0 %v1281
      %v1440 = vpop.f32.mrb[0].mxu0
      %v1441 = vadd.f32 0.0, %v1440
      %v1442 = vpop.f32.mrb[0].mxu0
      %v1443 = vpop.f32.mrb[0].mxu0
      %v1444 = vadd.f32 0.0, %v1443
      %v1445 = vpop.f32.mrb[0].mxu0
      %1446 = vdwg.mxu0
      %v1447 = vadd.f32 %v1245, %v1321
      %v1448 = vadd.f32 %v1246, %v1324
      %v1449 = vadd.f32 %v1247, %v1329
      %v1450 = vadd.f32 %v1248, %v1332
      %v1451 = vadd.f32 %v1249, %v1337
      %v1452 = vadd.f32 %v1250, %v1340
      %v1453 = vadd.f32 %v1251, %v1345
      %v1454 = vadd.f32 %v1252, %v1348
      %v1455 = vadd.f32 %v1253, %v1353
      %v1456 = vadd.f32 %v1254, %v1356
      %v1457 = vadd.f32 %v1255, %v1361
      %v1458 = vadd.f32 %v1256, %v1364
      %v1459 = vadd.f32 %v1257, %v1369
      %v1460 = vadd.f32 %v1258, %v1372
      %v1461 = vadd.f32 %v1259, %v1377
      %v1462 = vadd.f32 %v1260, %v1380
      %v1463 = vadd.f32 %v1261, %v1385
      %v1464 = vadd.f32 %v1262, %v1388
      %v1465 = vadd.f32 %v1263, %v1393
      %v1466 = vadd.f32 %v1264, %v1396
      %v1467 = vadd.f32 %v1265, %v1401
      %v1468 = vadd.f32 %v1266, %v1404
      %v1469 = vadd.f32 %v1267, %v1409
      %v1470 = vadd.f32 %v1268, %v1412
      %v1471 = vadd.f32 %v1269, %v1417
      %v1472 = vadd.f32 %v1270, %v1420
      %v1473 = vadd.f32 %v1271, %v1425
      %v1474 = vadd.f32 %v1272, %v1428
      %v1475 = vadd.f32 %v1273, %v1433
      %v1476 = vadd.f32 %v1274, %v1436
      %v1477 = vadd.f32 %v1275, %v1441
      %v1478 = vadd.f32 %v1276, %v1444
      %v1482 = vrot.slane %v274, 1
      %v1483 = vrot.slane %v275, 1
      %v1484 = vsel %vm345, %v1482, %v1483
      %v1485 = vrot.slane %v276, 1
      %v1486 = vsel %vm345, %v1483, %v1485
      %v1489 = vpack.c.bf16 %v1486, %v1484
      %s1490 = scalar_lea.vmem %s1, 8
      %v1491 = vld [vmem:[%s1490] sm:$0x3]
      %v1493 = vsel %vm476, %v1489, 0
      %v1496 = vsel %vm525, %v1491, 0
      %1498 = vmatprep.subr.bf16.mxu0 0
      %1499 = vmatpush1.bf16.msra.mxu0 %v1496
      %1500 = vmatprep.subr.bf16.mxu0 0
      %1501 = vmatpush1.bf16.msra.mxu0 0
      %1502 = vmatprep.subr.bf16.mxu0 0
      %1503 = vmatpush1.bf16.msra.mxu0 0
      %1504 = vmatprep.subr.bf16.mxu0 0
      %1505 = vmatpush1.bf16.msra.mxu0 0
      %1506 = vmatprep.subr.bf16.mxu0 0
      %1507 = vmatpush1.bf16.msra.mxu0 0
      %1508 = vmatprep.subr.bf16.mxu0 0
      %1509 = vmatpush1.bf16.msra.mxu0 0
      %1510 = vmatprep.subr.bf16.mxu0 0
      %1511 = vmatpush1.bf16.msra.mxu0 0
      %1512 = vmatprep.subr.bf16.mxu0 0
      %1513 = vmatpush1.bf16.msra.mxu0 0
      %1514 = vmatprep.subr.bf16.mxu0 0
      %1515 = vmatpush1.bf16.msra.mxu0 0
      %1516 = vmatprep.subr.bf16.mxu0 0
      %1517 = vmatpush1.bf16.msra.mxu0 0
      %1518 = vmatprep.subr.bf16.mxu0 0
      %1519 = vmatpush1.bf16.msra.mxu0 0
      %1520 = vmatprep.subr.bf16.mxu0 0
      %1521 = vmatpush1.bf16.msra.mxu0 0
      %1522 = vmatprep.subr.bf16.mxu0 0
      %1523 = vmatpush1.bf16.msra.mxu0 0
      %1524 = vmatprep.subr.bf16.mxu0 0
      %1525 = vmatpush1.bf16.msra.mxu0 0
      %1526 = vmatprep.subr.bf16.mxu0 0
      %1527 = vmatpush1.bf16.msra.mxu0 0
      %1528 = vmatprep.subr.bf16.mxu0 0
      %1529 = vmatpush1.bf16.msra.mxu0 0
      %1530 = vmatprep.mubr.bf16.mxu0 0
      %1531 = vmatmul.mubr.bf16.gmra.mrb[0].mxu0 %v481
      %v1532 = vpop.f32.mrb[0].mxu0
      %v1533 = vadd.f32 0.0, %v1532
      %v1534 = vpop.f32.mrb[0].mxu0
      %v1535 = vpop.f32.mrb[0].mxu0
      %v1536 = vadd.f32 0.0, %v1535
      %v1537 = vpop.f32.mrb[0].mxu0
      %1538 = vmatprep.mubr.bf16.mxu0 0
      %1539 = vmatmul.mubr.bf16.gmra.mrb[0].mxu0 %v484
      %v1540 = vpop.f32.mrb[0].mxu0
      %v1541 = vadd.f32 0.0, %v1540
      %v1542 = vpop.f32.mrb[0].mxu0
      %v1543 = vpop.f32.mrb[0].mxu0
      %v1544 = vadd.f32 0.0, %v1543
      %v1545 = vpop.f32.mrb[0].mxu0
      %1546 = vmatprep.mubr.bf16.mxu0 0
      %1547 = vmatmul.mubr.bf16.gmra.mrb[0].mxu0 %v487
      %v1548 = vpop.f32.mrb[0].mxu0
      %v1549 = vadd.f32 0.0, %v1548
      %v1550 = vpop.f32.mrb[0].mxu0
      %v1551 = vpop.f32.mrb[0].mxu0
      %v1552 = vadd.f32 0.0, %v1551
      %v1553 = vpop.f32.mrb[0].mxu0
      %1554 = vmatprep.mubr.bf16.mxu0 0
      %1555 = vmatmul.mubr.bf16.gmra.mrb[0].mxu0 %v490
      %v1556 = vpop.f32.mrb[0].mxu0
      %v1557 = vadd.f32 0.0, %v1556
      %v1558 = vpop.f32.mrb[0].mxu0
      %v1559 = vpop.f32.mrb[0].mxu0
      %v1560 = vadd.f32 0.0, %v1559
      %v1561 = vpop.f32.mrb[0].mxu0
      %1562 = vmatprep.mubr.bf16.mxu0 0
      %1563 = vmatmul.mubr.bf16.gmra.mrb[0].mxu0 %v493
      %v1564 = vpop.f32.mrb[0].mxu0
      %v1565 = vadd.f32 0.0, %v1564
      %v1566 = vpop.f32.mrb[0].mxu0
      %v1567 = vpop.f32.mrb[0].mxu0
      %v1568 = vadd.f32 0.0, %v1567
      %v1569 = vpop.f32.mrb[0].mxu0
      %1570 = vmatprep.mubr.bf16.mxu0 0
      %1571 = vmatmul.mubr.bf16.gmra.mrb[0].mxu0 %v496
      %v1572 = vpop.f32.mrb[0].mxu0
      %v1573 = vadd.f32 0.0, %v1572
      %v1574 = vpop.f32.mrb[0].mxu0
      %v1575 = vpop.f32.mrb[0].mxu0
      %v1576 = vadd.f32 0.0, %v1575
      %v1577 = vpop.f32.mrb[0].mxu0
      %1578 = vmatprep.mubr.bf16.mxu0 0
      %1579 = vmatmul.mubr.bf16.gmra.mrb[0].mxu0 %v499
      %v1580 = vpop.f32.mrb[0].mxu0
      %v1581 = vadd.f32 0.0, %v1580
      %v1582 = vpop.f32.mrb[0].mxu0
      %v1583 = vpop.f32.mrb[0].mxu0
      %v1584 = vadd.f32 0.0, %v1583
      %v1585 = vpop.f32.mrb[0].mxu0
      %1586 = vmatprep.mubr.bf16.mxu0 0
      %1587 = vmatmul.mubr.bf16.gmra.mrb[0].mxu0 %v502
      %v1588 = vpop.f32.mrb[0].mxu0
      %v1589 = vadd.f32 0.0, %v1588
      %v1590 = vpop.f32.mrb[0].mxu0
      %v1591 = vpop.f32.mrb[0].mxu0
      %v1592 = vadd.f32 0.0, %v1591
      %v1593 = vpop.f32.mrb[0].mxu0
      %1594 = vmatprep.mubr.bf16.mxu0 0
      %1595 = vmatmul.mubr.bf16.gmra.mrb[0].mxu0 %v505
      %v1596 = vpop.f32.mrb[0].mxu0
      %v1597 = vadd.f32 0.0, %v1596
      %v1598 = vpop.f32.mrb[0].mxu0
      %v1599 = vpop.f32.mrb[0].mxu0
      %v1600 = vadd.f32 0.0, %v1599
      %v1601 = vpop.f32.mrb[0].mxu0
      %1602 = vmatprep.mubr.bf16.mxu0 0
      %1603 = vmatmul.mubr.bf16.gmra.mrb[0].mxu0 %v508
      %v1604 = vpop.f32.mrb[0].mxu0
      %v1605 = vadd.f32 0.0, %v1604
      %v1606 = vpop.f32.mrb[0].mxu0
      %v1607 = vpop.f32.mrb[0].mxu0
      %v1608 = vadd.f32 0.0, %v1607
      %v1609 = vpop.f32.mrb[0].mxu0
      %1610 = vmatprep.mubr.bf16.mxu0 0
      %1611 = vmatmul.mubr.bf16.gmra.mrb[0].mxu0 %v511
      %v1612 = vpop.f32.mrb[0].mxu0
      %v1613 = vadd.f32 0.0, %v1612
      %v1614 = vpop.f32.mrb[0].mxu0
      %v1615 = vpop.f32.mrb[0].mxu0
      %v1616 = vadd.f32 0.0, %v1615
      %v1617 = vpop.f32.mrb[0].mxu0
      %1618 = vmatprep.mubr.bf16.mxu0 0
      %1619 = vmatmul.mubr.bf16.gmra.mrb[0].mxu0 %v514
      %v1620 = vpop.f32.mrb[0].mxu0
      %v1621 = vadd.f32 0.0, %v1620
      %v1622 = vpop.f32.mrb[0].mxu0
      %v1623 = vpop.f32.mrb[0].mxu0
      %v1624 = vadd.f32 0.0, %v1623
      %v1625 = vpop.f32.mrb[0].mxu0
      %1626 = vmatprep.mubr.bf16.mxu0 0
      %1627 = vmatmul.mubr.bf16.gmra.mrb[0].mxu0 %v517
      %v1628 = vpop.f32.mrb[0].mxu0
      %v1629 = vadd.f32 0.0, %v1628
      %v1630 = vpop.f32.mrb[0].mxu0
      %v1631 = vpop.f32.mrb[0].mxu0
      %v1632 = vadd.f32 0.0, %v1631
      %v1633 = vpop.f32.mrb[0].mxu0
      %1634 = vmatprep.mubr.bf16.mxu0 0
      %1635 = vmatmul.mubr.bf16.gmra.mrb[0].mxu0 %v520
      %v1636 = vpop.f32.mrb[0].mxu0
      %v1637 = vadd.f32 0.0, %v1636
      %v1638 = vpop.f32.mrb[0].mxu0
      %v1639 = vpop.f32.mrb[0].mxu0
      %v1640 = vadd.f32 0.0, %v1639
      %v1641 = vpop.f32.mrb[0].mxu0
      %1642 = vmatprep.mubr.bf16.mxu0 0
      %1643 = vmatmul.mubr.bf16.gmra.mrb[0].mxu0 %v523
      %v1644 = vpop.f32.mrb[0].mxu0
      %v1645 = vadd.f32 0.0, %v1644
      %v1646 = vpop.f32.mrb[0].mxu0
      %v1647 = vpop.f32.mrb[0].mxu0
      %v1648 = vadd.f32 0.0, %v1647
      %v1649 = vpop.f32.mrb[0].mxu0
      %1650 = vmatprep.mubr.bf16.mxu0 0
      %1651 = vmatmul.mubr.bf16.gmra.mrb[0].mxu0 %v1493
      %v1652 = vpop.f32.mrb[0].mxu0
      %v1653 = vadd.f32 0.0, %v1652
      %v1654 = vpop.f32.mrb[0].mxu0
      %v1655 = vpop.f32.mrb[0].mxu0
      %v1656 = vadd.f32 0.0, %v1655
      %v1657 = vpop.f32.mrb[0].mxu0
      %1658 = vdwg.mxu0
      %v1659 = vadd.f32 %v1447, %v1533
      %v1660 = vadd.f32 %v1448, %v1536
      %v1661 = vadd.f32 %v1449, %v1541
      %v1662 = vadd.f32 %v1450, %v1544
      %v1663 = vadd.f32 %v1451, %v1549
      %v1664 = vadd.f32 %v1452, %v1552
      %v1665 = vadd.f32 %v1453, %v1557
      %v1666 = vadd.f32 %v1454, %v1560
      %v1667 = vadd.f32 %v1455, %v1565
      %v1668 = vadd.f32 %v1456, %v1568
      %v1669 = vadd.f32 %v1457, %v1573
      %v1670 = vadd.f32 %v1458, %v1576
      %v1671 = vadd.f32 %v1459, %v1581
      %v1672 = vadd.f32 %v1460, %v1584
      %v1673 = vadd.f32 %v1461, %v1589
      %v1674 = vadd.f32 %v1462, %v1592
      %v1675 = vadd.f32 %v1463, %v1597
      %v1676 = vadd.f32 %v1464, %v1600
      %v1677 = vadd.f32 %v1465, %v1605
      %v1678 = vadd.f32 %v1466, %v1608
      %v1679 = vadd.f32 %v1467, %v1613
      %v1680 = vadd.f32 %v1468, %v1616
      %v1681 = vadd.f32 %v1469, %v1621
      %v1682 = vadd.f32 %v1470, %v1624
      %v1683 = vadd.f32 %v1471, %v1629
      %v1684 = vadd.f32 %v1472, %v1632
      %v1685 = vadd.f32 %v1473, %v1637
      %v1686 = vadd.f32 %v1474, %v1640
      %v1687 = vadd.f32 %v1475, %v1645
      %v1688 = vadd.f32 %v1476, %v1648
      %v1689 = vadd.f32 %v1477, %v1653
      %v1690 = vadd.f32 %v1478, %v1656
      %v1691 = vrot.slane %v274, 2
      %v1692 = vrot.slane %v275, 2
      %v1693 = vsel %vm902, %v1691, %v1692
      %v1694 = vrot.slane %v276, 2
      %v1695 = vsel %vm902, %v1692, %v1694
      %v1698 = vpack.c.bf16 %v1695, %v1693
      %s1699 = scalar_lea.vmem %s1, 10
      %v1700 = vld [vmem:[%s1699] sm:$0x3]
      %v1702 = vsel %vm476, %v1698, 0
      %v1705 = vsel %vm525, %v1700, 0
      %1707 = vmatprep.subr.bf16.mxu0 0
      %1708 = vmatpush1.bf16.msra.mxu0 %v1705
      %1709 = vmatprep.subr.bf16.mxu0 0
      %1710 = vmatpush1.bf16.msra.mxu0 0
      %1711 = vmatprep.subr.bf16.mxu0 0
      %1712 = vmatpush1.bf16.msra.mxu0 0
      %1713 = vmatprep.subr.bf16.mxu0 0
      %1714 = vmatpush1.bf16.msra.mxu0 0
      %1715 = vmatprep.subr.bf16.mxu0 0
      %1716 = vmatpush1.bf16.msra.mxu0 0
      %1717 = vmatprep.subr.bf16.mxu0 0
      %1718 = vmatpush1.bf16.msra.mxu0 0
      %1719 = vmatprep.subr.bf16.mxu0 0
      %1720 = vmatpush1.bf16.msra.mxu0 0
      %1721 = vmatprep.subr.bf16.mxu0 0
      %1722 = vmatpush1.bf16.msra.mxu0 0
      %1723 = vmatprep.subr.bf16.mxu0 0
      %1724 = vmatpush1.bf16.msra.mxu0 0
      %1725 = vmatprep.subr.bf16.mxu0 0
      %1726 = vmatpush1.bf16.msra.mxu0 0
      %1727 = vmatprep.subr.bf16.mxu0 0
      %1728 = vmatpush1.bf16.msra.mxu0 0
      %1729 = vmatprep.subr.bf16.mxu0 0
      %1730 = vmatpush1.bf16.msra.mxu0 0
      %1731 = vmatprep.subr.bf16.mxu0 0
      %1732 = vmatpush1.bf16.msra.mxu0 0
      %1733 = vmatprep.subr.bf16.mxu0 0
      %1734 = vmatpush1.bf16.msra.mxu0 0
      %1735 = vmatprep.subr.bf16.mxu0 0
      %1736 = vmatpush1.bf16.msra.mxu0 0
      %1737 = vmatprep.subr.bf16.mxu0 0
      %1738 = vmatpush1.bf16.msra.mxu0 0
      %1739 = vmatprep.mubr.bf16.mxu0 0
      %1740 = vmatmul.mubr.bf16.gmra.mrb[0].mxu0 %v1037
      %v1741 = vpop.f32.mrb[0].mxu0
      %v1742 = vadd.f32 0.0, %v1741
      %v1743 = vpop.f32.mrb[0].mxu0
      %v1744 = vpop.f32.mrb[0].mxu0
      %v1745 = vadd.f32 0.0, %v1744
      %v1746 = vpop.f32.mrb[0].mxu0
      %1747 = vmatprep.mubr.bf16.mxu0 0
      %1748 = vmatmul.mubr.bf16.gmra.mrb[0].mxu0 %v1040
      %v1749 = vpop.f32.mrb[0].mxu0
      %v1750 = vadd.f32 0.0, %v1749
      %v1751 = vpop.f32.mrb[0].mxu0
      %v1752 = vpop.f32.mrb[0].mxu0
      %v1753 = vadd.f32 0.0, %v1752
      %v1754 = vpop.f32.mrb[0].mxu0
      %1755 = vmatprep.mubr.bf16.mxu0 0
      %1756 = vmatmul.mubr.bf16.gmra.mrb[0].mxu0 %v1043
      %v1757 = vpop.f32.mrb[0].mxu0
      %v1758 = vadd.f32 0.0, %v1757
      %v1759 = vpop.f32.mrb[0].mxu0
      %v1760 = vpop.f32.mrb[0].mxu0
      %v1761 = vadd.f32 0.0, %v1760
      %v1762 = vpop.f32.mrb[0].mxu0
      %1763 = vmatprep.mubr.bf16.mxu0 0
      %1764 = vmatmul.mubr.bf16.gmra.mrb[0].mxu0 %v1046
      %v1765 = vpop.f32.mrb[0].mxu0
      %v1766 = vadd.f32 0.0, %v1765
      %v1767 = vpop.f32.mrb[0].mxu0
      %v1768 = vpop.f32.mrb[0].mxu0
      %v1769 = vadd.f32 0.0, %v1768
      %v1770 = vpop.f32.mrb[0].mxu0
      %1771 = vmatprep.mubr.bf16.mxu0 0
      %1772 = vmatmul.mubr.bf16.gmra.mrb[0].mxu0 %v1049
      %v1773 = vpop.f32.mrb[0].mxu0
      %v1774 = vadd.f32 0.0, %v1773
      %v1775 = vpop.f32.mrb[0].mxu0
      %v1776 = vpop.f32.mrb[0].mxu0
      %v1777 = vadd.f32 0.0, %v1776
      %v1778 = vpop.f32.mrb[0].mxu0
      %1779 = vmatprep.mubr.bf16.mxu0 0
      %1780 = vmatmul.mubr.bf16.gmra.mrb[0].mxu0 %v1052
      %v1781 = vpop.f32.mrb[0].mxu0
      %v1782 = vadd.f32 0.0, %v1781
      %v1783 = vpop.f32.mrb[0].mxu0
      %v1784 = vpop.f32.mrb[0].mxu0
      %v1785 = vadd.f32 0.0, %v1784
      %v1786 = vpop.f32.mrb[0].mxu0
      %1787 = vmatprep.mubr.bf16.mxu0 0
      %1788 = vmatmul.mubr.bf16.gmra.mrb[0].mxu0 %v1055
      %v1789 = vpop.f32.mrb[0].mxu0
      %v1790 = vadd.f32 0.0, %v1789
      %v1791 = vpop.f32.mrb[0].mxu0
      %v1792 = vpop.f32.mrb[0].mxu0
      %v1793 = vadd.f32 0.0, %v1792
      %v1794 = vpop.f32.mrb[0].mxu0
      %1795 = vmatprep.mubr.bf16.mxu0 0
      %1796 = vmatmul.mubr.bf16.gmra.mrb[0].mxu0 %v1058
      %v1797 = vpop.f32.mrb[0].mxu0
      %v1798 = vadd.f32 0.0, %v1797
      %v1799 = vpop.f32.mrb[0].mxu0
      %v1800 = vpop.f32.mrb[0].mxu0
      %v1801 = vadd.f32 0.0, %v1800
      %v1802 = vpop.f32.mrb[0].mxu0
      %1803 = vmatprep.mubr.bf16.mxu0 0
      %1804 = vmatmul.mubr.bf16.gmra.mrb[0].mxu0 %v1061
      %v1805 = vpop.f32.mrb[0].mxu0
      %v1806 = vadd.f32 0.0, %v1805
      %v1807 = vpop.f32.mrb[0].mxu0
      %v1808 = vpop.f32.mrb[0].mxu0
      %v1809 = vadd.f32 0.0, %v1808
      %v1810 = vpop.f32.mrb[0].mxu0
      %1811 = vmatprep.mubr.bf16.mxu0 0
      %1812 = vmatmul.mubr.bf16.gmra.mrb[0].mxu0 %v1064
      %v1813 = vpop.f32.mrb[0].mxu0
      %v1814 = vadd.f32 0.0, %v1813
      %v1815 = vpop.f32.mrb[0].mxu0
      %v1816 = vpop.f32.mrb[0].mxu0
      %v1817 = vadd.f32 0.0, %v1816
      %v1818 = vpop.f32.mrb[0].mxu0
      %1819 = vmatprep.mubr.bf16.mxu0 0
      %1820 = vmatmul.mubr.bf16.gmra.mrb[0].mxu0 %v1067
      %v1821 = vpop.f32.mrb[0].mxu0
      %v1822 = vadd.f32 0.0, %v1821
      %v1823 = vpop.f32.mrb[0].mxu0
      %v1824 = vpop.f32.mrb[0].mxu0
      %v1825 = vadd.f32 0.0, %v1824
      %v1826 = vpop.f32.mrb[0].mxu0
      %1827 = vmatprep.mubr.bf16.mxu0 0
      %1828 = vmatmul.mubr.bf16.gmra.mrb[0].mxu0 %v1070
      %v1829 = vpop.f32.mrb[0].mxu0
      %v1830 = vadd.f32 0.0, %v1829
      %v1831 = vpop.f32.mrb[0].mxu0
      %v1832 = vpop.f32.mrb[0].mxu0
      %v1833 = vadd.f32 0.0, %v1832
      %v1834 = vpop.f32.mrb[0].mxu0
      %1835 = vmatprep.mubr.bf16.mxu0 0
      %1836 = vmatmul.mubr.bf16.gmra.mrb[0].mxu0 %v1073
      %v1837 = vpop.f32.mrb[0].mxu0
      %v1838 = vadd.f32 0.0, %v1837
      %v1839 = vpop.f32.mrb[0].mxu0
      %v1840 = vpop.f32.mrb[0].mxu0
      %v1841 = vadd.f32 0.0, %v1840
      %v1842 = vpop.f32.mrb[0].mxu0
      %1843 = vmatprep.mubr.bf16.mxu0 0
      %1844 = vmatmul.mubr.bf16.gmra.mrb[0].mxu0 %v1076
      %v1845 = vpop.f32.mrb[0].mxu0
      %v1846 = vadd.f32 0.0, %v1845
      %v1847 = vpop.f32.mrb[0].mxu0
      %v1848 = vpop.f32.mrb[0].mxu0
      %v1849 = vadd.f32 0.0, %v1848
      %v1850 = vpop.f32.mrb[0].mxu0
      %1851 = vmatprep.mubr.bf16.mxu0 0
      %1852 = vmatmul.mubr.bf16.gmra.mrb[0].mxu0 %v1079
      %v1853 = vpop.f32.mrb[0].mxu0
      %v1854 = vadd.f32 0.0, %v1853
      %v1855 = vpop.f32.mrb[0].mxu0
      %v1856 = vpop.f32.mrb[0].mxu0
      %v1857 = vadd.f32 0.0, %v1856
      %v1858 = vpop.f32.mrb[0].mxu0
      %1859 = vmatprep.mubr.bf16.mxu0 0
      %1860 = vmatmul.mubr.bf16.gmra.mrb[0].mxu0 %v1702
      %v1861 = vpop.f32.mrb[0].mxu0
      %v1862 = vadd.f32 0.0, %v1861
      %v1863 = vpop.f32.mrb[0].mxu0
      %v1864 = vpop.f32.mrb[0].mxu0
      %v1865 = vadd.f32 0.0, %v1864
      %v1866 = vpop.f32.mrb[0].mxu0
      %1867 = vdwg.mxu0
      %v1868 = vadd.f32 %v1659, %v1742
      %v1869 = vadd.f32 %v1660, %v1745
      %v1870 = vadd.f32 %v1661, %v1750
      %v1871 = vadd.f32 %v1662, %v1753
      %v1872 = vadd.f32 %v1663, %v1758
      %v1873 = vadd.f32 %v1664, %v1761
      %v1874 = vadd.f32 %v1665, %v1766
      %v1875 = vadd.f32 %v1666, %v1769
      %v1876 = vadd.f32 %v1667, %v1774
      %v1877 = vadd.f32 %v1668, %v1777
      %v1878 = vadd.f32 %v1669, %v1782
      %v1879 = vadd.f32 %v1670, %v1785
      %v1880 = vadd.f32 %v1671, %v1790
      %v1881 = vadd.f32 %v1672, %v1793
      %v1882 = vadd.f32 %v1673, %v1798
      %v1883 = vadd.f32 %v1674, %v1801
      %v1884 = vadd.f32 %v1675, %v1806
      %v1885 = vadd.f32 %v1676, %v1809
      %v1886 = vadd.f32 %v1677, %v1814
      %v1887 = vadd.f32 %v1678, %v1817
      %v1888 = vadd.f32 %v1679, %v1822
      %v1889 = vadd.f32 %v1680, %v1825
      %v1890 = vadd.f32 %v1681, %v1830
      %v1891 = vadd.f32 %v1682, %v1833
      %v1892 = vadd.f32 %v1683, %v1838
      %v1893 = vadd.f32 %v1684, %v1841
      %v1894 = vadd.f32 %v1685, %v1846
      %v1895 = vadd.f32 %v1686, %v1849
      %v1896 = vadd.f32 %v1687, %v1854
      %v1897 = vadd.f32 %v1688, %v1857
      %v1898 = vadd.f32 %v1689, %v1862
      %v1899 = vadd.f32 %v1690, %v1865
      %v1900 = vpack.c.bf16 %v278, %v277
      %s1901 = scalar_lea.vmem %s1, 12
      %v1902 = vld [vmem:[%s1901] sm:$0x3]
      %v1904 = vsel %vm476, %v1900, 0
      %v1907 = vsel %vm525, %v1902, 0
      %1909 = vmatprep.subr.bf16.mxu0 0
      %1910 = vmatpush1.bf16.msra.mxu0 %v1907
      %1911 = vmatprep.subr.bf16.mxu0 0
      %1912 = vmatpush1.bf16.msra.mxu0 0
      %1913 = vmatprep.subr.bf16.mxu0 0
      %1914 = vmatpush1.bf16.msra.mxu0 0
      %1915 = vmatprep.subr.bf16.mxu0 0
      %1916 = vmatpush1.bf16.msra.mxu0 0
      %1917 = vmatprep.subr.bf16.mxu0 0
      %1918 = vmatpush1.bf16.msra.mxu0 0
      %1919 = vmatprep.subr.bf16.mxu0 0
      %1920 = vmatpush1.bf16.msra.mxu0 0
      %1921 = vmatprep.subr.bf16.mxu0 0
      %1922 = vmatpush1.bf16.msra.mxu0 0
      %1923 = vmatprep.subr.bf16.mxu0 0
      %1924 = vmatpush1.bf16.msra.mxu0 0
      %1925 = vmatprep.subr.bf16.mxu0 0
      %1926 = vmatpush1.bf16.msra.mxu0 0
      %1927 = vmatprep.subr.bf16.mxu0 0
      %1928 = vmatpush1.bf16.msra.mxu0 0
      %1929 = vmatprep.subr.bf16.mxu0 0
      %1930 = vmatpush1.bf16.msra.mxu0 0
      %1931 = vmatprep.subr.bf16.mxu0 0
      %1932 = vmatpush1.bf16.msra.mxu0 0
      %1933 = vmatprep.subr.bf16.mxu0 0
      %1934 = vmatpush1.bf16.msra.mxu0 0
      %1935 = vmatprep.subr.bf16.mxu0 0
      %1936 = vmatpush1.bf16.msra.mxu0 0
      %1937 = vmatprep.subr.bf16.mxu0 0
      %1938 = vmatpush1.bf16.msra.mxu0 0
      %1939 = vmatprep.subr.bf16.mxu0 0
      %1940 = vmatpush1.bf16.msra.mxu0 0
      %1941 = vmatprep.mubr.bf16.mxu0 0
      %1942 = vmatmul.mubr.bf16.gmra.mrb[0].mxu0 %v697
      %v1943 = vpop.f32.mrb[0].mxu0
      %v1944 = vadd.f32 0.0, %v1943
      %v1945 = vpop.f32.mrb[0].mxu0
      %v1946 = vpop.f32.mrb[0].mxu0
      %v1947 = vadd.f32 0.0, %v1946
      %v1948 = vpop.f32.mrb[0].mxu0
      %1949 = vmatprep.mubr.bf16.mxu0 0
      %1950 = vmatmul.mubr.bf16.gmra.mrb[0].mxu0 %v700
      %v1951 = vpop.f32.mrb[0].mxu0
      %v1952 = vadd.f32 0.0, %v1951
      %v1953 = vpop.f32.mrb[0].mxu0
      %v1954 = vpop.f32.mrb[0].mxu0
      %v1955 = vadd.f32 0.0, %v1954
      %v1956 = vpop.f32.mrb[0].mxu0
      %1957 = vmatprep.mubr.bf16.mxu0 0
      %1958 = vmatmul.mubr.bf16.gmra.mrb[0].mxu0 %v703
      %v1959 = vpop.f32.mrb[0].mxu0
      %v1960 = vadd.f32 0.0, %v1959
      %v1961 = vpop.f32.mrb[0].mxu0
      %v1962 = vpop.f32.mrb[0].mxu0
      %v1963 = vadd.f32 0.0, %v1962
      %v1964 = vpop.f32.mrb[0].mxu0
      %1965 = vmatprep.mubr.bf16.mxu0 0
      %1966 = vmatmul.mubr.bf16.gmra.mrb[0].mxu0 %v706
      %v1967 = vpop.f32.mrb[0].mxu0
      %v1968 = vadd.f32 0.0, %v1967
      %v1969 = vpop.f32.mrb[0].mxu0
      %v1970 = vpop.f32.mrb[0].mxu0
      %v1971 = vadd.f32 0.0, %v1970
      %v1972 = vpop.f32.mrb[0].mxu0
      %1973 = vmatprep.mubr.bf16.mxu0 0
      %1974 = vmatmul.mubr.bf16.gmra.mrb[0].mxu0 %v709
      %v1975 = vpop.f32.mrb[0].mxu0
      %v1976 = vadd.f32 0.0, %v1975
      %v1977 = vpop.f32.mrb[0].mxu0
      %v1978 = vpop.f32.mrb[0].mxu0
      %v1979 = vadd.f32 0.0, %v1978
      %v1980 = vpop.f32.mrb[0].mxu0
      %1981 = vmatprep.mubr.bf16.mxu0 0
      %1982 = vmatmul.mubr.bf16.gmra.mrb[0].mxu0 %v712
      %v1983 = vpop.f32.mrb[0].mxu0
      %v1984 = vadd.f32 0.0, %v1983
      %v1985 = vpop.f32.mrb[0].mxu0
      %v1986 = vpop.f32.mrb[0].mxu0
      %v1987 = vadd.f32 0.0, %v1986
      %v1988 = vpop.f32.mrb[0].mxu0
      %1989 = vmatprep.mubr.bf16.mxu0 0
      %1990 = vmatmul.mubr.bf16.gmra.mrb[0].mxu0 %v715
      %v1991 = vpop.f32.mrb[0].mxu0
      %v1992 = vadd.f32 0.0, %v1991
      %v1993 = vpop.f32.mrb[0].mxu0
      %v1994 = vpop.f32.mrb[0].mxu0
      %v1995 = vadd.f32 0.0, %v1994
      %v1996 = vpop.f32.mrb[0].mxu0
      %1997 = vmatprep.mubr.bf16.mxu0 0
      %1998 = vmatmul.mubr.bf16.gmra.mrb[0].mxu0 %v718
      %v1999 = vpop.f32.mrb[0].mxu0
      %v2000 = vadd.f32 0.0, %v1999
      %v2001 = vpop.f32.mrb[0].mxu0
      %v2002 = vpop.f32.mrb[0].mxu0
      %v2003 = vadd.f32 0.0, %v2002
      %v2004 = vpop.f32.mrb[0].mxu0
      %2005 = vmatprep.mubr.bf16.mxu0 0
      %2006 = vmatmul.mubr.bf16.gmra.mrb[0].mxu0 %v721
      %v2007 = vpop.f32.mrb[0].mxu0
      %v2008 = vadd.f32 0.0, %v2007
      %v2009 = vpop.f32.mrb[0].mxu0
      %v2010 = vpop.f32.mrb[0].mxu0
      %v2011 = vadd.f32 0.0, %v2010
      %v2012 = vpop.f32.mrb[0].mxu0
      %2013 = vmatprep.mubr.bf16.mxu0 0
      %2014 = vmatmul.mubr.bf16.gmra.mrb[0].mxu0 %v724
      %v2015 = vpop.f32.mrb[0].mxu0
      %v2016 = vadd.f32 0.0, %v2015
      %v2017 = vpop.f32.mrb[0].mxu0
      %v2018 = vpop.f32.mrb[0].mxu0
      %v2019 = vadd.f32 0.0, %v2018
      %v2020 = vpop.f32.mrb[0].mxu0
      %2021 = vmatprep.mubr.bf16.mxu0 0
      %2022 = vmatmul.mubr.bf16.gmra.mrb[0].mxu0 %v727
      %v2023 = vpop.f32.mrb[0].mxu0
      %v2024 = vadd.f32 0.0, %v2023
      %v2025 = vpop.f32.mrb[0].mxu0
      %v2026 = vpop.f32.mrb[0].mxu0
      %v2027 = vadd.f32 0.0, %v2026
      %v2028 = vpop.f32.mrb[0].mxu0
      %2029 = vmatprep.mubr.bf16.mxu0 0
      %2030 = vmatmul.mubr.bf16.gmra.mrb[0].mxu0 %v730
      %v2031 = vpop.f32.mrb[0].mxu0
      %v2032 = vadd.f32 0.0, %v2031
      %v2033 = vpop.f32.mrb[0].mxu0
      %v2034 = vpop.f32.mrb[0].mxu0
      %v2035 = vadd.f32 0.0, %v2034
      %v2036 = vpop.f32.mrb[0].mxu0
      %2037 = vmatprep.mubr.bf16.mxu0 0
      %2038 = vmatmul.mubr.bf16.gmra.mrb[0].mxu0 %v733
      %v2039 = vpop.f32.mrb[0].mxu0
      %v2040 = vadd.f32 0.0, %v2039
      %v2041 = vpop.f32.mrb[0].mxu0
      %v2042 = vpop.f32.mrb[0].mxu0
      %v2043 = vadd.f32 0.0, %v2042
      %v2044 = vpop.f32.mrb[0].mxu0
      %2045 = vmatprep.mubr.bf16.mxu0 0
      %2046 = vmatmul.mubr.bf16.gmra.mrb[0].mxu0 %v736
      %v2047 = vpop.f32.mrb[0].mxu0
      %v2048 = vadd.f32 0.0, %v2047
      %v2049 = vpop.f32.mrb[0].mxu0
      %v2050 = vpop.f32.mrb[0].mxu0
      %v2051 = vadd.f32 0.0, %v2050
      %v2052 = vpop.f32.mrb[0].mxu0
      %2053 = vmatprep.mubr.bf16.mxu0 0
      %2054 = vmatmul.mubr.bf16.gmra.mrb[0].mxu0 %v1281
      %v2055 = vpop.f32.mrb[0].mxu0
      %v2056 = vadd.f32 0.0, %v2055
      %v2057 = vpop.f32.mrb[0].mxu0
      %v2058 = vpop.f32.mrb[0].mxu0
      %v2059 = vadd.f32 0.0, %v2058
      %v2060 = vpop.f32.mrb[0].mxu0
      %2061 = vmatprep.mubr.bf16.mxu0 0
      %2062 = vmatmul.mubr.bf16.gmra.mrb[0].mxu0 %v1904
      %v2063 = vpop.f32.mrb[0].mxu0
      %v2064 = vadd.f32 0.0, %v2063
      %v2065 = vpop.f32.mrb[0].mxu0
      %v2066 = vpop.f32.mrb[0].mxu0
      %v2067 = vadd.f32 0.0, %v2066
      %v2068 = vpop.f32.mrb[0].mxu0
      %2069 = vdwg.mxu0
      %v2070 = vadd.f32 %v1868, %v1944
      %v2071 = vadd.f32 %v1869, %v1947
      %v2072 = vadd.f32 %v1870, %v1952
      %v2073 = vadd.f32 %v1871, %v1955
      %v2074 = vadd.f32 %v1872, %v1960
      %v2075 = vadd.f32 %v1873, %v1963
      %v2076 = vadd.f32 %v1874, %v1968
      %v2077 = vadd.f32 %v1875, %v1971
      %v2078 = vadd.f32 %v1876, %v1976
      %v2079 = vadd.f32 %v1877, %v1979
      %v2080 = vadd.f32 %v1878, %v1984
      %v2081 = vadd.f32 %v1879, %v1987
      %v2082 = vadd.f32 %v1880, %v1992
      %v2083 = vadd.f32 %v1881, %v1995
      %v2084 = vadd.f32 %v1882, %v2000
      %v2085 = vadd.f32 %v1883, %v2003
      %v2086 = vadd.f32 %v1884, %v2008
      %v2087 = vadd.f32 %v1885, %v2011
      %v2088 = vadd.f32 %v1886, %v2016
      %v2089 = vadd.f32 %v1887, %v2019
      %v2090 = vadd.f32 %v1888, %v2024
      %v2091 = vadd.f32 %v1889, %v2027
      %v2092 = vadd.f32 %v1890, %v2032
      %v2093 = vadd.f32 %v1891, %v2035
      %v2094 = vadd.f32 %v1892, %v2040
      %v2095 = vadd.f32 %v1893, %v2043
      %v2096 = vadd.f32 %v1894, %v2048
      %v2097 = vadd.f32 %v1895, %v2051
      %v2098 = vadd.f32 %v1896, %v2056
      %v2099 = vadd.f32 %v1897, %v2059
      %v2100 = vadd.f32 %v1898, %v2064
      %v2101 = vadd.f32 %v1899, %v2067
      %v2105 = vrot.slane %v277, 1
      %v2106 = vrot.slane %v278, 1
      %v2107 = vsel %vm345, %v2105, %v2106
      %v2108 = vrot.slane %v279, 1
      %v2109 = vsel %vm345, %v2106, %v2108
      %v2112 = vpack.c.bf16 %v2109, %v2107
      %s2113 = scalar_lea.vmem %s1, 14
      %v2114 = vld [vmem:[%s2113] sm:$0x3]
      %v2116 = vsel %vm476, %v2112, 0
      %v2119 = vsel %vm525, %v2114, 0
      %2121 = vmatprep.subr.bf16.mxu0 0
      %2122 = vmatpush1.bf16.msra.mxu0 %v2119
      %2123 = vmatprep.subr.bf16.mxu0 0
      %2124 = vmatpush1.bf16.msra.mxu0 0
      %2125 = vmatprep.subr.bf16.mxu0 0
      %2126 = vmatpush1.bf16.msra.mxu0 0
      %2127 = vmatprep.subr.bf16.mxu0 0
      %2128 = vmatpush1.bf16.msra.mxu0 0
      %2129 = vmatprep.subr.bf16.mxu0 0
      %2130 = vmatpush1.bf16.msra.mxu0 0
      %2131 = vmatprep.subr.bf16.mxu0 0
      %2132 = vmatpush1.bf16.msra.mxu0 0
      %2133 = vmatprep.subr.bf16.mxu0 0
      %2134 = vmatpush1.bf16.msra.mxu0 0
      %2135 = vmatprep.subr.bf16.mxu0 0
      %2136 = vmatpush1.bf16.msra.mxu0 0
      %2137 = vmatprep.subr.bf16.mxu0 0
      %2138 = vmatpush1.bf16.msra.mxu0 0
      %2139 = vmatprep.subr.bf16.mxu0 0
      %2140 = vmatpush1.bf16.msra.mxu0 0
      %2141 = vmatprep.subr.bf16.mxu0 0
      %2142 = vmatpush1.bf16.msra.mxu0 0
      %2143 = vmatprep.subr.bf16.mxu0 0
      %2144 = vmatpush1.bf16.msra.mxu0 0
      %2145 = vmatprep.subr.bf16.mxu0 0
      %2146 = vmatpush1.bf16.msra.mxu0 0
      %2147 = vmatprep.subr.bf16.mxu0 0
      %2148 = vmatpush1.bf16.msra.mxu0 0
      %2149 = vmatprep.subr.bf16.mxu0 0
      %2150 = vmatpush1.bf16.msra.mxu0 0
      %2151 = vmatprep.subr.bf16.mxu0 0
      %2152 = vmatpush1.bf16.msra.mxu0 0
      %2153 = vmatprep.mubr.bf16.mxu0 0
      %2154 = vmatmul.mubr.bf16.gmra.mrb[0].mxu0 %v484
      %v2155 = vpop.f32.mrb[0].mxu0
      %v2156 = vadd.f32 0.0, %v2155
      %v2157 = vpop.f32.mrb[0].mxu0
      %v2158 = vpop.f32.mrb[0].mxu0
      %v2159 = vadd.f32 0.0, %v2158
      %v2160 = vpop.f32.mrb[0].mxu0
      %2161 = vmatprep.mubr.bf16.mxu0 0
      %2162 = vmatmul.mubr.bf16.gmra.mrb[0].mxu0 %v487
      %v2163 = vpop.f32.mrb[0].mxu0
      %v2164 = vadd.f32 0.0, %v2163
      %v2165 = vpop.f32.mrb[0].mxu0
      %v2166 = vpop.f32.mrb[0].mxu0
      %v2167 = vadd.f32 0.0, %v2166
      %v2168 = vpop.f32.mrb[0].mxu0
      %2169 = vmatprep.mubr.bf16.mxu0 0
      %2170 = vmatmul.mubr.bf16.gmra.mrb[0].mxu0 %v490
      %v2171 = vpop.f32.mrb[0].mxu0
      %v2172 = vadd.f32 0.0, %v2171
      %v2173 = vpop.f32.mrb[0].mxu0
      %v2174 = vpop.f32.mrb[0].mxu0
      %v2175 = vadd.f32 0.0, %v2174
      %v2176 = vpop.f32.mrb[0].mxu0
      %2177 = vmatprep.mubr.bf16.mxu0 0
      %2178 = vmatmul.mubr.bf16.gmra.mrb[0].mxu0 %v493
      %v2179 = vpop.f32.mrb[0].mxu0
      %v2180 = vadd.f32 0.0, %v2179
      %v2181 = vpop.f32.mrb[0].mxu0
      %v2182 = vpop.f32.mrb[0].mxu0
      %v2183 = vadd.f32 0.0, %v2182
      %v2184 = vpop.f32.mrb[0].mxu0
      %2185 = vmatprep.mubr.bf16.mxu0 0
      %2186 = vmatmul.mubr.bf16.gmra.mrb[0].mxu0 %v496
      %v2187 = vpop.f32.mrb[0].mxu0
      %v2188 = vadd.f32 0.0, %v2187
      %v2189 = vpop.f32.mrb[0].mxu0
      %v2190 = vpop.f32.mrb[0].mxu0
      %v2191 = vadd.f32 0.0, %v2190
      %v2192 = vpop.f32.mrb[0].mxu0
      %2193 = vmatprep.mubr.bf16.mxu0 0
      %2194 = vmatmul.mubr.bf16.gmra.mrb[0].mxu0 %v499
      %v2195 = vpop.f32.mrb[0].mxu0
      %v2196 = vadd.f32 0.0, %v2195
      %v2197 = vpop.f32.mrb[0].mxu0
      %v2198 = vpop.f32.mrb[0].mxu0
      %v2199 = vadd.f32 0.0, %v2198
      %v2200 = vpop.f32.mrb[0].mxu0
      %2201 = vmatprep.mubr.bf16.mxu0 0
      %2202 = vmatmul.mubr.bf16.gmra.mrb[0].mxu0 %v502
      %v2203 = vpop.f32.mrb[0].mxu0
      %v2204 = vadd.f32 0.0, %v2203
      %v2205 = vpop.f32.mrb[0].mxu0
      %v2206 = vpop.f32.mrb[0].mxu0
      %v2207 = vadd.f32 0.0, %v2206
      %v2208 = vpop.f32.mrb[0].mxu0
      %2209 = vmatprep.mubr.bf16.mxu0 0
      %2210 = vmatmul.mubr.bf16.gmra.mrb[0].mxu0 %v505
      %v2211 = vpop.f32.mrb[0].mxu0
      %v2212 = vadd.f32 0.0, %v2211
      %v2213 = vpop.f32.mrb[0].mxu0
      %v2214 = vpop.f32.mrb[0].mxu0
      %v2215 = vadd.f32 0.0, %v2214
      %v2216 = vpop.f32.mrb[0].mxu0
      %2217 = vmatprep.mubr.bf16.mxu0 0
      %2218 = vmatmul.mubr.bf16.gmra.mrb[0].mxu0 %v508
      %v2219 = vpop.f32.mrb[0].mxu0
      %v2220 = vadd.f32 0.0, %v2219
      %v2221 = vpop.f32.mrb[0].mxu0
      %v2222 = vpop.f32.mrb[0].mxu0
      %v2223 = vadd.f32 0.0, %v2222
      %v2224 = vpop.f32.mrb[0].mxu0
      %2225 = vmatprep.mubr.bf16.mxu0 0
      %2226 = vmatmul.mubr.bf16.gmra.mrb[0].mxu0 %v511
      %v2227 = vpop.f32.mrb[0].mxu0
      %v2228 = vadd.f32 0.0, %v2227
      %v2229 = vpop.f32.mrb[0].mxu0
      %v2230 = vpop.f32.mrb[0].mxu0
      %v2231 = vadd.f32 0.0, %v2230
      %v2232 = vpop.f32.mrb[0].mxu0
      %2233 = vmatprep.mubr.bf16.mxu0 0
      %2234 = vmatmul.mubr.bf16.gmra.mrb[0].mxu0 %v514
      %v2235 = vpop.f32.mrb[0].mxu0
      %v2236 = vadd.f32 0.0, %v2235
      %v2237 = vpop.f32.mrb[0].mxu0
      %v2238 = vpop.f32.mrb[0].mxu0
      %v2239 = vadd.f32 0.0, %v2238
      %v2240 = vpop.f32.mrb[0].mxu0
      %2241 = vmatprep.mubr.bf16.mxu0 0
      %2242 = vmatmul.mubr.bf16.gmra.mrb[0].mxu0 %v517
      %v2243 = vpop.f32.mrb[0].mxu0
      %v2244 = vadd.f32 0.0, %v2243
      %v2245 = vpop.f32.mrb[0].mxu0
      %v2246 = vpop.f32.mrb[0].mxu0
      %v2247 = vadd.f32 0.0, %v2246
      %v2248 = vpop.f32.mrb[0].mxu0
      %2249 = vmatprep.mubr.bf16.mxu0 0
      %2250 = vmatmul.mubr.bf16.gmra.mrb[0].mxu0 %v520
      %v2251 = vpop.f32.mrb[0].mxu0
      %v2252 = vadd.f32 0.0, %v2251
      %v2253 = vpop.f32.mrb[0].mxu0
      %v2254 = vpop.f32.mrb[0].mxu0
      %v2255 = vadd.f32 0.0, %v2254
      %v2256 = vpop.f32.mrb[0].mxu0
      %2257 = vmatprep.mubr.bf16.mxu0 0
      %2258 = vmatmul.mubr.bf16.gmra.mrb[0].mxu0 %v523
      %v2259 = vpop.f32.mrb[0].mxu0
      %v2260 = vadd.f32 0.0, %v2259
      %v2261 = vpop.f32.mrb[0].mxu0
      %v2262 = vpop.f32.mrb[0].mxu0
      %v2263 = vadd.f32 0.0, %v2262
      %v2264 = vpop.f32.mrb[0].mxu0
      %2265 = vmatprep.mubr.bf16.mxu0 0
      %2266 = vmatmul.mubr.bf16.gmra.mrb[0].mxu0 %v1493
      %v2267 = vpop.f32.mrb[0].mxu0
      %v2268 = vadd.f32 0.0, %v2267
      %v2269 = vpop.f32.mrb[0].mxu0
      %v2270 = vpop.f32.mrb[0].mxu0
      %v2271 = vadd.f32 0.0, %v2270
      %v2272 = vpop.f32.mrb[0].mxu0
      %2273 = vmatprep.mubr.bf16.mxu0 0
      %2274 = vmatmul.mubr.bf16.gmra.mrb[0].mxu0 %v2116
      %v2275 = vpop.f32.mrb[0].mxu0
      %v2276 = vadd.f32 0.0, %v2275
      %v2277 = vpop.f32.mrb[0].mxu0
      %v2278 = vpop.f32.mrb[0].mxu0
      %v2279 = vadd.f32 0.0, %v2278
      %v2280 = vpop.f32.mrb[0].mxu0
      %2281 = vdwg.mxu0
      %v2282 = vadd.f32 %v2070, %v2156
      %v2283 = vadd.f32 %v2071, %v2159
      %v2284 = vadd.f32 %v2072, %v2164
      %v2285 = vadd.f32 %v2073, %v2167
      %v2286 = vadd.f32 %v2074, %v2172
      %v2287 = vadd.f32 %v2075, %v2175
      %v2288 = vadd.f32 %v2076, %v2180
      %v2289 = vadd.f32 %v2077, %v2183
      %v2290 = vadd.f32 %v2078, %v2188
      %v2291 = vadd.f32 %v2079, %v2191
      %v2292 = vadd.f32 %v2080, %v2196
      %v2293 = vadd.f32 %v2081, %v2199
      %v2294 = vadd.f32 %v2082, %v2204
      %v2295 = vadd.f32 %v2083, %v2207
      %v2296 = vadd.f32 %v2084, %v2212
      %v2297 = vadd.f32 %v2085, %v2215
      %v2298 = vadd.f32 %v2086, %v2220
      %v2299 = vadd.f32 %v2087, %v2223
      %v2300 = vadd.f32 %v2088, %v2228
      %v2301 = vadd.f32 %v2089, %v2231
      %v2302 = vadd.f32 %v2090, %v2236
      %v2303 = vadd.f32 %v2091, %v2239
      %v2304 = vadd.f32 %v2092, %v2244
      %v2305 = vadd.f32 %v2093, %v2247
      %v2306 = vadd.f32 %v2094, %v2252
      %v2307 = vadd.f32 %v2095, %v2255
      %v2308 = vadd.f32 %v2096, %v2260
      %v2309 = vadd.f32 %v2097, %v2263
      %v2310 = vadd.f32 %v2098, %v2268
      %v2311 = vadd.f32 %v2099, %v2271
      %v2312 = vadd.f32 %v2100, %v2276
      %v2313 = vadd.f32 %v2101, %v2279
      %v2314 = vrot.slane %v277, 2
      %v2315 = vrot.slane %v278, 2
      %v2316 = vsel %vm902, %v2314, %v2315
      %v2317 = vrot.slane %v279, 2
      %v2318 = vsel %vm902, %v2315, %v2317
      %v2321 = vpack.c.bf16 %v2318, %v2316
      %s2322 = scalar_lea.vmem %s1, 16
      %v2323 = vld [vmem:[%s2322] sm:$0x3]
      %v2325 = vsel %vm476, %v2321, 0
      %v2328 = vsel %vm525, %v2323, 0
      %2330 = vmatprep.subr.bf16.mxu0 0
      %2331 = vmatpush1.bf16.msra.mxu0 %v2328
      %2332 = vmatprep.subr.bf16.mxu0 0
      %2333 = vmatpush1.bf16.msra.mxu0 0
      %2334 = vmatprep.subr.bf16.mxu0 0
      %2335 = vmatpush1.bf16.msra.mxu0 0
      %2336 = vmatprep.subr.bf16.mxu0 0
      %2337 = vmatpush1.bf16.msra.mxu0 0
      %2338 = vmatprep.subr.bf16.mxu0 0
      %2339 = vmatpush1.bf16.msra.mxu0 0
      %2340 = vmatprep.subr.bf16.mxu0 0
      %2341 = vmatpush1.bf16.msra.mxu0 0
      %2342 = vmatprep.subr.bf16.mxu0 0
      %2343 = vmatpush1.bf16.msra.mxu0 0
      %2344 = vmatprep.subr.bf16.mxu0 0
      %2345 = vmatpush1.bf16.msra.mxu0 0
      %2346 = vmatprep.subr.bf16.mxu0 0
      %2347 = vmatpush1.bf16.msra.mxu0 0
      %2348 = vmatprep.subr.bf16.mxu0 0
      %2349 = vmatpush1.bf16.msra.mxu0 0
      %2350 = vmatprep.subr.bf16.mxu0 0
      %2351 = vmatpush1.bf16.msra.mxu0 0
      %2352 = vmatprep.subr.bf16.mxu0 0
      %2353 = vmatpush1.bf16.msra.mxu0 0
      %2354 = vmatprep.subr.bf16.mxu0 0
      %2355 = vmatpush1.bf16.msra.mxu0 0
      %2356 = vmatprep.subr.bf16.mxu0 0
      %2357 = vmatpush1.bf16.msra.mxu0 0
      %2358 = vmatprep.subr.bf16.mxu0 0
      %2359 = vmatpush1.bf16.msra.mxu0 0
      %2360 = vmatprep.subr.bf16.mxu0 0
      %2361 = vmatpush1.bf16.msra.mxu0 0
      %2362 = vmatprep.mubr.bf16.mxu0 0
      %2363 = vmatmul.mubr.bf16.gmra.mrb[0].mxu0 %v1040
      %v2364 = vpop.f32.mrb[0].mxu0
      %v2365 = vadd.f32 0.0, %v2364
      %v2366 = vpop.f32.mrb[0].mxu0
      %v2367 = vpop.f32.mrb[0].mxu0
      %v2368 = vadd.f32 0.0, %v2367
      %v2369 = vpop.f32.mrb[0].mxu0
      %2370 = vmatprep.mubr.bf16.mxu0 0
      %2371 = vmatmul.mubr.bf16.gmra.mrb[0].mxu0 %v1043
      %v2372 = vpop.f32.mrb[0].mxu0
      %v2373 = vadd.f32 0.0, %v2372
      %v2374 = vpop.f32.mrb[0].mxu0
      %v2375 = vpop.f32.mrb[0].mxu0
      %v2376 = vadd.f32 0.0, %v2375
      %v2377 = vpop.f32.mrb[0].mxu0
      %2378 = vmatprep.mubr.bf16.mxu0 0
      %2379 = vmatmul.mubr.bf16.gmra.mrb[0].mxu0 %v1046
      %v2380 = vpop.f32.mrb[0].mxu0
      %v2381 = vadd.f32 0.0, %v2380
      %v2382 = vpop.f32.mrb[0].mxu0
      %v2383 = vpop.f32.mrb[0].mxu0
      %v2384 = vadd.f32 0.0, %v2383
      %v2385 = vpop.f32.mrb[0].mxu0
      %2386 = vmatprep.mubr.bf16.mxu0 0
      %2387 = vmatmul.mubr.bf16.gmra.mrb[0].mxu0 %v1049
      %v2388 = vpop.f32.mrb[0].mxu0
      %v2389 = vadd.f32 0.0, %v2388
      %v2390 = vpop.f32.mrb[0].mxu0
      %v2391 = vpop.f32.mrb[0].mxu0
      %v2392 = vadd.f32 0.0, %v2391
      %v2393 = vpop.f32.mrb[0].mxu0
      %2394 = vmatprep.mubr.bf16.mxu0 0
      %2395 = vmatmul.mubr.bf16.gmra.mrb[0].mxu0 %v1052
      %v2396 = vpop.f32.mrb[0].mxu0
      %v2397 = vadd.f32 0.0, %v2396
      %v2398 = vpop.f32.mrb[0].mxu0
      %v2399 = vpop.f32.mrb[0].mxu0
      %v2400 = vadd.f32 0.0, %v2399
      %v2401 = vpop.f32.mrb[0].mxu0
      %2402 = vmatprep.mubr.bf16.mxu0 0
      %2403 = vmatmul.mubr.bf16.gmra.mrb[0].mxu0 %v1055
      %v2404 = vpop.f32.mrb[0].mxu0
      %v2405 = vadd.f32 0.0, %v2404
      %v2406 = vpop.f32.mrb[0].mxu0
      %v2407 = vpop.f32.mrb[0].mxu0
      %v2408 = vadd.f32 0.0, %v2407
      %v2409 = vpop.f32.mrb[0].mxu0
      %2410 = vmatprep.mubr.bf16.mxu0 0
      %2411 = vmatmul.mubr.bf16.gmra.mrb[0].mxu0 %v1058
      %v2412 = vpop.f32.mrb[0].mxu0
      %v2413 = vadd.f32 0.0, %v2412
      %v2414 = vpop.f32.mrb[0].mxu0
      %v2415 = vpop.f32.mrb[0].mxu0
      %v2416 = vadd.f32 0.0, %v2415
      %v2417 = vpop.f32.mrb[0].mxu0
      %2418 = vmatprep.mubr.bf16.mxu0 0
      %2419 = vmatmul.mubr.bf16.gmra.mrb[0].mxu0 %v1061
      %v2420 = vpop.f32.mrb[0].mxu0
      %v2421 = vadd.f32 0.0, %v2420
      %v2422 = vpop.f32.mrb[0].mxu0
      %v2423 = vpop.f32.mrb[0].mxu0
      %v2424 = vadd.f32 0.0, %v2423
      %v2425 = vpop.f32.mrb[0].mxu0
      %2426 = vmatprep.mubr.bf16.mxu0 0
      %2427 = vmatmul.mubr.bf16.gmra.mrb[0].mxu0 %v1064
      %v2428 = vpop.f32.mrb[0].mxu0
      %v2429 = vadd.f32 0.0, %v2428
      %v2430 = vpop.f32.mrb[0].mxu0
      %v2431 = vpop.f32.mrb[0].mxu0
      %v2432 = vadd.f32 0.0, %v2431
      %v2433 = vpop.f32.mrb[0].mxu0
      %2434 = vmatprep.mubr.bf16.mxu0 0
      %2435 = vmatmul.mubr.bf16.gmra.mrb[0].mxu0 %v1067
      %v2436 = vpop.f32.mrb[0].mxu0
      %v2437 = vadd.f32 0.0, %v2436
      %v2438 = vpop.f32.mrb[0].mxu0
      %v2439 = vpop.f32.mrb[0].mxu0
      %v2440 = vadd.f32 0.0, %v2439
      %v2441 = vpop.f32.mrb[0].mxu0
      %2442 = vmatprep.mubr.bf16.mxu0 0
      %2443 = vmatmul.mubr.bf16.gmra.mrb[0].mxu0 %v1070
      %v2444 = vpop.f32.mrb[0].mxu0
      %v2445 = vadd.f32 0.0, %v2444
      %v2446 = vpop.f32.mrb[0].mxu0
      %v2447 = vpop.f32.mrb[0].mxu0
      %v2448 = vadd.f32 0.0, %v2447
      %v2449 = vpop.f32.mrb[0].mxu0
      %2450 = vmatprep.mubr.bf16.mxu0 0
      %2451 = vmatmul.mubr.bf16.gmra.mrb[0].mxu0 %v1073
      %v2452 = vpop.f32.mrb[0].mxu0
      %v2453 = vadd.f32 0.0, %v2452
      %v2454 = vpop.f32.mrb[0].mxu0
      %v2455 = vpop.f32.mrb[0].mxu0
      %v2456 = vadd.f32 0.0, %v2455
      %v2457 = vpop.f32.mrb[0].mxu0
      %2458 = vmatprep.mubr.bf16.mxu0 0
      %2459 = vmatmul.mubr.bf16.gmra.mrb[0].mxu0 %v1076
      %v2460 = vpop.f32.mrb[0].mxu0
      %v2461 = vadd.f32 0.0, %v2460
      %v2462 = vpop.f32.mrb[0].mxu0
      %v2463 = vpop.f32.mrb[0].mxu0
      %v2464 = vadd.f32 0.0, %v2463
      %v2465 = vpop.f32.mrb[0].mxu0
      %2466 = vmatprep.mubr.bf16.mxu0 0
      %2467 = vmatmul.mubr.bf16.gmra.mrb[0].mxu0 %v1079
      %v2468 = vpop.f32.mrb[0].mxu0
      %v2469 = vadd.f32 0.0, %v2468
      %v2470 = vpop.f32.mrb[0].mxu0
      %v2471 = vpop.f32.mrb[0].mxu0
      %v2472 = vadd.f32 0.0, %v2471
      %v2473 = vpop.f32.mrb[0].mxu0
      %2474 = vmatprep.mubr.bf16.mxu0 0
      %2475 = vmatmul.mubr.bf16.gmra.mrb[0].mxu0 %v1702
      %v2476 = vpop.f32.mrb[0].mxu0
      %v2477 = vadd.f32 0.0, %v2476
      %v2478 = vpop.f32.mrb[0].mxu0
      %v2479 = vpop.f32.mrb[0].mxu0
      %v2480 = vadd.f32 0.0, %v2479
      %v2481 = vpop.f32.mrb[0].mxu0
      %2482 = vmatprep.mubr.bf16.mxu0 0
      %2483 = vmatmul.mubr.bf16.gmra.mrb[0].mxu0 %v2325
      %v2484 = vpop.f32.mrb[0].mxu0
      %v2485 = vadd.f32 0.0, %v2484
      %v2486 = vpop.f32.mrb[0].mxu0
      %v2487 = vpop.f32.mrb[0].mxu0
      %v2488 = vadd.f32 0.0, %v2487
      %v2489 = vpop.f32.mrb[0].mxu0
      %2490 = vdwg.mxu0
      %v2491 = vadd.f32 %v2282, %v2365
      %v2492 = vadd.f32 %v2283, %v2368
      %v2493 = vadd.f32 %v2284, %v2373
      %v2494 = vadd.f32 %v2285, %v2376
      %v2495 = vadd.f32 %v2286, %v2381
      %v2496 = vadd.f32 %v2287, %v2384
      %v2497 = vadd.f32 %v2288, %v2389
      %v2498 = vadd.f32 %v2289, %v2392
      %v2499 = vadd.f32 %v2290, %v2397
      %v2500 = vadd.f32 %v2291, %v2400
      %v2501 = vadd.f32 %v2292, %v2405
      %v2502 = vadd.f32 %v2293, %v2408
      %v2503 = vadd.f32 %v2294, %v2413
      %v2504 = vadd.f32 %v2295, %v2416
      %v2505 = vadd.f32 %v2296, %v2421
      %v2506 = vadd.f32 %v2297, %v2424
      %v2507 = vadd.f32 %v2298, %v2429
      %v2508 = vadd.f32 %v2299, %v2432
      %v2509 = vadd.f32 %v2300, %v2437
      %v2510 = vadd.f32 %v2301, %v2440
      %v2511 = vadd.f32 %v2302, %v2445
      %v2512 = vadd.f32 %v2303, %v2448
      %v2513 = vadd.f32 %v2304, %v2453
      %v2514 = vadd.f32 %v2305, %v2456
      %v2515 = vadd.f32 %v2306, %v2461
      %v2516 = vadd.f32 %v2307, %v2464
      %v2517 = vadd.f32 %v2308, %v2469
      %v2518 = vadd.f32 %v2309, %v2472
      %v2519 = vadd.f32 %v2310, %v2477
      %v2520 = vadd.f32 %v2311, %v2480
      %v2521 = vadd.f32 %v2312, %v2485
      %v2522 = vadd.f32 %v2313, %v2488
      %v2523 = vld [vmem:[%s2] sm:$0x1]
      %v2525 = vlaneseq
      %v2526 = vshrl.u32 %v2525, 7
      %v2527 = vsub.s32 0, %v2526
      %v2528 = vrot.slane %v2523, %v2527
      %v2530 = vadd.f32 %v2491, %v2528
      %v2531 = vadd.f32 %v2492, %v2528
      %v2532 = vadd.f32 %v2493, %v2528
      %v2533 = vadd.f32 %v2494, %v2528
      %v2534 = vadd.f32 %v2495, %v2528
      %v2535 = vadd.f32 %v2496, %v2528
      %v2536 = vadd.f32 %v2497, %v2528
      %v2537 = vadd.f32 %v2498, %v2528
      %v2538 = vadd.f32 %v2499, %v2528
      %v2539 = vadd.f32 %v2500, %v2528
      %v2540 = vadd.f32 %v2501, %v2528
      %v2541 = vadd.f32 %v2502, %v2528
      %v2542 = vadd.f32 %v2503, %v2528
      %v2543 = vadd.f32 %v2504, %v2528
      %v2544 = vadd.f32 %v2505, %v2528
      %v2545 = vadd.f32 %v2506, %v2528
      %v2546 = vadd.f32 %v2507, %v2528
      %v2547 = vadd.f32 %v2508, %v2528
      %v2548 = vadd.f32 %v2509, %v2528
      %v2549 = vadd.f32 %v2510, %v2528
      %v2550 = vadd.f32 %v2511, %v2528
      %v2551 = vadd.f32 %v2512, %v2528
      %v2552 = vadd.f32 %v2513, %v2528
      %v2553 = vadd.f32 %v2514, %v2528
      %v2554 = vadd.f32 %v2515, %v2528
      %v2555 = vadd.f32 %v2516, %v2528
      %v2556 = vadd.f32 %v2517, %v2528
      %v2557 = vadd.f32 %v2518, %v2528
      %v2558 = vadd.f32 %v2519, %v2528
      %v2559 = vadd.f32 %v2520, %v2528
      %v2560 = vadd.f32 %v2521, %v2528
      %v2561 = vadd.f32 %v2522, %v2528
      %v2562 = vmax.f32 %v2530, 0.0
      %v2563 = vmax.f32 %v2531, 0.0
      %v2564 = vmax.f32 %v2532, 0.0
      %v2565 = vmax.f32 %v2533, 0.0
      %v2566 = vmax.f32 %v2534, 0.0
      %v2567 = vmax.f32 %v2535, 0.0
      %v2568 = vmax.f32 %v2536, 0.0
      %v2569 = vmax.f32 %v2537, 0.0
      %v2570 = vmax.f32 %v2538, 0.0
      %v2571 = vmax.f32 %v2539, 0.0
      %v2572 = vmax.f32 %v2540, 0.0
      %v2573 = vmax.f32 %v2541, 0.0
      %v2574 = vmax.f32 %v2542, 0.0
      %v2575 = vmax.f32 %v2543, 0.0
      %v2576 = vmax.f32 %v2544, 0.0
      %v2577 = vmax.f32 %v2545, 0.0
      %v2578 = vmax.f32 %v2546, 0.0
      %v2579 = vmax.f32 %v2547, 0.0
      %v2580 = vmax.f32 %v2548, 0.0
      %v2581 = vmax.f32 %v2549, 0.0
      %v2582 = vmax.f32 %v2550, 0.0
      %v2583 = vmax.f32 %v2551, 0.0
      %v2584 = vmax.f32 %v2552, 0.0
      %v2585 = vmax.f32 %v2553, 0.0
      %v2586 = vmax.f32 %v2554, 0.0
      %v2587 = vmax.f32 %v2555, 0.0
      %v2588 = vmax.f32 %v2556, 0.0
      %v2589 = vmax.f32 %v2557, 0.0
      %v2590 = vmax.f32 %v2558, 0.0
      %v2591 = vmax.f32 %v2559, 0.0
      %v2592 = vmax.f32 %v2560, 0.0
      %v2593 = vmax.f32 %v2561, 0.0
      %v2594 = vpack.c.bf16 %v2563, %v2562
      %v2595 = vpack.c.bf16 %v2565, %v2564
      %v2596 = vpack.c.bf16 %v2567, %v2566
      %v2597 = vpack.c.bf16 %v2569, %v2568
      %v2598 = vpack.c.bf16 %v2571, %v2570
      %v2599 = vpack.c.bf16 %v2573, %v2572
      %v2600 = vpack.c.bf16 %v2575, %v2574
      %v2601 = vpack.c.bf16 %v2577, %v2576
      %v2602 = vpack.c.bf16 %v2579, %v2578
      %v2603 = vpack.c.bf16 %v2581, %v2580
      %v2604 = vpack.c.bf16 %v2583, %v2582
      %v2605 = vpack.c.bf16 %v2585, %v2584
      %v2606 = vpack.c.bf16 %v2587, %v2586
      %v2607 = vpack.c.bf16 %v2589, %v2588
      %v2608 = vpack.c.bf16 %v2591, %v2590
      %v2609 = vpack.c.bf16 %v2593, %v2592
      %v2626 = vunpack.c.l.b16 %v2594
      %v2627 = vunpack.c.h.b16 %v2594
      %v2628 = vunpack.c.l.b16 %v2595
      %v2629 = vunpack.c.h.b16 %v2595
      %v2630 = vunpack.c.l.b16 %v2596
      %v2631 = vunpack.c.h.b16 %v2596
      %v2632 = vunpack.c.l.b16 %v2597
      %v2633 = vunpack.c.h.b16 %v2597
      %v2634 = vunpack.c.l.b16 %v2598
      %v2635 = vunpack.c.h.b16 %v2598
      %v2636 = vunpack.c.l.b16 %v2599
      %v2637 = vunpack.c.h.b16 %v2599
      %v2638 = vunpack.c.l.b16 %v2600
      %v2639 = vunpack.c.h.b16 %v2600
      %v2640 = vunpack.c.l.b16 %v2601
      %v2641 = vunpack.c.h.b16 %v2601
      %v2642 = vunpack.c.l.b16 %v2602
      %v2643 = vunpack.c.h.b16 %v2602
      %v2644 = vunpack.c.l.b16 %v2603
      %v2645 = vunpack.c.h.b16 %v2603
      %v2646 = vunpack.c.l.b16 %v2604
      %v2647 = vunpack.c.h.b16 %v2604
      %v2648 = vunpack.c.l.b16 %v2605
      %v2649 = vunpack.c.h.b16 %v2605
      %v2650 = vunpack.c.l.b16 %v2606
      %v2651 = vunpack.c.h.b16 %v2606
      %v2652 = vunpack.c.l.b16 %v2607
      %v2653 = vunpack.c.h.b16 %v2607
      %v2654 = vunpack.c.l.b16 %v2608
      %v2655 = vunpack.c.h.b16 %v2608
      %v2656 = vunpack.c.l.b16 %v2609
      %v2657 = vunpack.c.h.b16 %v2609
      %v2658 = vpack.c.b16 %v2626, %v2626
      %v2659 = vpack.c.b16 %v2627, %v2627
      %v2660 = vpack.c.b16 %v2628, %v2628
      %v2661 = vpack.c.b16 %v2629, %v2629
      %v2662 = vpack.c.b16 %v2630, %v2630
      %v2663 = vpack.c.b16 %v2631, %v2631
      %v2664 = vpack.c.b16 %v2632, %v2632
      %v2665 = vpack.c.b16 %v2633, %v2633
      %v2666 = vpack.c.b16 %v2634, %v2634
      %v2667 = vpack.c.b16 %v2635, %v2635
      %v2668 = vpack.c.b16 %v2636, %v2636
      %v2669 = vpack.c.b16 %v2637, %v2637
      %v2670 = vpack.c.b16 %v2638, %v2638
      %v2671 = vpack.c.b16 %v2639, %v2639
      %v2672 = vpack.c.b16 %v2640, %v2640
      %v2673 = vpack.c.b16 %v2641, %v2641
      %v2674 = vpack.c.b16 %v2642, %v2642
      %v2675 = vpack.c.b16 %v2643, %v2643
      %v2676 = vpack.c.b16 %v2644, %v2644
      %v2677 = vpack.c.b16 %v2645, %v2645
      %v2678 = vpack.c.b16 %v2646, %v2646
      %v2679 = vpack.c.b16 %v2647, %v2647
      %v2680 = vpack.c.b16 %v2648, %v2648
      %v2681 = vpack.c.b16 %v2649, %v2649
      %v2682 = vpack.c.b16 %v2650, %v2650
      %v2683 = vpack.c.b16 %v2651, %v2651
      %v2684 = vpack.c.b16 %v2652, %v2652
      %v2685 = vpack.c.b16 %v2653, %v2653
      %v2686 = vpack.c.b16 %v2654, %v2654
      %v2687 = vpack.c.b16 %v2655, %v2655
      %v2688 = vpack.c.b16 %v2656, %v2656
      %v2689 = vpack.c.b16 %v2657, %v2657
      %2722 = vst [vmem:[%s170] sm:$0xf] %v2658
      %2723 = vst [vmem:[%s170 + $0x4] sm:$0xf] %v2659
      %2724 = vst [vmem:[%s170 + $0x8] sm:$0xf] %v2660
      %2725 = vst [vmem:[%s170 + $0xc] sm:$0xf] %v2661
      %2726 = vst [vmem:[%s170 + $0x10] sm:$0xf] %v2662
      %2727 = vst [vmem:[%s170 + $0x14] sm:$0xf] %v2663
      %2728 = vst [vmem:[%s170 + $0x18] sm:$0xf] %v2664
      %2729 = vst [vmem:[%s170 + $0x1c] sm:$0xf] %v2665
      %2730 = vst [vmem:[%s170 + $0x20] sm:$0xf] %v2666
      %2731 = vst [vmem:[%s170 + $0x24] sm:$0xf] %v2667
      %2732 = vst [vmem:[%s170 + $0x28] sm:$0xf] %v2668
      %2733 = vst [vmem:[%s170 + $0x2c] sm:$0xf] %v2669
      %2734 = vst [vmem:[%s170 + $0x30] sm:$0xf] %v2670
      %2735 = vst [vmem:[%s170 + $0x34] sm:$0xf] %v2671
      %2736 = vst [vmem:[%s170 + $0x38] sm:$0xf] %v2672
      %2737 = vst [vmem:[%s170 + $0x3c] sm:$0xf] %v2673
      %2738 = vst [vmem:[%s170 + $0x40] sm:$0xf] %v2674
      %2739 = vst [vmem:[%s170 + $0x44] sm:$0xf] %v2675
      %2740 = vst [vmem:[%s170 + $0x48] sm:$0xf] %v2676
      %2741 = vst [vmem:[%s170 + $0x4c] sm:$0xf] %v2677
      %2742 = vst [vmem:[%s170 + $0x50] sm:$0xf] %v2678
      %2743 = vst [vmem:[%s170 + $0x54] sm:$0xf] %v2679
      %2744 = vst [vmem:[%s170 + $0x58] sm:$0xf] %v2680
      %2745 = vst [vmem:[%s170 + $0x5c] sm:$0xf] %v2681
      %2746 = vst [vmem:[%s170 + $0x60] sm:$0xf] %v2682
      %2747 = vst [vmem:[%s170 + $0x64] sm:$0xf] %v2683
      %2748 = vst [vmem:[%s170 + $0x68] sm:$0xf] %v2684
      %2749 = vst [vmem:[%s170 + $0x6c] sm:$0xf] %v2685
      %2750 = vst [vmem:[%s170 + $0x70] sm:$0xf] %v2686
      %2751 = vst [vmem:[%s170 + $0x74] sm:$0xf] %v2687
      %2752 = vst [vmem:[%s170 + $0x78] sm:$0xf] %v2688
      %2753 = vst [vmem:[%s170 + $0x7c] sm:$0xf] %v2689
      %p2754 = scmp.lt.s32.totalorder %s14, 1
      %s2755 = scalar_select %p2754, %s14, 1
      %s2756 = smul.addr %s2755, 32
      %s2757 = smul.addr %s2756, 4
      %s2758 = scalar_lea.vmem %s3, %s2757
      // Predicated region
      $region33: #{encoder_cnn_forward.6} parent=31 // pred_check
        %p2759 = pneg %p100
      $region34: #{encoder_cnn_forward.6} parent=31 // pred_check_branch
        %2761 = sbr.rel (%p2759) target = $region36
      $region35: #{encoder_cnn_forward.6} parent=31 // pred_region
        _
      $region36: #{encoder_cnn_forward.6} parent=31 // pred_fallthru
        _
    $region32: #{encoder_cnn_forward.6} parent=5 // pred_fallthru
      _
    %p2762 = scmp.le.s32.totalorder 2, %s9
    // Predicated region
    $region37: #{encoder_cnn_forward.6} parent=5 // pred_check
      %p2763 = pneg %p2762
    $region38: #{encoder_cnn_forward.6} parent=5 // pred_check_branch
      %2765 = sbr.rel (%p2763) target = $region40
    $region39: #{encoder_cnn_forward.6} parent=5 // pred_region
      %s2766 = ssub.s32 %s9, 2
      // Predicated region
      $region41: #{encoder_cnn_forward.6} parent=39 // pred_check
        %p2767 = pneg %p106
      $region42: #{encoder_cnn_forward.6} parent=39 // pred_check_branch
        %2769 = sbr.rel (%p2767) target = $region44
      $region43: #{encoder_cnn_forward.6} parent=39 // pred_region
        %p2770 = scmp.lt.s32.totalorder %s15, 1
        %s2771 = scalar_select %p2770, %s15, 1
        %s2772 = smul.addr %s2771, 32
        %s2773 = smul.addr %s2772, 4
        %s2774 = scalar_lea.vmem %s3, %s2773
      $region44: #{encoder_cnn_forward.6} parent=39 // pred_fallthru
        _
    $region40: #{encoder_cnn_forward.6} parent=5 // pred_fallthru
      _
  $region6: #{encoder_cnn_forward.6} parent=0 // loop_footer
    %s13 = sadd.s32 1, %s9
  $region7: #{encoder_cnn_forward.6} parent=0 // loop_footer_branch
    %8 = sbr.rel target = $region3
  $region8: #{encoder_cnn_forward.6} parent=0 // loop_exit
    _

// kernel: encoder_cnn_forward.9
$region0: #{encoder_cnn_forward.9}
  #allocation0 [shape = 'u32[]', space=smem, size = 0x4, offset = 0x4, fixed_abs, tag = 'smem constant byte address 0x4 - core index']
  #allocation1 [shape = 'u32[144,128]{1,0:T(1,128)}', space=vmem, size = 0x12000, scoped, tag = 'internal scratch']
  %s0 = inlined_call_operand.vmem [shape: bf16[2,10,10,128], index: 0, kind: input, shape index: {}]
  %s1 = inlined_call_operand.vmem [shape: bf16[9,128,128], index: 1, kind: input, shape index: {}]
  %s2 = inlined_call_operand.vmem [shape: f32[1,128], index: 2, kind: input, shape index: {}]
  %s3 = inlined_call_operand.vmem [shape: bf16[2,64,128], index: 3, kind: output, shape index: {}]
  %s4 = sld [smem:[#allocation0]]
  $region45: #{encoder_cnn_forward.9} parent=0
    _
  %s6 = ssub.s32 1, %s4
  %s7 = scalar_select 0, %s6, %s4
  loop: start=0, step=1, limit=4
  $region2: #{encoder_cnn_forward.9} parent=0 // loop_pre_header
    _
  $region3: #{encoder_cnn_forward.9} parent=0 // loop_header
    %s9 = sphi 0, %s13
    %p10 = scmp.ge.s32.totalorder %s9, 4
    %s19 = sphi 0, %s21
    %s22 = sphi 0, %s19
    %s23 = sphi 0, %s22
    %s39 = sphi 0, %s23
    %s43 = sphi 0, %s43
    %s45 = sphi 0, %s43
    %s46 = sphi 0, %s45
    %s60 = sphi 0, %s46
    %s64 = sphi 0, %s64
    %s66 = sphi 0, %s64
    %s67 = sphi 0, %s66
    %s81 = sphi 0, %s67
    %s87 = sphi 0, %s89
    %s90 = sphi 0, %s87
    %s91 = sphi 0, %s90
    %s107 = sphi 0, %s91
  $region4: #{encoder_cnn_forward.9} parent=0 // loop_header_branch
    %12 = sbr.rel (%p10) target = $region8
  $region5: #{encoder_cnn_forward.9} parent=0 // loop_body
    %s14 = ssub.s32 %s9, 1
    %s15 = ssub.s32 %s9, 2
    %s16 = sadd.s32 %s9, 1
    %s17 = ssub.s32 %s9, %s16
    %p18 = scmp.eq.s32.totalorder %s17, 0
    %s20 = sadd.s32 %s19, 1
    %s21 = scalar_select %p18, %s19, %s20
    %p24 = pneg %p18
    %p25 = scmp.eq.s32.totalorder %s9, 1
    %p26 = por %p24, %p25
    %p27 = scmp.ne.s32.totalorder %s19, %s22
    %p28 = scmp.eq.s32.totalorder %s9, 0
    %p29 = por %p27, %p28
    %p30 = scmp.ne.s32.totalorder %s19, %s22
    %p31 = scmp.eq.s32.totalorder %s14, 1
    %p32 = por %p30, %p31
    %p33 = scmp.ne.s32.totalorder %s22, %s23
    %p34 = scmp.eq.s32.totalorder %s14, 0
    %p35 = por %p33, %p34
    %p36 = scmp.ne.s32.totalorder %s22, %s23
    %p37 = scmp.eq.s32.totalorder %s15, 1
    %p38 = por %p36, %p37
    %p40 = scmp.ne.s32.totalorder %s23, %s39
    %p41 = scmp.eq.s32.totalorder %s15, 0
    %p42 = por %p40, %p41
    %s44 = sadd.s32 %s43, 1
    %p47 = scmp.eq.s32.totalorder %s9, 1
    %p48 = scmp.ne.s32.totalorder %s43, %s45
    %p49 = scmp.eq.s32.totalorder %s9, 0
    %p50 = por %p48, %p49
    %p51 = scmp.ne.s32.totalorder %s43, %s45
    %p52 = scmp.eq.s32.totalorder %s14, 1
    %p53 = por %p51, %p52
    %p54 = scmp.ne.s32.totalorder %s45, %s46
    %p55 = scmp.eq.s32.totalorder %s14, 0
    %p56 = por %p54, %p55
    %p57 = scmp.ne.s32.totalorder %s45, %s46
    %p58 = scmp.eq.s32.totalorder %s15, 1
    %p59 = por %p57, %p58
    %p61 = scmp.ne.s32.totalorder %s46, %s60
    %p62 = scmp.eq.s32.totalorder %s15, 0
    %p63 = por %p61, %p62
    %s65 = sadd.s32 %s64, 1
    %p68 = scmp.eq.s32.totalorder %s9, 1
    %p69 = scmp.ne.s32.totalorder %s64, %s66
    %p70 = scmp.eq.s32.totalorder %s9, 0
    %p71 = por %p69, %p70
    %p72 = scmp.ne.s32.totalorder %s64, %s66
    %p73 = scmp.eq.s32.totalorder %s14, 1
    %p74 = por %p72, %p73
    %p75 = scmp.ne.s32.totalorder %s66, %s67
    %p76 = scmp.eq.s32.totalorder %s14, 0
    %p77 = por %p75, %p76
    %p78 = scmp.ne.s32.totalorder %s66, %s67
    %p79 = scmp.eq.s32.totalorder %s15, 1
    %p80 = por %p78, %p79
    %p82 = scmp.ne.s32.totalorder %s67, %s81
    %p83 = scmp.eq.s32.totalorder %s15, 0
    %p84 = por %p82, %p83
    %s85 = ssub.s32 %s9, %s16
    %p86 = scmp.eq.s32.totalorder %s85, 0
    %s88 = sadd.s32 %s87, 1
    %s89 = scalar_select %p86, %s87, %s88
    %p92 = pneg %p86
    %p93 = scmp.eq.s32.totalorder %s9, 1
    %p94 = por %p92, %p93
    %p95 = scmp.ne.s32.totalorder %s87, %s90
    %p96 = scmp.eq.s32.totalorder %s9, 0
    %p97 = por %p95, %p96
    %p98 = scmp.ne.s32.totalorder %s87, %s90
    %p99 = scmp.eq.s32.totalorder %s14, 1
    %p100 = por %p98, %p99
    %p101 = scmp.ne.s32.totalorder %s90, %s91
    %p102 = scmp.eq.s32.totalorder %s14, 0
    %p103 = por %p101, %p102
    %p104 = scmp.ne.s32.totalorder %s90, %s91
    %p105 = scmp.eq.s32.totalorder %s15, 1
    %p106 = por %p104, %p105
    %p108 = scmp.ne.s32.totalorder %s91, %s107
    %p109 = scmp.eq.s32.totalorder %s15, 0
    %p110 = por %p108, %p109
    %p111 = scmp.le.s32.totalorder 1, %s9
    %p112 = scmp.lt.s32.totalorder %s9, 3
    %p113 = pnand %p111, %p112
    %p114 = pneg %p113
    // Predicated region
    $region9: #{encoder_cnn_forward.9} parent=5 // pred_check
      _
    $region10: #{encoder_cnn_forward.9} parent=5 // pred_check_branch
      %116 = sbr.rel (%p113) target = $region12
    $region11: #{encoder_cnn_forward.9} parent=5 // pred_region
      %s117 = ssub.s32 %s9, 1
      // Predicated region
      $region13: #{encoder_cnn_forward.9} parent=11 // pred_check
        %p118 = pneg %p56
      $region14: #{encoder_cnn_forward.9} parent=11 // pred_check_branch
        %120 = sbr.rel (%p118) target = $region16
      $region15: #{encoder_cnn_forward.9} parent=11 // pred_region
        _
      $region16: #{encoder_cnn_forward.9} parent=11 // pred_fallthru
        _
      // Predicated region
      $region17: #{encoder_cnn_forward.9} parent=11 // pred_check
        %p121 = pneg %p77
      $region18: #{encoder_cnn_forward.9} parent=11 // pred_check_branch
        %123 = sbr.rel (%p121) target = $region20
      $region19: #{encoder_cnn_forward.9} parent=11 // pred_region
        _
      $region20: #{encoder_cnn_forward.9} parent=11 // pred_fallthru
        _
    $region12: #{encoder_cnn_forward.9} parent=5 // pred_fallthru
      _
    %p124 = scmp.lt.s32.totalorder %s9, 2
    // Predicated region
    $region21: #{encoder_cnn_forward.9} parent=5 // pred_check
      %p125 = pneg %p124
    $region22: #{encoder_cnn_forward.9} parent=5 // pred_check_branch
      %127 = sbr.rel (%p125) target = $region24
    $region23: #{encoder_cnn_forward.9} parent=5 // pred_region
      // Predicated region
      $region25: #{encoder_cnn_forward.9} parent=23 // pred_check
        %p128 = pneg %p29
      $region26: #{encoder_cnn_forward.9} parent=23 // pred_check_branch
        %130 = sbr.rel (%p128) target = $region28
      $region27: #{encoder_cnn_forward.9} parent=23 // pred_region
        %p131 = scmp.lt.s32.totalorder %s9, 1
        %s132 = scalar_select %p131, %s9, 1
        %s133 = smul.addr %s132, 20
        %s134 = smul.addr %s133, 4
        %s135 = scalar_lea.vmem %s0, %s134
      $region28: #{encoder_cnn_forward.9} parent=23 // pred_fallthru
        _
    $region24: #{encoder_cnn_forward.9} parent=5 // pred_fallthru
      _
    %p136 = scmp.le.s32.totalorder 1, %s9
    %p137 = scmp.lt.s32.totalorder %s9, 3
    %p138 = pnand %p136, %p137
    %p139 = pneg %p138
    // Predicated region
    $region29: #{encoder_cnn_forward.9} parent=5 // pred_check
      _
    $region30: #{encoder_cnn_forward.9} parent=5 // pred_check_branch
      %141 = sbr.rel (%p138) target = $region32
    $region31: #{encoder_cnn_forward.9} parent=5 // pred_region
      %s142 = ssub.s32 %s9, 1
      %p143 = scmp.lt.s32.totalorder %s14, 1
      %s144 = scalar_select %p143, %s14, 1
      %s145 = smul.addr %s144, 20
      %s146 = smul.addr %s145, 4
      %s147 = scalar_lea.vmem %s0, %s146
      %p148 = pneg %p35
      %p149 = pneg %p32
      %p150 = pneg %p56
      %p151 = pneg %p53
      %p152 = pneg %p77
      %p153 = pneg %p74
      %p154 = pneg %p103
      %p155 = pneg %p100
      %p156 = scmp.lt.s32.totalorder %s14, 1
      %s157 = scalar_select %p156, %s14, 1
      %s158 = smul.addr %s157, 8
      %s159 = smul.addr %s158, 4
      %s160 = scalar_lea.vmem %s3, %s159
      %p161 = scmp.lt.s32.totalorder %s14, 1
      %s162 = scalar_select %p161, %s14, 1
      %s163 = smul.addr %s162, 20
      %s164 = smul.addr %s163, 4
      %s165 = scalar_lea.vmem %s0, %s164
      %p166 = scmp.lt.s32.totalorder %s14, 1
      %s167 = scalar_select %p166, %s14, 1
      %s168 = smul.addr %s167, 8
      %s169 = smul.addr %s168, 4
      %s170 = scalar_lea.vmem %s3, %s169
      %v172 = vld [vmem:[%s165] sm:$0xf]
      %v173 = vld [vmem:[%s165 + $0x4] sm:$0x1]
      %v174 = vld [vmem:[%s165 + $0x8] sm:$0xf]
      %v175 = vld [vmem:[%s165 + $0xc] sm:$0x1]
      %v176 = vld [vmem:[%s165 + $0x10] sm:$0xf]
      %v177 = vld [vmem:[%s165 + $0x14] sm:$0x1]
      %v178 = vld [vmem:[%s165 + $0x18] sm:$0xf]
      %v179 = vld [vmem:[%s165 + $0x1c] sm:$0x1]
      %v180 = vld [vmem:[%s165 + $0x20] sm:$0xf]
      %v181 = vld [vmem:[%s165 + $0x24] sm:$0x1]
      %v182 = vld [vmem:[%s165 + $0x28] sm:$0xf]
      %v183 = vld [vmem:[%s165 + $0x2c] sm:$0x1]
      %v184 = vld [vmem:[%s165 + $0x30] sm:$0xf]
      %v185 = vld [vmem:[%s165 + $0x34] sm:$0x1]
      %v186 = vld [vmem:[%s165 + $0x38] sm:$0xf]
      %v187 = vld [vmem:[%s165 + $0x3c] sm:$0x1]
      %v188 = vld [vmem:[%s165 + $0x40] sm:$0xf]
      %v189 = vld [vmem:[%s165 + $0x44] sm:$0x1]
      %v190 = vld [vmem:[%s165 + $0x48] sm:$0xf]
      %v191 = vld [vmem:[%s165 + $0x4c] sm:$0x1]
      %v192 = vunpack.c.l.bf16 %v172
      %v193 = vunpack.c.l.bf16 %v173
      %v194 = vunpack.c.l.bf16 %v174
      %v195 = vunpack.c.l.bf16 %v175
      %v196 = vunpack.c.l.bf16 %v176
      %v197 = vunpack.c.l.bf16 %v177
      %v198 = vunpack.c.l.bf16 %v178
      %v199 = vunpack.c.l.bf16 %v179
      %v200 = vunpack.c.l.bf16 %v180
      %v201 = vunpack.c.l.bf16 %v181
      %v202 = vunpack.c.l.bf16 %v182
      %v203 = vunpack.c.l.bf16 %v183
      %v204 = vunpack.c.l.bf16 %v184
      %v205 = vunpack.c.l.bf16 %v185
      %v206 = vunpack.c.l.bf16 %v186
      %v207 = vunpack.c.l.bf16 %v187
      %v208 = vunpack.c.l.bf16 %v188
      %v209 = vunpack.c.l.bf16 %v189
      %v210 = vunpack.c.l.bf16 %v190
      %v211 = vunpack.c.l.bf16 %v191
      %v212 = vpack.c.bf16 %v194, %v192
      %v213 = vpack.c.bf16 %v198, %v196
      %v214 = vpack.c.bf16 %v202, %v200
      %v215 = vpack.c.bf16 %v206, %v204
      %v216 = vld [vmem:[%s1] sm:$0xf]
      %v217 = vld [vmem:[%s1 + $0x4] sm:$0xf]
      %v218 = vld [vmem:[%s1 + $0x8] sm:$0xf]
      %v219 = vld [vmem:[%s1 + $0xc] sm:$0xf]
      %v220 = vld [vmem:[%s1 + $0x10] sm:$0xf]
      %v221 = vld [vmem:[%s1 + $0x14] sm:$0xf]
      %v222 = vld [vmem:[%s1 + $0x18] sm:$0xf]
      %v223 = vld [vmem:[%s1 + $0x1c] sm:$0xf]
      %v224 = vld [vmem:[%s1 + $0x20] sm:$0xf]
      %v225 = vld [vmem:[%s1 + $0x24] sm:$0xf]
      %v226 = vld [vmem:[%s1 + $0x28] sm:$0xf]
      %v227 = vld [vmem:[%s1 + $0x2c] sm:$0xf]
      %v228 = vld [vmem:[%s1 + $0x30] sm:$0xf]
      %v229 = vld [vmem:[%s1 + $0x34] sm:$0xf]
      %v230 = vld [vmem:[%s1 + $0x38] sm:$0xf]
      %v231 = vld [vmem:[%s1 + $0x3c] sm:$0xf]
      %vm248 = vcmask 1046528
      %v249 = vrot.slane %v192, 1
      %v250 = vrot.slane %v193, 1
      %v251 = vsel %vm248, %v249, %v250
      %v252 = vrot.slane %v194, 1
      %v253 = vrot.slane %v195, 1
      %v254 = vsel %vm248, %v252, %v253
      %v255 = vrot.slane %v196, 1
      %v256 = vrot.slane %v197, 1
      %v257 = vsel %vm248, %v255, %v256
      %v258 = vrot.slane %v198, 1
      %v259 = vrot.slane %v199, 1
      %v260 = vsel %vm248, %v258, %v259
      %v261 = vrot.slane %v200, 1
      %v262 = vrot.slane %v201, 1
      %v263 = vsel %vm248, %v261, %v262
      %v264 = vrot.slane %v202, 1
      %v265 = vrot.slane %v203, 1
      %v266 = vsel %vm248, %v264, %v265
      %v267 = vrot.slane %v204, 1
      %v268 = vrot.slane %v205, 1
      %v269 = vsel %vm248, %v267, %v268
      %v270 = vrot.slane %v206, 1
      %v271 = vrot.slane %v207, 1
      %v272 = vsel %vm248, %v270, %v271
      %v281 = vpack.c.bf16 %v254, %v251
      %v282 = vpack.c.bf16 %v260, %v257
      %v283 = vpack.c.bf16 %v266, %v263
      %v284 = vpack.c.bf16 %v272, %v269
      %s285 = scalar_lea.vmem %s1, 64
      %v286 = vld [vmem:[%s285] sm:$0xf]
      %v287 = vld [vmem:[%s285 + $0x4] sm:$0xf]
      %v288 = vld [vmem:[%s285 + $0x8] sm:$0xf]
      %v289 = vld [vmem:[%s285 + $0xc] sm:$0xf]
      %v290 = vld [vmem:[%s285 + $0x10] sm:$0xf]
      %v291 = vld [vmem:[%s285 + $0x14] sm:$0xf]
      %v292 = vld [vmem:[%s285 + $0x18] sm:$0xf]
      %v293 = vld [vmem:[%s285 + $0x1c] sm:$0xf]
      %v294 = vld [vmem:[%s285 + $0x20] sm:$0xf]
      %v295 = vld [vmem:[%s285 + $0x24] sm:$0xf]
      %v296 = vld [vmem:[%s285 + $0x28] sm:$0xf]
      %v297 = vld [vmem:[%s285 + $0x2c] sm:$0xf]
      %v298 = vld [vmem:[%s285 + $0x30] sm:$0xf]
      %v299 = vld [vmem:[%s285 + $0x34] sm:$0xf]
      %v300 = vld [vmem:[%s285 + $0x38] sm:$0xf]
      %v301 = vld [vmem:[%s285 + $0x3c] sm:$0xf]
      %v318 = vunpack.c.l.b16 %v286
      %v319 = vunpack.c.l.b16 %v287
      %v320 = vunpack.c.l.b16 %v288
      %v321 = vunpack.c.l.b16 %v289
      %v322 = vunpack.c.l.b16 %v290
      %v323 = vunpack.c.l.b16 %v291
      %v324 = vunpack.c.l.b16 %v292
      %v325 = vunpack.c.l.b16 %v293
      %v326 = vunpack.c.l.b16 %v294
      %v327 = vunpack.c.l.b16 %v295
      %v328 = vunpack.c.l.b16 %v296
      %v329 = vunpack.c.l.b16 %v297
      %v330 = vunpack.c.l.b16 %v298
      %v331 = vunpack.c.l.b16 %v299
      %v332 = vunpack.c.l.b16 %v300
      %v333 = vunpack.c.l.b16 %v301
      %v334 = vpack.c.b16 %v319, %v318
      %v335 = vpack.c.b16 %v321, %v320
      %v336 = vpack.c.b16 %v323, %v322
      %v337 = vpack.c.b16 %v325, %v324
      %v338 = vpack.c.b16 %v327, %v326
      %v339 = vpack.c.b16 %v329, %v328
      %v340 = vpack.c.b16 %v331, %v330
      %v341 = vpack.c.b16 %v333, %v332
      %350 = vmatprep.subr.bf16.mxu0 0
      %351 = vmatpush1.bf16.msra.mxu0 %v334
      %352 = vmatprep.subr.bf16.mxu0 0
      %353 = vmatpush1.bf16.msra.mxu0 %v335
      %354 = vmatprep.subr.bf16.mxu0 0
      %355 = vmatpush1.bf16.msra.mxu0 %v336
      %356 = vmatprep.subr.bf16.mxu0 0
      %357 = vmatpush1.bf16.msra.mxu0 %v337
      %358 = vmatprep.subr.bf16.mxu0 0
      %359 = vmatpush1.bf16.msra.mxu0 %v338
      %360 = vmatprep.subr.bf16.mxu0 0
      %361 = vmatpush1.bf16.msra.mxu0 %v339
      %362 = vmatprep.subr.bf16.mxu0 0
      %363 = vmatpush1.bf16.msra.mxu0 %v340
      %364 = vmatprep.subr.bf16.mxu0 0
      %365 = vmatpush1.bf16.msra.mxu0 %v341
      %366 = vmatprep.subr.bf16.mxu0 0
      %367 = vmatpush1.bf16.msra.mxu0 0
      %368 = vmatprep.subr.bf16.mxu0 0
      %369 = vmatpush1.bf16.msra.mxu0 0
      %370 = vmatprep.subr.bf16.mxu0 0
      %371 = vmatpush1.bf16.msra.mxu0 0
      %372 = vmatprep.subr.bf16.mxu0 0
      %373 = vmatpush1.bf16.msra.mxu0 0
      %374 = vmatprep.subr.bf16.mxu0 0
      %375 = vmatpush1.bf16.msra.mxu0 0
      %376 = vmatprep.subr.bf16.mxu0 0
      %377 = vmatpush1.bf16.msra.mxu0 0
      %378 = vmatprep.subr.bf16.mxu0 0
      %379 = vmatpush1.bf16.msra.mxu0 0
      %380 = vmatprep.subr.bf16.mxu0 0
      %381 = vmatpush1.bf16.msra.mxu0 0
      %382 = vmatprep.mubr.bf16.mxu0 0
      %383 = vmatmul.mubr.bf16.gmra.mrb[0].mxu0 %v281
      %v384 = vpop.f32.mrb[0].mxu0
      %v385 = vadd.f32 0.0, %v384
      %v386 = vpop.f32.mrb[0].mxu0
      %v387 = vpop.f32.mrb[0].mxu0
      %v388 = vadd.f32 0.0, %v387
      %v389 = vpop.f32.mrb[0].mxu0
      %390 = vmatprep.mubr.bf16.mxu0 0
      %391 = vmatmul.mubr.bf16.gmra.mrb[0].mxu0 %v282
      %v392 = vpop.f32.mrb[0].mxu0
      %v393 = vadd.f32 0.0, %v392
      %v394 = vpop.f32.mrb[0].mxu0
      %v395 = vpop.f32.mrb[0].mxu0
      %v396 = vadd.f32 0.0, %v395
      %v397 = vpop.f32.mrb[0].mxu0
      %398 = vmatprep.mubr.bf16.mxu0 0
      %399 = vmatmul.mubr.bf16.gmra.mrb[0].mxu0 %v283
      %v400 = vpop.f32.mrb[0].mxu0
      %v401 = vadd.f32 0.0, %v400
      %v402 = vpop.f32.mrb[0].mxu0
      %v403 = vpop.f32.mrb[0].mxu0
      %v404 = vadd.f32 0.0, %v403
      %v405 = vpop.f32.mrb[0].mxu0
      %406 = vmatprep.mubr.bf16.mxu0 0
      %407 = vmatmul.mubr.bf16.gmra.mrb[0].mxu0 %v284
      %v408 = vpop.f32.mrb[0].mxu0
      %v409 = vadd.f32 0.0, %v408
      %v410 = vpop.f32.mrb[0].mxu0
      %v411 = vpop.f32.mrb[0].mxu0
      %v412 = vadd.f32 0.0, %v411
      %v413 = vpop.f32.mrb[0].mxu0
      %414 = vdwg.mxu0
      %v431 = vunpack.c.l.b16 %v216
      %v432 = vunpack.c.l.b16 %v217
      %v433 = vunpack.c.l.b16 %v218
      %v434 = vunpack.c.l.b16 %v219
      %v435 = vunpack.c.l.b16 %v220
      %v436 = vunpack.c.l.b16 %v221
      %v437 = vunpack.c.l.b16 %v222
      %v438 = vunpack.c.l.b16 %v223
      %v439 = vunpack.c.l.b16 %v224
      %v440 = vunpack.c.l.b16 %v225
      %v441 = vunpack.c.l.b16 %v226
      %v442 = vunpack.c.l.b16 %v227
      %v443 = vunpack.c.l.b16 %v228
      %v444 = vunpack.c.l.b16 %v229
      %v445 = vunpack.c.l.b16 %v230
      %v446 = vunpack.c.l.b16 %v231
      %v447 = vpack.c.b16 %v432, %v431
      %v448 = vpack.c.b16 %v434, %v433
      %v449 = vpack.c.b16 %v436, %v435
      %v450 = vpack.c.b16 %v438, %v437
      %v451 = vpack.c.b16 %v440, %v439
      %v452 = vpack.c.b16 %v442, %v441
      %v453 = vpack.c.b16 %v444, %v443
      %v454 = vpack.c.b16 %v446, %v445
      %463 = vmatprep.subr.bf16.mxu0 0
      %464 = vmatpush1.bf16.msra.mxu0 %v447
      %465 = vmatprep.subr.bf16.mxu0 0
      %466 = vmatpush1.bf16.msra.mxu0 %v448
      %467 = vmatprep.subr.bf16.mxu0 0
      %468 = vmatpush1.bf16.msra.mxu0 %v449
      %469 = vmatprep.subr.bf16.mxu0 0
      %470 = vmatpush1.bf16.msra.mxu0 %v450
      %471 = vmatprep.subr.bf16.mxu0 0
      %472 = vmatpush1.bf16.msra.mxu0 %v451
      %473 = vmatprep.subr.bf16.mxu0 0
      %474 = vmatpush1.bf16.msra.mxu0 %v452
      %475 = vmatprep.subr.bf16.mxu0 0
      %476 = vmatpush1.bf16.msra.mxu0 %v453
      %477 = vmatprep.subr.bf16.mxu0 0
      %478 = vmatpush1.bf16.msra.mxu0 %v454
      %479 = vmatprep.subr.bf16.mxu0 0
      %480 = vmatpush1.bf16.msra.mxu0 0
      %481 = vmatprep.subr.bf16.mxu0 0
      %482 = vmatpush1.bf16.msra.mxu0 0
      %483 = vmatprep.subr.bf16.mxu0 0
      %484 = vmatpush1.bf16.msra.mxu0 0
      %485 = vmatprep.subr.bf16.mxu0 0
      %486 = vmatpush1.bf16.msra.mxu0 0
      %487 = vmatprep.subr.bf16.mxu0 0
      %488 = vmatpush1.bf16.msra.mxu0 0
      %489 = vmatprep.subr.bf16.mxu0 0
      %490 = vmatpush1.bf16.msra.mxu0 0
      %491 = vmatprep.subr.bf16.mxu0 0
      %492 = vmatpush1.bf16.msra.mxu0 0
      %493 = vmatprep.subr.bf16.mxu0 0
      %494 = vmatpush1.bf16.msra.mxu0 0
      %495 = vmatprep.mubr.bf16.mxu0 0
      %496 = vmatmul.mubr.bf16.gmra.mrb[0].mxu0 %v212
      %v497 = vpop.f32.mrb[0].mxu0
      %v498 = vadd.f32 %v385, %v497
      %v499 = vpop.f32.mrb[0].mxu0
      %v500 = vpop.f32.mrb[0].mxu0
      %v501 = vadd.f32 %v388, %v500
      %v502 = vpop.f32.mrb[0].mxu0
      %503 = vmatprep.mubr.bf16.mxu0 0
      %504 = vmatmul.mubr.bf16.gmra.mrb[0].mxu0 %v213
      %v505 = vpop.f32.mrb[0].mxu0
      %v506 = vadd.f32 %v393, %v505
      %v507 = vpop.f32.mrb[0].mxu0
      %v508 = vpop.f32.mrb[0].mxu0
      %v509 = vadd.f32 %v396, %v508
      %v510 = vpop.f32.mrb[0].mxu0
      %511 = vmatprep.mubr.bf16.mxu0 0
      %512 = vmatmul.mubr.bf16.gmra.mrb[0].mxu0 %v214
      %v513 = vpop.f32.mrb[0].mxu0
      %v514 = vadd.f32 %v401, %v513
      %v515 = vpop.f32.mrb[0].mxu0
      %v516 = vpop.f32.mrb[0].mxu0
      %v517 = vadd.f32 %v404, %v516
      %v518 = vpop.f32.mrb[0].mxu0
      %519 = vmatprep.mubr.bf16.mxu0 0
      %520 = vmatmul.mubr.bf16.gmra.mrb[0].mxu0 %v215
      %v521 = vpop.f32.mrb[0].mxu0
      %v522 = vadd.f32 %v409, %v521
      %v523 = vpop.f32.mrb[0].mxu0
      %v524 = vpop.f32.mrb[0].mxu0
      %v525 = vadd.f32 %v412, %v524
      %v526 = vpop.f32.mrb[0].mxu0
      %527 = vdwg.mxu0
      %vm528 = vcmask 1045504
      %v529 = vrot.slane %v192, 2
      %v530 = vrot.slane %v193, 2
      %v531 = vsel %vm528, %v529, %v530
      %v532 = vrot.slane %v194, 2
      %v533 = vrot.slane %v195, 2
      %v534 = vsel %vm528, %v532, %v533
      %v535 = vrot.slane %v196, 2
      %v536 = vrot.slane %v197, 2
      %v537 = vsel %vm528, %v535, %v536
      %v538 = vrot.slane %v198, 2
      %v539 = vrot.slane %v199, 2
      %v540 = vsel %vm528, %v538, %v539
      %v541 = vrot.slane %v200, 2
      %v542 = vrot.slane %v201, 2
      %v543 = vsel %vm528, %v541, %v542
      %v544 = vrot.slane %v202, 2
      %v545 = vrot.slane %v203, 2
      %v546 = vsel %vm528, %v544, %v545
      %v547 = vrot.slane %v204, 2
      %v548 = vrot.slane %v205, 2
      %v549 = vsel %vm528, %v547, %v548
      %v550 = vrot.slane %v206, 2
      %v551 = vrot.slane %v207, 2
      %v552 = vsel %vm528, %v550, %v551
      %v561 = vpack.c.bf16 %v534, %v531
      %v562 = vpack.c.bf16 %v540, %v537
      %v563 = vpack.c.bf16 %v546, %v543
      %v564 = vpack.c.bf16 %v552, %v549
      %s565 = scalar_lea.vmem %s1, 128
      %v566 = vld [vmem:[%s565] sm:$0xf]
      %v567 = vld [vmem:[%s565 + $0x4] sm:$0xf]
      %v568 = vld [vmem:[%s565 + $0x8] sm:$0xf]
      %v569 = vld [vmem:[%s565 + $0xc] sm:$0xf]
      %v570 = vld [vmem:[%s565 + $0x10] sm:$0xf]
      %v571 = vld [vmem:[%s565 + $0x14] sm:$0xf]
      %v572 = vld [vmem:[%s565 + $0x18] sm:$0xf]
      %v573 = vld [vmem:[%s565 + $0x1c] sm:$0xf]
      %v574 = vld [vmem:[%s565 + $0x20] sm:$0xf]
      %v575 = vld [vmem:[%s565 + $0x24] sm:$0xf]
      %v576 = vld [vmem:[%s565 + $0x28] sm:$0xf]
      %v577 = vld [vmem:[%s565 + $0x2c] sm:$0xf]
      %v578 = vld [vmem:[%s565 + $0x30] sm:$0xf]
      %v579 = vld [vmem:[%s565 + $0x34] sm:$0xf]
      %v580 = vld [vmem:[%s565 + $0x38] sm:$0xf]
      %v581 = vld [vmem:[%s565 + $0x3c] sm:$0xf]
      %v598 = vunpack.c.l.b16 %v566
      %v599 = vunpack.c.l.b16 %v567
      %v600 = vunpack.c.l.b16 %v568
      %v601 = vunpack.c.l.b16 %v569
      %v602 = vunpack.c.l.b16 %v570
      %v603 = vunpack.c.l.b16 %v571
      %v604 = vunpack.c.l.b16 %v572
      %v605 = vunpack.c.l.b16 %v573
      %v606 = vunpack.c.l.b16 %v574
      %v607 = vunpack.c.l.b16 %v575
      %v608 = vunpack.c.l.b16 %v576
      %v609 = vunpack.c.l.b16 %v577
      %v610 = vunpack.c.l.b16 %v578
      %v611 = vunpack.c.l.b16 %v579
      %v612 = vunpack.c.l.b16 %v580
      %v613 = vunpack.c.l.b16 %v581
      %v614 = vpack.c.b16 %v599, %v598
      %v615 = vpack.c.b16 %v601, %v600
      %v616 = vpack.c.b16 %v603, %v602
      %v617 = vpack.c.b16 %v605, %v604
      %v618 = vpack.c.b16 %v607, %v606
      %v619 = vpack.c.b16 %v609, %v608
      %v620 = vpack.c.b16 %v611, %v610
      %v621 = vpack.c.b16 %v613, %v612
      %630 = vmatprep.subr.bf16.mxu0 0
      %631 = vmatpush1.bf16.msra.mxu0 %v614
      %632 = vmatprep.subr.bf16.mxu0 0
      %633 = vmatpush1.bf16.msra.mxu0 %v615
      %634 = vmatprep.subr.bf16.mxu0 0
      %635 = vmatpush1.bf16.msra.mxu0 %v616
      %636 = vmatprep.subr.bf16.mxu0 0
      %637 = vmatpush1.bf16.msra.mxu0 %v617
      %638 = vmatprep.subr.bf16.mxu0 0
      %639 = vmatpush1.bf16.msra.mxu0 %v618
      %640 = vmatprep.subr.bf16.mxu0 0
      %641 = vmatpush1.bf16.msra.mxu0 %v619
      %642 = vmatprep.subr.bf16.mxu0 0
      %643 = vmatpush1.bf16.msra.mxu0 %v620
      %644 = vmatprep.subr.bf16.mxu0 0
      %645 = vmatpush1.bf16.msra.mxu0 %v621
      %646 = vmatprep.subr.bf16.mxu0 0
      %647 = vmatpush1.bf16.msra.mxu0 0
      %648 = vmatprep.subr.bf16.mxu0 0
      %649 = vmatpush1.bf16.msra.mxu0 0
      %650 = vmatprep.subr.bf16.mxu0 0
      %651 = vmatpush1.bf16.msra.mxu0 0
      %652 = vmatprep.subr.bf16.mxu0 0
      %653 = vmatpush1.bf16.msra.mxu0 0
      %654 = vmatprep.subr.bf16.mxu0 0
      %655 = vmatpush1.bf16.msra.mxu0 0
      %656 = vmatprep.subr.bf16.mxu0 0
      %657 = vmatpush1.bf16.msra.mxu0 0
      %658 = vmatprep.subr.bf16.mxu0 0
      %659 = vmatpush1.bf16.msra.mxu0 0
      %660 = vmatprep.subr.bf16.mxu0 0
      %661 = vmatpush1.bf16.msra.mxu0 0
      %662 = vmatprep.mubr.bf16.mxu0 0
      %663 = vmatmul.mubr.bf16.gmra.mrb[0].mxu0 %v561
      %v664 = vpop.f32.mrb[0].mxu0
      %v665 = vadd.f32 0.0, %v664
      %v666 = vpop.f32.mrb[0].mxu0
      %v667 = vpop.f32.mrb[0].mxu0
      %v668 = vadd.f32 0.0, %v667
      %v669 = vpop.f32.mrb[0].mxu0
      %670 = vmatprep.mubr.bf16.mxu0 0
      %671 = vmatmul.mubr.bf16.gmra.mrb[0].mxu0 %v562
      %v672 = vpop.f32.mrb[0].mxu0
      %v673 = vadd.f32 0.0, %v672
      %v674 = vpop.f32.mrb[0].mxu0
      %v675 = vpop.f32.mrb[0].mxu0
      %v676 = vadd.f32 0.0, %v675
      %v677 = vpop.f32.mrb[0].mxu0
      %678 = vmatprep.mubr.bf16.mxu0 0
      %679 = vmatmul.mubr.bf16.gmra.mrb[0].mxu0 %v563
      %v680 = vpop.f32.mrb[0].mxu0
      %v681 = vadd.f32 0.0, %v680
      %v682 = vpop.f32.mrb[0].mxu0
      %v683 = vpop.f32.mrb[0].mxu0
      %v684 = vadd.f32 0.0, %v683
      %v685 = vpop.f32.mrb[0].mxu0
      %686 = vmatprep.mubr.bf16.mxu0 0
      %687 = vmatmul.mubr.bf16.gmra.mrb[0].mxu0 %v564
      %v688 = vpop.f32.mrb[0].mxu0
      %v689 = vadd.f32 0.0, %v688
      %v690 = vpop.f32.mrb[0].mxu0
      %v691 = vpop.f32.mrb[0].mxu0
      %v692 = vadd.f32 0.0, %v691
      %v693 = vpop.f32.mrb[0].mxu0
      %694 = vdwg.mxu0
      %v695 = vadd.f32 %v498, %v665
      %v696 = vadd.f32 %v501, %v668
      %v697 = vadd.f32 %v506, %v673
      %v698 = vadd.f32 %v509, %v676
      %v699 = vadd.f32 %v514, %v681
      %v700 = vadd.f32 %v517, %v684
      %v701 = vadd.f32 %v522, %v689
      %v702 = vadd.f32 %v525, %v692
      %v703 = vpack.c.bf16 %v196, %v194
      %v704 = vpack.c.bf16 %v200, %v198
      %v705 = vpack.c.bf16 %v204, %v202
      %v706 = vpack.c.bf16 %v208, %v206
      %s707 = scalar_lea.vmem %s1, 192
      %v708 = vld [vmem:[%s707] sm:$0xf]
      %v709 = vld [vmem:[%s707 + $0x4] sm:$0xf]
      %v710 = vld [vmem:[%s707 + $0x8] sm:$0xf]
      %v711 = vld [vmem:[%s707 + $0xc] sm:$0xf]
      %v712 = vld [vmem:[%s707 + $0x10] sm:$0xf]
      %v713 = vld [vmem:[%s707 + $0x14] sm:$0xf]
      %v714 = vld [vmem:[%s707 + $0x18] sm:$0xf]
      %v715 = vld [vmem:[%s707 + $0x1c] sm:$0xf]
      %v716 = vld [vmem:[%s707 + $0x20] sm:$0xf]
      %v717 = vld [vmem:[%s707 + $0x24] sm:$0xf]
      %v718 = vld [vmem:[%s707 + $0x28] sm:$0xf]
      %v719 = vld [vmem:[%s707 + $0x2c] sm:$0xf]
      %v720 = vld [vmem:[%s707 + $0x30] sm:$0xf]
      %v721 = vld [vmem:[%s707 + $0x34] sm:$0xf]
      %v722 = vld [vmem:[%s707 + $0x38] sm:$0xf]
      %v723 = vld [vmem:[%s707 + $0x3c] sm:$0xf]
      %v740 = vunpack.c.l.b16 %v708
      %v741 = vunpack.c.l.b16 %v709
      %v742 = vunpack.c.l.b16 %v710
      %v743 = vunpack.c.l.b16 %v711
      %v744 = vunpack.c.l.b16 %v712
      %v745 = vunpack.c.l.b16 %v713
      %v746 = vunpack.c.l.b16 %v714
      %v747 = vunpack.c.l.b16 %v715
      %v748 = vunpack.c.l.b16 %v716
      %v749 = vunpack.c.l.b16 %v717
      %v750 = vunpack.c.l.b16 %v718
      %v751 = vunpack.c.l.b16 %v719
      %v752 = vunpack.c.l.b16 %v720
      %v753 = vunpack.c.l.b16 %v721
      %v754 = vunpack.c.l.b16 %v722
      %v755 = vunpack.c.l.b16 %v723
      %v756 = vpack.c.b16 %v741, %v740
      %v757 = vpack.c.b16 %v743, %v742
      %v758 = vpack.c.b16 %v745, %v744
      %v759 = vpack.c.b16 %v747, %v746
      %v760 = vpack.c.b16 %v749, %v748
      %v761 = vpack.c.b16 %v751, %v750
      %v762 = vpack.c.b16 %v753, %v752
      %v763 = vpack.c.b16 %v755, %v754
      %772 = vmatprep.subr.bf16.mxu0 0
      %773 = vmatpush1.bf16.msra.mxu0 %v756
      %774 = vmatprep.subr.bf16.mxu0 0
      %775 = vmatpush1.bf16.msra.mxu0 %v757
      %776 = vmatprep.subr.bf16.mxu0 0
      %777 = vmatpush1.bf16.msra.mxu0 %v758
      %778 = vmatprep.subr.bf16.mxu0 0
      %779 = vmatpush1.bf16.msra.mxu0 %v759
      %780 = vmatprep.subr.bf16.mxu0 0
      %781 = vmatpush1.bf16.msra.mxu0 %v760
      %782 = vmatprep.subr.bf16.mxu0 0
      %783 = vmatpush1.bf16.msra.mxu0 %v761
      %784 = vmatprep.subr.bf16.mxu0 0
      %785 = vmatpush1.bf16.msra.mxu0 %v762
      %786 = vmatprep.subr.bf16.mxu0 0
      %787 = vmatpush1.bf16.msra.mxu0 %v763
      %788 = vmatprep.subr.bf16.mxu0 0
      %789 = vmatpush1.bf16.msra.mxu0 0
      %790 = vmatprep.subr.bf16.mxu0 0
      %791 = vmatpush1.bf16.msra.mxu0 0
      %792 = vmatprep.subr.bf16.mxu0 0
      %793 = vmatpush1.bf16.msra.mxu0 0
      %794 = vmatprep.subr.bf16.mxu0 0
      %795 = vmatpush1.bf16.msra.mxu0 0
      %796 = vmatprep.subr.bf16.mxu0 0
      %797 = vmatpush1.bf16.msra.mxu0 0
      %798 = vmatprep.subr.bf16.mxu0 0
      %799 = vmatpush1.bf16.msra.mxu0 0
      %800 = vmatprep.subr.bf16.mxu0 0
      %801 = vmatpush1.bf16.msra.mxu0 0
      %802 = vmatprep.subr.bf16.mxu0 0
      %803 = vmatpush1.bf16.msra.mxu0 0
      %804 = vmatprep.mubr.bf16.mxu0 0
      %805 = vmatmul.mubr.bf16.gmra.mrb[0].mxu0 %v703
      %v806 = vpop.f32.mrb[0].mxu0
      %v807 = vadd.f32 0.0, %v806
      %v808 = vpop.f32.mrb[0].mxu0
      %v809 = vpop.f32.mrb[0].mxu0
      %v810 = vadd.f32 0.0, %v809
      %v811 = vpop.f32.mrb[0].mxu0
      %812 = vmatprep.mubr.bf16.mxu0 0
      %813 = vmatmul.mubr.bf16.gmra.mrb[0].mxu0 %v704
      %v814 = vpop.f32.mrb[0].mxu0
      %v815 = vadd.f32 0.0, %v814
      %v816 = vpop.f32.mrb[0].mxu0
      %v817 = vpop.f32.mrb[0].mxu0
      %v818 = vadd.f32 0.0, %v817
      %v819 = vpop.f32.mrb[0].mxu0
      %820 = vmatprep.mubr.bf16.mxu0 0
      %821 = vmatmul.mubr.bf16.gmra.mrb[0].mxu0 %v705
      %v822 = vpop.f32.mrb[0].mxu0
      %v823 = vadd.f32 0.0, %v822
      %v824 = vpop.f32.mrb[0].mxu0
      %v825 = vpop.f32.mrb[0].mxu0
      %v826 = vadd.f32 0.0, %v825
      %v827 = vpop.f32.mrb[0].mxu0
      %828 = vmatprep.mubr.bf16.mxu0 0
      %829 = vmatmul.mubr.bf16.gmra.mrb[0].mxu0 %v706
      %v830 = vpop.f32.mrb[0].mxu0
      %v831 = vadd.f32 0.0, %v830
      %v832 = vpop.f32.mrb[0].mxu0
      %v833 = vpop.f32.mrb[0].mxu0
      %v834 = vadd.f32 0.0, %v833
      %v835 = vpop.f32.mrb[0].mxu0
      %836 = vdwg.mxu0
      %v837 = vadd.f32 %v695, %v807
      %v838 = vadd.f32 %v696, %v810
      %v839 = vadd.f32 %v697, %v815
      %v840 = vadd.f32 %v698, %v818
      %v841 = vadd.f32 %v699, %v823
      %v842 = vadd.f32 %v700, %v826
      %v843 = vadd.f32 %v701, %v831
      %v844 = vadd.f32 %v702, %v834
      %v847 = vrot.slane %v208, 1
      %v848 = vrot.slane %v209, 1
      %v849 = vsel %vm248, %v847, %v848
      %v851 = vpack.c.bf16 %v257, %v254
      %v852 = vpack.c.bf16 %v263, %v260
      %v853 = vpack.c.bf16 %v269, %v266
      %v854 = vpack.c.bf16 %v849, %v272
      %s855 = scalar_lea.vmem %s1, 256
      %v856 = vld [vmem:[%s855] sm:$0xf]
      %v857 = vld [vmem:[%s855 + $0x4] sm:$0xf]
      %v858 = vld [vmem:[%s855 + $0x8] sm:$0xf]
      %v859 = vld [vmem:[%s855 + $0xc] sm:$0xf]
      %v860 = vld [vmem:[%s855 + $0x10] sm:$0xf]
      %v861 = vld [vmem:[%s855 + $0x14] sm:$0xf]
      %v862 = vld [vmem:[%s855 + $0x18] sm:$0xf]
      %v863 = vld [vmem:[%s855 + $0x1c] sm:$0xf]
      %v864 = vld [vmem:[%s855 + $0x20] sm:$0xf]
      %v865 = vld [vmem:[%s855 + $0x24] sm:$0xf]
      %v866 = vld [vmem:[%s855 + $0x28] sm:$0xf]
      %v867 = vld [vmem:[%s855 + $0x2c] sm:$0xf]
      %v868 = vld [vmem:[%s855 + $0x30] sm:$0xf]
      %v869 = vld [vmem:[%s855 + $0x34] sm:$0xf]
      %v870 = vld [vmem:[%s855 + $0x38] sm:$0xf]
      %v871 = vld [vmem:[%s855 + $0x3c] sm:$0xf]
      %v888 = vunpack.c.l.b16 %v856
      %v889 = vunpack.c.l.b16 %v857
      %v890 = vunpack.c.l.b16 %v858
      %v891 = vunpack.c.l.b16 %v859
      %v892 = vunpack.c.l.b16 %v860
      %v893 = vunpack.c.l.b16 %v861
      %v894 = vunpack.c.l.b16 %v862
      %v895 = vunpack.c.l.b16 %v863
      %v896 = vunpack.c.l.b16 %v864
      %v897 = vunpack.c.l.b16 %v865
      %v898 = vunpack.c.l.b16 %v866
      %v899 = vunpack.c.l.b16 %v867
      %v900 = vunpack.c.l.b16 %v868
      %v901 = vunpack.c.l.b16 %v869
      %v902 = vunpack.c.l.b16 %v870
      %v903 = vunpack.c.l.b16 %v871
      %v904 = vpack.c.b16 %v889, %v888
      %v905 = vpack.c.b16 %v891, %v890
      %v906 = vpack.c.b16 %v893, %v892
      %v907 = vpack.c.b16 %v895, %v894
      %v908 = vpack.c.b16 %v897, %v896
      %v909 = vpack.c.b16 %v899, %v898
      %v910 = vpack.c.b16 %v901, %v900
      %v911 = vpack.c.b16 %v903, %v902
      %920 = vmatprep.subr.bf16.mxu0 0
      %921 = vmatpush1.bf16.msra.mxu0 %v904
      %922 = vmatprep.subr.bf16.mxu0 0
      %923 = vmatpush1.bf16.msra.mxu0 %v905
      %924 = vmatprep.subr.bf16.mxu0 0
      %925 = vmatpush1.bf16.msra.mxu0 %v906
      %926 = vmatprep.subr.bf16.mxu0 0
      %927 = vmatpush1.bf16.msra.mxu0 %v907
      %928 = vmatprep.subr.bf16.mxu0 0
      %929 = vmatpush1.bf16.msra.mxu0 %v908
      %930 = vmatprep.subr.bf16.mxu0 0
      %931 = vmatpush1.bf16.msra.mxu0 %v909
      %932 = vmatprep.subr.bf16.mxu0 0
      %933 = vmatpush1.bf16.msra.mxu0 %v910
      %934 = vmatprep.subr.bf16.mxu0 0
      %935 = vmatpush1.bf16.msra.mxu0 %v911
      %936 = vmatprep.subr.bf16.mxu0 0
      %937 = vmatpush1.bf16.msra.mxu0 0
      %938 = vmatprep.subr.bf16.mxu0 0
      %939 = vmatpush1.bf16.msra.mxu0 0
      %940 = vmatprep.subr.bf16.mxu0 0
      %941 = vmatpush1.bf16.msra.mxu0 0
      %942 = vmatprep.subr.bf16.mxu0 0
      %943 = vmatpush1.bf16.msra.mxu0 0
      %944 = vmatprep.subr.bf16.mxu0 0
      %945 = vmatpush1.bf16.msra.mxu0 0
      %946 = vmatprep.subr.bf16.mxu0 0
      %947 = vmatpush1.bf16.msra.mxu0 0
      %948 = vmatprep.subr.bf16.mxu0 0
      %949 = vmatpush1.bf16.msra.mxu0 0
      %950 = vmatprep.subr.bf16.mxu0 0
      %951 = vmatpush1.bf16.msra.mxu0 0
      %952 = vmatprep.mubr.bf16.mxu0 0
      %953 = vmatmul.mubr.bf16.gmra.mrb[0].mxu0 %v851
      %v954 = vpop.f32.mrb[0].mxu0
      %v955 = vadd.f32 0.0, %v954
      %v956 = vpop.f32.mrb[0].mxu0
      %v957 = vpop.f32.mrb[0].mxu0
      %v958 = vadd.f32 0.0, %v957
      %v959 = vpop.f32.mrb[0].mxu0
      %960 = vmatprep.mubr.bf16.mxu0 0
      %961 = vmatmul.mubr.bf16.gmra.mrb[0].mxu0 %v852
      %v962 = vpop.f32.mrb[0].mxu0
      %v963 = vadd.f32 0.0, %v962
      %v964 = vpop.f32.mrb[0].mxu0
      %v965 = vpop.f32.mrb[0].mxu0
      %v966 = vadd.f32 0.0, %v965
      %v967 = vpop.f32.mrb[0].mxu0
      %968 = vmatprep.mubr.bf16.mxu0 0
      %969 = vmatmul.mubr.bf16.gmra.mrb[0].mxu0 %v853
      %v970 = vpop.f32.mrb[0].mxu0
      %v971 = vadd.f32 0.0, %v970
      %v972 = vpop.f32.mrb[0].mxu0
      %v973 = vpop.f32.mrb[0].mxu0
      %v974 = vadd.f32 0.0, %v973
      %v975 = vpop.f32.mrb[0].mxu0
      %976 = vmatprep.mubr.bf16.mxu0 0
      %977 = vmatmul.mubr.bf16.gmra.mrb[0].mxu0 %v854
      %v978 = vpop.f32.mrb[0].mxu0
      %v979 = vadd.f32 0.0, %v978
      %v980 = vpop.f32.mrb[0].mxu0
      %v981 = vpop.f32.mrb[0].mxu0
      %v982 = vadd.f32 0.0, %v981
      %v983 = vpop.f32.mrb[0].mxu0
      %984 = vdwg.mxu0
      %v985 = vadd.f32 %v837, %v955
      %v986 = vadd.f32 %v838, %v958
      %v987 = vadd.f32 %v839, %v963
      %v988 = vadd.f32 %v840, %v966
      %v989 = vadd.f32 %v841, %v971
      %v990 = vadd.f32 %v842, %v974
      %v991 = vadd.f32 %v843, %v979
      %v992 = vadd.f32 %v844, %v982
      %v993 = vrot.slane %v208, 2
      %v994 = vrot.slane %v209, 2
      %v995 = vsel %vm528, %v993, %v994
      %v997 = vpack.c.bf16 %v537, %v534
      %v998 = vpack.c.bf16 %v543, %v540
      %v999 = vpack.c.bf16 %v549, %v546
      %v1000 = vpack.c.bf16 %v995, %v552
      %s1001 = scalar_lea.vmem %s1, 320
      %v1002 = vld [vmem:[%s1001] sm:$0xf]
      %v1003 = vld [vmem:[%s1001 + $0x4] sm:$0xf]
      %v1004 = vld [vmem:[%s1001 + $0x8] sm:$0xf]
      %v1005 = vld [vmem:[%s1001 + $0xc] sm:$0xf]
      %v1006 = vld [vmem:[%s1001 + $0x10] sm:$0xf]
      %v1007 = vld [vmem:[%s1001 + $0x14] sm:$0xf]
      %v1008 = vld [vmem:[%s1001 + $0x18] sm:$0xf]
      %v1009 = vld [vmem:[%s1001 + $0x1c] sm:$0xf]
      %v1010 = vld [vmem:[%s1001 + $0x20] sm:$0xf]
      %v1011 = vld [vmem:[%s1001 + $0x24] sm:$0xf]
      %v1012 = vld [vmem:[%s1001 + $0x28] sm:$0xf]
      %v1013 = vld [vmem:[%s1001 + $0x2c] sm:$0xf]
      %v1014 = vld [vmem:[%s1001 + $0x30] sm:$0xf]
      %v1015 = vld [vmem:[%s1001 + $0x34] sm:$0xf]
      %v1016 = vld [vmem:[%s1001 + $0x38] sm:$0xf]
      %v1017 = vld [vmem:[%s1001 + $0x3c] sm:$0xf]
      %v1034 = vunpack.c.l.b16 %v1002
      %v1035 = vunpack.c.l.b16 %v1003
      %v1036 = vunpack.c.l.b16 %v1004
      %v1037 = vunpack.c.l.b16 %v1005
      %v1038 = vunpack.c.l.b16 %v1006
      %v1039 = vunpack.c.l.b16 %v1007
      %v1040 = vunpack.c.l.b16 %v1008
      %v1041 = vunpack.c.l.b16 %v1009
      %v1042 = vunpack.c.l.b16 %v1010
      %v1043 = vunpack.c.l.b16 %v1011
      %v1044 = vunpack.c.l.b16 %v1012
      %v1045 = vunpack.c.l.b16 %v1013
      %v1046 = vunpack.c.l.b16 %v1014
      %v1047 = vunpack.c.l.b16 %v1015
      %v1048 = vunpack.c.l.b16 %v1016
      %v1049 = vunpack.c.l.b16 %v1017
      %v1050 = vpack.c.b16 %v1035, %v1034
      %v1051 = vpack.c.b16 %v1037, %v1036
      %v1052 = vpack.c.b16 %v1039, %v1038
      %v1053 = vpack.c.b16 %v1041, %v1040
      %v1054 = vpack.c.b16 %v1043, %v1042
      %v1055 = vpack.c.b16 %v1045, %v1044
      %v1056 = vpack.c.b16 %v1047, %v1046
      %v1057 = vpack.c.b16 %v1049, %v1048
      %1066 = vmatprep.subr.bf16.mxu0 0
      %1067 = vmatpush1.bf16.msra.mxu0 %v1050
      %1068 = vmatprep.subr.bf16.mxu0 0
      %1069 = vmatpush1.bf16.msra.mxu0 %v1051
      %1070 = vmatprep.subr.bf16.mxu0 0
      %1071 = vmatpush1.bf16.msra.mxu0 %v1052
      %1072 = vmatprep.subr.bf16.mxu0 0
      %1073 = vmatpush1.bf16.msra.mxu0 %v1053
      %1074 = vmatprep.subr.bf16.mxu0 0
      %1075 = vmatpush1.bf16.msra.mxu0 %v1054
      %1076 = vmatprep.subr.bf16.mxu0 0
      %1077 = vmatpush1.bf16.msra.mxu0 %v1055
      %1078 = vmatprep.subr.bf16.mxu0 0
      %1079 = vmatpush1.bf16.msra.mxu0 %v1056
      %1080 = vmatprep.subr.bf16.mxu0 0
      %1081 = vmatpush1.bf16.msra.mxu0 %v1057
      %1082 = vmatprep.subr.bf16.mxu0 0
      %1083 = vmatpush1.bf16.msra.mxu0 0
      %1084 = vmatprep.subr.bf16.mxu0 0
      %1085 = vmatpush1.bf16.msra.mxu0 0
      %1086 = vmatprep.subr.bf16.mxu0 0
      %1087 = vmatpush1.bf16.msra.mxu0 0
      %1088 = vmatprep.subr.bf16.mxu0 0
      %1089 = vmatpush1.bf16.msra.mxu0 0
      %1090 = vmatprep.subr.bf16.mxu0 0
      %1091 = vmatpush1.bf16.msra.mxu0 0
      %1092 = vmatprep.subr.bf16.mxu0 0
      %1093 = vmatpush1.bf16.msra.mxu0 0
      %1094 = vmatprep.subr.bf16.mxu0 0
      %1095 = vmatpush1.bf16.msra.mxu0 0
      %1096 = vmatprep.subr.bf16.mxu0 0
      %1097 = vmatpush1.bf16.msra.mxu0 0
      %1098 = vmatprep.mubr.bf16.mxu0 0
      %1099 = vmatmul.mubr.bf16.gmra.mrb[0].mxu0 %v997
      %v1100 = vpop.f32.mrb[0].mxu0
      %v1101 = vadd.f32 0.0, %v1100
      %v1102 = vpop.f32.mrb[0].mxu0
      %v1103 = vpop.f32.mrb[0].mxu0
      %v1104 = vadd.f32 0.0, %v1103
      %v1105 = vpop.f32.mrb[0].mxu0
      %1106 = vmatprep.mubr.bf16.mxu0 0
      %1107 = vmatmul.mubr.bf16.gmra.mrb[0].mxu0 %v998
      %v1108 = vpop.f32.mrb[0].mxu0
      %v1109 = vadd.f32 0.0, %v1108
      %v1110 = vpop.f32.mrb[0].mxu0
      %v1111 = vpop.f32.mrb[0].mxu0
      %v1112 = vadd.f32 0.0, %v1111
      %v1113 = vpop.f32.mrb[0].mxu0
      %1114 = vmatprep.mubr.bf16.mxu0 0
      %1115 = vmatmul.mubr.bf16.gmra.mrb[0].mxu0 %v999
      %v1116 = vpop.f32.mrb[0].mxu0
      %v1117 = vadd.f32 0.0, %v1116
      %v1118 = vpop.f32.mrb[0].mxu0
      %v1119 = vpop.f32.mrb[0].mxu0
      %v1120 = vadd.f32 0.0, %v1119
      %v1121 = vpop.f32.mrb[0].mxu0
      %1122 = vmatprep.mubr.bf16.mxu0 0
      %1123 = vmatmul.mubr.bf16.gmra.mrb[0].mxu0 %v1000
      %v1124 = vpop.f32.mrb[0].mxu0
      %v1125 = vadd.f32 0.0, %v1124
      %v1126 = vpop.f32.mrb[0].mxu0
      %v1127 = vpop.f32.mrb[0].mxu0
      %v1128 = vadd.f32 0.0, %v1127
      %v1129 = vpop.f32.mrb[0].mxu0
      %1130 = vdwg.mxu0
      %v1131 = vadd.f32 %v985, %v1101
      %v1132 = vadd.f32 %v986, %v1104
      %v1133 = vadd.f32 %v987, %v1109
      %v1134 = vadd.f32 %v988, %v1112
      %v1135 = vadd.f32 %v989, %v1117
      %v1136 = vadd.f32 %v990, %v1120
      %v1137 = vadd.f32 %v991, %v1125
      %v1138 = vadd.f32 %v992, %v1128
      %v1139 = vpack.c.bf16 %v210, %v208
      %s1140 = scalar_lea.vmem %s1, 384
      %v1141 = vld [vmem:[%s1140] sm:$0xf]
      %v1142 = vld [vmem:[%s1140 + $0x4] sm:$0xf]
      %v1143 = vld [vmem:[%s1140 + $0x8] sm:$0xf]
      %v1144 = vld [vmem:[%s1140 + $0xc] sm:$0xf]
      %v1145 = vld [vmem:[%s1140 + $0x10] sm:$0xf]
      %v1146 = vld [vmem:[%s1140 + $0x14] sm:$0xf]
      %v1147 = vld [vmem:[%s1140 + $0x18] sm:$0xf]
      %v1148 = vld [vmem:[%s1140 + $0x1c] sm:$0xf]
      %v1149 = vld [vmem:[%s1140 + $0x20] sm:$0xf]
      %v1150 = vld [vmem:[%s1140 + $0x24] sm:$0xf]
      %v1151 = vld [vmem:[%s1140 + $0x28] sm:$0xf]
      %v1152 = vld [vmem:[%s1140 + $0x2c] sm:$0xf]
      %v1153 = vld [vmem:[%s1140 + $0x30] sm:$0xf]
      %v1154 = vld [vmem:[%s1140 + $0x34] sm:$0xf]
      %v1155 = vld [vmem:[%s1140 + $0x38] sm:$0xf]
      %v1156 = vld [vmem:[%s1140 + $0x3c] sm:$0xf]
      %v1173 = vunpack.c.l.b16 %v1141
      %v1174 = vunpack.c.l.b16 %v1142
      %v1175 = vunpack.c.l.b16 %v1143
      %v1176 = vunpack.c.l.b16 %v1144
      %v1177 = vunpack.c.l.b16 %v1145
      %v1178 = vunpack.c.l.b16 %v1146
      %v1179 = vunpack.c.l.b16 %v1147
      %v1180 = vunpack.c.l.b16 %v1148
      %v1181 = vunpack.c.l.b16 %v1149
      %v1182 = vunpack.c.l.b16 %v1150
      %v1183 = vunpack.c.l.b16 %v1151
      %v1184 = vunpack.c.l.b16 %v1152
      %v1185 = vunpack.c.l.b16 %v1153
      %v1186 = vunpack.c.l.b16 %v1154
      %v1187 = vunpack.c.l.b16 %v1155
      %v1188 = vunpack.c.l.b16 %v1156
      %v1189 = vpack.c.b16 %v1174, %v1173
      %v1190 = vpack.c.b16 %v1176, %v1175
      %v1191 = vpack.c.b16 %v1178, %v1177
      %v1192 = vpack.c.b16 %v1180, %v1179
      %v1193 = vpack.c.b16 %v1182, %v1181
      %v1194 = vpack.c.b16 %v1184, %v1183
      %v1195 = vpack.c.b16 %v1186, %v1185
      %v1196 = vpack.c.b16 %v1188, %v1187
      %1205 = vmatprep.subr.bf16.mxu0 0
      %1206 = vmatpush1.bf16.msra.mxu0 %v1189
      %1207 = vmatprep.subr.bf16.mxu0 0
      %1208 = vmatpush1.bf16.msra.mxu0 %v1190
      %1209 = vmatprep.subr.bf16.mxu0 0
      %1210 = vmatpush1.bf16.msra.mxu0 %v1191
      %1211 = vmatprep.subr.bf16.mxu0 0
      %1212 = vmatpush1.bf16.msra.mxu0 %v1192
      %1213 = vmatprep.subr.bf16.mxu0 0
      %1214 = vmatpush1.bf16.msra.mxu0 %v1193
      %1215 = vmatprep.subr.bf16.mxu0 0
      %1216 = vmatpush1.bf16.msra.mxu0 %v1194
      %1217 = vmatprep.subr.bf16.mxu0 0
      %1218 = vmatpush1.bf16.msra.mxu0 %v1195
      %1219 = vmatprep.subr.bf16.mxu0 0
      %1220 = vmatpush1.bf16.msra.mxu0 %v1196
      %1221 = vmatprep.subr.bf16.mxu0 0
      %1222 = vmatpush1.bf16.msra.mxu0 0
      %1223 = vmatprep.subr.bf16.mxu0 0
      %1224 = vmatpush1.bf16.msra.mxu0 0
      %1225 = vmatprep.subr.bf16.mxu0 0
      %1226 = vmatpush1.bf16.msra.mxu0 0
      %1227 = vmatprep.subr.bf16.mxu0 0
      %1228 = vmatpush1.bf16.msra.mxu0 0
      %1229 = vmatprep.subr.bf16.mxu0 0
      %1230 = vmatpush1.bf16.msra.mxu0 0
      %1231 = vmatprep.subr.bf16.mxu0 0
      %1232 = vmatpush1.bf16.msra.mxu0 0
      %1233 = vmatprep.subr.bf16.mxu0 0
      %1234 = vmatpush1.bf16.msra.mxu0 0
      %1235 = vmatprep.subr.bf16.mxu0 0
      %1236 = vmatpush1.bf16.msra.mxu0 0
      %1237 = vmatprep.mubr.bf16.mxu0 0
      %1238 = vmatmul.mubr.bf16.gmra.mrb[0].mxu0 %v213
      %v1239 = vpop.f32.mrb[0].mxu0
      %v1240 = vadd.f32 0.0, %v1239
      %v1241 = vpop.f32.mrb[0].mxu0
      %v1242 = vpop.f32.mrb[0].mxu0
      %v1243 = vadd.f32 0.0, %v1242
      %v1244 = vpop.f32.mrb[0].mxu0
      %1245 = vmatprep.mubr.bf16.mxu0 0
      %1246 = vmatmul.mubr.bf16.gmra.mrb[0].mxu0 %v214
      %v1247 = vpop.f32.mrb[0].mxu0
      %v1248 = vadd.f32 0.0, %v1247
      %v1249 = vpop.f32.mrb[0].mxu0
      %v1250 = vpop.f32.mrb[0].mxu0
      %v1251 = vadd.f32 0.0, %v1250
      %v1252 = vpop.f32.mrb[0].mxu0
      %1253 = vmatprep.mubr.bf16.mxu0 0
      %1254 = vmatmul.mubr.bf16.gmra.mrb[0].mxu0 %v215
      %v1255 = vpop.f32.mrb[0].mxu0
      %v1256 = vadd.f32 0.0, %v1255
      %v1257 = vpop.f32.mrb[0].mxu0
      %v1258 = vpop.f32.mrb[0].mxu0
      %v1259 = vadd.f32 0.0, %v1258
      %v1260 = vpop.f32.mrb[0].mxu0
      %1261 = vmatprep.mubr.bf16.mxu0 0
      %1262 = vmatmul.mubr.bf16.gmra.mrb[0].mxu0 %v1139
      %v1263 = vpop.f32.mrb[0].mxu0
      %v1264 = vadd.f32 0.0, %v1263
      %v1265 = vpop.f32.mrb[0].mxu0
      %v1266 = vpop.f32.mrb[0].mxu0
      %v1267 = vadd.f32 0.0, %v1266
      %v1268 = vpop.f32.mrb[0].mxu0
      %1269 = vdwg.mxu0
      %v1270 = vadd.f32 %v1131, %v1240
      %v1271 = vadd.f32 %v1132, %v1243
      %v1272 = vadd.f32 %v1133, %v1248
      %v1273 = vadd.f32 %v1134, %v1251
      %v1274 = vadd.f32 %v1135, %v1256
      %v1275 = vadd.f32 %v1136, %v1259
      %v1276 = vadd.f32 %v1137, %v1264
      %v1277 = vadd.f32 %v1138, %v1267
      %v1280 = vrot.slane %v210, 1
      %v1281 = vrot.slane %v211, 1
      %v1282 = vsel %vm248, %v1280, %v1281
      %v1284 = vpack.c.bf16 %v1282, %v849
      %s1285 = scalar_lea.vmem %s1, 448
      %v1286 = vld [vmem:[%s1285] sm:$0xf]
      %v1287 = vld [vmem:[%s1285 + $0x4] sm:$0xf]
      %v1288 = vld [vmem:[%s1285 + $0x8] sm:$0xf]
      %v1289 = vld [vmem:[%s1285 + $0xc] sm:$0xf]
      %v1290 = vld [vmem:[%s1285 + $0x10] sm:$0xf]
      %v1291 = vld [vmem:[%s1285 + $0x14] sm:$0xf]
      %v1292 = vld [vmem:[%s1285 + $0x18] sm:$0xf]
      %v1293 = vld [vmem:[%s1285 + $0x1c] sm:$0xf]
      %v1294 = vld [vmem:[%s1285 + $0x20] sm:$0xf]
      %v1295 = vld [vmem:[%s1285 + $0x24] sm:$0xf]
      %v1296 = vld [vmem:[%s1285 + $0x28] sm:$0xf]
      %v1297 = vld [vmem:[%s1285 + $0x2c] sm:$0xf]
      %v1298 = vld [vmem:[%s1285 + $0x30] sm:$0xf]
      %v1299 = vld [vmem:[%s1285 + $0x34] sm:$0xf]
      %v1300 = vld [vmem:[%s1285 + $0x38] sm:$0xf]
      %v1301 = vld [vmem:[%s1285 + $0x3c] sm:$0xf]
      %v1318 = vunpack.c.l.b16 %v1286
      %v1319 = vunpack.c.l.b16 %v1287
      %v1320 = vunpack.c.l.b16 %v1288
      %v1321 = vunpack.c.l.b16 %v1289
      %v1322 = vunpack.c.l.b16 %v1290
      %v1323 = vunpack.c.l.b16 %v1291
      %v1324 = vunpack.c.l.b16 %v1292
      %v1325 = vunpack.c.l.b16 %v1293
      %v1326 = vunpack.c.l.b16 %v1294
      %v1327 = vunpack.c.l.b16 %v1295
      %v1328 = vunpack.c.l.b16 %v1296
      %v1329 = vunpack.c.l.b16 %v1297
      %v1330 = vunpack.c.l.b16 %v1298
      %v1331 = vunpack.c.l.b16 %v1299
      %v1332 = vunpack.c.l.b16 %v1300
      %v1333 = vunpack.c.l.b16 %v1301
      %v1334 = vpack.c.b16 %v1319, %v1318
      %v1335 = vpack.c.b16 %v1321, %v1320
      %v1336 = vpack.c.b16 %v1323, %v1322
      %v1337 = vpack.c.b16 %v1325, %v1324
      %v1338 = vpack.c.b16 %v1327, %v1326
      %v1339 = vpack.c.b16 %v1329, %v1328
      %v1340 = vpack.c.b16 %v1331, %v1330
      %v1341 = vpack.c.b16 %v1333, %v1332
      %1350 = vmatprep.subr.bf16.mxu0 0
      %1351 = vmatpush1.bf16.msra.mxu0 %v1334
      %1352 = vmatprep.subr.bf16.mxu0 0
      %1353 = vmatpush1.bf16.msra.mxu0 %v1335
      %1354 = vmatprep.subr.bf16.mxu0 0
      %1355 = vmatpush1.bf16.msra.mxu0 %v1336
      %1356 = vmatprep.subr.bf16.mxu0 0
      %1357 = vmatpush1.bf16.msra.mxu0 %v1337
      %1358 = vmatprep.subr.bf16.mxu0 0
      %1359 = vmatpush1.bf16.msra.mxu0 %v1338
      %1360 = vmatprep.subr.bf16.mxu0 0
      %1361 = vmatpush1.bf16.msra.mxu0 %v1339
      %1362 = vmatprep.subr.bf16.mxu0 0
      %1363 = vmatpush1.bf16.msra.mxu0 %v1340
      %1364 = vmatprep.subr.bf16.mxu0 0
      %1365 = vmatpush1.bf16.msra.mxu0 %v1341
      %1366 = vmatprep.subr.bf16.mxu0 0
      %1367 = vmatpush1.bf16.msra.mxu0 0
      %1368 = vmatprep.subr.bf16.mxu0 0
      %1369 = vmatpush1.bf16.msra.mxu0 0
      %1370 = vmatprep.subr.bf16.mxu0 0
      %1371 = vmatpush1.bf16.msra.mxu0 0
      %1372 = vmatprep.subr.bf16.mxu0 0
      %1373 = vmatpush1.bf16.msra.mxu0 0
      %1374 = vmatprep.subr.bf16.mxu0 0
      %1375 = vmatpush1.bf16.msra.mxu0 0
      %1376 = vmatprep.subr.bf16.mxu0 0
      %1377 = vmatpush1.bf16.msra.mxu0 0
      %1378 = vmatprep.subr.bf16.mxu0 0
      %1379 = vmatpush1.bf16.msra.mxu0 0
      %1380 = vmatprep.subr.bf16.mxu0 0
      %1381 = vmatpush1.bf16.msra.mxu0 0
      %1382 = vmatprep.mubr.bf16.mxu0 0
      %1383 = vmatmul.mubr.bf16.gmra.mrb[0].mxu0 %v282
      %v1384 = vpop.f32.mrb[0].mxu0
      %v1385 = vadd.f32 0.0, %v1384
      %v1386 = vpop.f32.mrb[0].mxu0
      %v1387 = vpop.f32.mrb[0].mxu0
      %v1388 = vadd.f32 0.0, %v1387
      %v1389 = vpop.f32.mrb[0].mxu0
      %1390 = vmatprep.mubr.bf16.mxu0 0
      %1391 = vmatmul.mubr.bf16.gmra.mrb[0].mxu0 %v283
      %v1392 = vpop.f32.mrb[0].mxu0
      %v1393 = vadd.f32 0.0, %v1392
      %v1394 = vpop.f32.mrb[0].mxu0
      %v1395 = vpop.f32.mrb[0].mxu0
      %v1396 = vadd.f32 0.0, %v1395
      %v1397 = vpop.f32.mrb[0].mxu0
      %1398 = vmatprep.mubr.bf16.mxu0 0
      %1399 = vmatmul.mubr.bf16.gmra.mrb[0].mxu0 %v284
      %v1400 = vpop.f32.mrb[0].mxu0
      %v1401 = vadd.f32 0.0, %v1400
      %v1402 = vpop.f32.mrb[0].mxu0
      %v1403 = vpop.f32.mrb[0].mxu0
      %v1404 = vadd.f32 0.0, %v1403
      %v1405 = vpop.f32.mrb[0].mxu0
      %1406 = vmatprep.mubr.bf16.mxu0 0
      %1407 = vmatmul.mubr.bf16.gmra.mrb[0].mxu0 %v1284
      %v1408 = vpop.f32.mrb[0].mxu0
      %v1409 = vadd.f32 0.0, %v1408
      %v1410 = vpop.f32.mrb[0].mxu0
      %v1411 = vpop.f32.mrb[0].mxu0
      %v1412 = vadd.f32 0.0, %v1411
      %v1413 = vpop.f32.mrb[0].mxu0
      %1414 = vdwg.mxu0
      %v1415 = vadd.f32 %v1270, %v1385
      %v1416 = vadd.f32 %v1271, %v1388
      %v1417 = vadd.f32 %v1272, %v1393
      %v1418 = vadd.f32 %v1273, %v1396
      %v1419 = vadd.f32 %v1274, %v1401
      %v1420 = vadd.f32 %v1275, %v1404
      %v1421 = vadd.f32 %v1276, %v1409
      %v1422 = vadd.f32 %v1277, %v1412
      %v1423 = vrot.slane %v210, 2
      %v1424 = vrot.slane %v211, 2
      %v1425 = vsel %vm528, %v1423, %v1424
      %v1427 = vpack.c.bf16 %v1425, %v995
      %s1428 = scalar_lea.vmem %s1, 512
      %v1429 = vld [vmem:[%s1428] sm:$0xf]
      %v1430 = vld [vmem:[%s1428 + $0x4] sm:$0xf]
      %v1431 = vld [vmem:[%s1428 + $0x8] sm:$0xf]
      %v1432 = vld [vmem:[%s1428 + $0xc] sm:$0xf]
      %v1433 = vld [vmem:[%s1428 + $0x10] sm:$0xf]
      %v1434 = vld [vmem:[%s1428 + $0x14] sm:$0xf]
      %v1435 = vld [vmem:[%s1428 + $0x18] sm:$0xf]
      %v1436 = vld [vmem:[%s1428 + $0x1c] sm:$0xf]
      %v1437 = vld [vmem:[%s1428 + $0x20] sm:$0xf]
      %v1438 = vld [vmem:[%s1428 + $0x24] sm:$0xf]
      %v1439 = vld [vmem:[%s1428 + $0x28] sm:$0xf]
      %v1440 = vld [vmem:[%s1428 + $0x2c] sm:$0xf]
      %v1441 = vld [vmem:[%s1428 + $0x30] sm:$0xf]
      %v1442 = vld [vmem:[%s1428 + $0x34] sm:$0xf]
      %v1443 = vld [vmem:[%s1428 + $0x38] sm:$0xf]
      %v1444 = vld [vmem:[%s1428 + $0x3c] sm:$0xf]
      %v1461 = vunpack.c.l.b16 %v1429
      %v1462 = vunpack.c.l.b16 %v1430
      %v1463 = vunpack.c.l.b16 %v1431
      %v1464 = vunpack.c.l.b16 %v1432
      %v1465 = vunpack.c.l.b16 %v1433
      %v1466 = vunpack.c.l.b16 %v1434
      %v1467 = vunpack.c.l.b16 %v1435
      %v1468 = vunpack.c.l.b16 %v1436
      %v1469 = vunpack.c.l.b16 %v1437
      %v1470 = vunpack.c.l.b16 %v1438
      %v1471 = vunpack.c.l.b16 %v1439
      %v1472 = vunpack.c.l.b16 %v1440
      %v1473 = vunpack.c.l.b16 %v1441
      %v1474 = vunpack.c.l.b16 %v1442
      %v1475 = vunpack.c.l.b16 %v1443
      %v1476 = vunpack.c.l.b16 %v1444
      %v1477 = vpack.c.b16 %v1462, %v1461
      %v1478 = vpack.c.b16 %v1464, %v1463
      %v1479 = vpack.c.b16 %v1466, %v1465
      %v1480 = vpack.c.b16 %v1468, %v1467
      %v1481 = vpack.c.b16 %v1470, %v1469
      %v1482 = vpack.c.b16 %v1472, %v1471
      %v1483 = vpack.c.b16 %v1474, %v1473
      %v1484 = vpack.c.b16 %v1476, %v1475
      %1493 = vmatprep.subr.bf16.mxu0 0
      %1494 = vmatpush1.bf16.msra.mxu0 %v1477
      %1495 = vmatprep.subr.bf16.mxu0 0
      %1496 = vmatpush1.bf16.msra.mxu0 %v1478
      %1497 = vmatprep.subr.bf16.mxu0 0
      %1498 = vmatpush1.bf16.msra.mxu0 %v1479
      %1499 = vmatprep.subr.bf16.mxu0 0
      %1500 = vmatpush1.bf16.msra.mxu0 %v1480
      %1501 = vmatprep.subr.bf16.mxu0 0
      %1502 = vmatpush1.bf16.msra.mxu0 %v1481
      %1503 = vmatprep.subr.bf16.mxu0 0
      %1504 = vmatpush1.bf16.msra.mxu0 %v1482
      %1505 = vmatprep.subr.bf16.mxu0 0
      %1506 = vmatpush1.bf16.msra.mxu0 %v1483
      %1507 = vmatprep.subr.bf16.mxu0 0
      %1508 = vmatpush1.bf16.msra.mxu0 %v1484
      %1509 = vmatprep.subr.bf16.mxu0 0
      %1510 = vmatpush1.bf16.msra.mxu0 0
      %1511 = vmatprep.subr.bf16.mxu0 0
      %1512 = vmatpush1.bf16.msra.mxu0 0
      %1513 = vmatprep.subr.bf16.mxu0 0
      %1514 = vmatpush1.bf16.msra.mxu0 0
      %1515 = vmatprep.subr.bf16.mxu0 0
      %1516 = vmatpush1.bf16.msra.mxu0 0
      %1517 = vmatprep.subr.bf16.mxu0 0
      %1518 = vmatpush1.bf16.msra.mxu0 0
      %1519 = vmatprep.subr.bf16.mxu0 0
      %1520 = vmatpush1.bf16.msra.mxu0 0
      %1521 = vmatprep.subr.bf16.mxu0 0
      %1522 = vmatpush1.bf16.msra.mxu0 0
      %1523 = vmatprep.subr.bf16.mxu0 0
      %1524 = vmatpush1.bf16.msra.mxu0 0
      %1525 = vmatprep.mubr.bf16.mxu0 0
      %1526 = vmatmul.mubr.bf16.gmra.mrb[0].mxu0 %v562
      %v1527 = vpop.f32.mrb[0].mxu0
      %v1528 = vadd.f32 0.0, %v1527
      %v1529 = vpop.f32.mrb[0].mxu0
      %v1530 = vpop.f32.mrb[0].mxu0
      %v1531 = vadd.f32 0.0, %v1530
      %v1532 = vpop.f32.mrb[0].mxu0
      %1533 = vmatprep.mubr.bf16.mxu0 0
      %1534 = vmatmul.mubr.bf16.gmra.mrb[0].mxu0 %v563
      %v1535 = vpop.f32.mrb[0].mxu0
      %v1536 = vadd.f32 0.0, %v1535
      %v1537 = vpop.f32.mrb[0].mxu0
      %v1538 = vpop.f32.mrb[0].mxu0
      %v1539 = vadd.f32 0.0, %v1538
      %v1540 = vpop.f32.mrb[0].mxu0
      %1541 = vmatprep.mubr.bf16.mxu0 0
      %1542 = vmatmul.mubr.bf16.gmra.mrb[0].mxu0 %v564
      %v1543 = vpop.f32.mrb[0].mxu0
      %v1544 = vadd.f32 0.0, %v1543
      %v1545 = vpop.f32.mrb[0].mxu0
      %v1546 = vpop.f32.mrb[0].mxu0
      %v1547 = vadd.f32 0.0, %v1546
      %v1548 = vpop.f32.mrb[0].mxu0
      %1549 = vmatprep.mubr.bf16.mxu0 0
      %1550 = vmatmul.mubr.bf16.gmra.mrb[0].mxu0 %v1427
      %v1551 = vpop.f32.mrb[0].mxu0
      %v1552 = vadd.f32 0.0, %v1551
      %v1553 = vpop.f32.mrb[0].mxu0
      %v1554 = vpop.f32.mrb[0].mxu0
      %v1555 = vadd.f32 0.0, %v1554
      %v1556 = vpop.f32.mrb[0].mxu0
      %1557 = vdwg.mxu0
      %v1558 = vadd.f32 %v1415, %v1528
      %v1559 = vadd.f32 %v1416, %v1531
      %v1560 = vadd.f32 %v1417, %v1536
      %v1561 = vadd.f32 %v1418, %v1539
      %v1562 = vadd.f32 %v1419, %v1544
      %v1563 = vadd.f32 %v1420, %v1547
      %v1564 = vadd.f32 %v1421, %v1552
      %v1565 = vadd.f32 %v1422, %v1555
      %v1566 = vld [vmem:[%s2] sm:$0x1]
      %v1568 = vlaneseq
      %v1569 = vshrl.u32 %v1568, 7
      %v1570 = vsub.s32 0, %v1569
      %v1571 = vrot.slane %v1566, %v1570
      %v1573 = vadd.f32 %v1558, %v1571
      %v1574 = vadd.f32 %v1559, %v1571
      %v1575 = vadd.f32 %v1560, %v1571
      %v1576 = vadd.f32 %v1561, %v1571
      %v1577 = vadd.f32 %v1562, %v1571
      %v1578 = vadd.f32 %v1563, %v1571
      %v1579 = vadd.f32 %v1564, %v1571
      %v1580 = vadd.f32 %v1565, %v1571
      %v1581 = vmax.f32 %v1573, 0.0
      %v1582 = vmax.f32 %v1574, 0.0
      %v1583 = vmax.f32 %v1575, 0.0
      %v1584 = vmax.f32 %v1576, 0.0
      %v1585 = vmax.f32 %v1577, 0.0
      %v1586 = vmax.f32 %v1578, 0.0
      %v1587 = vmax.f32 %v1579, 0.0
      %v1588 = vmax.f32 %v1580, 0.0
      %v1589 = vpack.c.bf16 %v1582, %v1581
      %v1590 = vpack.c.bf16 %v1584, %v1583
      %v1591 = vpack.c.bf16 %v1586, %v1585
      %v1592 = vpack.c.bf16 %v1588, %v1587
      %v1597 = vunpack.c.l.b16 %v1589
      %v1598 = vunpack.c.h.b16 %v1589
      %v1599 = vunpack.c.l.b16 %v1590
      %v1600 = vunpack.c.h.b16 %v1590
      %v1601 = vunpack.c.l.b16 %v1591
      %v1602 = vunpack.c.h.b16 %v1591
      %v1603 = vunpack.c.l.b16 %v1592
      %v1604 = vunpack.c.h.b16 %v1592
      %v1605 = vpack.c.b16 %v1597, %v1597
      %v1606 = vpack.c.b16 %v1598, %v1598
      %v1607 = vpack.c.b16 %v1599, %v1599
      %v1608 = vpack.c.b16 %v1600, %v1600
      %v1609 = vpack.c.b16 %v1601, %v1601
      %v1610 = vpack.c.b16 %v1602, %v1602
      %v1611 = vpack.c.b16 %v1603, %v1603
      %v1612 = vpack.c.b16 %v1604, %v1604
      %1621 = vst [vmem:[%s170] sm:$0xf] %v1605
      %1622 = vst [vmem:[%s170 + $0x4] sm:$0xf] %v1606
      %1623 = vst [vmem:[%s170 + $0x8] sm:$0xf] %v1607
      %1624 = vst [vmem:[%s170 + $0xc] sm:$0xf] %v1608
      %1625 = vst [vmem:[%s170 + $0x10] sm:$0xf] %v1609
      %1626 = vst [vmem:[%s170 + $0x14] sm:$0xf] %v1610
      %1627 = vst [vmem:[%s170 + $0x18] sm:$0xf] %v1611
      %1628 = vst [vmem:[%s170 + $0x1c] sm:$0xf] %v1612
      %p1629 = scmp.lt.s32.totalorder %s14, 1
      %s1630 = scalar_select %p1629, %s14, 1
      %s1631 = smul.addr %s1630, 8
      %s1632 = smul.addr %s1631, 4
      %s1633 = scalar_lea.vmem %s3, %s1632
      // Predicated region
      $region33: #{encoder_cnn_forward.9} parent=31 // pred_check
        %p1634 = pneg %p100
      $region34: #{encoder_cnn_forward.9} parent=31 // pred_check_branch
        %1636 = sbr.rel (%p1634) target = $region36
      $region35: #{encoder_cnn_forward.9} parent=31 // pred_region
        _
      $region36: #{encoder_cnn_forward.9} parent=31 // pred_fallthru
        _
    $region32: #{encoder_cnn_forward.9} parent=5 // pred_fallthru
      _
    %p1637 = scmp.le.s32.totalorder 2, %s9
    // Predicated region
    $region37: #{encoder_cnn_forward.9} parent=5 // pred_check
      %p1638 = pneg %p1637
    $region38: #{encoder_cnn_forward.9} parent=5 // pred_check_branch
      %1640 = sbr.rel (%p1638) target = $region40
    $region39: #{encoder_cnn_forward.9} parent=5 // pred_region
      %s1641 = ssub.s32 %s9, 2
      // Predicated region
      $region41: #{encoder_cnn_forward.9} parent=39 // pred_check
        %p1642 = pneg %p106
      $region42: #{encoder_cnn_forward.9} parent=39 // pred_check_branch
        %1644 = sbr.rel (%p1642) target = $region44
      $region43: #{encoder_cnn_forward.9} parent=39 // pred_region
        %p1645 = scmp.lt.s32.totalorder %s15, 1
        %s1646 = scalar_select %p1645, %s15, 1
        %s1647 = smul.addr %s1646, 8
        %s1648 = smul.addr %s1647, 4
        %s1649 = scalar_lea.vmem %s3, %s1648
      $region44: #{encoder_cnn_forward.9} parent=39 // pred_fallthru
        _
    $region40: #{encoder_cnn_forward.9} parent=5 // pred_fallthru
      _
  $region6: #{encoder_cnn_forward.9} parent=0 // loop_footer
    %s13 = sadd.s32 1, %s9
  $region7: #{encoder_cnn_forward.9} parent=0 // loop_footer_branch
    %8 = sbr.rel target = $region3
  $region8: #{encoder_cnn_forward.9} parent=0 // loop_exit
    _

</llo_original>
